<compile_context>
chip_gen: v5e
topology: v5e:2x2
jax: 0.10.0
libtpu: 0.0.40
codegen_flags: <defaults>
</compile_context>

<pallas_src>
import functools

import jax
import jax.numpy as jnp
from jax.experimental import pallas as pl
from jax.experimental.pallas import tpu as pltpu


# Safe on every generation (>= v5e's 16 MiB default scoped VMEM, <= physical
# VMEM everywhere); actual per-step block usage here is far below this.
_VMEM_LIMIT_BYTES = 32 * 1024 * 1024


def _pick_row_tile(n_rows, target):
    """Largest even divisor of n_rows that is <= target (n_rows is even here)."""
    if n_rows <= target:
        return n_rows
    best = 2
    for cand in range(2, target + 1, 2):
        if n_rows % cand == 0:
            best = cand
    return best


# ------------------------------------------------------------------
# In-kernel helper: 3x3 valid convolution on a column-pair packed slab.
# ------------------------------------------------------------------
def _packed_conv3x3(p, w_mat):
    """3x3 valid conv on a column-pair-packed activation.

    p     : (R, V, 2*C) f32 -- packed view of an (R, 2*V, C) NHWC slab,
            lanes ordered (column parity, channel).
    w_mat : (9*C, Cout)     -- HWIO weights flattened in (di, dj, ch) order.
    returns (R-2, V-1, 2*Cout) -- packed view of the (R-2, 2*V-2, Cout) output.
    """
    r, v, c2 = p.shape
    c = c2 // 2
    cout = w_mat.shape[1]
    ro, vo = r - 2, v - 1

    lo = p[:, : v - 1, :]        # columns 2v, 2v+1
    hi = p[:, 1:, :]             # columns 2v+2, 2v+3
    # column taps (dj = 0,1,2) for even / odd output columns, (dj, ch) on lanes
    cols_e = jnp.concatenate([lo, hi[:, :, :c]], axis=-1)       # (R, V-1, 3C)
    cols_o = jnp.concatenate([lo[:, :, c:], hi], axis=-1)       # (R, V-1, 3C)
    # row taps (di = 0,1,2): full im2col patch, K = 9*C
    patch_e = jnp.concatenate([cols_e[d:d + ro] for d in range(3)], axis=-1)
    patch_o = jnp.concatenate([cols_o[d:d + ro] for d in range(3)], axis=-1)

    out_e = jnp.dot(patch_e.reshape(ro * vo, 9 * c), w_mat,
                    preferred_element_type=jnp.float32)
    out_o = jnp.dot(patch_o.reshape(ro * vo, 9 * c), w_mat,
                    preferred_element_type=jnp.float32)
    return jnp.concatenate([out_e.reshape(ro, vo, cout),
                            out_o.reshape(ro, vo, cout)], axis=-1)


# ------------------------------------------------------------------
# Kernel 1: ConvTranspose2d(2,2,stride=2) + pixel shuffle + skip "concat"
#           + conv1(3x3) + bias + (ReLU) + BN partial statistics.
# ------------------------------------------------------------------
def _up_conv1_kernel(x_ref, skip_ref, wup_ref, w1y_ref, w1s_ref, b1_ref,
                     h_ref, st_ref, *, tr, relu):
    w_in = x_ref.shape[1]
    in_c = x_ref.shape[2]
    cup = in_c // 2

    t = pl.program_id(1)
    r0 = pl.multiple_of(t * tr, 2)        # first output row of this tile (even)
    i0 = t * (tr // 2)                    # first x row feeding this tile
    ru = tr // 2 + 1                      # x rows needed (incl. halo)

    # ---- transposed conv: one matmul per output-row parity (ki) ----
    xt = x_ref[pl.ds(i0, ru)]                                   # (ru, W, inC)
    xf = xt.reshape(ru * w_in, in_c)
    a0 = jnp.dot(xf, wup_ref[0], preferred_element_type=jnp.float32)
    a1 = jnp.dot(xf, wup_ref[1], preferred_element_type=jnp.float32)
    a0 = a0.reshape(ru, w_in, 2 * cup)
    a1 = a1.reshape(ru, w_in, 2 * cup)
    # interleave the two row parities (pixel shuffle along rows); columns stay
    # packed as (kj, channel) on the lane axis -> no cross-lane relayout.
    yp = jnp.stack([a0, a1], axis=1).reshape(2 * ru, w_in, 2 * cup)

    # ---- skip connection (already center-cropped + packed), with row halo ----
    sp = skip_ref[pl.ds(r0, tr + 2)].astype(jnp.float32)        # (tr+2, W, 2Cup)

    # ---- conv1: split along Cin (y-part + skip-part), one accumulator ----
    acc = (_packed_conv3x3(yp, w1y_ref[...])
           + _packed_conv3x3(sp, w1s_ref[...])
           + b1_ref[...])
    if relu:
        acc = jnp.maximum(acc, 0.0)

    h_ref[...] = acc.astype(h_ref.dtype)

    # single-pass BN statistics (sum and sum of squares, per packed channel)
    flat = acc.reshape(acc.shape[0] * acc.shape[1], acc.shape[2])
    st_ref[0:1, :] = jnp.sum(flat, axis=0, keepdims=True)
    st_ref[1:2, :] = jnp.sum(flat * flat, axis=0, keepdims=True)


# ------------------------------------------------------------------
# Kernel 2: conv(3x3, BN1 folded into weights) + bias + (ReLU) + BN stats.
# ------------------------------------------------------------------
def _conv_bn_kernel(p_ref, w_ref, b_ref, h_ref, st_ref, *, tr, relu):
    r0 = pl.program_id(1) * tr
    p = p_ref[pl.ds(r0, tr + 2)].astype(jnp.float32)
    acc = _packed_conv3x3(p, w_ref[...]) + b_ref[...]
    if relu:
        acc = jnp.maximum(acc, 0.0)
    h_ref[...] = acc.astype(h_ref.dtype)

    flat = acc.reshape(acc.shape[0] * acc.shape[1], acc.shape[2])
    st_ref[0:1, :] = jnp.sum(flat, axis=0, keepdims=True)
    st_ref[1:2, :] = jnp.sum(flat * flat, axis=0, keepdims=True)


# ------------------------------------------------------------------
# pallas_call wrappers
# ------------------------------------------------------------------
def _fused_upconv_conv1(x, skip_p, wup, w1y, w1s, b1p, relu, row_tile):
    n, h, w, in_c = x.shape
    cup = in_c // 2
    cout = w1y.shape[1]
    ho, vo = 2 * h - 2, w - 1
    tr = _pick_row_tile(ho, row_tile)
    n_r = ho // tr

    flops = 2 * n * h * w * in_c * 4 * cup + 2 * n * ho * 2 * vo * 9 * in_c * cout
    bytes_accessed = 4 * (x.size + skip_p.size + n * ho * vo * 2 * cout)

    return pl.pallas_call(
        functools.partial(_up_conv1_kernel, tr=tr, relu=relu),
        grid=(n, n_r),
        in_specs=[
            pl.BlockSpec((None, h, w, in_c), lambda b, r: (b, 0, 0, 0)),
            pl.BlockSpec((None, 2 * h, w, 2 * cup), lambda b, r: (b, 0, 0, 0)),
            pl.BlockSpec((2, in_c, 2 * cup), lambda b, r: (0, 0, 0)),
            pl.BlockSpec((9 * cup, cout), lambda b, r: (0, 0)),
            pl.BlockSpec((9 * cup, cout), lambda b, r: (0, 0)),
            pl.BlockSpec((1, 2 * cout), lambda b, r: (0, 0)),
        ],
        out_specs=[
            pl.BlockSpec((None, tr, vo, 2 * cout), lambda b, r: (b, r, 0, 0)),
            pl.BlockSpec((None, None, 2, 2 * cout), lambda b, r: (b, r, 0, 0)),
        ],
        out_shape=[
            jax.ShapeDtypeStruct((n, ho, vo, 2 * cout), x.dtype),
            jax.ShapeDtypeStruct((n, n_r, 2, 2 * cout), jnp.float32),
        ],
        compiler_params=pltpu.CompilerParams(
            dimension_semantics=("parallel", "parallel"),
            vmem_limit_bytes=_VMEM_LIMIT_BYTES),
        cost_estimate=pl.CostEstimate(flops=flops, transcendentals=0,
                                      bytes_accessed=bytes_accessed),
    )(x, skip_p, wup, w1y, w1s, b1p)


def _fused_conv_bn(h_in, w_mat, b_p, relu, row_tile):
    n, rows_in, v_in, c2 = h_in.shape
    c_in = c2 // 2
    cout = w_mat.shape[1]
    ho, vo = rows_in - 2, v_in - 1
    tr = _pick_row_tile(ho, row_tile)
    n_r = ho // tr

    flops = 2 * n * ho * 2 * vo * 9 * c_in * cout
    bytes_accessed = 4 * (h_in.size + n * ho * vo * 2 * cout)

    return pl.pallas_call(
        functools.partial(_conv_bn_kernel, tr=tr, relu=relu),
        grid=(n, n_r),
        in_specs=[
            pl.BlockSpec((None, rows_in, v_in, c2), lambda b, r: (b, 0, 0, 0)),
            pl.BlockSpec((9 * c_in, cout), lambda b, r: (0, 0)),
            pl.BlockSpec((1, 2 * cout), lambda b, r: (0, 0)),
        ],
        out_specs=[
            pl.BlockSpec((None, tr, vo, 2 * cout), lambda b, r: (b, r, 0, 0)),
            pl.BlockSpec((None, None, 2, 2 * cout), lambda b, r: (b, r, 0, 0)),
        ],
        out_shape=[
            jax.ShapeDtypeStruct((n, ho, vo, 2 * cout), h_in.dtype),
            jax.ShapeDtypeStruct((n, n_r, 2, 2 * cout), jnp.float32),
        ],
        compiler_params=pltpu.CompilerParams(
            dimension_semantics=("parallel", "parallel"),
            vmem_limit_bytes=_VMEM_LIMIT_BYTES),
        cost_estimate=pl.CostEstimate(flops=flops, transcendentals=0,
                                      bytes_accessed=bytes_accessed),
    )(h_in, w_mat, b_p)


def _bn_scale_shift(stats, count, out_c, gamma, beta, eps):
    """Per-channel BN affine (scale, shift) from partial sum / sum-sq tiles."""
    tot = jnp.sum(stats, axis=(0, 1))                 # (2, 2*outC)
    ssum = tot[0, :out_c] + tot[0, out_c:]
    ssq = tot[1, :out_c] + tot[1, out_c:]
    mean = ssum / count
    var = ssq / count - mean * mean                   # biased batch variance
    scale = gamma * jax.lax.rsqrt(var + eps)
    shift = beta - mean * scale
    return scale, shift


# ------------------------------------------------------------------
# upStep forward (NCHW in / NCHW out, like the PyTorch module)
# ------------------------------------------------------------------
def up_step_forward(x_nchw, x_down_nchw, params, with_relu=True, eps=1e-5,
                    row_tile=16):
    n, in_c, h, w = x_nchw.shape
    cup = in_c // 2
    out_c = params["w1"].shape[0]

    # ---- NCHW -> NHWC only at the module boundary ----
    x = jnp.transpose(x_nchw, (0, 2, 3, 1))
    xd = jnp.transpose(x_down_nchw, (0, 2, 3, 1))

    # ---- center-crop the skip connection and column-pair pack it ----
    hd, wd = xd.shape[1], xd.shape[2]
    dy, dx = (hd - 2 * h) // 2, (wd - 2 * w) // 2
    skip = xd[:, dy:dy + 2 * h, dx:dx + 2 * w, :]
    skip_p = skip.reshape(n, 2 * h, w, 2 * cup)       # free row-major re-pack

    # ---- parameter-sized preprocessing (tiny) ----
    w_up = params["w_up"]                             # (inC, Cup, 2, 2) torch layout
    wup_k = jnp.transpose(w_up, (2, 0, 3, 1)).reshape(2, in_c, 2 * cup)
    w1 = params["w1"]                                 # (outC, inC, 3, 3) torch layout
    w1y = jnp.transpose(w1[:, :cup], (2, 3, 1, 0)).reshape(9 * cup, out_c)
    w1s = jnp.transpose(w1[:, cup:], (2, 3, 1, 0)).reshape(9 * cup, out_c)
    # fold the ConvTranspose bias into conv1's bias (exact: conv is linear)
    b1_eff = params["b1"] + jnp.einsum("ocij,c->o", w1[:, :cup], params["b_up"])
    b1p = jnp.tile(b1_eff, 2)[None, :]

    # ---- stage 1: upconv + shuffle + "concat" + conv1 (+ReLU) + BN stats ----
    h1p, st1 = _fused_upconv_conv1(x, skip_p, wup_k, w1y, w1s, b1p,
                                   with_relu, row_tile)

    ho1, wo1 = 2 * h - 2, 2 * w - 2
    if with_relu:
        s1, t1 = _bn_scale_shift(st1, n * ho1 * wo1, out_c,
                                 params["gamma"], params["beta"], eps)
    else:
        s1 = jnp.ones((out_c,), jnp.float32)
        t1 = jnp.zeros((out_c,), jnp.float32)

    # ---- fold BN1 (per-channel affine) exactly into conv2's weights/bias ----
    w2 = params["w2"]
    w2_eff = w2 * s1[None, :, None, None]
    b2_eff = params["b2"] + jnp.einsum("ocij,c->o", w2, t1)
    w2m = jnp.transpose(w2_eff, (2, 3, 1, 0)).reshape(9 * out_c, out_c)
    b2p = jnp.tile(b2_eff, 2)[None, :]

    # ---- stage 2: conv2 (+ReLU) + BN stats ----
    h2p, st2 = _fused_conv_bn(h1p, w2m, b2p, with_relu, row_tile)

    ho2, wo2 = 2 * h - 4, 2 * w - 4
    if with_relu:
        s2, t2 = _bn_scale_shift(st2, n * ho2 * wo2, out_c,
                                 params["gamma"], params["beta"], eps)
        # BN2 affine: fused by XLA with the un-pack / NCHW transpose below.
        h2p = h2p * jnp.tile(s2, 2) + jnp.tile(t2, 2)

    out = h2p.reshape(n, ho2, wo2, out_c)             # un-pack columns (free)
    return jnp.transpose(out, (0, 3, 1, 2))           # NHWC -> NCHW


# ------------------------------------------------------------------
# Deterministic parameter init (PyTorch-style uniform(-1/sqrt(fan_in), ...))
# ------------------------------------------------------------------
def init_params(key, in_c, out_c):
    c_up = in_c // 2
    keys = jax.random.split(key, 6)

    def u(k, shape, fan_in):
        bound = 1.0 / float(fan_in) ** 0.5
        return jax.random.uniform(k, shape, jnp.float32, -bound, bound)

    return {
        "w_up": u(keys[0], (in_c, c_up, 2, 2), in_c * 2 * 2),  # ConvTranspose2d
        "b_up": u(keys[1], (c_up,), in_c * 2 * 2),
        "w1": u(keys[2], (out_c, in_c, 3, 3), in_c * 9),       # Conv2d OIHW
        "b1": u(keys[3], (out_c,), in_c * 9),
        "w2": u(keys[4], (out_c, out_c, 3, 3), out_c * 9),
        "b2": u(keys[5], (out_c,), out_c * 9),
        "gamma": jnp.ones((out_c,), jnp.float32),
        "beta": jnp.zeros((out_c,), jnp.float32),
    }


# ------------------------------------------------------------------
# Pure-JAX reference (mirrors the PyTorch module exactly), for validation.
# ------------------------------------------------------------------
def _reference_forward(x_nchw, x_down_nchw, params, with_relu, eps=1e-5):
    hp = jax.lax.Precision.HIGHEST
    x = jnp.transpose(x_nchw, (0, 2, 3, 1)).astype(jnp.float32)
    xd = jnp.transpose(x_down_nchw, (0, 2, 3, 1)).astype(jnp.float32)
    n, h, w, in_c = x.shape
    cup = in_c // 2

    y = jnp.einsum("nijc,cokl->nikjlo", x, params["w_up"], precision=hp)
    y = y.reshape(n, 2 * h, 2 * w, cup) + params["b_up"]

    hd, wd = xd.shape[1], xd.shape[2]
    dy, dx = (hd - 2 * h) // 2, (wd - 2 * w) // 2
    crop = xd[:, dy:dy + 2 * h, dx:dx + 2 * w, :]
    cat = jnp.concatenate([y, crop], axis=-1)

    def conv3(t, w_oihw, b):
        wh = jnp.transpose(w_oihw, (2, 3, 1, 0))
        ho, wo = t.shape[1] - 2, t.shape[2] - 2
        acc = jnp.zeros((t.shape[0], ho, wo, w_oihw.shape[0]), jnp.float32)
        for di in range(3):
            for dj in range(3):
                acc = acc + jnp.einsum("nhwc,co->nhwo",
                                       t[:, di:di + ho, dj:dj + wo, :],
                                       wh[di, dj], precision=hp)
        return acc + b

    def bn(t):
        m = t.mean(axis=(0, 1, 2))
        v = ((t - m) ** 2).mean(axis=(0, 1, 2))
        return (t - m) * jax.lax.rsqrt(v + eps) * params["gamma"] + params["beta"]

    h1 = conv3(cat, params["w1"], params["b1"])
    if with_relu:
        h1 = bn(jnp.maximum(h1, 0.0))
    h2 = conv3(h1, params["w2"], params["b2"])
    if with_relu:
        h2 = bn(jnp.maximum(h2, 0.0))
    return jnp.transpose(h2, (0, 3, 1, 2))


if __name__ == "__main__":
    in_c, out_c = 8, 4
    n, h, w = 2, 16, 16
    hd, wd = 40, 40  # skip connection is larger; center-crop offsets = 4

    key = jax.random.PRNGKey(0)
    kx, kd, kp = jax.random.split(key, 3)
    x = jax.random.normal(kx, (n, in_c, h, w), jnp.float32)
    x_down = jax.random.normal(kd, (n, in_c // 2, hd, wd), jnp.float32)
    params = init_params(kp, in_c, out_c)

    # withReLU=True path (conv -> ReLU -> BatchNorm, shared BN module)
    fwd = jax.jit(functools.partial(up_step_forward, with_relu=True))
    out = jax.block_until_ready(fwd(x, x_down, params))
    assert out.shape == (n, out_c, 2 * h - 4, 2 * w - 4), out.shape
    assert out.dtype == jnp.float32
    ref = _reference_forward(x, x_down, params, with_relu=True)
    err = float(jnp.max(jnp.abs(out - ref)))
    assert err < 2e-3, f"max abs error vs reference (relu+bn): {err}"

    # withReLU=False path
    fwd_nr = jax.jit(functools.partial(up_step_forward, with_relu=False))
    out_nr = jax.block_until_ready(fwd_nr(x, x_down, params))
    ref_nr = _reference_forward(x, x_down, params, with_relu=False)
    err_nr = float(jnp.max(jnp.abs(out_nr - ref_nr)))
    assert err_nr < 2e-3, f"max abs error vs reference (no relu): {err_nr}"

    print("KERNEL_OK")
</pallas_src>

<mosaic_0001>
module attributes {stable_mosaic.version = 11 : i64} {
  func.func @_up_conv1_kernel(%arg0: i32, %arg1: i32, %arg2: memref<1x16x16x8xf32, #tpu.memory_space<vmem>>, %arg3: memref<1x32x16x8xf32, #tpu.memory_space<vmem>>, %arg4: memref<2x8x8xf32, #tpu.memory_space<vmem>>, %arg5: memref<36x4xf32, #tpu.memory_space<vmem>>, %arg6: memref<36x4xf32, #tpu.memory_space<vmem>>, %arg7: memref<1x8xf32, #tpu.memory_space<vmem>>, %arg8: memref<1x10x15x8xf32, #tpu.memory_space<vmem>>, %arg9: memref<1x1x2x8xf32, #tpu.memory_space<vmem>>) attributes {dimension_semantics = [#tpu.dimension_semantics<parallel>, #tpu.dimension_semantics<parallel>], iteration_bounds = array<i64: 2, 3>, scalar_prefetch = 0 : i64, scratch_operands = 0 : i64, tpu.core_type = #tpu.core_type<tc>, window_params = [{transform_indices = @transform_0, window_bounds = array<i64: 1, 16, 16, 8>}, {transform_indices = @transform_1, window_bounds = array<i64: 1, 32, 16, 8>}, {pipeline_mode = #tpu.pipeline_mode<synchronous>, transform_indices = @transform_2, window_bounds = array<i64: 2, 8, 8>}, {pipeline_mode = #tpu.pipeline_mode<synchronous>, transform_indices = @transform_3, window_bounds = array<i64: 36, 4>}, {pipeline_mode = #tpu.pipeline_mode<synchronous>, transform_indices = @transform_4, window_bounds = array<i64: 36, 4>}, {pipeline_mode = #tpu.pipeline_mode<synchronous>, transform_indices = @transform_5, window_bounds = array<i64: 1, 8>}, {transform_indices = @transform_6, window_bounds = array<i64: 1, 10, 15, 8>}, {transform_indices = @transform_7, window_bounds = array<i64: 1, 1, 2, 8>}]} {
    %c10_i32 = arith.constant 10 : i32
    %0 = arith.muli %arg1, %c10_i32 : i32
    %1 = tpu.assume_multiple %0, 2 : i32
    %c5_i32 = arith.constant 5 : i32
    %2 = arith.muli %arg1, %c5_i32 : i32
    %c0 = arith.constant 0 : index
    %3 = arith.index_cast %2 : i32 to index
    %c0_0 = arith.constant 0 : index
    %c0_1 = arith.constant 0 : index
    %4 = vector.load %arg2[%c0, %3, %c0_0, %c0_1] : memref<1x16x16x8xf32, #tpu.memory_space<vmem>>, vector<1x6x16x8xf32>
    %5 = vector.shape_cast %4 : vector<1x6x16x8xf32> to vector<6x16x8xf32>
    %6 = vector.shape_cast %5 : vector<6x16x8xf32> to vector<96x8xf32>
    %c0_2 = arith.constant 0 : index
    %c0_3 = arith.constant 0 : index
    %c0_4 = arith.constant 0 : index
    %7 = vector.load %arg4[%c0_2, %c0_3, %c0_4] : memref<2x8x8xf32, #tpu.memory_space<vmem>>, vector<1x8x8xf32>
    %8 = vector.shape_cast %7 : vector<1x8x8xf32> to vector<8x8xf32>
    %cst = arith.constant dense<0.000000e+00> : vector<96x8xf32>
    %9 = tpu.matmul %6, %8, %cst {dimension_numbers = #tpu.dot_dimension_numbers<[1], [0], [0], [1], [0, 0, 1, 1], [], []>} : vector<96x8xf32>, vector<8x8xf32>, vector<96x8xf32> -> vector<96x8xf32>
    %c1 = arith.constant 1 : index
    %c0_5 = arith.constant 0 : index
    %c0_6 = arith.constant 0 : index
    %10 = vector.load %arg4[%c1, %c0_5, %c0_6] : memref<2x8x8xf32, #tpu.memory_space<vmem>>, vector<1x8x8xf32>
    %11 = vector.shape_cast %10 : vector<1x8x8xf32> to vector<8x8xf32>
    %cst_7 = arith.constant dense<0.000000e+00> : vector<96x8xf32>
    %12 = tpu.matmul %6, %11, %cst_7 {dimension_numbers = #tpu.dot_dimension_numbers<[1], [0], [0], [1], [0, 0, 1, 1], [], []>} : vector<96x8xf32>, vector<8x8xf32>, vector<96x8xf32> -> vector<96x8xf32>
    %13 = vector.shape_cast %9 : vector<96x8xf32> to vector<6x16x8xf32>
    %14 = vector.shape_cast %12 : vector<96x8xf32> to vector<6x16x8xf32>
    %15 = vector.shape_cast %13 : vector<6x16x8xf32> to vector<6x1x16x8xf32>
    %16 = vector.shape_cast %14 : vector<6x16x8xf32> to vector<6x1x16x8xf32>
    %17 = tpu.concatenate %15, %16 in 1 : vector<6x1x16x8xf32>, vector<6x1x16x8xf32> -> vector<6x2x16x8xf32>
    %18 = vector.shape_cast %17 : vector<6x2x16x8xf32> to vector<12x16x8xf32>
    %c0_8 = arith.constant 0 : index
    %19 = arith.index_cast %1 : i32 to index
    %c0_9 = arith.constant 0 : index
    %c0_10 = arith.constant 0 : index
    %20 = vector.load %arg3[%c0_8, %19, %c0_9, %c0_10] : memref<1x32x16x8xf32, #tpu.memory_space<vmem>>, vector<1x12x16x8xf32>
    %21 = vector.shape_cast %20 : vector<1x12x16x8xf32> to vector<12x16x8xf32>
    %c0_11 = arith.constant 0 : index
    %c0_12 = arith.constant 0 : index
    %22 = vector.load %arg5[%c0_11, %c0_12] : memref<36x4xf32, #tpu.memory_space<vmem>>, vector<36x4xf32>
    %23 = vector.extract_strided_slice %18 {offsets = [0, 0, 0], sizes = [12, 15, 8], strides = [1, 1, 1]} : vector<12x16x8xf32> to vector<12x15x8xf32>
    %24 = vector.extract_strided_slice %18 {offsets = [0, 1, 0], sizes = [12, 15, 8], strides = [1, 1, 1]} : vector<12x16x8xf32> to vector<12x15x8xf32>
    %25 = vector.extract_strided_slice %24 {offsets = [0, 0, 0], sizes = [12, 15, 4], strides = [1, 1, 1]} : vector<12x15x8xf32> to vector<12x15x4xf32>
    %26 = tpu.concatenate %23, %25 in 2 : vector<12x15x8xf32>, vector<12x15x4xf32> -> vector<12x15x12xf32>
    %27 = vector.extract_strided_slice %23 {offsets = [0, 0, 4], sizes = [12, 15, 4], strides = [1, 1, 1]} : vector<12x15x8xf32> to vector<12x15x4xf32>
    %28 = tpu.concatenate %27, %24 in 2 : vector<12x15x4xf32>, vector<12x15x8xf32> -> vector<12x15x12xf32>
    %29 = vector.extract_strided_slice %26 {offsets = [0, 0, 0], sizes = [10, 15, 12], strides = [1, 1, 1]} : vector<12x15x12xf32> to vector<10x15x12xf32>
    %30 = vector.extract_strided_slice %26 {offsets = [1, 0, 0], sizes = [10, 15, 12], strides = [1, 1, 1]} : vector<12x15x12xf32> to vector<10x15x12xf32>
    %31 = vector.extract_strided_slice %26 {offsets = [2, 0, 0], sizes = [10, 15, 12], strides = [1, 1, 1]} : vector<12x15x12xf32> to vector<10x15x12xf32>
    %32 = tpu.concatenate %29, %30, %31 in 2 : vector<10x15x12xf32>, vector<10x15x12xf32>, vector<10x15x12xf32> -> vector<10x15x36xf32>
    %33 = vector.extract_strided_slice %28 {offsets = [0, 0, 0], sizes = [10, 15, 12], strides = [1, 1, 1]} : vector<12x15x12xf32> to vector<10x15x12xf32>
    %34 = vector.extract_strided_slice %28 {offsets = [1, 0, 0], sizes = [10, 15, 12], strides = [1, 1, 1]} : vector<12x15x12xf32> to vector<10x15x12xf32>
    %35 = vector.extract_strided_slice %28 {offsets = [2, 0, 0], sizes = [10, 15, 12], strides = [1, 1, 1]} : vector<12x15x12xf32> to vector<10x15x12xf32>
    %36 = tpu.concatenate %33, %34, %35 in 2 : vector<10x15x12xf32>, vector<10x15x12xf32>, vector<10x15x12xf32> -> vector<10x15x36xf32>
    %37 = vector.shape_cast %32 : vector<10x15x36xf32> to vector<150x36xf32>
    %cst_13 = arith.constant dense<0.000000e+00> : vector<150x4xf32>
    %38 = tpu.matmul %37, %22, %cst_13 {dimension_numbers = #tpu.dot_dimension_numbers<[1], [0], [0], [1], [0, 0, 1, 1], [], []>} : vector<150x36xf32>, vector<36x4xf32>, vector<150x4xf32> -> vector<150x4xf32>
    %39 = vector.shape_cast %36 : vector<10x15x36xf32> to vector<150x36xf32>
    %cst_14 = arith.constant dense<0.000000e+00> : vector<150x4xf32>
    %40 = tpu.matmul %39, %22, %cst_14 {dimension_numbers = #tpu.dot_dimension_numbers<[1], [0], [0], [1], [0, 0, 1, 1], [], []>} : vector<150x36xf32>, vector<36x4xf32>, vector<150x4xf32> -> vector<150x4xf32>
    %41 = vector.shape_cast %38 : vector<150x4xf32> to vector<10x15x4xf32>
    %42 = vector.shape_cast %40 : vector<150x4xf32> to vector<10x15x4xf32>
    %43 = tpu.concatenate %41, %42 in 2 : vector<10x15x4xf32>, vector<10x15x4xf32> -> vector<10x15x8xf32>
    %c0_15 = arith.constant 0 : index
    %c0_16 = arith.constant 0 : index
    %44 = vector.load %arg6[%c0_15, %c0_16] : memref<36x4xf32, #tpu.memory_space<vmem>>, vector<36x4xf32>
    %45 = vector.extract_strided_slice %21 {offsets = [0, 0, 0], sizes = [12, 15, 8], strides = [1, 1, 1]} : vector<12x16x8xf32> to vector<12x15x8xf32>
    %46 = vector.extract_strided_slice %21 {offsets = [0, 1, 0], sizes = [12, 15, 8], strides = [1, 1, 1]} : vector<12x16x8xf32> to vector<12x15x8xf32>
    %47 = vector.extract_strided_slice %46 {offsets = [0, 0, 0], sizes = [12, 15, 4], strides = [1, 1, 1]} : vector<12x15x8xf32> to vector<12x15x4xf32>
    %48 = tpu.concatenate %45, %47 in 2 : vector<12x15x8xf32>, vector<12x15x4xf32> -> vector<12x15x12xf32>
    %49 = vector.extract_strided_slice %45 {offsets = [0, 0, 4], sizes = [12, 15, 4], strides = [1, 1, 1]} : vector<12x15x8xf32> to vector<12x15x4xf32>
    %50 = tpu.concatenate %49, %46 in 2 : vector<12x15x4xf32>, vector<12x15x8xf32> -> vector<12x15x12xf32>
    %51 = vector.extract_strided_slice %48 {offsets = [0, 0, 0], sizes = [10, 15, 12], strides = [1, 1, 1]} : vector<12x15x12xf32> to vector<10x15x12xf32>
    %52 = vector.extract_strided_slice %48 {offsets = [1, 0, 0], sizes = [10, 15, 12], strides = [1, 1, 1]} : vector<12x15x12xf32> to vector<10x15x12xf32>
    %53 = vector.extract_strided_slice %48 {offsets = [2, 0, 0], sizes = [10, 15, 12], strides = [1, 1, 1]} : vector<12x15x12xf32> to vector<10x15x12xf32>
    %54 = tpu.concatenate %51, %52, %53 in 2 : vector<10x15x12xf32>, vector<10x15x12xf32>, vector<10x15x12xf32> -> vector<10x15x36xf32>
    %55 = vector.extract_strided_slice %50 {offsets = [0, 0, 0], sizes = [10, 15, 12], strides = [1, 1, 1]} : vector<12x15x12xf32> to vector<10x15x12xf32>
    %56 = vector.extract_strided_slice %50 {offsets = [1, 0, 0], sizes = [10, 15, 12], strides = [1, 1, 1]} : vector<12x15x12xf32> to vector<10x15x12xf32>
    %57 = vector.extract_strided_slice %50 {offsets = [2, 0, 0], sizes = [10, 15, 12], strides = [1, 1, 1]} : vector<12x15x12xf32> to vector<10x15x12xf32>
    %58 = tpu.concatenate %55, %56, %57 in 2 : vector<10x15x12xf32>, vector<10x15x12xf32>, vector<10x15x12xf32> -> vector<10x15x36xf32>
    %59 = vector.shape_cast %54 : vector<10x15x36xf32> to vector<150x36xf32>
    %cst_17 = arith.constant dense<0.000000e+00> : vector<150x4xf32>
    %60 = tpu.matmul %59, %44, %cst_17 {dimension_numbers = #tpu.dot_dimension_numbers<[1], [0], [0], [1], [0, 0, 1, 1], [], []>} : vector<150x36xf32>, vector<36x4xf32>, vector<150x4xf32> -> vector<150x4xf32>
    %61 = vector.shape_cast %58 : vector<10x15x36xf32> to vector<150x36xf32>
    %cst_18 = arith.constant dense<0.000000e+00> : vector<150x4xf32>
    %62 = tpu.matmul %61, %44, %cst_18 {dimension_numbers = #tpu.dot_dimension_numbers<[1], [0], [0], [1], [0, 0, 1, 1], [], []>} : vector<150x36xf32>, vector<36x4xf32>, vector<150x4xf32> -> vector<150x4xf32>
    %63 = vector.shape_cast %60 : vector<150x4xf32> to vector<10x15x4xf32>
    %64 = vector.shape_cast %62 : vector<150x4xf32> to vector<10x15x4xf32>
    %65 = tpu.concatenate %63, %64 in 2 : vector<10x15x4xf32>, vector<10x15x4xf32> -> vector<10x15x8xf32>
    %66 = arith.addf %43, %65 : vector<10x15x8xf32>
    %c0_19 = arith.constant 0 : index
    %c0_20 = arith.constant 0 : index
    %67 = vector.load %arg7[%c0_19, %c0_20] : memref<1x8xf32, #tpu.memory_space<vmem>>, vector<1x8xf32>
    %68 = vector.shape_cast %67 : vector<1x8xf32> to vector<1x1x8xf32>
    %69 = vector.broadcast %68 : vector<1x1x8xf32> to vector<10x15x8xf32>
    %70 = arith.addf %66, %69 : vector<10x15x8xf32>
    %cst_21 = arith.constant 0.000000e+00 : f32
    %71 = vector.broadcast %cst_21 : f32 to vector<10x15x8xf32>
    %72 = arith.maximumf %70, %71 : vector<10x15x8xf32>
    %c0_22 = arith.constant 0 : index
    %c0_23 = arith.constant 0 : index
    %c0_24 = arith.constant 0 : index
    %c0_25 = arith.constant 0 : index
    %73 = vector.load %arg8[%c0_22, %c0_23, %c0_24, %c0_25] : memref<1x10x15x8xf32, #tpu.memory_space<vmem>>, vector<1x10x15x8xf32>
    %74 = vector.shape_cast %73 : vector<1x10x15x8xf32> to vector<10x15x8xf32>
    %75 = vector.shape_cast %72 : vector<10x15x8xf32> to vector<1x10x15x8xf32>
    tpu.vector_store %arg8[%c0_22, %c0_23, %c0_24, %c0_25], %75 {strides = array<i32>} : memref<1x10x15x8xf32, #tpu.memory_space<vmem>>, vector<1x10x15x8xf32>,
    %76 = vector.shape_cast %72 : vector<10x15x8xf32> to vector<150x8xf32>
    %cst_26 = arith.constant dense<0.000000e+00> : vector<8xf32>
    %77 = vector.multi_reduction <add>, %76, %cst_26 [0] : vector<150x8xf32> to vector<8xf32>
    %78 = vector.shape_cast %77 : vector<8xf32> to vector<1x8xf32>
    %c0_27 = arith.constant 0 : index
    %c0_28 = arith.constant 0 : index
    %c0_29 = arith.constant 0 : index
    %c0_30 = arith.constant 0 : index
    %79 = vector.load %arg9[%c0_27, %c0_28, %c0_29, %c0_30] : memref<1x1x2x8xf32, #tpu.memory_space<vmem>>, vector<1x1x1x8xf32>
    %80 = vector.shape_cast %79 : vector<1x1x1x8xf32> to vector<1x8xf32>
    %81 = vector.shape_cast %78 : vector<1x8xf32> to vector<1x1x1x8xf32>
    tpu.vector_store %arg9[%c0_27, %c0_28, %c0_29, %c0_30], %81 {strides = array<i32>} : memref<1x1x2x8xf32, #tpu.memory_space<vmem>>, vector<1x1x1x8xf32>,
    %82 = arith.mulf %76, %76 : vector<150x8xf32>
    %cst_31 = arith.constant dense<0.000000e+00> : vector<8xf32>
    %83 = vector.multi_reduction <add>, %82, %cst_31 [0] : vector<150x8xf32> to vector<8xf32>
    %84 = vector.shape_cast %83 : vector<8xf32> to vector<1x8xf32>
    %c0_32 = arith.constant 0 : index
    %c0_33 = arith.constant 0 : index
    %c1_34 = arith.constant 1 : index
    %c0_35 = arith.constant 0 : index
    %85 = vector.load %arg9[%c0_32, %c0_33, %c1_34, %c0_35] : memref<1x1x2x8xf32, #tpu.memory_space<vmem>>, vector<1x1x1x8xf32>
    %86 = vector.shape_cast %85 : vector<1x1x1x8xf32> to vector<1x8xf32>
    %87 = vector.shape_cast %84 : vector<1x8xf32> to vector<1x1x1x8xf32>
    tpu.vector_store %arg9[%c0_32, %c0_33, %c1_34, %c0_35], %87 {strides = array<i32>} : memref<1x1x2x8xf32, #tpu.memory_space<vmem>>, vector<1x1x1x8xf32>,
    return
  }
  func.func @transform_0(%arg0: i32, %arg1: i32) -> (i32, i32, i32, i32) {
    %c0_i32 = arith.constant 0 : i32
    %c0_i32_0 = arith.constant 0 : i32
    %c0_i32_1 = arith.constant 0 : i32
    %c0_i32_2 = arith.constant 0 : i32
    return %arg0, %c0_i32, %c0_i32_0, %c0_i32_1 : i32, i32, i32, i32
  }
  func.func @transform_1(%arg0: i32, %arg1: i32) -> (i32, i32, i32, i32) {
    %c0_i32 = arith.constant 0 : i32
    %c0_i32_0 = arith.constant 0 : i32
    %c0_i32_1 = arith.constant 0 : i32
    %c0_i32_2 = arith.constant 0 : i32
    return %arg0, %c0_i32, %c0_i32_0, %c0_i32_1 : i32, i32, i32, i32
  }
  func.func @transform_2(%arg0: i32, %arg1: i32) -> (i32, i32, i32) {
    %c0_i32 = arith.constant 0 : i32
    %c0_i32_0 = arith.constant 0 : i32
    %c0_i32_1 = arith.constant 0 : i32
    %c0_i32_2 = arith.constant 0 : i32
    return %c0_i32, %c0_i32_0, %c0_i32_1 : i32, i32, i32
  }
  func.func @transform_3(%arg0: i32, %arg1: i32) -> (i32, i32) {
    %c0_i32 = arith.constant 0 : i32
    %c0_i32_0 = arith.constant 0 : i32
    %c0_i32_1 = arith.constant 0 : i32
    return %c0_i32, %c0_i32_0 : i32, i32
  }
  func.func @transform_4(%arg0: i32, %arg1: i32) -> (i32, i32) {
    %c0_i32 = arith.constant 0 : i32
    %c0_i32_0 = arith.constant 0 : i32
    %c0_i32_1 = arith.constant 0 : i32
    return %c0_i32, %c0_i32_0 : i32, i32
  }
  func.func @transform_5(%arg0: i32, %arg1: i32) -> (i32, i32) {
    %c0_i32 = arith.constant 0 : i32
    %c0_i32_0 = arith.constant 0 : i32
    %c0_i32_1 = arith.constant 0 : i32
    return %c0_i32, %c0_i32_0 : i32, i32
  }
  func.func @transform_6(%arg0: i32, %arg1: i32) -> (i32, i32, i32, i32) {
    %c0_i32 = arith.constant 0 : i32
    %c0_i32_0 = arith.constant 0 : i32
    %c0_i32_1 = arith.constant 0 : i32
    return %arg0, %arg1, %c0_i32, %c0_i32_0 : i32, i32, i32, i32
  }
  func.func @transform_7(%arg0: i32, %arg1: i32) -> (i32, i32, i32, i32) {
    %c0_i32 = arith.constant 0 : i32
    %c0_i32_0 = arith.constant 0 : i32
    %c0_i32_1 = arith.constant 0 : i32
    return %arg0, %arg1, %c0_i32, %c0_i32_0 : i32, i32, i32, i32
  }
}

module attributes {stable_mosaic.version = 11 : i64} {
  func.func @_conv_bn_kernel(%arg0: i32, %arg1: i32, %arg2: memref<1x30x15x8xf32, #tpu.memory_space<vmem>>, %arg3: memref<36x4xf32, #tpu.memory_space<vmem>>, %arg4: memref<1x8xf32, #tpu.memory_space<vmem>>, %arg5: memref<1x14x14x8xf32, #tpu.memory_space<vmem>>, %arg6: memref<1x1x2x8xf32, #tpu.memory_space<vmem>>) attributes {dimension_semantics = [#tpu.dimension_semantics<parallel>, #tpu.dimension_semantics<parallel>], iteration_bounds = array<i64: 2, 2>, scalar_prefetch = 0 : i64, scratch_operands = 0 : i64, tpu.core_type = #tpu.core_type<tc>, window_params = [{transform_indices = @transform_0, window_bounds = array<i64: 1, 30, 15, 8>}, {pipeline_mode = #tpu.pipeline_mode<synchronous>, transform_indices = @transform_1, window_bounds = array<i64: 36, 4>}, {pipeline_mode = #tpu.pipeline_mode<synchronous>, transform_indices = @transform_2, window_bounds = array<i64: 1, 8>}, {transform_indices = @transform_3, window_bounds = array<i64: 1, 14, 14, 8>}, {transform_indices = @transform_4, window_bounds = array<i64: 1, 1, 2, 8>}]} {
    %c14_i32 = arith.constant 14 : i32
    %0 = arith.muli %arg1, %c14_i32 : i32
    %c0 = arith.constant 0 : index
    %1 = arith.index_cast %0 : i32 to index
    %c0_0 = arith.constant 0 : index
    %c0_1 = arith.constant 0 : index
    %2 = vector.load %arg2[%c0, %1, %c0_0, %c0_1] : memref<1x30x15x8xf32, #tpu.memory_space<vmem>>, vector<1x16x15x8xf32>
    %3 = vector.shape_cast %2 : vector<1x16x15x8xf32> to vector<16x15x8xf32>
    %c0_2 = arith.constant 0 : index
    %c0_3 = arith.constant 0 : index
    %4 = vector.load %arg3[%c0_2, %c0_3] : memref<36x4xf32, #tpu.memory_space<vmem>>, vector<36x4xf32>
    %5 = vector.extract_strided_slice %3 {offsets = [0, 0, 0], sizes = [16, 14, 8], strides = [1, 1, 1]} : vector<16x15x8xf32> to vector<16x14x8xf32>
    %6 = vector.extract_strided_slice %3 {offsets = [0, 1, 0], sizes = [16, 14, 8], strides = [1, 1, 1]} : vector<16x15x8xf32> to vector<16x14x8xf32>
    %7 = vector.extract_strided_slice %6 {offsets = [0, 0, 0], sizes = [16, 14, 4], strides = [1, 1, 1]} : vector<16x14x8xf32> to vector<16x14x4xf32>
    %8 = tpu.concatenate %5, %7 in 2 : vector<16x14x8xf32>, vector<16x14x4xf32> -> vector<16x14x12xf32>
    %9 = vector.extract_strided_slice %5 {offsets = [0, 0, 4], sizes = [16, 14, 4], strides = [1, 1, 1]} : vector<16x14x8xf32> to vector<16x14x4xf32>
    %10 = tpu.concatenate %9, %6 in 2 : vector<16x14x4xf32>, vector<16x14x8xf32> -> vector<16x14x12xf32>
    %11 = vector.extract_strided_slice %8 {offsets = [0, 0, 0], sizes = [14, 14, 12], strides = [1, 1, 1]} : vector<16x14x12xf32> to vector<14x14x12xf32>
    %12 = vector.extract_strided_slice %8 {offsets = [1, 0, 0], sizes = [14, 14, 12], strides = [1, 1, 1]} : vector<16x14x12xf32> to vector<14x14x12xf32>
    %13 = vector.extract_strided_slice %8 {offsets = [2, 0, 0], sizes = [14, 14, 12], strides = [1, 1, 1]} : vector<16x14x12xf32> to vector<14x14x12xf32>
    %14 = tpu.concatenate %11, %12, %13 in 2 : vector<14x14x12xf32>, vector<14x14x12xf32>, vector<14x14x12xf32> -> vector<14x14x36xf32>
    %15 = vector.extract_strided_slice %10 {offsets = [0, 0, 0], sizes = [14, 14, 12], strides = [1, 1, 1]} : vector<16x14x12xf32> to vector<14x14x12xf32>
    %16 = vector.extract_strided_slice %10 {offsets = [1, 0, 0], sizes = [14, 14, 12], strides = [1, 1, 1]} : vector<16x14x12xf32> to vector<14x14x12xf32>
    %17 = vector.extract_strided_slice %10 {offsets = [2, 0, 0], sizes = [14, 14, 12], strides = [1, 1, 1]} : vector<16x14x12xf32> to vector<14x14x12xf32>
    %18 = tpu.concatenate %15, %16, %17 in 2 : vector<14x14x12xf32>, vector<14x14x12xf32>, vector<14x14x12xf32> -> vector<14x14x36xf32>
    %19 = vector.shape_cast %14 : vector<14x14x36xf32> to vector<196x36xf32>
    %cst = arith.constant dense<0.000000e+00> : vector<196x4xf32>
    %20 = tpu.matmul %19, %4, %cst {dimension_numbers = #tpu.dot_dimension_numbers<[1], [0], [0], [1], [0, 0, 1, 1], [], []>} : vector<196x36xf32>, vector<36x4xf32>, vector<196x4xf32> -> vector<196x4xf32>
    %21 = vector.shape_cast %18 : vector<14x14x36xf32> to vector<196x36xf32>
    %cst_4 = arith.constant dense<0.000000e+00> : vector<196x4xf32>
    %22 = tpu.matmul %21, %4, %cst_4 {dimension_numbers = #tpu.dot_dimension_numbers<[1], [0], [0], [1], [0, 0, 1, 1], [], []>} : vector<196x36xf32>, vector<36x4xf32>, vector<196x4xf32> -> vector<196x4xf32>
    %23 = vector.shape_cast %20 : vector<196x4xf32> to vector<14x14x4xf32>
    %24 = vector.shape_cast %22 : vector<196x4xf32> to vector<14x14x4xf32>
    %25 = tpu.concatenate %23, %24 in 2 : vector<14x14x4xf32>, vector<14x14x4xf32> -> vector<14x14x8xf32>
    %c0_5 = arith.constant 0 : index
    %c0_6 = arith.constant 0 : index
    %26 = vector.load %arg4[%c0_5, %c0_6] : memref<1x8xf32, #tpu.memory_space<vmem>>, vector<1x8xf32>
    %27 = vector.shape_cast %26 : vector<1x8xf32> to vector<1x1x8xf32>
    %28 = vector.broadcast %27 : vector<1x1x8xf32> to vector<14x14x8xf32>
    %29 = arith.addf %25, %28 : vector<14x14x8xf32>
    %cst_7 = arith.constant 0.000000e+00 : f32
    %30 = vector.broadcast %cst_7 : f32 to vector<14x14x8xf32>
    %31 = arith.maximumf %29, %30 : vector<14x14x8xf32>
    %c0_8 = arith.constant 0 : index
    %c0_9 = arith.constant 0 : index
    %c0_10 = arith.constant 0 : index
    %c0_11 = arith.constant 0 : index
    %32 = vector.load %arg5[%c0_8, %c0_9, %c0_10, %c0_11] : memref<1x14x14x8xf32, #tpu.memory_space<vmem>>, vector<1x14x14x8xf32>
    %33 = vector.shape_cast %32 : vector<1x14x14x8xf32> to vector<14x14x8xf32>
    %34 = vector.shape_cast %31 : vector<14x14x8xf32> to vector<1x14x14x8xf32>
    tpu.vector_store %arg5[%c0_8, %c0_9, %c0_10, %c0_11], %34 {strides = array<i32>} : memref<1x14x14x8xf32, #tpu.memory_space<vmem>>, vector<1x14x14x8xf32>,
    %35 = vector.shape_cast %31 : vector<14x14x8xf32> to vector<196x8xf32>
    %cst_12 = arith.constant dense<0.000000e+00> : vector<8xf32>
    %36 = vector.multi_reduction <add>, %35, %cst_12 [0] : vector<196x8xf32> to vector<8xf32>
    %37 = vector.shape_cast %36 : vector<8xf32> to vector<1x8xf32>
    %c0_13 = arith.constant 0 : index
    %c0_14 = arith.constant 0 : index
    %c0_15 = arith.constant 0 : index
    %c0_16 = arith.constant 0 : index
    %38 = vector.load %arg6[%c0_13, %c0_14, %c0_15, %c0_16] : memref<1x1x2x8xf32, #tpu.memory_space<vmem>>, vector<1x1x1x8xf32>
    %39 = vector.shape_cast %38 : vector<1x1x1x8xf32> to vector<1x8xf32>
    %40 = vector.shape_cast %37 : vector<1x8xf32> to vector<1x1x1x8xf32>
    tpu.vector_store %arg6[%c0_13, %c0_14, %c0_15, %c0_16], %40 {strides = array<i32>} : memref<1x1x2x8xf32, #tpu.memory_space<vmem>>, vector<1x1x1x8xf32>,
    %41 = arith.mulf %35, %35 : vector<196x8xf32>
    %cst_17 = arith.constant dense<0.000000e+00> : vector<8xf32>
    %42 = vector.multi_reduction <add>, %41, %cst_17 [0] : vector<196x8xf32> to vector<8xf32>
    %43 = vector.shape_cast %42 : vector<8xf32> to vector<1x8xf32>
    %c0_18 = arith.constant 0 : index
    %c0_19 = arith.constant 0 : index
    %c1 = arith.constant 1 : index
    %c0_20 = arith.constant 0 : index
    %44 = vector.load %arg6[%c0_18, %c0_19, %c1, %c0_20] : memref<1x1x2x8xf32, #tpu.memory_space<vmem>>, vector<1x1x1x8xf32>
    %45 = vector.shape_cast %44 : vector<1x1x1x8xf32> to vector<1x8xf32>
    %46 = vector.shape_cast %43 : vector<1x8xf32> to vector<1x1x1x8xf32>
    tpu.vector_store %arg6[%c0_18, %c0_19, %c1, %c0_20], %46 {strides = array<i32>} : memref<1x1x2x8xf32, #tpu.memory_space<vmem>>, vector<1x1x1x8xf32>,
    return
  }
  func.func @transform_0(%arg0: i32, %arg1: i32) -> (i32, i32, i32, i32) {
    %c0_i32 = arith.constant 0 : i32
    %c0_i32_0 = arith.constant 0 : i32
    %c0_i32_1 = arith.constant 0 : i32
    %c0_i32_2 = arith.constant 0 : i32
    return %arg0, %c0_i32, %c0_i32_0, %c0_i32_1 : i32, i32, i32, i32
  }
  func.func @transform_1(%arg0: i32, %arg1: i32) -> (i32, i32) {
    %c0_i32 = arith.constant 0 : i32
    %c0_i32_0 = arith.constant 0 : i32
    %c0_i32_1 = arith.constant 0 : i32
    return %c0_i32, %c0_i32_0 : i32, i32
  }
  func.func @transform_2(%arg0: i32, %arg1: i32) -> (i32, i32) {
    %c0_i32 = arith.constant 0 : i32
    %c0_i32_0 = arith.constant 0 : i32
    %c0_i32_1 = arith.constant 0 : i32
    return %c0_i32, %c0_i32_0 : i32, i32
  }
  func.func @transform_3(%arg0: i32, %arg1: i32) -> (i32, i32, i32, i32) {
    %c0_i32 = arith.constant 0 : i32
    %c0_i32_0 = arith.constant 0 : i32
    %c0_i32_1 = arith.constant 0 : i32
    return %arg0, %arg1, %c0_i32, %c0_i32_0 : i32, i32, i32, i32
  }
  func.func @transform_4(%arg0: i32, %arg1: i32) -> (i32, i32, i32, i32) {
    %c0_i32 = arith.constant 0 : i32
    %c0_i32_0 = arith.constant 0 : i32
    %c0_i32_1 = arith.constant 0 : i32
    return %arg0, %arg1, %c0_i32, %c0_i32_0 : i32, i32, i32, i32
  }
}

</mosaic_0001>

<llo_original>
// kernel: tile.23
$region0: #{tile.23}
  #allocation0 [shape = 's32[1]{0}', space=sflag, size = 0x4, scoped, tag = 'scoped memory for tile.23']
  %s0 = inlined_call_operand.vmem [shape: f32[4], index: 0, kind: input, shape index: {}]
  %s1 = inlined_call_operand.vmem [shape: f32[2,4], index: 1, kind: output, shape index: {}]
  // Predicated region
  $region2: #{tile.23} parent=0 // pred_check
    _
  $region3: #{tile.23} parent=0 // pred_check_branch
    %3 = sbr.rel (0) target = $region5
  $region4: #{tile.23} parent=0 // pred_region
    _
  $region5: #{tile.23} parent=0 // pred_fallthru
    _
  %v4 = vld [vmem:[%s0] ss:$0 sm:$0xff]
  %5 = vst [vmem:[%s1] sm:$0x3] %v4

// kernel: tile.24
$region0: #{tile.24}
  %s0 = inlined_call_operand.vmem [shape: f32[2,4], index: 0, kind: input, shape index: {}]
  %s1 = inlined_call_operand.vmem [shape: f32[1,8], index: 1, kind: output, shape index: {}]
  $region1: #{tile.24} parent=0
    #allocation0 [shape = 'u8[4096]{0}', space=vmem, size = 0x1000, scoped, tag = 'scoped mem for output reshape']
    #allocation1 [shape = 'u8[4096]{0}', space=vmem, size = 0x1000, scoped, tag = 'scoped mem for input reshape']
    %s3 = ssub.s32 4, 1
    %v4 = vld [vmem:[%s0] sm:%s3]
    %5 = vst [vmem:[#allocation1] sm:%s3] %v4
    %v6 = vld [vmem:[#allocation1] sm:$0x1]
    %vm7 = vcmask 31744
    %8 = vst.msk [vmem:[#allocation0] sm:$0x1] %vm7, %v6
    %s9 = scalar_lea.vmem [#allocation1], 1
    %v10 = vld [vmem:[%s9] sm:$0x1]
    %11 = vrot.lane.b32.xlu0 %v10, 4
    %v12 = vpop.permute.xlu0 %11
    %vm13 = vcmask 64544
    %14 = vst.msk [vmem:[#allocation0] sm:$0x1] %vm13, %v12
    %s16 = ssub.s32 2, 1
    %v17 = vld [vmem:[#allocation0] sm:%s16]
    %s19 = ssub.s32 2, 1
    %20 = vst [vmem:[%s1] sm:%s19] %v17

// kernel: up_step_forward.3
$region0: #{up_step_forward.3}
  #allocation0 [shape = 'u32[]', space=smem, size = 0x4, offset = 0x4, fixed_abs, tag = 'smem constant byte address 0x4 - core index']
  #allocation1 [shape = 'u32[72,128]{1,0:T(1,128)}', space=vmem, size = 0x9000, scoped, tag = 'internal scratch']
  %s0 = inlined_call_operand.vmem [shape: f32[2,30,15,8], index: 0, kind: input, shape index: {}]
  %s1 = inlined_call_operand.vmem [shape: f32[36,4], index: 1, kind: input, shape index: {}]
  %s2 = inlined_call_operand.vmem [shape: f32[1,8], index: 2, kind: input, shape index: {}]
  %s3 = inlined_call_operand.vmem [shape: f32[2,28,14,8], index: 3, kind: output, shape index: {0}]
  %s4 = inlined_call_operand.vmem [shape: f32[2,2,2,8], index: 4, kind: output, shape index: {1}]
  %5 = xla_tuple %s3, %s4
  %s6 = sld [smem:[#allocation0]]
  $region53: #{up_step_forward.3} parent=0
    _
  %s8 = ssub.s32 1, %s6
  %s9 = scalar_select 0, %s8, %s6
  loop: start=0, step=1, limit=6
  $region2: #{up_step_forward.3} parent=0 // loop_pre_header
    _
  $region3: #{up_step_forward.3} parent=0 // loop_header
    %s11 = sphi 0, %s15
    %p12 = scmp.ge.s32.totalorder %s11, 6
    %s18 = sphi 0, %s30
    %s19 = sphi 0, %s26
    %s20 = sphi 0, %s18
    %s21 = sphi 0, %s19
    %s22 = sphi 0, %s20
    %s23 = sphi 0, %s21
    %s33 = sphi 0, %s35
    %s36 = sphi 0, %s33
    %s37 = sphi 0, %s36
    %s53 = sphi 0, %s37
    %s57 = sphi 0, %s57
    %s59 = sphi 0, %s57
    %s60 = sphi 0, %s59
    %s74 = sphi 0, %s60
    %s78 = sphi 0, %s78
    %s80 = sphi 0, %s78
    %s81 = sphi 0, %s80
    %s95 = sphi 0, %s81
    %s103 = sphi 0, %s105
    %s106 = sphi 0, %s103
    %s107 = sphi 0, %s106
    %s123 = sphi 0, %s107
    %s131 = sphi 0, %s133
    %s134 = sphi 0, %s131
    %s135 = sphi 0, %s134
    %s151 = sphi 0, %s135
  $region4: #{up_step_forward.3} parent=0 // loop_header_branch
    %14 = sbr.rel (%p12) target = $region8
  $region5: #{up_step_forward.3} parent=0 // loop_body
    %s16 = ssub.s32 %s11, 1
    %s17 = ssub.s32 %s11, 2
    %s24 = sadd.s32 1, %s19
    %p25 = scmp.ge.s32.totalorder %s24, 2
    %s26 = scalar_select %p25, 0, %s24
    %s27 = sadd.s32 1, %s18
    %s28 = scalar_select %p25, %s27, %s18
    %p29 = scmp.ge.s32.totalorder %s28, 2
    %s30 = scalar_select %p29, 0, %s28
    %s31 = ssub.s32 %s18, %s30
    %p32 = scmp.eq.s32.totalorder %s31, 0
    %s34 = sadd.s32 %s33, 1
    %s35 = scalar_select %p32, %s33, %s34
    %p38 = pneg %p32
    %p39 = scmp.eq.s32.totalorder %s11, 3
    %p40 = por %p38, %p39
    %p41 = scmp.ne.s32.totalorder %s33, %s36
    %p42 = scmp.eq.s32.totalorder %s11, 0
    %p43 = por %p41, %p42
    %p44 = scmp.ne.s32.totalorder %s33, %s36
    %p45 = scmp.eq.s32.totalorder %s16, 3
    %p46 = por %p44, %p45
    %p47 = scmp.ne.s32.totalorder %s36, %s37
    %p48 = scmp.eq.s32.totalorder %s16, 0
    %p49 = por %p47, %p48
    %p50 = scmp.ne.s32.totalorder %s36, %s37
    %p51 = scmp.eq.s32.totalorder %s17, 3
    %p52 = por %p50, %p51
    %p54 = scmp.ne.s32.totalorder %s37, %s53
    %p55 = scmp.eq.s32.totalorder %s17, 0
    %p56 = por %p54, %p55
    %s58 = sadd.s32 %s57, 1
    %p61 = scmp.eq.s32.totalorder %s11, 3
    %p62 = scmp.ne.s32.totalorder %s57, %s59
    %p63 = scmp.eq.s32.totalorder %s11, 0
    %p64 = por %p62, %p63
    %p65 = scmp.ne.s32.totalorder %s57, %s59
    %p66 = scmp.eq.s32.totalorder %s16, 3
    %p67 = por %p65, %p66
    %p68 = scmp.ne.s32.totalorder %s59, %s60
    %p69 = scmp.eq.s32.totalorder %s16, 0
    %p70 = por %p68, %p69
    %p71 = scmp.ne.s32.totalorder %s59, %s60
    %p72 = scmp.eq.s32.totalorder %s17, 3
    %p73 = por %p71, %p72
    %p75 = scmp.ne.s32.totalorder %s60, %s74
    %p76 = scmp.eq.s32.totalorder %s17, 0
    %p77 = por %p75, %p76
    %s79 = sadd.s32 %s78, 1
    %p82 = scmp.eq.s32.totalorder %s11, 3
    %p83 = scmp.ne.s32.totalorder %s78, %s80
    %p84 = scmp.eq.s32.totalorder %s11, 0
    %p85 = por %p83, %p84
    %p86 = scmp.ne.s32.totalorder %s78, %s80
    %p87 = scmp.eq.s32.totalorder %s16, 3
    %p88 = por %p86, %p87
    %p89 = scmp.ne.s32.totalorder %s80, %s81
    %p90 = scmp.eq.s32.totalorder %s16, 0
    %p91 = por %p89, %p90
    %p92 = scmp.ne.s32.totalorder %s80, %s81
    %p93 = scmp.eq.s32.totalorder %s17, 3
    %p94 = por %p92, %p93
    %p96 = scmp.ne.s32.totalorder %s81, %s95
    %p97 = scmp.eq.s32.totalorder %s17, 0
    %p98 = por %p96, %p97
    %s99 = ssub.s32 %s18, %s30
    %s100 = ssub.s32 %s19, %s26
    %s101 = sor.u32 %s99, %s100
    %p102 = scmp.eq.s32.totalorder %s101, 0
    %s104 = sadd.s32 %s103, 1
    %s105 = scalar_select %p102, %s103, %s104
    %p108 = pneg %p102
    %p109 = scmp.eq.s32.totalorder %s11, 3
    %p110 = por %p108, %p109
    %p111 = scmp.ne.s32.totalorder %s103, %s106
    %p112 = scmp.eq.s32.totalorder %s11, 0
    %p113 = por %p111, %p112
    %p114 = scmp.ne.s32.totalorder %s103, %s106
    %p115 = scmp.eq.s32.totalorder %s16, 3
    %p116 = por %p114, %p115
    %p117 = scmp.ne.s32.totalorder %s106, %s107
    %p118 = scmp.eq.s32.totalorder %s16, 0
    %p119 = por %p117, %p118
    %p120 = scmp.ne.s32.totalorder %s106, %s107
    %p121 = scmp.eq.s32.totalorder %s17, 3
    %p122 = por %p120, %p121
    %p124 = scmp.ne.s32.totalorder %s107, %s123
    %p125 = scmp.eq.s32.totalorder %s17, 0
    %p126 = por %p124, %p125
    %s127 = ssub.s32 %s18, %s30
    %s128 = ssub.s32 %s19, %s26
    %s129 = sor.u32 %s127, %s128
    %p130 = scmp.eq.s32.totalorder %s129, 0
    %s132 = sadd.s32 %s131, 1
    %s133 = scalar_select %p130, %s131, %s132
    %p136 = pneg %p130
    %p137 = scmp.eq.s32.totalorder %s11, 3
    %p138 = por %p136, %p137
    %p139 = scmp.ne.s32.totalorder %s131, %s134
    %p140 = scmp.eq.s32.totalorder %s11, 0
    %p141 = por %p139, %p140
    %p142 = scmp.ne.s32.totalorder %s131, %s134
    %p143 = scmp.eq.s32.totalorder %s16, 3
    %p144 = por %p142, %p143
    %p145 = scmp.ne.s32.totalorder %s134, %s135
    %p146 = scmp.eq.s32.totalorder %s16, 0
    %p147 = por %p145, %p146
    %p148 = scmp.ne.s32.totalorder %s134, %s135
    %p149 = scmp.eq.s32.totalorder %s17, 3
    %p150 = por %p148, %p149
    %p152 = scmp.ne.s32.totalorder %s135, %s151
    %p153 = scmp.eq.s32.totalorder %s17, 0
    %p154 = por %p152, %p153
    %p155 = scmp.le.s32.totalorder 1, %s11
    %p156 = scmp.lt.s32.totalorder %s11, 5
    %p157 = pnand %p155, %p156
    %p158 = pneg %p157
    // Predicated region
    $region9: #{up_step_forward.3} parent=5 // pred_check
      _
    $region10: #{up_step_forward.3} parent=5 // pred_check_branch
      %160 = sbr.rel (%p157) target = $region12
    $region11: #{up_step_forward.3} parent=5 // pred_region
      %s161 = ssub.s32 %s11, 1
      // Predicated region
      $region13: #{up_step_forward.3} parent=11 // pred_check
        %p162 = pneg %p70
      $region14: #{up_step_forward.3} parent=11 // pred_check_branch
        %164 = sbr.rel (%p162) target = $region16
      $region15: #{up_step_forward.3} parent=11 // pred_region
        _
      $region16: #{up_step_forward.3} parent=11 // pred_fallthru
        _
      // Predicated region
      $region17: #{up_step_forward.3} parent=11 // pred_check
        %p165 = pneg %p91
      $region18: #{up_step_forward.3} parent=11 // pred_check_branch
        %167 = sbr.rel (%p165) target = $region20
      $region19: #{up_step_forward.3} parent=11 // pred_region
        _
      $region20: #{up_step_forward.3} parent=11 // pred_fallthru
        _
    $region12: #{up_step_forward.3} parent=5 // pred_fallthru
      _
    %p168 = scmp.lt.s32.totalorder %s11, 4
    // Predicated region
    $region21: #{up_step_forward.3} parent=5 // pred_check
      %p169 = pneg %p168
    $region22: #{up_step_forward.3} parent=5 // pred_check_branch
      %171 = sbr.rel (%p169) target = $region24
    $region23: #{up_step_forward.3} parent=5 // pred_region
      // Predicated region
      $region25: #{up_step_forward.3} parent=23 // pred_check
        %p172 = pneg %p43
      $region26: #{up_step_forward.3} parent=23 // pred_check_branch
        %174 = sbr.rel (%p172) target = $region28
      $region27: #{up_step_forward.3} parent=23 // pred_region
        %p175 = scmp.lt.s32.totalorder %s18, 1
        %s176 = scalar_select %p175, %s18, 1
        %s177 = smul.addr %s176, 60
        %s178 = smul.addr %s177, 8
        %s179 = scalar_lea.vmem %s0, %s178
      $region28: #{up_step_forward.3} parent=23 // pred_fallthru
        _
    $region24: #{up_step_forward.3} parent=5 // pred_fallthru
      _
    %p180 = scmp.le.s32.totalorder 1, %s11
    %p181 = scmp.lt.s32.totalorder %s11, 5
    %p182 = pnand %p180, %p181
    %p183 = pneg %p182
    // Predicated region
    $region29: #{up_step_forward.3} parent=5 // pred_check
      _
    $region30: #{up_step_forward.3} parent=5 // pred_check_branch
      %185 = sbr.rel (%p182) target = $region32
    $region31: #{up_step_forward.3} parent=5 // pred_region
      %s186 = ssub.s32 %s11, 1
      %p187 = scmp.lt.s32.totalorder %s20, 1
      %s188 = scalar_select %p187, %s20, 1
      %s189 = smul.addr %s188, 60
      %s190 = smul.addr %s189, 8
      %s191 = scalar_lea.vmem %s0, %s190
      %p192 = pneg %p49
      %p193 = pneg %p46
      %p194 = pneg %p70
      %p195 = pneg %p67
      %p196 = pneg %p91
      %p197 = pneg %p88
      %p198 = pneg %p119
      %p199 = pneg %p116
      %s200 = smul.u32 14, %s21
      %p201 = scmp.lt.s32.totalorder %s20, 1
      %s202 = scalar_select %p201, %s20, 1
      %p203 = scmp.lt.s32.totalorder %s200, 27
      %s204 = scalar_select %p203, %s200, 27
      %s205 = smul.addr %s204, 2
      %s206 = smul.addr %s202, 56
      %s207 = sadd.s32 %s205, %s206
      %s208 = smul.addr %s207, 8
      %s209 = scalar_lea.vmem %s3, %s208
      %p210 = pneg %p147
      %p211 = pneg %p144
      %p212 = scmp.lt.s32.totalorder %s20, 1
      %s213 = scalar_select %p212, %s20, 1
      %p214 = scmp.lt.s32.totalorder %s21, 1
      %s215 = scalar_select %p214, %s21, 1
      %s216 = smul.addr %s213, 2
      %s217 = sadd.s32 %s215, %s216
      %s218 = smul.addr %s217, 2
      %s219 = scalar_lea.vmem %s4, %s218
      %p220 = scmp.lt.s32.totalorder %s20, 1
      %s221 = scalar_select %p220, %s20, 1
      %s222 = smul.addr %s221, 60
      %s223 = smul.addr %s222, 8
      %s224 = scalar_lea.vmem %s0, %s223
      %s225 = smul.u32 14, %s21
      %p226 = scmp.lt.s32.totalorder %s20, 1
      %s227 = scalar_select %p226, %s20, 1
      %p228 = scmp.lt.s32.totalorder %s225, 27
      %s229 = scalar_select %p228, %s225, 27
      %s230 = smul.addr %s229, 2
      %s231 = smul.addr %s227, 56
      %s232 = sadd.s32 %s230, %s231
      %s233 = smul.addr %s232, 8
      %s234 = scalar_lea.vmem %s3, %s233
      %s235 = smul.u32 14, %s21
      %p236 = scmp.lt.s32.totalorder %s20, 1
      %s237 = scalar_select %p236, %s20, 1
      %p238 = scmp.lt.s32.totalorder %s21, 1
      %s239 = scalar_select %p238, %s21, 1
      %s240 = smul.addr %s237, 2
      %s241 = sadd.s32 %s239, %s240
      %s242 = smul.addr %s241, 2
      %s243 = scalar_lea.vmem %s4, %s242
      %s244 = smul.u32 %s21, 14
      %s245 = smul.u32 %s244, 16
      %s246 = scalar_lea.vmem %s224, %s245
      %v247 = vld [vmem:[%s246] sm:$0xff]
      %v248 = vld [vmem:[%s246 + $0x8] sm:$0x7f]
      %v249 = vld [vmem:[%s246 + $0x10] sm:$0xff]
      %v250 = vld [vmem:[%s246 + $0x18] sm:$0x7f]
      %v251 = vld [vmem:[%s246 + $0x20] sm:$0xff]
      %v252 = vld [vmem:[%s246 + $0x28] sm:$0x7f]
      %v253 = vld [vmem:[%s246 + $0x30] sm:$0xff]
      %v254 = vld [vmem:[%s246 + $0x38] sm:$0x7f]
      %v255 = vld [vmem:[%s246 + $0x40] sm:$0xff]
      %v256 = vld [vmem:[%s246 + $0x48] sm:$0x7f]
      %v257 = vld [vmem:[%s246 + $0x50] sm:$0xff]
      %v258 = vld [vmem:[%s246 + $0x58] sm:$0x7f]
      %v259 = vld [vmem:[%s246 + $0x60] sm:$0xff]
      %v260 = vld [vmem:[%s246 + $0x68] sm:$0x7f]
      %v261 = vld [vmem:[%s246 + $0x70] sm:$0xff]
      %v262 = vld [vmem:[%s246 + $0x78] sm:$0x7f]
      %v263 = vld [vmem:[%s246 + $0x80] sm:$0xff]
      %v264 = vld [vmem:[%s246 + $0x88] sm:$0x7f]
      %v265 = vld [vmem:[%s246 + $0x90] sm:$0xff]
      %v266 = vld [vmem:[%s246 + $0x98] sm:$0x7f]
      %v267 = vld [vmem:[%s246 + $0xa0] sm:$0xff]
      %v268 = vld [vmem:[%s246 + $0xa8] sm:$0x7f]
      %v269 = vld [vmem:[%s246 + $0xb0] sm:$0xff]
      %v270 = vld [vmem:[%s246 + $0xb8] sm:$0x7f]
      %v271 = vld [vmem:[%s246 + $0xc0] sm:$0xff]
      %v272 = vld [vmem:[%s246 + $0xc8] sm:$0x7f]
      %v273 = vld [vmem:[%s246 + $0xd0] sm:$0xff]
      %v274 = vld [vmem:[%s246 + $0xd8] sm:$0x7f]
      %v275 = vld [vmem:[%s246 + $0xe0] sm:$0xff]
      %v276 = vld [vmem:[%s246 + $0xe8] sm:$0x7f]
      %v277 = vld [vmem:[%s246 + $0xf0] sm:$0xff]
      %v278 = vld [vmem:[%s246 + $0xf8] sm:$0x7f]
      %v279 = vld [vmem:[%s1] sm:$0xff]
      %v280 = vld [vmem:[%s1 + $0x8] sm:$0xff]
      %v281 = vld [vmem:[%s1 + $0x10] sm:$0xff]
      %v282 = vld [vmem:[%s1 + $0x18] sm:$0xff]
      %v283 = vld [vmem:[%s1 + $0x20] sm:$0xf]
      %vm316 = vcmask 1046528
      %v317 = vrot.slane %v247, 1
      %v318 = vrot.slane %v248, 1
      %v319 = vsel %vm316, %v317, %v318
      %v320 = vrot.slane %v249, 1
      %v321 = vrot.slane %v250, 1
      %v322 = vsel %vm316, %v320, %v321
      %v323 = vrot.slane %v251, 1
      %v324 = vrot.slane %v252, 1
      %v325 = vsel %vm316, %v323, %v324
      %v326 = vrot.slane %v253, 1
      %v327 = vrot.slane %v254, 1
      %v328 = vsel %vm316, %v326, %v327
      %v329 = vrot.slane %v255, 1
      %v330 = vrot.slane %v256, 1
      %v331 = vsel %vm316, %v329, %v330
      %v332 = vrot.slane %v257, 1
      %v333 = vrot.slane %v258, 1
      %v334 = vsel %vm316, %v332, %v333
      %v335 = vrot.slane %v259, 1
      %v336 = vrot.slane %v260, 1
      %v337 = vsel %vm316, %v335, %v336
      %v338 = vrot.slane %v261, 1
      %v339 = vrot.slane %v262, 1
      %v340 = vsel %vm316, %v338, %v339
      %v341 = vrot.slane %v263, 1
      %v342 = vrot.slane %v264, 1
      %v343 = vsel %vm316, %v341, %v342
      %v344 = vrot.slane %v265, 1
      %v345 = vrot.slane %v266, 1
      %v346 = vsel %vm316, %v344, %v345
      %v347 = vrot.slane %v267, 1
      %v348 = vrot.slane %v268, 1
      %v349 = vsel %vm316, %v347, %v348
      %v350 = vrot.slane %v269, 1
      %v351 = vrot.slane %v270, 1
      %v352 = vsel %vm316, %v350, %v351
      %v353 = vrot.slane %v271, 1
      %v354 = vrot.slane %v272, 1
      %v355 = vsel %vm316, %v353, %v354
      %v356 = vrot.slane %v273, 1
      %v357 = vrot.slane %v274, 1
      %v358 = vsel %vm316, %v356, %v357
      %v359 = vrot.slane %v275, 1
      %v360 = vrot.slane %v276, 1
      %v361 = vsel %vm316, %v359, %v360
      %v362 = vrot.slane %v277, 1
      %v363 = vrot.slane %v278, 1
      %v364 = vsel %vm316, %v362, %v363
      %365 = vrot.lane.b32.xlu0 %v319, 8
      %v366 = vpop.permute.xlu0 %365
      %367 = vrot.lane.b32.xlu0 %v318, 8
      %v368 = vpop.permute.xlu0 %367
      %369 = vrot.lane.b32.xlu0 %v322, 8
      %v370 = vpop.permute.xlu0 %369
      %371 = vrot.lane.b32.xlu0 %v321, 8
      %v372 = vpop.permute.xlu0 %371
      %373 = vrot.lane.b32.xlu0 %v325, 8
      %v374 = vpop.permute.xlu0 %373
      %375 = vrot.lane.b32.xlu0 %v324, 8
      %v376 = vpop.permute.xlu0 %375
      %377 = vrot.lane.b32.xlu0 %v328, 8
      %v378 = vpop.permute.xlu0 %377
      %379 = vrot.lane.b32.xlu0 %v327, 8
      %v380 = vpop.permute.xlu0 %379
      %381 = vrot.lane.b32.xlu0 %v331, 8
      %v382 = vpop.permute.xlu0 %381
      %383 = vrot.lane.b32.xlu0 %v330, 8
      %v384 = vpop.permute.xlu0 %383
      %385 = vrot.lane.b32.xlu0 %v334, 8
      %v386 = vpop.permute.xlu0 %385
      %387 = vrot.lane.b32.xlu0 %v333, 8
      %v388 = vpop.permute.xlu0 %387
      %389 = vrot.lane.b32.xlu0 %v337, 8
      %v390 = vpop.permute.xlu0 %389
      %391 = vrot.lane.b32.xlu0 %v336, 8
      %v392 = vpop.permute.xlu0 %391
      %393 = vrot.lane.b32.xlu0 %v340, 8
      %v394 = vpop.permute.xlu0 %393
      %395 = vrot.lane.b32.xlu0 %v339, 8
      %v396 = vpop.permute.xlu0 %395
      %397 = vrot.lane.b32.xlu0 %v343, 8
      %v398 = vpop.permute.xlu0 %397
      %399 = vrot.lane.b32.xlu0 %v342, 8
      %v400 = vpop.permute.xlu0 %399
      %401 = vrot.lane.b32.xlu0 %v346, 8
      %v402 = vpop.permute.xlu0 %401
      %403 = vrot.lane.b32.xlu0 %v345, 8
      %v404 = vpop.permute.xlu0 %403
      %405 = vrot.lane.b32.xlu0 %v349, 8
      %v406 = vpop.permute.xlu0 %405
      %407 = vrot.lane.b32.xlu0 %v348, 8
      %v408 = vpop.permute.xlu0 %407
      %409 = vrot.lane.b32.xlu0 %v352, 8
      %v410 = vpop.permute.xlu0 %409
      %411 = vrot.lane.b32.xlu0 %v351, 8
      %v412 = vpop.permute.xlu0 %411
      %413 = vrot.lane.b32.xlu0 %v355, 8
      %v414 = vpop.permute.xlu0 %413
      %415 = vrot.lane.b32.xlu0 %v354, 8
      %v416 = vpop.permute.xlu0 %415
      %417 = vrot.lane.b32.xlu0 %v358, 8
      %v418 = vpop.permute.xlu0 %417
      %419 = vrot.lane.b32.xlu0 %v357, 8
      %v420 = vpop.permute.xlu0 %419
      %421 = vrot.lane.b32.xlu0 %v361, 8
      %v422 = vpop.permute.xlu0 %421
      %423 = vrot.lane.b32.xlu0 %v360, 8
      %v424 = vpop.permute.xlu0 %423
      %425 = vrot.lane.b32.xlu0 %v364, 8
      %v426 = vpop.permute.xlu0 %425
      %427 = vrot.lane.b32.xlu0 %v363, 8
      %v428 = vpop.permute.xlu0 %427
      %vm461 = vcmask 64512
      %v462 = vsel %vm461, %v247, %v366
      %v463 = vsel %vm461, %v248, %v368
      %v464 = vsel %vm461, %v249, %v370
      %v465 = vsel %vm461, %v250, %v372
      %v466 = vsel %vm461, %v251, %v374
      %v467 = vsel %vm461, %v252, %v376
      %v468 = vsel %vm461, %v253, %v378
      %v469 = vsel %vm461, %v254, %v380
      %v470 = vsel %vm461, %v255, %v382
      %v471 = vsel %vm461, %v256, %v384
      %v472 = vsel %vm461, %v257, %v386
      %v473 = vsel %vm461, %v258, %v388
      %v474 = vsel %vm461, %v259, %v390
      %v475 = vsel %vm461, %v260, %v392
      %v476 = vsel %vm461, %v261, %v394
      %v477 = vsel %vm461, %v262, %v396
      %v478 = vsel %vm461, %v263, %v398
      %v479 = vsel %vm461, %v264, %v400
      %v480 = vsel %vm461, %v265, %v402
      %v481 = vsel %vm461, %v266, %v404
      %v482 = vsel %vm461, %v267, %v406
      %v483 = vsel %vm461, %v268, %v408
      %v484 = vsel %vm461, %v269, %v410
      %v485 = vsel %vm461, %v270, %v412
      %v486 = vsel %vm461, %v271, %v414
      %v487 = vsel %vm461, %v272, %v416
      %v488 = vsel %vm461, %v273, %v418
      %v489 = vsel %vm461, %v274, %v420
      %v490 = vsel %vm461, %v275, %v422
      %v491 = vsel %vm461, %v276, %v424
      %v492 = vsel %vm461, %v277, %v426
      %v493 = vsel %vm461, %v278, %v428
      %494 = vrot.lane.b32.xlu0 %v247, 124
      %v495 = vpop.permute.xlu0 %494
      %496 = vrot.lane.b32.xlu0 %v248, 124
      %v497 = vpop.permute.xlu0 %496
      %498 = vrot.lane.b32.xlu0 %v249, 124
      %v499 = vpop.permute.xlu0 %498
      %500 = vrot.lane.b32.xlu0 %v250, 124
      %v501 = vpop.permute.xlu0 %500
      %502 = vrot.lane.b32.xlu0 %v251, 124
      %v503 = vpop.permute.xlu0 %502
      %504 = vrot.lane.b32.xlu0 %v252, 124
      %v505 = vpop.permute.xlu0 %504
      %506 = vrot.lane.b32.xlu0 %v253, 124
      %v507 = vpop.permute.xlu0 %506
      %508 = vrot.lane.b32.xlu0 %v254, 124
      %v509 = vpop.permute.xlu0 %508
      %510 = vrot.lane.b32.xlu0 %v255, 124
      %v511 = vpop.permute.xlu0 %510
      %512 = vrot.lane.b32.xlu0 %v256, 124
      %v513 = vpop.permute.xlu0 %512
      %514 = vrot.lane.b32.xlu0 %v257, 124
      %v515 = vpop.permute.xlu0 %514
      %516 = vrot.lane.b32.xlu0 %v258, 124
      %v517 = vpop.permute.xlu0 %516
      %518 = vrot.lane.b32.xlu0 %v259, 124
      %v519 = vpop.permute.xlu0 %518
      %520 = vrot.lane.b32.xlu0 %v260, 124
      %v521 = vpop.permute.xlu0 %520
      %522 = vrot.lane.b32.xlu0 %v261, 124
      %v523 = vpop.permute.xlu0 %522
      %524 = vrot.lane.b32.xlu0 %v262, 124
      %v525 = vpop.permute.xlu0 %524
      %526 = vrot.lane.b32.xlu0 %v263, 124
      %v527 = vpop.permute.xlu0 %526
      %528 = vrot.lane.b32.xlu0 %v264, 124
      %v529 = vpop.permute.xlu0 %528
      %530 = vrot.lane.b32.xlu0 %v265, 124
      %v531 = vpop.permute.xlu0 %530
      %532 = vrot.lane.b32.xlu0 %v266, 124
      %v533 = vpop.permute.xlu0 %532
      %534 = vrot.lane.b32.xlu0 %v267, 124
      %v535 = vpop.permute.xlu0 %534
      %536 = vrot.lane.b32.xlu0 %v268, 124
      %v537 = vpop.permute.xlu0 %536
      %538 = vrot.lane.b32.xlu0 %v269, 124
      %v539 = vpop.permute.xlu0 %538
      %540 = vrot.lane.b32.xlu0 %v270, 124
      %v541 = vpop.permute.xlu0 %540
      %542 = vrot.lane.b32.xlu0 %v271, 124
      %v543 = vpop.permute.xlu0 %542
      %544 = vrot.lane.b32.xlu0 %v272, 124
      %v545 = vpop.permute.xlu0 %544
      %546 = vrot.lane.b32.xlu0 %v273, 124
      %v547 = vpop.permute.xlu0 %546
      %548 = vrot.lane.b32.xlu0 %v274, 124
      %v549 = vpop.permute.xlu0 %548
      %550 = vrot.lane.b32.xlu0 %v275, 124
      %v551 = vpop.permute.xlu0 %550
      %552 = vrot.lane.b32.xlu0 %v276, 124
      %v553 = vpop.permute.xlu0 %552
      %554 = vrot.lane.b32.xlu0 %v277, 124
      %v555 = vpop.permute.xlu0 %554
      %556 = vrot.lane.b32.xlu0 %v278, 124
      %v557 = vpop.permute.xlu0 %556
      %590 = vrot.lane.b32.xlu0 %v319, 4
      %v591 = vpop.permute.xlu0 %590
      %592 = vrot.lane.b32.xlu0 %v318, 4
      %v593 = vpop.permute.xlu0 %592
      %594 = vrot.lane.b32.xlu0 %v322, 4
      %v595 = vpop.permute.xlu0 %594
      %596 = vrot.lane.b32.xlu0 %v321, 4
      %v597 = vpop.permute.xlu0 %596
      %598 = vrot.lane.b32.xlu0 %v325, 4
      %v599 = vpop.permute.xlu0 %598
      %600 = vrot.lane.b32.xlu0 %v324, 4
      %v601 = vpop.permute.xlu0 %600
      %602 = vrot.lane.b32.xlu0 %v328, 4
      %v603 = vpop.permute.xlu0 %602
      %604 = vrot.lane.b32.xlu0 %v327, 4
      %v605 = vpop.permute.xlu0 %604
      %606 = vrot.lane.b32.xlu0 %v331, 4
      %v607 = vpop.permute.xlu0 %606
      %608 = vrot.lane.b32.xlu0 %v330, 4
      %v609 = vpop.permute.xlu0 %608
      %610 = vrot.lane.b32.xlu0 %v334, 4
      %v611 = vpop.permute.xlu0 %610
      %612 = vrot.lane.b32.xlu0 %v333, 4
      %v613 = vpop.permute.xlu0 %612
      %614 = vrot.lane.b32.xlu0 %v337, 4
      %v615 = vpop.permute.xlu0 %614
      %616 = vrot.lane.b32.xlu0 %v336, 4
      %v617 = vpop.permute.xlu0 %616
      %618 = vrot.lane.b32.xlu0 %v340, 4
      %v619 = vpop.permute.xlu0 %618
      %620 = vrot.lane.b32.xlu0 %v339, 4
      %v621 = vpop.permute.xlu0 %620
      %622 = vrot.lane.b32.xlu0 %v343, 4
      %v623 = vpop.permute.xlu0 %622
      %624 = vrot.lane.b32.xlu0 %v342, 4
      %v625 = vpop.permute.xlu0 %624
      %626 = vrot.lane.b32.xlu0 %v346, 4
      %v627 = vpop.permute.xlu0 %626
      %628 = vrot.lane.b32.xlu0 %v345, 4
      %v629 = vpop.permute.xlu0 %628
      %630 = vrot.lane.b32.xlu0 %v349, 4
      %v631 = vpop.permute.xlu0 %630
      %632 = vrot.lane.b32.xlu0 %v348, 4
      %v633 = vpop.permute.xlu0 %632
      %634 = vrot.lane.b32.xlu0 %v352, 4
      %v635 = vpop.permute.xlu0 %634
      %636 = vrot.lane.b32.xlu0 %v351, 4
      %v637 = vpop.permute.xlu0 %636
      %638 = vrot.lane.b32.xlu0 %v355, 4
      %v639 = vpop.permute.xlu0 %638
      %640 = vrot.lane.b32.xlu0 %v354, 4
      %v641 = vpop.permute.xlu0 %640
      %642 = vrot.lane.b32.xlu0 %v358, 4
      %v643 = vpop.permute.xlu0 %642
      %644 = vrot.lane.b32.xlu0 %v357, 4
      %v645 = vpop.permute.xlu0 %644
      %646 = vrot.lane.b32.xlu0 %v361, 4
      %v647 = vpop.permute.xlu0 %646
      %648 = vrot.lane.b32.xlu0 %v360, 4
      %v649 = vpop.permute.xlu0 %648
      %650 = vrot.lane.b32.xlu0 %v364, 4
      %v651 = vpop.permute.xlu0 %650
      %652 = vrot.lane.b32.xlu0 %v363, 4
      %v653 = vpop.permute.xlu0 %652
      %vm686 = vcmask 31744
      %v687 = vsel %vm686, %v495, %v591
      %v688 = vsel %vm686, %v497, %v593
      %v689 = vsel %vm686, %v499, %v595
      %v690 = vsel %vm686, %v501, %v597
      %v691 = vsel %vm686, %v503, %v599
      %v692 = vsel %vm686, %v505, %v601
      %v693 = vsel %vm686, %v507, %v603
      %v694 = vsel %vm686, %v509, %v605
      %v695 = vsel %vm686, %v511, %v607
      %v696 = vsel %vm686, %v513, %v609
      %v697 = vsel %vm686, %v515, %v611
      %v698 = vsel %vm686, %v517, %v613
      %v699 = vsel %vm686, %v519, %v615
      %v700 = vsel %vm686, %v521, %v617
      %v701 = vsel %vm686, %v523, %v619
      %v702 = vsel %vm686, %v525, %v621
      %v703 = vsel %vm686, %v527, %v623
      %v704 = vsel %vm686, %v529, %v625
      %v705 = vsel %vm686, %v531, %v627
      %v706 = vsel %vm686, %v533, %v629
      %v707 = vsel %vm686, %v535, %v631
      %v708 = vsel %vm686, %v537, %v633
      %v709 = vsel %vm686, %v539, %v635
      %v710 = vsel %vm686, %v541, %v637
      %v711 = vsel %vm686, %v543, %v639
      %v712 = vsel %vm686, %v545, %v641
      %v713 = vsel %vm686, %v547, %v643
      %v714 = vsel %vm686, %v549, %v645
      %v715 = vsel %vm686, %v551, %v647
      %v716 = vsel %vm686, %v553, %v649
      %v717 = vsel %vm686, %v555, %v651
      %v718 = vsel %vm686, %v557, %v653
      %747 = vrot.lane.b32.xlu0 %v464, 12
      %v748 = vpop.permute.xlu0 %747
      %749 = vrot.lane.b32.xlu0 %v465, 12
      %v750 = vpop.permute.xlu0 %749
      %751 = vrot.lane.b32.xlu0 %v466, 12
      %v752 = vpop.permute.xlu0 %751
      %753 = vrot.lane.b32.xlu0 %v467, 12
      %v754 = vpop.permute.xlu0 %753
      %755 = vrot.lane.b32.xlu0 %v468, 12
      %v756 = vpop.permute.xlu0 %755
      %757 = vrot.lane.b32.xlu0 %v469, 12
      %v758 = vpop.permute.xlu0 %757
      %759 = vrot.lane.b32.xlu0 %v470, 12
      %v760 = vpop.permute.xlu0 %759
      %761 = vrot.lane.b32.xlu0 %v471, 12
      %v762 = vpop.permute.xlu0 %761
      %763 = vrot.lane.b32.xlu0 %v472, 12
      %v764 = vpop.permute.xlu0 %763
      %765 = vrot.lane.b32.xlu0 %v473, 12
      %v766 = vpop.permute.xlu0 %765
      %767 = vrot.lane.b32.xlu0 %v474, 12
      %v768 = vpop.permute.xlu0 %767
      %769 = vrot.lane.b32.xlu0 %v475, 12
      %v770 = vpop.permute.xlu0 %769
      %771 = vrot.lane.b32.xlu0 %v476, 12
      %v772 = vpop.permute.xlu0 %771
      %773 = vrot.lane.b32.xlu0 %v477, 12
      %v774 = vpop.permute.xlu0 %773
      %775 = vrot.lane.b32.xlu0 %v478, 12
      %v776 = vpop.permute.xlu0 %775
      %777 = vrot.lane.b32.xlu0 %v479, 12
      %v778 = vpop.permute.xlu0 %777
      %779 = vrot.lane.b32.xlu0 %v480, 12
      %v780 = vpop.permute.xlu0 %779
      %781 = vrot.lane.b32.xlu0 %v481, 12
      %v782 = vpop.permute.xlu0 %781
      %783 = vrot.lane.b32.xlu0 %v482, 12
      %v784 = vpop.permute.xlu0 %783
      %785 = vrot.lane.b32.xlu0 %v483, 12
      %v786 = vpop.permute.xlu0 %785
      %787 = vrot.lane.b32.xlu0 %v484, 12
      %v788 = vpop.permute.xlu0 %787
      %789 = vrot.lane.b32.xlu0 %v485, 12
      %v790 = vpop.permute.xlu0 %789
      %791 = vrot.lane.b32.xlu0 %v486, 12
      %v792 = vpop.permute.xlu0 %791
      %793 = vrot.lane.b32.xlu0 %v487, 12
      %v794 = vpop.permute.xlu0 %793
      %795 = vrot.lane.b32.xlu0 %v488, 12
      %v796 = vpop.permute.xlu0 %795
      %797 = vrot.lane.b32.xlu0 %v489, 12
      %v798 = vpop.permute.xlu0 %797
      %799 = vrot.lane.b32.xlu0 %v490, 12
      %v800 = vpop.permute.xlu0 %799
      %801 = vrot.lane.b32.xlu0 %v491, 12
      %v802 = vpop.permute.xlu0 %801
      %833 = vrot.lane.b32.xlu0 %v466, 24
      %v834 = vpop.permute.xlu0 %833
      %835 = vrot.lane.b32.xlu0 %v467, 24
      %v836 = vpop.permute.xlu0 %835
      %837 = vrot.lane.b32.xlu0 %v468, 24
      %v838 = vpop.permute.xlu0 %837
      %839 = vrot.lane.b32.xlu0 %v469, 24
      %v840 = vpop.permute.xlu0 %839
      %841 = vrot.lane.b32.xlu0 %v470, 24
      %v842 = vpop.permute.xlu0 %841
      %843 = vrot.lane.b32.xlu0 %v471, 24
      %v844 = vpop.permute.xlu0 %843
      %845 = vrot.lane.b32.xlu0 %v472, 24
      %v846 = vpop.permute.xlu0 %845
      %847 = vrot.lane.b32.xlu0 %v473, 24
      %v848 = vpop.permute.xlu0 %847
      %849 = vrot.lane.b32.xlu0 %v474, 24
      %v850 = vpop.permute.xlu0 %849
      %851 = vrot.lane.b32.xlu0 %v475, 24
      %v852 = vpop.permute.xlu0 %851
      %853 = vrot.lane.b32.xlu0 %v476, 24
      %v854 = vpop.permute.xlu0 %853
      %855 = vrot.lane.b32.xlu0 %v477, 24
      %v856 = vpop.permute.xlu0 %855
      %857 = vrot.lane.b32.xlu0 %v478, 24
      %v858 = vpop.permute.xlu0 %857
      %859 = vrot.lane.b32.xlu0 %v479, 24
      %v860 = vpop.permute.xlu0 %859
      %861 = vrot.lane.b32.xlu0 %v480, 24
      %v862 = vpop.permute.xlu0 %861
      %863 = vrot.lane.b32.xlu0 %v481, 24
      %v864 = vpop.permute.xlu0 %863
      %865 = vrot.lane.b32.xlu0 %v482, 24
      %v866 = vpop.permute.xlu0 %865
      %867 = vrot.lane.b32.xlu0 %v483, 24
      %v868 = vpop.permute.xlu0 %867
      %869 = vrot.lane.b32.xlu0 %v484, 24
      %v870 = vpop.permute.xlu0 %869
      %871 = vrot.lane.b32.xlu0 %v485, 24
      %v872 = vpop.permute.xlu0 %871
      %873 = vrot.lane.b32.xlu0 %v486, 24
      %v874 = vpop.permute.xlu0 %873
      %875 = vrot.lane.b32.xlu0 %v487, 24
      %v876 = vpop.permute.xlu0 %875
      %877 = vrot.lane.b32.xlu0 %v488, 24
      %v878 = vpop.permute.xlu0 %877
      %879 = vrot.lane.b32.xlu0 %v489, 24
      %v880 = vpop.permute.xlu0 %879
      %881 = vrot.lane.b32.xlu0 %v490, 24
      %v882 = vpop.permute.xlu0 %881
      %883 = vrot.lane.b32.xlu0 %v491, 24
      %v884 = vpop.permute.xlu0 %883
      %885 = vrot.lane.b32.xlu0 %v492, 24
      %v886 = vpop.permute.xlu0 %885
      %887 = vrot.lane.b32.xlu0 %v493, 24
      %v888 = vpop.permute.xlu0 %887
      %vm917 = vcmask 97280
      %v918 = vsel %vm917, %v462, %v748
      %v919 = vsel %vm917, %v463, %v750
      %v920 = vsel %vm917, %v464, %v752
      %v921 = vsel %vm917, %v465, %v754
      %v922 = vsel %vm917, %v466, %v756
      %v923 = vsel %vm917, %v467, %v758
      %v924 = vsel %vm917, %v468, %v760
      %v925 = vsel %vm917, %v469, %v762
      %v926 = vsel %vm917, %v470, %v764
      %v927 = vsel %vm917, %v471, %v766
      %v928 = vsel %vm917, %v472, %v768
      %v929 = vsel %vm917, %v473, %v770
      %v930 = vsel %vm917, %v474, %v772
      %v931 = vsel %vm917, %v475, %v774
      %v932 = vsel %vm917, %v476, %v776
      %v933 = vsel %vm917, %v477, %v778
      %v934 = vsel %vm917, %v478, %v780
      %v935 = vsel %vm917, %v479, %v782
      %v936 = vsel %vm917, %v480, %v784
      %v937 = vsel %vm917, %v481, %v786
      %v938 = vsel %vm917, %v482, %v788
      %v939 = vsel %vm917, %v483, %v790
      %v940 = vsel %vm917, %v484, %v792
      %v941 = vsel %vm917, %v485, %v794
      %v942 = vsel %vm917, %v486, %v796
      %v943 = vsel %vm917, %v487, %v798
      %v944 = vsel %vm917, %v488, %v800
      %v945 = vsel %vm917, %v489, %v802
      %vm946 = vcmask 195584
      %v947 = vsel %vm946, %v918, %v834
      %v948 = vsel %vm946, %v919, %v836
      %v949 = vsel %vm946, %v920, %v838
      %v950 = vsel %vm946, %v921, %v840
      %v951 = vsel %vm946, %v922, %v842
      %v952 = vsel %vm946, %v923, %v844
      %v953 = vsel %vm946, %v924, %v846
      %v954 = vsel %vm946, %v925, %v848
      %v955 = vsel %vm946, %v926, %v850
      %v956 = vsel %vm946, %v927, %v852
      %v957 = vsel %vm946, %v928, %v854
      %v958 = vsel %vm946, %v929, %v856
      %v959 = vsel %vm946, %v930, %v858
      %v960 = vsel %vm946, %v931, %v860
      %v961 = vsel %vm946, %v932, %v862
      %v962 = vsel %vm946, %v933, %v864
      %v963 = vsel %vm946, %v934, %v866
      %v964 = vsel %vm946, %v935, %v868
      %v965 = vsel %vm946, %v936, %v870
      %v966 = vsel %vm946, %v937, %v872
      %v967 = vsel %vm946, %v938, %v874
      %v968 = vsel %vm946, %v939, %v876
      %v969 = vsel %vm946, %v940, %v878
      %v970 = vsel %vm946, %v941, %v880
      %v971 = vsel %vm946, %v942, %v882
      %v972 = vsel %vm946, %v943, %v884
      %v973 = vsel %vm946, %v944, %v886
      %v974 = vsel %vm946, %v945, %v888
      %1003 = vrot.lane.b32.xlu0 %v689, 12
      %v1004 = vpop.permute.xlu0 %1003
      %1005 = vrot.lane.b32.xlu0 %v690, 12
      %v1006 = vpop.permute.xlu0 %1005
      %1007 = vrot.lane.b32.xlu0 %v691, 12
      %v1008 = vpop.permute.xlu0 %1007
      %1009 = vrot.lane.b32.xlu0 %v692, 12
      %v1010 = vpop.permute.xlu0 %1009
      %1011 = vrot.lane.b32.xlu0 %v693, 12
      %v1012 = vpop.permute.xlu0 %1011
      %1013 = vrot.lane.b32.xlu0 %v694, 12
      %v1014 = vpop.permute.xlu0 %1013
      %1015 = vrot.lane.b32.xlu0 %v695, 12
      %v1016 = vpop.permute.xlu0 %1015
      %1017 = vrot.lane.b32.xlu0 %v696, 12
      %v1018 = vpop.permute.xlu0 %1017
      %1019 = vrot.lane.b32.xlu0 %v697, 12
      %v1020 = vpop.permute.xlu0 %1019
      %1021 = vrot.lane.b32.xlu0 %v698, 12
      %v1022 = vpop.permute.xlu0 %1021
      %1023 = vrot.lane.b32.xlu0 %v699, 12
      %v1024 = vpop.permute.xlu0 %1023
      %1025 = vrot.lane.b32.xlu0 %v700, 12
      %v1026 = vpop.permute.xlu0 %1025
      %1027 = vrot.lane.b32.xlu0 %v701, 12
      %v1028 = vpop.permute.xlu0 %1027
      %1029 = vrot.lane.b32.xlu0 %v702, 12
      %v1030 = vpop.permute.xlu0 %1029
      %1031 = vrot.lane.b32.xlu0 %v703, 12
      %v1032 = vpop.permute.xlu0 %1031
      %1033 = vrot.lane.b32.xlu0 %v704, 12
      %v1034 = vpop.permute.xlu0 %1033
      %1035 = vrot.lane.b32.xlu0 %v705, 12
      %v1036 = vpop.permute.xlu0 %1035
      %1037 = vrot.lane.b32.xlu0 %v706, 12
      %v1038 = vpop.permute.xlu0 %1037
      %1039 = vrot.lane.b32.xlu0 %v707, 12
      %v1040 = vpop.permute.xlu0 %1039
      %1041 = vrot.lane.b32.xlu0 %v708, 12
      %v1042 = vpop.permute.xlu0 %1041
      %1043 = vrot.lane.b32.xlu0 %v709, 12
      %v1044 = vpop.permute.xlu0 %1043
      %1045 = vrot.lane.b32.xlu0 %v710, 12
      %v1046 = vpop.permute.xlu0 %1045
      %1047 = vrot.lane.b32.xlu0 %v711, 12
      %v1048 = vpop.permute.xlu0 %1047
      %1049 = vrot.lane.b32.xlu0 %v712, 12
      %v1050 = vpop.permute.xlu0 %1049
      %1051 = vrot.lane.b32.xlu0 %v713, 12
      %v1052 = vpop.permute.xlu0 %1051
      %1053 = vrot.lane.b32.xlu0 %v714, 12
      %v1054 = vpop.permute.xlu0 %1053
      %1055 = vrot.lane.b32.xlu0 %v715, 12
      %v1056 = vpop.permute.xlu0 %1055
      %1057 = vrot.lane.b32.xlu0 %v716, 12
      %v1058 = vpop.permute.xlu0 %1057
      %1089 = vrot.lane.b32.xlu0 %v691, 24
      %v1090 = vpop.permute.xlu0 %1089
      %1091 = vrot.lane.b32.xlu0 %v692, 24
      %v1092 = vpop.permute.xlu0 %1091
      %1093 = vrot.lane.b32.xlu0 %v693, 24
      %v1094 = vpop.permute.xlu0 %1093
      %1095 = vrot.lane.b32.xlu0 %v694, 24
      %v1096 = vpop.permute.xlu0 %1095
      %1097 = vrot.lane.b32.xlu0 %v695, 24
      %v1098 = vpop.permute.xlu0 %1097
      %1099 = vrot.lane.b32.xlu0 %v696, 24
      %v1100 = vpop.permute.xlu0 %1099
      %1101 = vrot.lane.b32.xlu0 %v697, 24
      %v1102 = vpop.permute.xlu0 %1101
      %1103 = vrot.lane.b32.xlu0 %v698, 24
      %v1104 = vpop.permute.xlu0 %1103
      %1105 = vrot.lane.b32.xlu0 %v699, 24
      %v1106 = vpop.permute.xlu0 %1105
      %1107 = vrot.lane.b32.xlu0 %v700, 24
      %v1108 = vpop.permute.xlu0 %1107
      %1109 = vrot.lane.b32.xlu0 %v701, 24
      %v1110 = vpop.permute.xlu0 %1109
      %1111 = vrot.lane.b32.xlu0 %v702, 24
      %v1112 = vpop.permute.xlu0 %1111
      %1113 = vrot.lane.b32.xlu0 %v703, 24
      %v1114 = vpop.permute.xlu0 %1113
      %1115 = vrot.lane.b32.xlu0 %v704, 24
      %v1116 = vpop.permute.xlu0 %1115
      %1117 = vrot.lane.b32.xlu0 %v705, 24
      %v1118 = vpop.permute.xlu0 %1117
      %1119 = vrot.lane.b32.xlu0 %v706, 24
      %v1120 = vpop.permute.xlu0 %1119
      %1121 = vrot.lane.b32.xlu0 %v707, 24
      %v1122 = vpop.permute.xlu0 %1121
      %1123 = vrot.lane.b32.xlu0 %v708, 24
      %v1124 = vpop.permute.xlu0 %1123
      %1125 = vrot.lane.b32.xlu0 %v709, 24
      %v1126 = vpop.permute.xlu0 %1125
      %1127 = vrot.lane.b32.xlu0 %v710, 24
      %v1128 = vpop.permute.xlu0 %1127
      %1129 = vrot.lane.b32.xlu0 %v711, 24
      %v1130 = vpop.permute.xlu0 %1129
      %1131 = vrot.lane.b32.xlu0 %v712, 24
      %v1132 = vpop.permute.xlu0 %1131
      %1133 = vrot.lane.b32.xlu0 %v713, 24
      %v1134 = vpop.permute.xlu0 %1133
      %1135 = vrot.lane.b32.xlu0 %v714, 24
      %v1136 = vpop.permute.xlu0 %1135
      %1137 = vrot.lane.b32.xlu0 %v715, 24
      %v1138 = vpop.permute.xlu0 %1137
      %1139 = vrot.lane.b32.xlu0 %v716, 24
      %v1140 = vpop.permute.xlu0 %1139
      %1141 = vrot.lane.b32.xlu0 %v717, 24
      %v1142 = vpop.permute.xlu0 %1141
      %1143 = vrot.lane.b32.xlu0 %v718, 24
      %v1144 = vpop.permute.xlu0 %1143
      %v1173 = vsel %vm917, %v687, %v1004
      %v1174 = vsel %vm917, %v688, %v1006
      %v1175 = vsel %vm917, %v689, %v1008
      %v1176 = vsel %vm917, %v690, %v1010
      %v1177 = vsel %vm917, %v691, %v1012
      %v1178 = vsel %vm917, %v692, %v1014
      %v1179 = vsel %vm917, %v693, %v1016
      %v1180 = vsel %vm917, %v694, %v1018
      %v1181 = vsel %vm917, %v695, %v1020
      %v1182 = vsel %vm917, %v696, %v1022
      %v1183 = vsel %vm917, %v697, %v1024
      %v1184 = vsel %vm917, %v698, %v1026
      %v1185 = vsel %vm917, %v699, %v1028
      %v1186 = vsel %vm917, %v700, %v1030
      %v1187 = vsel %vm917, %v701, %v1032
      %v1188 = vsel %vm917, %v702, %v1034
      %v1189 = vsel %vm917, %v703, %v1036
      %v1190 = vsel %vm917, %v704, %v1038
      %v1191 = vsel %vm917, %v705, %v1040
      %v1192 = vsel %vm917, %v706, %v1042
      %v1193 = vsel %vm917, %v707, %v1044
      %v1194 = vsel %vm917, %v708, %v1046
      %v1195 = vsel %vm917, %v709, %v1048
      %v1196 = vsel %vm917, %v710, %v1050
      %v1197 = vsel %vm917, %v711, %v1052
      %v1198 = vsel %vm917, %v712, %v1054
      %v1199 = vsel %vm917, %v713, %v1056
      %v1200 = vsel %vm917, %v714, %v1058
      %v1201 = vsel %vm946, %v1173, %v1090
      %v1202 = vsel %vm946, %v1174, %v1092
      %v1203 = vsel %vm946, %v1175, %v1094
      %v1204 = vsel %vm946, %v1176, %v1096
      %v1205 = vsel %vm946, %v1177, %v1098
      %v1206 = vsel %vm946, %v1178, %v1100
      %v1207 = vsel %vm946, %v1179, %v1102
      %v1208 = vsel %vm946, %v1180, %v1104
      %v1209 = vsel %vm946, %v1181, %v1106
      %v1210 = vsel %vm946, %v1182, %v1108
      %v1211 = vsel %vm946, %v1183, %v1110
      %v1212 = vsel %vm946, %v1184, %v1112
      %v1213 = vsel %vm946, %v1185, %v1114
      %v1214 = vsel %vm946, %v1186, %v1116
      %v1215 = vsel %vm946, %v1187, %v1118
      %v1216 = vsel %vm946, %v1188, %v1120
      %v1217 = vsel %vm946, %v1189, %v1122
      %v1218 = vsel %vm946, %v1190, %v1124
      %v1219 = vsel %vm946, %v1191, %v1126
      %v1220 = vsel %vm946, %v1192, %v1128
      %v1221 = vsel %vm946, %v1193, %v1130
      %v1222 = vsel %vm946, %v1194, %v1132
      %v1223 = vsel %vm946, %v1195, %v1134
      %v1224 = vsel %vm946, %v1196, %v1136
      %v1225 = vsel %vm946, %v1197, %v1138
      %v1226 = vsel %vm946, %v1198, %v1140
      %v1227 = vsel %vm946, %v1199, %v1142
      %v1228 = vsel %vm946, %v1200, %v1144
      %v1257 = vrot.slane %v947, 2
      %v1258 = vrot.slane %v947, 4
      %v1259 = vrot.slane %v947, 6
      %v1260 = vrot.slane %v948, 2
      %v1261 = vrot.slane %v948, 4
      %v1262 = vrot.slane %v949, 2
      %v1263 = vrot.slane %v949, 4
      %v1264 = vrot.slane %v949, 6
      %v1265 = vrot.slane %v950, 2
      %v1266 = vrot.slane %v950, 4
      %v1267 = vrot.slane %v951, 2
      %v1268 = vrot.slane %v951, 4
      %v1269 = vrot.slane %v951, 6
      %v1270 = vrot.slane %v952, 2
      %v1271 = vrot.slane %v952, 4
      %v1272 = vrot.slane %v953, 2
      %v1273 = vrot.slane %v953, 4
      %v1274 = vrot.slane %v953, 6
      %v1275 = vrot.slane %v954, 2
      %v1276 = vrot.slane %v954, 4
      %v1277 = vrot.slane %v955, 2
      %v1278 = vrot.slane %v955, 4
      %v1279 = vrot.slane %v955, 6
      %v1280 = vrot.slane %v956, 2
      %v1281 = vrot.slane %v956, 4
      %v1282 = vrot.slane %v957, 2
      %v1283 = vrot.slane %v957, 4
      %v1284 = vrot.slane %v957, 6
      %v1285 = vrot.slane %v958, 2
      %v1286 = vrot.slane %v958, 4
      %v1287 = vrot.slane %v959, 2
      %v1288 = vrot.slane %v959, 4
      %v1289 = vrot.slane %v959, 6
      %v1290 = vrot.slane %v960, 2
      %v1291 = vrot.slane %v960, 4
      %v1292 = vrot.slane %v961, 2
      %v1293 = vrot.slane %v961, 4
      %v1294 = vrot.slane %v961, 6
      %v1295 = vrot.slane %v962, 2
      %v1296 = vrot.slane %v962, 4
      %v1297 = vrot.slane %v963, 2
      %v1298 = vrot.slane %v963, 4
      %v1299 = vrot.slane %v963, 6
      %v1300 = vrot.slane %v964, 2
      %v1301 = vrot.slane %v964, 4
      %v1302 = vrot.slane %v965, 2
      %v1303 = vrot.slane %v965, 4
      %v1304 = vrot.slane %v965, 6
      %v1305 = vrot.slane %v966, 2
      %v1306 = vrot.slane %v966, 4
      %v1307 = vrot.slane %v967, 2
      %v1308 = vrot.slane %v967, 4
      %v1309 = vrot.slane %v967, 6
      %v1310 = vrot.slane %v968, 2
      %v1311 = vrot.slane %v968, 4
      %v1312 = vrot.slane %v969, 2
      %v1313 = vrot.slane %v969, 4
      %v1314 = vrot.slane %v969, 6
      %v1315 = vrot.slane %v970, 2
      %v1316 = vrot.slane %v970, 4
      %v1317 = vrot.slane %v971, 2
      %v1318 = vrot.slane %v971, 4
      %v1319 = vrot.slane %v971, 6
      %v1320 = vrot.slane %v972, 2
      %v1321 = vrot.slane %v972, 4
      %v1322 = vrot.slane %v973, 2
      %v1323 = vrot.slane %v973, 4
      %v1324 = vrot.slane %v973, 6
      %v1325 = vrot.slane %v974, 2
      %v1326 = vrot.slane %v974, 4
      %1327 = vst [vmem:[#allocation1] ss:$4 sm:$0xff] %v947
      %s1328 = scalar_lea.vmem [#allocation1], 1
      %1329 = vst [vmem:[%s1328] ss:$4 sm:$0xff] %v1257
      %s1330 = scalar_lea.vmem [#allocation1], 2
      %1331 = vst [vmem:[%s1330] ss:$4 sm:$0xff] %v1258
      %s1332 = scalar_lea.vmem [#allocation1], 3
      %1333 = vst [vmem:[%s1332] ss:$4 sm:$0xff] %v1259
      %s1334 = scalar_lea.vmem [#allocation1], 32
      %1335 = vst [vmem:[%s1334] ss:$4 sm:$0xff] %v948
      %s1336 = scalar_lea.vmem [#allocation1], 33
      %1337 = vst [vmem:[%s1336] ss:$4 sm:$0xff] %v1260
      %s1338 = scalar_lea.vmem [#allocation1], 34
      %1339 = vst [vmem:[%s1338] ss:$4 sm:$0xff] %v1261
      %s1340 = scalar_lea.vmem [#allocation1], 35
      %1341 = vst [vmem:[%s1340] ss:$4 sm:$0xff] %v949
      %v1342 = vld.sshfl [vmem:[#allocation1] sm:$0xff pattern:$0x73625140]
      %v1343 = vld.sshfl [vmem:[#allocation1 + $0x20] sm:$0xff pattern:$0x73625140]
      %1344 = vst [vmem:[#allocation1] ss:$4 sm:$0xff] %v1262
      %1345 = vst [vmem:[%s1328] ss:$4 sm:$0xff] %v1263
      %1346 = vst [vmem:[%s1330] ss:$4 sm:$0xff] %v1264
      %1347 = vst [vmem:[%s1332] ss:$4 sm:$0xff] %v950
      %1348 = vst [vmem:[%s1334] ss:$4 sm:$0xff] %v1265
      %1349 = vst [vmem:[%s1336] ss:$4 sm:$0xff] %v1266
      %1350 = vst [vmem:[%s1338] ss:$4 sm:$0xff] %v951
      %1351 = vst [vmem:[%s1340] ss:$4 sm:$0xff] %v1267
      %v1352 = vld.sshfl [vmem:[#allocation1] sm:$0xff pattern:$0x73625140]
      %v1353 = vld.sshfl [vmem:[#allocation1 + $0x20] sm:$0xff pattern:$0x73625140]
      %1354 = vst [vmem:[#allocation1] ss:$4 sm:$0xff] %v1268
      %1355 = vst [vmem:[%s1328] ss:$4 sm:$0xff] %v1269
      %1356 = vst [vmem:[%s1330] ss:$4 sm:$0xff] %v952
      %1357 = vst [vmem:[%s1332] ss:$4 sm:$0xff] %v1270
      %1358 = vst [vmem:[%s1334] ss:$4 sm:$0xff] %v1271
      %1359 = vst [vmem:[%s1336] ss:$4 sm:$0xff] %v953
      %1360 = vst [vmem:[%s1338] ss:$4 sm:$0xff] %v1272
      %1361 = vst [vmem:[%s1340] ss:$4 sm:$0xff] %v1273
      %v1362 = vld.sshfl [vmem:[#allocation1] sm:$0xff pattern:$0x73625140]
      %v1363 = vld.sshfl [vmem:[#allocation1 + $0x20] sm:$0xff pattern:$0x73625140]
      %1364 = vst [vmem:[#allocation1] ss:$4 sm:$0xff] %v1274
      %1365 = vst [vmem:[%s1328] ss:$4 sm:$0xff] %v954
      %1366 = vst [vmem:[%s1330] ss:$4 sm:$0xff] %v1275
      %1367 = vst [vmem:[%s1332] ss:$4 sm:$0xff] %v1276
      %1368 = vst [vmem:[%s1334] ss:$4 sm:$0xff] %v955
      %1369 = vst [vmem:[%s1336] ss:$4 sm:$0xff] %v1277
      %1370 = vst [vmem:[%s1338] ss:$4 sm:$0xff] %v1278
      %1371 = vst [vmem:[%s1340] ss:$4 sm:$0xff] %v1279
      %v1372 = vld.sshfl [vmem:[#allocation1] sm:$0xff pattern:$0x73625140]
      %v1373 = vld.sshfl [vmem:[#allocation1 + $0x20] sm:$0xff pattern:$0x73625140]
      %1374 = vst [vmem:[#allocation1] ss:$4 sm:$0xff] %v956
      %1375 = vst [vmem:[%s1328] ss:$4 sm:$0xff] %v1280
      %1376 = vst [vmem:[%s1330] ss:$4 sm:$0xff] %v1281
      %1377 = vst [vmem:[%s1332] ss:$4 sm:$0xff] %v957
      %1378 = vst [vmem:[%s1334] ss:$4 sm:$0xff] %v1282
      %1379 = vst [vmem:[%s1336] ss:$4 sm:$0xff] %v1283
      %1380 = vst [vmem:[%s1338] ss:$4 sm:$0xff] %v1284
      %1381 = vst [vmem:[%s1340] ss:$4 sm:$0xff] %v958
      %v1382 = vld.sshfl [vmem:[#allocation1] sm:$0xff pattern:$0x73625140]
      %v1383 = vld.sshfl [vmem:[#allocation1 + $0x20] sm:$0xff pattern:$0x73625140]
      %1384 = vst [vmem:[#allocation1] ss:$4 sm:$0xff] %v1285
      %1385 = vst [vmem:[%s1328] ss:$4 sm:$0xff] %v1286
      %1386 = vst [vmem:[%s1330] ss:$4 sm:$0xff] %v959
      %1387 = vst [vmem:[%s1332] ss:$4 sm:$0xff] %v1287
      %1388 = vst [vmem:[%s1334] ss:$4 sm:$0xff] %v1288
      %1389 = vst [vmem:[%s1336] ss:$4 sm:$0xff] %v1289
      %1390 = vst [vmem:[%s1338] ss:$4 sm:$0xff] %v960
      %1391 = vst [vmem:[%s1340] ss:$4 sm:$0xff] %v1290
      %v1392 = vld.sshfl [vmem:[#allocation1] sm:$0xff pattern:$0x73625140]
      %v1393 = vld.sshfl [vmem:[#allocation1 + $0x20] sm:$0xff pattern:$0x73625140]
      %1394 = vst [vmem:[#allocation1] ss:$4 sm:$0xff] %v1291
      %1395 = vst [vmem:[%s1328] ss:$4 sm:$0xff] %v961
      %1396 = vst [vmem:[%s1330] ss:$4 sm:$0xff] %v1292
      %1397 = vst [vmem:[%s1332] ss:$4 sm:$0xff] %v1293
      %1398 = vst [vmem:[%s1334] ss:$4 sm:$0xff] %v1294
      %1399 = vst [vmem:[%s1336] ss:$4 sm:$0xff] %v962
      %1400 = vst [vmem:[%s1338] ss:$4 sm:$0xff] %v1295
      %1401 = vst [vmem:[%s1340] ss:$4 sm:$0xff] %v1296
      %v1402 = vld.sshfl [vmem:[#allocation1] sm:$0xff pattern:$0x73625140]
      %v1403 = vld.sshfl [vmem:[#allocation1 + $0x20] sm:$0xff pattern:$0x73625140]
      %1404 = vst [vmem:[#allocation1] ss:$4 sm:$0xff] %v963
      %1405 = vst [vmem:[%s1328] ss:$4 sm:$0xff] %v1297
      %1406 = vst [vmem:[%s1330] ss:$4 sm:$0xff] %v1298
      %1407 = vst [vmem:[%s1332] ss:$4 sm:$0xff] %v1299
      %1408 = vst [vmem:[%s1334] ss:$4 sm:$0xff] %v964
      %1409 = vst [vmem:[%s1336] ss:$4 sm:$0xff] %v1300
      %1410 = vst [vmem:[%s1338] ss:$4 sm:$0xff] %v1301
      %1411 = vst [vmem:[%s1340] ss:$4 sm:$0xff] %v965
      %v1412 = vld.sshfl [vmem:[#allocation1] sm:$0xff pattern:$0x73625140]
      %v1413 = vld.sshfl [vmem:[#allocation1 + $0x20] sm:$0xff pattern:$0x73625140]
      %1414 = vst [vmem:[#allocation1] ss:$4 sm:$0xff] %v1302
      %1415 = vst [vmem:[%s1328] ss:$4 sm:$0xff] %v1303
      %1416 = vst [vmem:[%s1330] ss:$4 sm:$0xff] %v1304
      %1417 = vst [vmem:[%s1332] ss:$4 sm:$0xff] %v966
      %1418 = vst [vmem:[%s1334] ss:$4 sm:$0xff] %v1305
      %1419 = vst [vmem:[%s1336] ss:$4 sm:$0xff] %v1306
      %1420 = vst [vmem:[%s1338] ss:$4 sm:$0xff] %v967
      %1421 = vst [vmem:[%s1340] ss:$4 sm:$0xff] %v1307
      %v1422 = vld.sshfl [vmem:[#allocation1] sm:$0xff pattern:$0x73625140]
      %v1423 = vld.sshfl [vmem:[#allocation1 + $0x20] sm:$0xff pattern:$0x73625140]
      %1424 = vst [vmem:[#allocation1] ss:$4 sm:$0xff] %v1308
      %1425 = vst [vmem:[%s1328] ss:$4 sm:$0xff] %v1309
      %1426 = vst [vmem:[%s1330] ss:$4 sm:$0xff] %v968
      %1427 = vst [vmem:[%s1332] ss:$4 sm:$0xff] %v1310
      %1428 = vst [vmem:[%s1334] ss:$4 sm:$0xff] %v1311
      %1429 = vst [vmem:[%s1336] ss:$4 sm:$0xff] %v969
      %1430 = vst [vmem:[%s1338] ss:$4 sm:$0xff] %v1312
      %1431 = vst [vmem:[%s1340] ss:$4 sm:$0xff] %v1313
      %v1432 = vld.sshfl [vmem:[#allocation1] sm:$0xff pattern:$0x73625140]
      %v1433 = vld.sshfl [vmem:[#allocation1 + $0x20] sm:$0xff pattern:$0x73625140]
      %1434 = vst [vmem:[#allocation1] ss:$4 sm:$0xff] %v1314
      %1435 = vst [vmem:[%s1328] ss:$4 sm:$0xff] %v970
      %1436 = vst [vmem:[%s1330] ss:$4 sm:$0xff] %v1315
      %1437 = vst [vmem:[%s1332] ss:$4 sm:$0xff] %v1316
      %1438 = vst [vmem:[%s1334] ss:$4 sm:$0xff] %v971
      %1439 = vst [vmem:[%s1336] ss:$4 sm:$0xff] %v1317
      %1440 = vst [vmem:[%s1338] ss:$4 sm:$0xff] %v1318
      %1441 = vst [vmem:[%s1340] ss:$4 sm:$0xff] %v1319
      %v1442 = vld.sshfl [vmem:[#allocation1] sm:$0xff pattern:$0x73625140]
      %v1443 = vld.sshfl [vmem:[#allocation1 + $0x20] sm:$0xff pattern:$0x73625140]
      %1444 = vst [vmem:[#allocation1] ss:$4 sm:$0xff] %v972
      %1445 = vst [vmem:[%s1328] ss:$4 sm:$0xff] %v1320
      %1446 = vst [vmem:[%s1330] ss:$4 sm:$0xff] %v1321
      %1447 = vst [vmem:[%s1332] ss:$4 sm:$0xff] %v973
      %1448 = vst [vmem:[%s1334] ss:$4 sm:$0xff] %v1322
      %1449 = vst [vmem:[%s1336] ss:$4 sm:$0xff] %v1323
      %1450 = vst [vmem:[%s1338] ss:$4 sm:$0xff] %v1324
      %1451 = vst [vmem:[%s1340] ss:$4 sm:$0xff] %v974
      %v1452 = vld.sshfl [vmem:[#allocation1] sm:$0xff pattern:$0x73625140]
      %v1453 = vld.sshfl [vmem:[#allocation1 + $0x20] sm:$0xff pattern:$0x73625140]
      %1454 = vst [vmem:[#allocation1] ss:$4 sm:$0xff] %v1325
      %1455 = vst [vmem:[%s1328] ss:$4 sm:$0xff] %v1326
      %v1456 = vld.sshfl [vmem:[#allocation1] sm:$0xff pattern:$0x73625140]
      %vm1457 = vcmask 293888
      %v1458 = vsel %vm1457, %v1342, 0
      %v1460 = vsel %vm1457, %v1343, 0
      %v1462 = vsel %vm1457, %v1352, 0
      %v1464 = vsel %vm1457, %v1353, 0
      %v1466 = vsel %vm1457, %v1362, 0
      %v1468 = vsel %vm1457, %v1363, 0
      %v1470 = vsel %vm1457, %v1372, 0
      %v1472 = vsel %vm1457, %v1373, 0
      %v1474 = vsel %vm1457, %v1382, 0
      %v1476 = vsel %vm1457, %v1383, 0
      %v1478 = vsel %vm1457, %v1392, 0
      %v1480 = vsel %vm1457, %v1393, 0
      %v1482 = vsel %vm1457, %v1402, 0
      %v1484 = vsel %vm1457, %v1403, 0
      %v1486 = vsel %vm1457, %v1412, 0
      %v1488 = vsel %vm1457, %v1413, 0
      %v1490 = vsel %vm1457, %v1422, 0
      %v1492 = vsel %vm1457, %v1423, 0
      %v1494 = vsel %vm1457, %v1432, 0
      %v1496 = vsel %vm1457, %v1433, 0
      %v1498 = vsel %vm1457, %v1442, 0
      %v1500 = vsel %vm1457, %v1443, 0
      %v1502 = vsel %vm1457, %v1452, 0
      %v1504 = vsel %vm1457, %v1453, 0
      %v1506 = vsel %vm1457, %v1456, 0
      %vm1508 = vcmask 1043456
      %v1510 = vsel %vm1508, %v283, 0
      %1512 = vmatpush.msra.mxu0 0.0
      %1513 = vmatpush.msra.mxu0 0.0
      %1514 = vmatpush.msra.mxu0 0.0
      %1515 = vmatpush.msra.mxu0 0.0
      %1516 = vmatpush.msra.mxu0 0.0
      %1517 = vmatpush.msra.mxu0 0.0
      %1518 = vmatpush.msra.mxu0 0.0
      %1519 = vmatpush.msra.mxu0 0.0
      %1520 = vmatpush.msra.mxu0 0.0
      %1521 = vmatpush.msra.mxu0 0.0
      %1522 = vmatpush.msra.mxu0 0.0
      %1523 = vmatpush.msra.mxu0 %v1510
      %1524 = vmatpush.msra.mxu0 %v282
      %1525 = vmatpush.msra.mxu0 %v281
      %1526 = vmatpush.msra.mxu0 %v280
      %1527 = vmatpush.msra.mxu0 %v279
      %1528 = vmatmul.f32.gmra.mxu0 %v1458
      %v1529 = vpop.f32.mrf.mxu0
      %v1530 = vadd.f32 0.0, %v1529
      %1531 = vmatmul.f32.gmra.mxu0 %v1460
      %v1532 = vpop.f32.mrf.mxu0
      %v1533 = vadd.f32 0.0, %v1532
      %1534 = vmatmul.f32.gmra.mxu0 %v1462
      %v1535 = vpop.f32.mrf.mxu0
      %v1536 = vadd.f32 0.0, %v1535
      %1537 = vmatmul.f32.gmra.mxu0 %v1464
      %v1538 = vpop.f32.mrf.mxu0
      %v1539 = vadd.f32 0.0, %v1538
      %1540 = vmatmul.f32.gmra.mxu0 %v1466
      %v1541 = vpop.f32.mrf.mxu0
      %v1542 = vadd.f32 0.0, %v1541
      %1543 = vmatmul.f32.gmra.mxu0 %v1468
      %v1544 = vpop.f32.mrf.mxu0
      %v1545 = vadd.f32 0.0, %v1544
      %1546 = vmatmul.f32.gmra.mxu0 %v1470
      %v1547 = vpop.f32.mrf.mxu0
      %v1548 = vadd.f32 0.0, %v1547
      %1549 = vmatmul.f32.gmra.mxu0 %v1472
      %v1550 = vpop.f32.mrf.mxu0
      %v1551 = vadd.f32 0.0, %v1550
      %1552 = vmatmul.f32.gmra.mxu0 %v1474
      %v1553 = vpop.f32.mrf.mxu0
      %v1554 = vadd.f32 0.0, %v1553
      %1555 = vmatmul.f32.gmra.mxu0 %v1476
      %v1556 = vpop.f32.mrf.mxu0
      %v1557 = vadd.f32 0.0, %v1556
      %1558 = vmatmul.f32.gmra.mxu0 %v1478
      %v1559 = vpop.f32.mrf.mxu0
      %v1560 = vadd.f32 0.0, %v1559
      %1561 = vmatmul.f32.gmra.mxu0 %v1480
      %v1562 = vpop.f32.mrf.mxu0
      %v1563 = vadd.f32 0.0, %v1562
      %1564 = vmatmul.f32.gmra.mxu0 %v1482
      %v1565 = vpop.f32.mrf.mxu0
      %v1566 = vadd.f32 0.0, %v1565
      %1567 = vmatmul.f32.gmra.mxu0 %v1484
      %v1568 = vpop.f32.mrf.mxu0
      %v1569 = vadd.f32 0.0, %v1568
      %1570 = vmatmul.f32.gmra.mxu0 %v1486
      %v1571 = vpop.f32.mrf.mxu0
      %v1572 = vadd.f32 0.0, %v1571
      %1573 = vmatmul.f32.gmra.mxu0 %v1488
      %v1574 = vpop.f32.mrf.mxu0
      %v1575 = vadd.f32 0.0, %v1574
      %1576 = vmatmul.f32.gmra.mxu0 %v1490
      %v1577 = vpop.f32.mrf.mxu0
      %v1578 = vadd.f32 0.0, %v1577
      %1579 = vmatmul.f32.gmra.mxu0 %v1492
      %v1580 = vpop.f32.mrf.mxu0
      %v1581 = vadd.f32 0.0, %v1580
      %1582 = vmatmul.f32.gmra.mxu0 %v1494
      %v1583 = vpop.f32.mrf.mxu0
      %v1584 = vadd.f32 0.0, %v1583
      %1585 = vmatmul.f32.gmra.mxu0 %v1496
      %v1586 = vpop.f32.mrf.mxu0
      %v1587 = vadd.f32 0.0, %v1586
      %1588 = vmatmul.f32.gmra.mxu0 %v1498
      %v1589 = vpop.f32.mrf.mxu0
      %v1590 = vadd.f32 0.0, %v1589
      %1591 = vmatmul.f32.gmra.mxu0 %v1500
      %v1592 = vpop.f32.mrf.mxu0
      %v1593 = vadd.f32 0.0, %v1592
      %1594 = vmatmul.f32.gmra.mxu0 %v1502
      %v1595 = vpop.f32.mrf.mxu0
      %v1596 = vadd.f32 0.0, %v1595
      %1597 = vmatmul.f32.gmra.mxu0 %v1504
      %v1598 = vpop.f32.mrf.mxu0
      %v1599 = vadd.f32 0.0, %v1598
      %1600 = vmatmul.f32.gmra.mxu0 %v1506
      %v1601 = vpop.f32.mrf.mxu0
      %v1602 = vadd.f32 0.0, %v1601
      %1603 = vdwg.mxu0
      %v1632 = vrot.slane %v1201, 2
      %v1633 = vrot.slane %v1201, 4
      %v1634 = vrot.slane %v1201, 6
      %v1635 = vrot.slane %v1202, 2
      %v1636 = vrot.slane %v1202, 4
      %v1637 = vrot.slane %v1203, 2
      %v1638 = vrot.slane %v1203, 4
      %v1639 = vrot.slane %v1203, 6
      %v1640 = vrot.slane %v1204, 2
      %v1641 = vrot.slane %v1204, 4
      %v1642 = vrot.slane %v1205, 2
      %v1643 = vrot.slane %v1205, 4
      %v1644 = vrot.slane %v1205, 6
      %v1645 = vrot.slane %v1206, 2
      %v1646 = vrot.slane %v1206, 4
      %v1647 = vrot.slane %v1207, 2
      %v1648 = vrot.slane %v1207, 4
      %v1649 = vrot.slane %v1207, 6
      %v1650 = vrot.slane %v1208, 2
      %v1651 = vrot.slane %v1208, 4
      %v1652 = vrot.slane %v1209, 2
      %v1653 = vrot.slane %v1209, 4
      %v1654 = vrot.slane %v1209, 6
      %v1655 = vrot.slane %v1210, 2
      %v1656 = vrot.slane %v1210, 4
      %v1657 = vrot.slane %v1211, 2
      %v1658 = vrot.slane %v1211, 4
      %v1659 = vrot.slane %v1211, 6
      %v1660 = vrot.slane %v1212, 2
      %v1661 = vrot.slane %v1212, 4
      %v1662 = vrot.slane %v1213, 2
      %v1663 = vrot.slane %v1213, 4
      %v1664 = vrot.slane %v1213, 6
      %v1665 = vrot.slane %v1214, 2
      %v1666 = vrot.slane %v1214, 4
      %v1667 = vrot.slane %v1215, 2
      %v1668 = vrot.slane %v1215, 4
      %v1669 = vrot.slane %v1215, 6
      %v1670 = vrot.slane %v1216, 2
      %v1671 = vrot.slane %v1216, 4
      %v1672 = vrot.slane %v1217, 2
      %v1673 = vrot.slane %v1217, 4
      %v1674 = vrot.slane %v1217, 6
      %v1675 = vrot.slane %v1218, 2
      %v1676 = vrot.slane %v1218, 4
      %v1677 = vrot.slane %v1219, 2
      %v1678 = vrot.slane %v1219, 4
      %v1679 = vrot.slane %v1219, 6
      %v1680 = vrot.slane %v1220, 2
      %v1681 = vrot.slane %v1220, 4
      %v1682 = vrot.slane %v1221, 2
      %v1683 = vrot.slane %v1221, 4
      %v1684 = vrot.slane %v1221, 6
      %v1685 = vrot.slane %v1222, 2
      %v1686 = vrot.slane %v1222, 4
      %v1687 = vrot.slane %v1223, 2
      %v1688 = vrot.slane %v1223, 4
      %v1689 = vrot.slane %v1223, 6
      %v1690 = vrot.slane %v1224, 2
      %v1691 = vrot.slane %v1224, 4
      %v1692 = vrot.slane %v1225, 2
      %v1693 = vrot.slane %v1225, 4
      %v1694 = vrot.slane %v1225, 6
      %v1695 = vrot.slane %v1226, 2
      %v1696 = vrot.slane %v1226, 4
      %v1697 = vrot.slane %v1227, 2
      %v1698 = vrot.slane %v1227, 4
      %v1699 = vrot.slane %v1227, 6
      %v1700 = vrot.slane %v1228, 2
      %v1701 = vrot.slane %v1228, 4
      %1702 = vst [vmem:[#allocation1] ss:$4 sm:$0xff] %v1201
      %s1703 = scalar_lea.vmem [#allocation1], 1
      %1704 = vst [vmem:[%s1703] ss:$4 sm:$0xff] %v1632
      %s1705 = scalar_lea.vmem [#allocation1], 2
      %1706 = vst [vmem:[%s1705] ss:$4 sm:$0xff] %v1633
      %s1707 = scalar_lea.vmem [#allocation1], 3
      %1708 = vst [vmem:[%s1707] ss:$4 sm:$0xff] %v1634
      %s1709 = scalar_lea.vmem [#allocation1], 32
      %1710 = vst [vmem:[%s1709] ss:$4 sm:$0xff] %v1202
      %s1711 = scalar_lea.vmem [#allocation1], 33
      %1712 = vst [vmem:[%s1711] ss:$4 sm:$0xff] %v1635
      %s1713 = scalar_lea.vmem [#allocation1], 34
      %1714 = vst [vmem:[%s1713] ss:$4 sm:$0xff] %v1636
      %s1715 = scalar_lea.vmem [#allocation1], 35
      %1716 = vst [vmem:[%s1715] ss:$4 sm:$0xff] %v1203
      %v1717 = vld.sshfl [vmem:[#allocation1] sm:$0xff pattern:$0x73625140]
      %v1718 = vld.sshfl [vmem:[#allocation1 + $0x20] sm:$0xff pattern:$0x73625140]
      %1719 = vst [vmem:[#allocation1] ss:$4 sm:$0xff] %v1637
      %1720 = vst [vmem:[%s1703] ss:$4 sm:$0xff] %v1638
      %1721 = vst [vmem:[%s1705] ss:$4 sm:$0xff] %v1639
      %1722 = vst [vmem:[%s1707] ss:$4 sm:$0xff] %v1204
      %1723 = vst [vmem:[%s1709] ss:$4 sm:$0xff] %v1640
      %1724 = vst [vmem:[%s1711] ss:$4 sm:$0xff] %v1641
      %1725 = vst [vmem:[%s1713] ss:$4 sm:$0xff] %v1205
      %1726 = vst [vmem:[%s1715] ss:$4 sm:$0xff] %v1642
      %v1727 = vld.sshfl [vmem:[#allocation1] sm:$0xff pattern:$0x73625140]
      %v1728 = vld.sshfl [vmem:[#allocation1 + $0x20] sm:$0xff pattern:$0x73625140]
      %1729 = vst [vmem:[#allocation1] ss:$4 sm:$0xff] %v1643
      %1730 = vst [vmem:[%s1703] ss:$4 sm:$0xff] %v1644
      %1731 = vst [vmem:[%s1705] ss:$4 sm:$0xff] %v1206
      %1732 = vst [vmem:[%s1707] ss:$4 sm:$0xff] %v1645
      %1733 = vst [vmem:[%s1709] ss:$4 sm:$0xff] %v1646
      %1734 = vst [vmem:[%s1711] ss:$4 sm:$0xff] %v1207
      %1735 = vst [vmem:[%s1713] ss:$4 sm:$0xff] %v1647
      %1736 = vst [vmem:[%s1715] ss:$4 sm:$0xff] %v1648
      %v1737 = vld.sshfl [vmem:[#allocation1] sm:$0xff pattern:$0x73625140]
      %v1738 = vld.sshfl [vmem:[#allocation1 + $0x20] sm:$0xff pattern:$0x73625140]
      %1739 = vst [vmem:[#allocation1] ss:$4 sm:$0xff] %v1649
      %1740 = vst [vmem:[%s1703] ss:$4 sm:$0xff] %v1208
      %1741 = vst [vmem:[%s1705] ss:$4 sm:$0xff] %v1650
      %1742 = vst [vmem:[%s1707] ss:$4 sm:$0xff] %v1651
      %1743 = vst [vmem:[%s1709] ss:$4 sm:$0xff] %v1209
      %1744 = vst [vmem:[%s1711] ss:$4 sm:$0xff] %v1652
      %1745 = vst [vmem:[%s1713] ss:$4 sm:$0xff] %v1653
      %1746 = vst [vmem:[%s1715] ss:$4 sm:$0xff] %v1654
      %v1747 = vld.sshfl [vmem:[#allocation1] sm:$0xff pattern:$0x73625140]
      %v1748 = vld.sshfl [vmem:[#allocation1 + $0x20] sm:$0xff pattern:$0x73625140]
      %1749 = vst [vmem:[#allocation1] ss:$4 sm:$0xff] %v1210
      %1750 = vst [vmem:[%s1703] ss:$4 sm:$0xff] %v1655
      %1751 = vst [vmem:[%s1705] ss:$4 sm:$0xff] %v1656
      %1752 = vst [vmem:[%s1707] ss:$4 sm:$0xff] %v1211
      %1753 = vst [vmem:[%s1709] ss:$4 sm:$0xff] %v1657
      %1754 = vst [vmem:[%s1711] ss:$4 sm:$0xff] %v1658
      %1755 = vst [vmem:[%s1713] ss:$4 sm:$0xff] %v1659
      %1756 = vst [vmem:[%s1715] ss:$4 sm:$0xff] %v1212
      %v1757 = vld.sshfl [vmem:[#allocation1] sm:$0xff pattern:$0x73625140]
      %v1758 = vld.sshfl [vmem:[#allocation1 + $0x20] sm:$0xff pattern:$0x73625140]
      %1759 = vst [vmem:[#allocation1] ss:$4 sm:$0xff] %v1660
      %1760 = vst [vmem:[%s1703] ss:$4 sm:$0xff] %v1661
      %1761 = vst [vmem:[%s1705] ss:$4 sm:$0xff] %v1213
      %1762 = vst [vmem:[%s1707] ss:$4 sm:$0xff] %v1662
      %1763 = vst [vmem:[%s1709] ss:$4 sm:$0xff] %v1663
      %1764 = vst [vmem:[%s1711] ss:$4 sm:$0xff] %v1664
      %1765 = vst [vmem:[%s1713] ss:$4 sm:$0xff] %v1214
      %1766 = vst [vmem:[%s1715] ss:$4 sm:$0xff] %v1665
      %v1767 = vld.sshfl [vmem:[#allocation1] sm:$0xff pattern:$0x73625140]
      %v1768 = vld.sshfl [vmem:[#allocation1 + $0x20] sm:$0xff pattern:$0x73625140]
      %1769 = vst [vmem:[#allocation1] ss:$4 sm:$0xff] %v1666
      %1770 = vst [vmem:[%s1703] ss:$4 sm:$0xff] %v1215
      %1771 = vst [vmem:[%s1705] ss:$4 sm:$0xff] %v1667
      %1772 = vst [vmem:[%s1707] ss:$4 sm:$0xff] %v1668
      %1773 = vst [vmem:[%s1709] ss:$4 sm:$0xff] %v1669
      %1774 = vst [vmem:[%s1711] ss:$4 sm:$0xff] %v1216
      %1775 = vst [vmem:[%s1713] ss:$4 sm:$0xff] %v1670
      %1776 = vst [vmem:[%s1715] ss:$4 sm:$0xff] %v1671
      %v1777 = vld.sshfl [vmem:[#allocation1] sm:$0xff pattern:$0x73625140]
      %v1778 = vld.sshfl [vmem:[#allocation1 + $0x20] sm:$0xff pattern:$0x73625140]
      %1779 = vst [vmem:[#allocation1] ss:$4 sm:$0xff] %v1217
      %1780 = vst [vmem:[%s1703] ss:$4 sm:$0xff] %v1672
      %1781 = vst [vmem:[%s1705] ss:$4 sm:$0xff] %v1673
      %1782 = vst [vmem:[%s1707] ss:$4 sm:$0xff] %v1674
      %1783 = vst [vmem:[%s1709] ss:$4 sm:$0xff] %v1218
      %1784 = vst [vmem:[%s1711] ss:$4 sm:$0xff] %v1675
      %1785 = vst [vmem:[%s1713] ss:$4 sm:$0xff] %v1676
      %1786 = vst [vmem:[%s1715] ss:$4 sm:$0xff] %v1219
      %v1787 = vld.sshfl [vmem:[#allocation1] sm:$0xff pattern:$0x73625140]
      %v1788 = vld.sshfl [vmem:[#allocation1 + $0x20] sm:$0xff pattern:$0x73625140]
      %1789 = vst [vmem:[#allocation1] ss:$4 sm:$0xff] %v1677
      %1790 = vst [vmem:[%s1703] ss:$4 sm:$0xff] %v1678
      %1791 = vst [vmem:[%s1705] ss:$4 sm:$0xff] %v1679
      %1792 = vst [vmem:[%s1707] ss:$4 sm:$0xff] %v1220
      %1793 = vst [vmem:[%s1709] ss:$4 sm:$0xff] %v1680
      %1794 = vst [vmem:[%s1711] ss:$4 sm:$0xff] %v1681
      %1795 = vst [vmem:[%s1713] ss:$4 sm:$0xff] %v1221
      %1796 = vst [vmem:[%s1715] ss:$4 sm:$0xff] %v1682
      %v1797 = vld.sshfl [vmem:[#allocation1] sm:$0xff pattern:$0x73625140]
      %v1798 = vld.sshfl [vmem:[#allocation1 + $0x20] sm:$0xff pattern:$0x73625140]
      %1799 = vst [vmem:[#allocation1] ss:$4 sm:$0xff] %v1683
      %1800 = vst [vmem:[%s1703] ss:$4 sm:$0xff] %v1684
      %1801 = vst [vmem:[%s1705] ss:$4 sm:$0xff] %v1222
      %1802 = vst [vmem:[%s1707] ss:$4 sm:$0xff] %v1685
      %1803 = vst [vmem:[%s1709] ss:$4 sm:$0xff] %v1686
      %1804 = vst [vmem:[%s1711] ss:$4 sm:$0xff] %v1223
      %1805 = vst [vmem:[%s1713] ss:$4 sm:$0xff] %v1687
      %1806 = vst [vmem:[%s1715] ss:$4 sm:$0xff] %v1688
      %v1807 = vld.sshfl [vmem:[#allocation1] sm:$0xff pattern:$0x73625140]
      %v1808 = vld.sshfl [vmem:[#allocation1 + $0x20] sm:$0xff pattern:$0x73625140]
      %1809 = vst [vmem:[#allocation1] ss:$4 sm:$0xff] %v1689
      %1810 = vst [vmem:[%s1703] ss:$4 sm:$0xff] %v1224
      %1811 = vst [vmem:[%s1705] ss:$4 sm:$0xff] %v1690
      %1812 = vst [vmem:[%s1707] ss:$4 sm:$0xff] %v1691
      %1813 = vst [vmem:[%s1709] ss:$4 sm:$0xff] %v1225
      %1814 = vst [vmem:[%s1711] ss:$4 sm:$0xff] %v1692
      %1815 = vst [vmem:[%s1713] ss:$4 sm:$0xff] %v1693
      %1816 = vst [vmem:[%s1715] ss:$4 sm:$0xff] %v1694
      %v1817 = vld.sshfl [vmem:[#allocation1] sm:$0xff pattern:$0x73625140]
      %v1818 = vld.sshfl [vmem:[#allocation1 + $0x20] sm:$0xff pattern:$0x73625140]
      %1819 = vst [vmem:[#allocation1] ss:$4 sm:$0xff] %v1226
      %1820 = vst [vmem:[%s1703] ss:$4 sm:$0xff] %v1695
      %1821 = vst [vmem:[%s1705] ss:$4 sm:$0xff] %v1696
      %1822 = vst [vmem:[%s1707] ss:$4 sm:$0xff] %v1227
      %1823 = vst [vmem:[%s1709] ss:$4 sm:$0xff] %v1697
      %1824 = vst [vmem:[%s1711] ss:$4 sm:$0xff] %v1698
      %1825 = vst [vmem:[%s1713] ss:$4 sm:$0xff] %v1699
      %1826 = vst [vmem:[%s1715] ss:$4 sm:$0xff] %v1228
      %v1827 = vld.sshfl [vmem:[#allocation1] sm:$0xff pattern:$0x73625140]
      %v1828 = vld.sshfl [vmem:[#allocation1 + $0x20] sm:$0xff pattern:$0x73625140]
      %1829 = vst [vmem:[#allocation1] ss:$4 sm:$0xff] %v1700
      %1830 = vst [vmem:[%s1703] ss:$4 sm:$0xff] %v1701
      %v1831 = vld.sshfl [vmem:[#allocation1] sm:$0xff pattern:$0x73625140]
      %v1832 = vsel %vm1457, %v1717, 0
      %v1834 = vsel %vm1457, %v1718, 0
      %v1836 = vsel %vm1457, %v1727, 0
      %v1838 = vsel %vm1457, %v1728, 0
      %v1840 = vsel %vm1457, %v1737, 0
      %v1842 = vsel %vm1457, %v1738, 0
      %v1844 = vsel %vm1457, %v1747, 0
      %v1846 = vsel %vm1457, %v1748, 0
      %v1848 = vsel %vm1457, %v1757, 0
      %v1850 = vsel %vm1457, %v1758, 0
      %v1852 = vsel %vm1457, %v1767, 0
      %v1854 = vsel %vm1457, %v1768, 0
      %v1856 = vsel %vm1457, %v1777, 0
      %v1858 = vsel %vm1457, %v1778, 0
      %v1860 = vsel %vm1457, %v1787, 0
      %v1862 = vsel %vm1457, %v1788, 0
      %v1864 = vsel %vm1457, %v1797, 0
      %v1866 = vsel %vm1457, %v1798, 0
      %v1868 = vsel %vm1457, %v1807, 0
      %v1870 = vsel %vm1457, %v1808, 0
      %v1872 = vsel %vm1457, %v1817, 0
      %v1874 = vsel %vm1457, %v1818, 0
      %v1876 = vsel %vm1457, %v1827, 0
      %v1878 = vsel %vm1457, %v1828, 0
      %v1880 = vsel %vm1457, %v1831, 0
      %1882 = vmatpush.msra.mxu0 0.0
      %1883 = vmatpush.msra.mxu0 0.0
      %1884 = vmatpush.msra.mxu0 0.0
      %1885 = vmatpush.msra.mxu0 0.0
      %1886 = vmatpush.msra.mxu0 0.0
      %1887 = vmatpush.msra.mxu0 0.0
      %1888 = vmatpush.msra.mxu0 0.0
      %1889 = vmatpush.msra.mxu0 0.0
      %1890 = vmatpush.msra.mxu0 0.0
      %1891 = vmatpush.msra.mxu0 0.0
      %1892 = vmatpush.msra.mxu0 0.0
      %1893 = vmatpush.msra.mxu0 %v1510
      %1894 = vmatpush.msra.mxu0 %v282
      %1895 = vmatpush.msra.mxu0 %v281
      %1896 = vmatpush.msra.mxu0 %v280
      %1897 = vmatpush.msra.mxu0 %v279
      %1898 = vmatmul.f32.gmra.mxu0 %v1832
      %v1899 = vpop.f32.mrf.mxu0
      %v1900 = vadd.f32 0.0, %v1899
      %1901 = vmatmul.f32.gmra.mxu0 %v1834
      %v1902 = vpop.f32.mrf.mxu0
      %v1903 = vadd.f32 0.0, %v1902
      %1904 = vmatmul.f32.gmra.mxu0 %v1836
      %v1905 = vpop.f32.mrf.mxu0
      %v1906 = vadd.f32 0.0, %v1905
      %1907 = vmatmul.f32.gmra.mxu0 %v1838
      %v1908 = vpop.f32.mrf.mxu0
      %v1909 = vadd.f32 0.0, %v1908
      %1910 = vmatmul.f32.gmra.mxu0 %v1840
      %v1911 = vpop.f32.mrf.mxu0
      %v1912 = vadd.f32 0.0, %v1911
      %1913 = vmatmul.f32.gmra.mxu0 %v1842
      %v1914 = vpop.f32.mrf.mxu0
      %v1915 = vadd.f32 0.0, %v1914
      %1916 = vmatmul.f32.gmra.mxu0 %v1844
      %v1917 = vpop.f32.mrf.mxu0
      %v1918 = vadd.f32 0.0, %v1917
      %1919 = vmatmul.f32.gmra.mxu0 %v1846
      %v1920 = vpop.f32.mrf.mxu0
      %v1921 = vadd.f32 0.0, %v1920
      %1922 = vmatmul.f32.gmra.mxu0 %v1848
      %v1923 = vpop.f32.mrf.mxu0
      %v1924 = vadd.f32 0.0, %v1923
      %1925 = vmatmul.f32.gmra.mxu0 %v1850
      %v1926 = vpop.f32.mrf.mxu0
      %v1927 = vadd.f32 0.0, %v1926
      %1928 = vmatmul.f32.gmra.mxu0 %v1852
      %v1929 = vpop.f32.mrf.mxu0
      %v1930 = vadd.f32 0.0, %v1929
      %1931 = vmatmul.f32.gmra.mxu0 %v1854
      %v1932 = vpop.f32.mrf.mxu0
      %v1933 = vadd.f32 0.0, %v1932
      %1934 = vmatmul.f32.gmra.mxu0 %v1856
      %v1935 = vpop.f32.mrf.mxu0
      %v1936 = vadd.f32 0.0, %v1935
      %1937 = vmatmul.f32.gmra.mxu0 %v1858
      %v1938 = vpop.f32.mrf.mxu0
      %v1939 = vadd.f32 0.0, %v1938
      %1940 = vmatmul.f32.gmra.mxu0 %v1860
      %v1941 = vpop.f32.mrf.mxu0
      %v1942 = vadd.f32 0.0, %v1941
      %1943 = vmatmul.f32.gmra.mxu0 %v1862
      %v1944 = vpop.f32.mrf.mxu0
      %v1945 = vadd.f32 0.0, %v1944
      %1946 = vmatmul.f32.gmra.mxu0 %v1864
      %v1947 = vpop.f32.mrf.mxu0
      %v1948 = vadd.f32 0.0, %v1947
      %1949 = vmatmul.f32.gmra.mxu0 %v1866
      %v1950 = vpop.f32.mrf.mxu0
      %v1951 = vadd.f32 0.0, %v1950
      %1952 = vmatmul.f32.gmra.mxu0 %v1868
      %v1953 = vpop.f32.mrf.mxu0
      %v1954 = vadd.f32 0.0, %v1953
      %1955 = vmatmul.f32.gmra.mxu0 %v1870
      %v1956 = vpop.f32.mrf.mxu0
      %v1957 = vadd.f32 0.0, %v1956
      %1958 = vmatmul.f32.gmra.mxu0 %v1872
      %v1959 = vpop.f32.mrf.mxu0
      %v1960 = vadd.f32 0.0, %v1959
      %1961 = vmatmul.f32.gmra.mxu0 %v1874
      %v1962 = vpop.f32.mrf.mxu0
      %v1963 = vadd.f32 0.0, %v1962
      %1964 = vmatmul.f32.gmra.mxu0 %v1876
      %v1965 = vpop.f32.mrf.mxu0
      %v1966 = vadd.f32 0.0, %v1965
      %1967 = vmatmul.f32.gmra.mxu0 %v1878
      %v1968 = vpop.f32.mrf.mxu0
      %v1969 = vadd.f32 0.0, %v1968
      %1970 = vmatmul.f32.gmra.mxu0 %v1880
      %v1971 = vpop.f32.mrf.mxu0
      %v1972 = vadd.f32 0.0, %v1971
      %1973 = vdwg.mxu0
      %v1999 = vrot.slane %v1530, 2
      %v2000 = vrot.slane %v1530, 4
      %v2001 = vrot.slane %v1530, 6
      %v2002 = vrot.slane %v1533, 2
      %v2003 = vrot.slane %v1533, 4
      %v2004 = vrot.slane %v1533, 6
      %v2005 = vrot.slane %v1536, 2
      %v2006 = vrot.slane %v1536, 4
      %v2007 = vrot.slane %v1536, 6
      %v2008 = vrot.slane %v1539, 2
      %v2009 = vrot.slane %v1539, 4
      %v2010 = vrot.slane %v1539, 6
      %v2011 = vrot.slane %v1542, 2
      %v2012 = vrot.slane %v1542, 4
      %v2013 = vrot.slane %v1542, 6
      %v2014 = vrot.slane %v1545, 2
      %v2015 = vrot.slane %v1545, 4
      %v2016 = vrot.slane %v1545, 6
      %v2017 = vrot.slane %v1548, 2
      %v2018 = vrot.slane %v1548, 4
      %v2019 = vrot.slane %v1548, 6
      %v2020 = vrot.slane %v1551, 2
      %v2021 = vrot.slane %v1551, 4
      %v2022 = vrot.slane %v1551, 6
      %v2023 = vrot.slane %v1554, 2
      %v2024 = vrot.slane %v1554, 4
      %v2025 = vrot.slane %v1554, 6
      %v2026 = vrot.slane %v1557, 2
      %v2027 = vrot.slane %v1557, 4
      %v2028 = vrot.slane %v1557, 6
      %v2029 = vrot.slane %v1560, 2
      %v2030 = vrot.slane %v1560, 4
      %v2031 = vrot.slane %v1560, 6
      %v2032 = vrot.slane %v1563, 2
      %v2033 = vrot.slane %v1563, 4
      %v2034 = vrot.slane %v1563, 6
      %v2035 = vrot.slane %v1566, 2
      %v2036 = vrot.slane %v1566, 4
      %v2037 = vrot.slane %v1566, 6
      %v2038 = vrot.slane %v1569, 2
      %v2039 = vrot.slane %v1569, 4
      %v2040 = vrot.slane %v1569, 6
      %v2041 = vrot.slane %v1572, 2
      %v2042 = vrot.slane %v1572, 4
      %v2043 = vrot.slane %v1572, 6
      %v2044 = vrot.slane %v1575, 2
      %v2045 = vrot.slane %v1575, 4
      %v2046 = vrot.slane %v1575, 6
      %v2047 = vrot.slane %v1578, 2
      %v2048 = vrot.slane %v1578, 4
      %v2049 = vrot.slane %v1578, 6
      %v2050 = vrot.slane %v1581, 2
      %v2051 = vrot.slane %v1581, 4
      %v2052 = vrot.slane %v1581, 6
      %v2053 = vrot.slane %v1584, 2
      %v2054 = vrot.slane %v1584, 4
      %v2055 = vrot.slane %v1584, 6
      %v2056 = vrot.slane %v1587, 2
      %v2057 = vrot.slane %v1587, 4
      %v2058 = vrot.slane %v1587, 6
      %v2059 = vrot.slane %v1590, 2
      %v2060 = vrot.slane %v1590, 4
      %v2061 = vrot.slane %v1590, 6
      %v2062 = vrot.slane %v1593, 2
      %v2063 = vrot.slane %v1593, 4
      %v2064 = vrot.slane %v1593, 6
      %v2065 = vrot.slane %v1596, 2
      %v2066 = vrot.slane %v1596, 4
      %v2067 = vrot.slane %v1596, 6
      %v2068 = vrot.slane %v1599, 2
      %v2069 = vrot.slane %v1599, 4
      %v2070 = vrot.slane %v1599, 6
      %v2071 = vrot.slane %v1602, 2
      %v2097 = vrot.slane %v1900, 2
      %v2098 = vrot.slane %v1900, 4
      %v2099 = vrot.slane %v1900, 6
      %v2100 = vrot.slane %v1903, 2
      %v2101 = vrot.slane %v1903, 4
      %v2102 = vrot.slane %v1903, 6
      %v2103 = vrot.slane %v1906, 2
      %v2104 = vrot.slane %v1906, 4
      %v2105 = vrot.slane %v1906, 6
      %v2106 = vrot.slane %v1909, 2
      %v2107 = vrot.slane %v1909, 4
      %v2108 = vrot.slane %v1909, 6
      %v2109 = vrot.slane %v1912, 2
      %v2110 = vrot.slane %v1912, 4
      %v2111 = vrot.slane %v1912, 6
      %v2112 = vrot.slane %v1915, 2
      %v2113 = vrot.slane %v1915, 4
      %v2114 = vrot.slane %v1915, 6
      %v2115 = vrot.slane %v1918, 2
      %v2116 = vrot.slane %v1918, 4
      %v2117 = vrot.slane %v1918, 6
      %v2118 = vrot.slane %v1921, 2
      %v2119 = vrot.slane %v1921, 4
      %v2120 = vrot.slane %v1921, 6
      %v2121 = vrot.slane %v1924, 2
      %v2122 = vrot.slane %v1924, 4
      %v2123 = vrot.slane %v1924, 6
      %v2124 = vrot.slane %v1927, 2
      %v2125 = vrot.slane %v1927, 4
      %v2126 = vrot.slane %v1927, 6
      %v2127 = vrot.slane %v1930, 2
      %v2128 = vrot.slane %v1930, 4
      %v2129 = vrot.slane %v1930, 6
      %v2130 = vrot.slane %v1933, 2
      %v2131 = vrot.slane %v1933, 4
      %v2132 = vrot.slane %v1933, 6
      %v2133 = vrot.slane %v1936, 2
      %v2134 = vrot.slane %v1936, 4
      %v2135 = vrot.slane %v1936, 6
      %v2136 = vrot.slane %v1939, 2
      %v2137 = vrot.slane %v1939, 4
      %v2138 = vrot.slane %v1939, 6
      %v2139 = vrot.slane %v1942, 2
      %v2140 = vrot.slane %v1942, 4
      %v2141 = vrot.slane %v1942, 6
      %v2142 = vrot.slane %v1945, 2
      %v2143 = vrot.slane %v1945, 4
      %v2144 = vrot.slane %v1945, 6
      %v2145 = vrot.slane %v1948, 2
      %v2146 = vrot.slane %v1948, 4
      %v2147 = vrot.slane %v1948, 6
      %v2148 = vrot.slane %v1951, 2
      %v2149 = vrot.slane %v1951, 4
      %v2150 = vrot.slane %v1951, 6
      %v2151 = vrot.slane %v1954, 2
      %v2152 = vrot.slane %v1954, 4
      %v2153 = vrot.slane %v1954, 6
      %v2154 = vrot.slane %v1957, 2
      %v2155 = vrot.slane %v1957, 4
      %v2156 = vrot.slane %v1957, 6
      %v2157 = vrot.slane %v1960, 2
      %v2158 = vrot.slane %v1960, 4
      %v2159 = vrot.slane %v1960, 6
      %v2160 = vrot.slane %v1963, 2
      %v2161 = vrot.slane %v1963, 4
      %v2162 = vrot.slane %v1963, 6
      %v2163 = vrot.slane %v1966, 2
      %v2164 = vrot.slane %v1966, 4
      %v2165 = vrot.slane %v1966, 6
      %v2166 = vrot.slane %v1969, 2
      %v2167 = vrot.slane %v1969, 4
      %v2168 = vrot.slane %v1969, 6
      %v2169 = vrot.slane %v1972, 2
      %2170 = vst [vmem:[#allocation1] ss:$4 sm:$0xff] %v1530
      %s2171 = scalar_lea.vmem [#allocation1], 1
      %2172 = vst [vmem:[%s2171] ss:$4 sm:$0xff] %v1999
      %s2173 = scalar_lea.vmem [#allocation1], 2
      %2174 = vst [vmem:[%s2173] ss:$4 sm:$0xff] %v2000
      %s2175 = scalar_lea.vmem [#allocation1], 3
      %2176 = vst [vmem:[%s2175] ss:$4 sm:$0xff] %v2001
      %s2177 = scalar_lea.vmem [#allocation1], 32
      %2178 = vst [vmem:[%s2177] ss:$4 sm:$0xff] %v1533
      %s2179 = scalar_lea.vmem [#allocation1], 33
      %2180 = vst [vmem:[%s2179] ss:$4 sm:$0xff] %v2002
      %s2181 = scalar_lea.vmem [#allocation1], 34
      %2182 = vst [vmem:[%s2181] ss:$4 sm:$0xff] %v2003
      %v2183 = vld.sshfl [vmem:[#allocation1] sm:$0xff pattern:$0x73625140]
      %v2184 = vld.sshfl [vmem:[#allocation1 + $0x20] sm:$0xff pattern:$0x73625140]
      %2185 = vst [vmem:[#allocation1] ss:$4 sm:$0xff] %v2004
      %2186 = vst [vmem:[%s2171] ss:$4 sm:$0xff] %v1536
      %2187 = vst [vmem:[%s2173] ss:$4 sm:$0xff] %v2005
      %2188 = vst [vmem:[%s2175] ss:$4 sm:$0xff] %v2006
      %2189 = vst [vmem:[%s2177] ss:$4 sm:$0xff] %v2007
      %2190 = vst [vmem:[%s2179] ss:$4 sm:$0xff] %v1539
      %2191 = vst [vmem:[%s2181] ss:$4 sm:$0xff] %v2008
      %v2192 = vld.sshfl [vmem:[#allocation1] sm:$0xff pattern:$0x73625140]
      %v2193 = vld.sshfl [vmem:[#allocation1 + $0x20] sm:$0xff pattern:$0x73625140]
      %2194 = vst [vmem:[#allocation1] ss:$4 sm:$0xff] %v2009
      %2195 = vst [vmem:[%s2171] ss:$4 sm:$0xff] %v2010
      %2196 = vst [vmem:[%s2173] ss:$4 sm:$0xff] %v1542
      %2197 = vst [vmem:[%s2175] ss:$4 sm:$0xff] %v2011
      %2198 = vst [vmem:[%s2177] ss:$4 sm:$0xff] %v2012
      %2199 = vst [vmem:[%s2179] ss:$4 sm:$0xff] %v2013
      %2200 = vst [vmem:[%s2181] ss:$4 sm:$0xff] %v1545
      %v2201 = vld.sshfl [vmem:[#allocation1] sm:$0xff pattern:$0x73625140]
      %v2202 = vld.sshfl [vmem:[#allocation1 + $0x20] sm:$0xff pattern:$0x73625140]
      %2203 = vst [vmem:[#allocation1] ss:$4 sm:$0xff] %v2014
      %2204 = vst [vmem:[%s2171] ss:$4 sm:$0xff] %v2015
      %2205 = vst [vmem:[%s2173] ss:$4 sm:$0xff] %v2016
      %2206 = vst [vmem:[%s2175] ss:$4 sm:$0xff] %v1548
      %2207 = vst [vmem:[%s2177] ss:$4 sm:$0xff] %v2017
      %2208 = vst [vmem:[%s2179] ss:$4 sm:$0xff] %v2018
      %2209 = vst [vmem:[%s2181] ss:$4 sm:$0xff] %v2019
      %v2210 = vld.sshfl [vmem:[#allocation1] sm:$0xff pattern:$0x73625140]
      %v2211 = vld.sshfl [vmem:[#allocation1 + $0x20] sm:$0xff pattern:$0x73625140]
      %2212 = vst [vmem:[#allocation1] ss:$4 sm:$0xff] %v1551
      %2213 = vst [vmem:[%s2171] ss:$4 sm:$0xff] %v2020
      %2214 = vst [vmem:[%s2173] ss:$4 sm:$0xff] %v2021
      %2215 = vst [vmem:[%s2175] ss:$4 sm:$0xff] %v2022
      %2216 = vst [vmem:[%s2177] ss:$4 sm:$0xff] %v1554
      %2217 = vst [vmem:[%s2179] ss:$4 sm:$0xff] %v2023
      %2218 = vst [vmem:[%s2181] ss:$4 sm:$0xff] %v2024
      %v2219 = vld.sshfl [vmem:[#allocation1] sm:$0xff pattern:$0x73625140]
      %v2220 = vld.sshfl [vmem:[#allocation1 + $0x20] sm:$0xff pattern:$0x73625140]
      %2221 = vst [vmem:[#allocation1] ss:$4 sm:$0xff] %v2025
      %2222 = vst [vmem:[%s2171] ss:$4 sm:$0xff] %v1557
      %2223 = vst [vmem:[%s2173] ss:$4 sm:$0xff] %v2026
      %2224 = vst [vmem:[%s2175] ss:$4 sm:$0xff] %v2027
      %2225 = vst [vmem:[%s2177] ss:$4 sm:$0xff] %v2028
      %2226 = vst [vmem:[%s2179] ss:$4 sm:$0xff] %v1560
      %2227 = vst [vmem:[%s2181] ss:$4 sm:$0xff] %v2029
      %v2228 = vld.sshfl [vmem:[#allocation1] sm:$0xff pattern:$0x73625140]
      %v2229 = vld.sshfl [vmem:[#allocation1 + $0x20] sm:$0xff pattern:$0x73625140]
      %2230 = vst [vmem:[#allocation1] ss:$4 sm:$0xff] %v2030
      %2231 = vst [vmem:[%s2171] ss:$4 sm:$0xff] %v2031
      %2232 = vst [vmem:[%s2173] ss:$4 sm:$0xff] %v1563
      %2233 = vst [vmem:[%s2175] ss:$4 sm:$0xff] %v2032
      %2234 = vst [vmem:[%s2177] ss:$4 sm:$0xff] %v2033
      %2235 = vst [vmem:[%s2179] ss:$4 sm:$0xff] %v2034
      %2236 = vst [vmem:[%s2181] ss:$4 sm:$0xff] %v1566
      %v2237 = vld.sshfl [vmem:[#allocation1] sm:$0xff pattern:$0x73625140]
      %v2238 = vld.sshfl [vmem:[#allocation1 + $0x20] sm:$0xff pattern:$0x73625140]
      %2239 = vst [vmem:[#allocation1] ss:$4 sm:$0xff] %v2035
      %2240 = vst [vmem:[%s2171] ss:$4 sm:$0xff] %v2036
      %2241 = vst [vmem:[%s2173] ss:$4 sm:$0xff] %v2037
      %2242 = vst [vmem:[%s2175] ss:$4 sm:$0xff] %v1569
      %2243 = vst [vmem:[%s2177] ss:$4 sm:$0xff] %v2038
      %2244 = vst [vmem:[%s2179] ss:$4 sm:$0xff] %v2039
      %2245 = vst [vmem:[%s2181] ss:$4 sm:$0xff] %v2040
      %v2246 = vld.sshfl [vmem:[#allocation1] sm:$0xff pattern:$0x73625140]
      %v2247 = vld.sshfl [vmem:[#allocation1 + $0x20] sm:$0xff pattern:$0x73625140]
      %2248 = vst [vmem:[#allocation1] ss:$4 sm:$0xff] %v1572
      %2249 = vst [vmem:[%s2171] ss:$4 sm:$0xff] %v2041
      %2250 = vst [vmem:[%s2173] ss:$4 sm:$0xff] %v2042
      %2251 = vst [vmem:[%s2175] ss:$4 sm:$0xff] %v2043
      %2252 = vst [vmem:[%s2177] ss:$4 sm:$0xff] %v1575
      %2253 = vst [vmem:[%s2179] ss:$4 sm:$0xff] %v2044
      %2254 = vst [vmem:[%s2181] ss:$4 sm:$0xff] %v2045
      %v2255 = vld.sshfl [vmem:[#allocation1] sm:$0xff pattern:$0x73625140]
      %v2256 = vld.sshfl [vmem:[#allocation1 + $0x20] sm:$0xff pattern:$0x73625140]
      %2257 = vst [vmem:[#allocation1] ss:$4 sm:$0xff] %v2046
      %2258 = vst [vmem:[%s2171] ss:$4 sm:$0xff] %v1578
      %2259 = vst [vmem:[%s2173] ss:$4 sm:$0xff] %v2047
      %2260 = vst [vmem:[%s2175] ss:$4 sm:$0xff] %v2048
      %2261 = vst [vmem:[%s2177] ss:$4 sm:$0xff] %v2049
      %2262 = vst [vmem:[%s2179] ss:$4 sm:$0xff] %v1581
      %2263 = vst [vmem:[%s2181] ss:$4 sm:$0xff] %v2050
      %v2264 = vld.sshfl [vmem:[#allocation1] sm:$0xff pattern:$0x73625140]
      %v2265 = vld.sshfl [vmem:[#allocation1 + $0x20] sm:$0xff pattern:$0x73625140]
      %2266 = vst [vmem:[#allocation1] ss:$4 sm:$0xff] %v2051
      %2267 = vst [vmem:[%s2171] ss:$4 sm:$0xff] %v2052
      %2268 = vst [vmem:[%s2173] ss:$4 sm:$0xff] %v1584
      %2269 = vst [vmem:[%s2175] ss:$4 sm:$0xff] %v2053
      %2270 = vst [vmem:[%s2177] ss:$4 sm:$0xff] %v2054
      %2271 = vst [vmem:[%s2179] ss:$4 sm:$0xff] %v2055
      %2272 = vst [vmem:[%s2181] ss:$4 sm:$0xff] %v1587
      %v2273 = vld.sshfl [vmem:[#allocation1] sm:$0xff pattern:$0x73625140]
      %v2274 = vld.sshfl [vmem:[#allocation1 + $0x20] sm:$0xff pattern:$0x73625140]
      %2275 = vst [vmem:[#allocation1] ss:$4 sm:$0xff] %v2056
      %2276 = vst [vmem:[%s2171] ss:$4 sm:$0xff] %v2057
      %2277 = vst [vmem:[%s2173] ss:$4 sm:$0xff] %v2058
      %2278 = vst [vmem:[%s2175] ss:$4 sm:$0xff] %v1590
      %2279 = vst [vmem:[%s2177] ss:$4 sm:$0xff] %v2059
      %2280 = vst [vmem:[%s2179] ss:$4 sm:$0xff] %v2060
      %2281 = vst [vmem:[%s2181] ss:$4 sm:$0xff] %v2061
      %v2282 = vld.sshfl [vmem:[#allocation1] sm:$0xff pattern:$0x73625140]
      %v2283 = vld.sshfl [vmem:[#allocation1 + $0x20] sm:$0xff pattern:$0x73625140]
      %2284 = vst [vmem:[#allocation1] ss:$4 sm:$0xff] %v1593
      %2285 = vst [vmem:[%s2171] ss:$4 sm:$0xff] %v2062
      %2286 = vst [vmem:[%s2173] ss:$4 sm:$0xff] %v2063
      %2287 = vst [vmem:[%s2175] ss:$4 sm:$0xff] %v2064
      %2288 = vst [vmem:[%s2177] ss:$4 sm:$0xff] %v1596
      %2289 = vst [vmem:[%s2179] ss:$4 sm:$0xff] %v2065
      %2290 = vst [vmem:[%s2181] ss:$4 sm:$0xff] %v2066
      %v2291 = vld.sshfl [vmem:[#allocation1] sm:$0xff pattern:$0x73625140]
      %v2292 = vld.sshfl [vmem:[#allocation1 + $0x20] sm:$0xff pattern:$0x73625140]
      %2293 = vst [vmem:[#allocation1] ss:$4 sm:$0xff] %v2067
      %2294 = vst [vmem:[%s2171] ss:$4 sm:$0xff] %v1599
      %2295 = vst [vmem:[%s2173] ss:$4 sm:$0xff] %v2068
      %2296 = vst [vmem:[%s2175] ss:$4 sm:$0xff] %v2069
      %2297 = vst [vmem:[%s2177] ss:$4 sm:$0xff] %v2070
      %2298 = vst [vmem:[%s2179] ss:$4 sm:$0xff] %v1602
      %2299 = vst [vmem:[%s2181] ss:$4 sm:$0xff] %v2071
      %v2300 = vld.sshfl [vmem:[#allocation1] sm:$0xff pattern:$0x73625140]
      %v2301 = vld.sshfl [vmem:[#allocation1 + $0x20] sm:$0xff pattern:$0x73625140]
      %2330 = vst [vmem:[#allocation1] ss:$4 sm:$0xff] %v1900
      %s2331 = scalar_lea.vmem [#allocation1], 1
      %2332 = vst [vmem:[%s2331] ss:$4 sm:$0xff] %v2097
      %s2333 = scalar_lea.vmem [#allocation1], 2
      %2334 = vst [vmem:[%s2333] ss:$4 sm:$0xff] %v2098
      %s2335 = scalar_lea.vmem [#allocation1], 3
      %2336 = vst [vmem:[%s2335] ss:$4 sm:$0xff] %v2099
      %s2337 = scalar_lea.vmem [#allocation1], 32
      %2338 = vst [vmem:[%s2337] ss:$4 sm:$0xff] %v1903
      %s2339 = scalar_lea.vmem [#allocation1], 33
      %2340 = vst [vmem:[%s2339] ss:$4 sm:$0xff] %v2100
      %s2341 = scalar_lea.vmem [#allocation1], 34
      %2342 = vst [vmem:[%s2341] ss:$4 sm:$0xff] %v2101
      %v2343 = vld.sshfl [vmem:[#allocation1] sm:$0xff pattern:$0x73625140]
      %v2344 = vld.sshfl [vmem:[#allocation1 + $0x20] sm:$0xff pattern:$0x73625140]
      %2345 = vst [vmem:[#allocation1] ss:$4 sm:$0xff] %v2102
      %2346 = vst [vmem:[%s2331] ss:$4 sm:$0xff] %v1906
      %2347 = vst [vmem:[%s2333] ss:$4 sm:$0xff] %v2103
      %2348 = vst [vmem:[%s2335] ss:$4 sm:$0xff] %v2104
      %2349 = vst [vmem:[%s2337] ss:$4 sm:$0xff] %v2105
      %2350 = vst [vmem:[%s2339] ss:$4 sm:$0xff] %v1909
      %2351 = vst [vmem:[%s2341] ss:$4 sm:$0xff] %v2106
      %v2352 = vld.sshfl [vmem:[#allocation1] sm:$0xff pattern:$0x73625140]
      %v2353 = vld.sshfl [vmem:[#allocation1 + $0x20] sm:$0xff pattern:$0x73625140]
      %2354 = vst [vmem:[#allocation1] ss:$4 sm:$0xff] %v2107
      %2355 = vst [vmem:[%s2331] ss:$4 sm:$0xff] %v2108
      %2356 = vst [vmem:[%s2333] ss:$4 sm:$0xff] %v1912
      %2357 = vst [vmem:[%s2335] ss:$4 sm:$0xff] %v2109
      %2358 = vst [vmem:[%s2337] ss:$4 sm:$0xff] %v2110
      %2359 = vst [vmem:[%s2339] ss:$4 sm:$0xff] %v2111
      %2360 = vst [vmem:[%s2341] ss:$4 sm:$0xff] %v1915
      %v2361 = vld.sshfl [vmem:[#allocation1] sm:$0xff pattern:$0x73625140]
      %v2362 = vld.sshfl [vmem:[#allocation1 + $0x20] sm:$0xff pattern:$0x73625140]
      %2363 = vst [vmem:[#allocation1] ss:$4 sm:$0xff] %v2112
      %2364 = vst [vmem:[%s2331] ss:$4 sm:$0xff] %v2113
      %2365 = vst [vmem:[%s2333] ss:$4 sm:$0xff] %v2114
      %2366 = vst [vmem:[%s2335] ss:$4 sm:$0xff] %v1918
      %2367 = vst [vmem:[%s2337] ss:$4 sm:$0xff] %v2115
      %2368 = vst [vmem:[%s2339] ss:$4 sm:$0xff] %v2116
      %2369 = vst [vmem:[%s2341] ss:$4 sm:$0xff] %v2117
      %v2370 = vld.sshfl [vmem:[#allocation1] sm:$0xff pattern:$0x73625140]
      %v2371 = vld.sshfl [vmem:[#allocation1 + $0x20] sm:$0xff pattern:$0x73625140]
      %2372 = vst [vmem:[#allocation1] ss:$4 sm:$0xff] %v1921
      %2373 = vst [vmem:[%s2331] ss:$4 sm:$0xff] %v2118
      %2374 = vst [vmem:[%s2333] ss:$4 sm:$0xff] %v2119
      %2375 = vst [vmem:[%s2335] ss:$4 sm:$0xff] %v2120
      %2376 = vst [vmem:[%s2337] ss:$4 sm:$0xff] %v1924
      %2377 = vst [vmem:[%s2339] ss:$4 sm:$0xff] %v2121
      %2378 = vst [vmem:[%s2341] ss:$4 sm:$0xff] %v2122
      %v2379 = vld.sshfl [vmem:[#allocation1] sm:$0xff pattern:$0x73625140]
      %v2380 = vld.sshfl [vmem:[#allocation1 + $0x20] sm:$0xff pattern:$0x73625140]
      %2381 = vst [vmem:[#allocation1] ss:$4 sm:$0xff] %v2123
      %2382 = vst [vmem:[%s2331] ss:$4 sm:$0xff] %v1927
      %2383 = vst [vmem:[%s2333] ss:$4 sm:$0xff] %v2124
      %2384 = vst [vmem:[%s2335] ss:$4 sm:$0xff] %v2125
      %2385 = vst [vmem:[%s2337] ss:$4 sm:$0xff] %v2126
      %2386 = vst [vmem:[%s2339] ss:$4 sm:$0xff] %v1930
      %2387 = vst [vmem:[%s2341] ss:$4 sm:$0xff] %v2127
      %v2388 = vld.sshfl [vmem:[#allocation1] sm:$0xff pattern:$0x73625140]
      %v2389 = vld.sshfl [vmem:[#allocation1 + $0x20] sm:$0xff pattern:$0x73625140]
      %2390 = vst [vmem:[#allocation1] ss:$4 sm:$0xff] %v2128
      %2391 = vst [vmem:[%s2331] ss:$4 sm:$0xff] %v2129
      %2392 = vst [vmem:[%s2333] ss:$4 sm:$0xff] %v1933
      %2393 = vst [vmem:[%s2335] ss:$4 sm:$0xff] %v2130
      %2394 = vst [vmem:[%s2337] ss:$4 sm:$0xff] %v2131
      %2395 = vst [vmem:[%s2339] ss:$4 sm:$0xff] %v2132
      %2396 = vst [vmem:[%s2341] ss:$4 sm:$0xff] %v1936
      %v2397 = vld.sshfl [vmem:[#allocation1] sm:$0xff pattern:$0x73625140]
      %v2398 = vld.sshfl [vmem:[#allocation1 + $0x20] sm:$0xff pattern:$0x73625140]
      %2399 = vst [vmem:[#allocation1] ss:$4 sm:$0xff] %v2133
      %2400 = vst [vmem:[%s2331] ss:$4 sm:$0xff] %v2134
      %2401 = vst [vmem:[%s2333] ss:$4 sm:$0xff] %v2135
      %2402 = vst [vmem:[%s2335] ss:$4 sm:$0xff] %v1939
      %2403 = vst [vmem:[%s2337] ss:$4 sm:$0xff] %v2136
      %2404 = vst [vmem:[%s2339] ss:$4 sm:$0xff] %v2137
      %2405 = vst [vmem:[%s2341] ss:$4 sm:$0xff] %v2138
      %v2406 = vld.sshfl [vmem:[#allocation1] sm:$0xff pattern:$0x73625140]
      %v2407 = vld.sshfl [vmem:[#allocation1 + $0x20] sm:$0xff pattern:$0x73625140]
      %2408 = vst [vmem:[#allocation1] ss:$4 sm:$0xff] %v1942
      %2409 = vst [vmem:[%s2331] ss:$4 sm:$0xff] %v2139
      %2410 = vst [vmem:[%s2333] ss:$4 sm:$0xff] %v2140
      %2411 = vst [vmem:[%s2335] ss:$4 sm:$0xff] %v2141
      %2412 = vst [vmem:[%s2337] ss:$4 sm:$0xff] %v1945
      %2413 = vst [vmem:[%s2339] ss:$4 sm:$0xff] %v2142
      %2414 = vst [vmem:[%s2341] ss:$4 sm:$0xff] %v2143
      %v2415 = vld.sshfl [vmem:[#allocation1] sm:$0xff pattern:$0x73625140]
      %v2416 = vld.sshfl [vmem:[#allocation1 + $0x20] sm:$0xff pattern:$0x73625140]
      %2417 = vst [vmem:[#allocation1] ss:$4 sm:$0xff] %v2144
      %2418 = vst [vmem:[%s2331] ss:$4 sm:$0xff] %v1948
      %2419 = vst [vmem:[%s2333] ss:$4 sm:$0xff] %v2145
      %2420 = vst [vmem:[%s2335] ss:$4 sm:$0xff] %v2146
      %2421 = vst [vmem:[%s2337] ss:$4 sm:$0xff] %v2147
      %2422 = vst [vmem:[%s2339] ss:$4 sm:$0xff] %v1951
      %2423 = vst [vmem:[%s2341] ss:$4 sm:$0xff] %v2148
      %v2424 = vld.sshfl [vmem:[#allocation1] sm:$0xff pattern:$0x73625140]
      %v2425 = vld.sshfl [vmem:[#allocation1 + $0x20] sm:$0xff pattern:$0x73625140]
      %2426 = vst [vmem:[#allocation1] ss:$4 sm:$0xff] %v2149
      %2427 = vst [vmem:[%s2331] ss:$4 sm:$0xff] %v2150
      %2428 = vst [vmem:[%s2333] ss:$4 sm:$0xff] %v1954
      %2429 = vst [vmem:[%s2335] ss:$4 sm:$0xff] %v2151
      %2430 = vst [vmem:[%s2337] ss:$4 sm:$0xff] %v2152
      %2431 = vst [vmem:[%s2339] ss:$4 sm:$0xff] %v2153
      %2432 = vst [vmem:[%s2341] ss:$4 sm:$0xff] %v1957
      %v2433 = vld.sshfl [vmem:[#allocation1] sm:$0xff pattern:$0x73625140]
      %v2434 = vld.sshfl [vmem:[#allocation1 + $0x20] sm:$0xff pattern:$0x73625140]
      %2435 = vst [vmem:[#allocation1] ss:$4 sm:$0xff] %v2154
      %2436 = vst [vmem:[%s2331] ss:$4 sm:$0xff] %v2155
      %2437 = vst [vmem:[%s2333] ss:$4 sm:$0xff] %v2156
      %2438 = vst [vmem:[%s2335] ss:$4 sm:$0xff] %v1960
      %2439 = vst [vmem:[%s2337] ss:$4 sm:$0xff] %v2157
      %2440 = vst [vmem:[%s2339] ss:$4 sm:$0xff] %v2158
      %2441 = vst [vmem:[%s2341] ss:$4 sm:$0xff] %v2159
      %v2442 = vld.sshfl [vmem:[#allocation1] sm:$0xff pattern:$0x73625140]
      %v2443 = vld.sshfl [vmem:[#allocation1 + $0x20] sm:$0xff pattern:$0x73625140]
      %2444 = vst [vmem:[#allocation1] ss:$4 sm:$0xff] %v1963
      %2445 = vst [vmem:[%s2331] ss:$4 sm:$0xff] %v2160
      %2446 = vst [vmem:[%s2333] ss:$4 sm:$0xff] %v2161
      %2447 = vst [vmem:[%s2335] ss:$4 sm:$0xff] %v2162
      %2448 = vst [vmem:[%s2337] ss:$4 sm:$0xff] %v1966
      %2449 = vst [vmem:[%s2339] ss:$4 sm:$0xff] %v2163
      %2450 = vst [vmem:[%s2341] ss:$4 sm:$0xff] %v2164
      %v2451 = vld.sshfl [vmem:[#allocation1] sm:$0xff pattern:$0x73625140]
      %v2452 = vld.sshfl [vmem:[#allocation1 + $0x20] sm:$0xff pattern:$0x73625140]
      %2453 = vst [vmem:[#allocation1] ss:$4 sm:$0xff] %v2165
      %2454 = vst [vmem:[%s2331] ss:$4 sm:$0xff] %v1969
      %2455 = vst [vmem:[%s2333] ss:$4 sm:$0xff] %v2166
      %2456 = vst [vmem:[%s2335] ss:$4 sm:$0xff] %v2167
      %2457 = vst [vmem:[%s2337] ss:$4 sm:$0xff] %v2168
      %2458 = vst [vmem:[%s2339] ss:$4 sm:$0xff] %v1972
      %2459 = vst [vmem:[%s2341] ss:$4 sm:$0xff] %v2169
      %v2460 = vld.sshfl [vmem:[#allocation1] sm:$0xff pattern:$0x73625140]
      %v2461 = vld.sshfl [vmem:[#allocation1 + $0x20] sm:$0xff pattern:$0x73625140]
      %2462 = vrot.lane.b32.xlu0 %v2343, 4
      %v2463 = vpop.permute.xlu0 %2462
      %2464 = vrot.lane.b32.xlu0 %v2344, 4
      %v2465 = vpop.permute.xlu0 %2464
      %2466 = vrot.lane.b32.xlu0 %v2352, 4
      %v2467 = vpop.permute.xlu0 %2466
      %2468 = vrot.lane.b32.xlu0 %v2353, 4
      %v2469 = vpop.permute.xlu0 %2468
      %2470 = vrot.lane.b32.xlu0 %v2361, 4
      %v2471 = vpop.permute.xlu0 %2470
      %2472 = vrot.lane.b32.xlu0 %v2362, 4
      %v2473 = vpop.permute.xlu0 %2472
      %2474 = vrot.lane.b32.xlu0 %v2370, 4
      %v2475 = vpop.permute.xlu0 %2474
      %2476 = vrot.lane.b32.xlu0 %v2371, 4
      %v2477 = vpop.permute.xlu0 %2476
      %2478 = vrot.lane.b32.xlu0 %v2379, 4
      %v2479 = vpop.permute.xlu0 %2478
      %2480 = vrot.lane.b32.xlu0 %v2380, 4
      %v2481 = vpop.permute.xlu0 %2480
      %2482 = vrot.lane.b32.xlu0 %v2388, 4
      %v2483 = vpop.permute.xlu0 %2482
      %2484 = vrot.lane.b32.xlu0 %v2389, 4
      %v2485 = vpop.permute.xlu0 %2484
      %2486 = vrot.lane.b32.xlu0 %v2397, 4
      %v2487 = vpop.permute.xlu0 %2486
      %2488 = vrot.lane.b32.xlu0 %v2398, 4
      %v2489 = vpop.permute.xlu0 %2488
      %2490 = vrot.lane.b32.xlu0 %v2406, 4
      %v2491 = vpop.permute.xlu0 %2490
      %2492 = vrot.lane.b32.xlu0 %v2407, 4
      %v2493 = vpop.permute.xlu0 %2492
      %2494 = vrot.lane.b32.xlu0 %v2415, 4
      %v2495 = vpop.permute.xlu0 %2494
      %2496 = vrot.lane.b32.xlu0 %v2416, 4
      %v2497 = vpop.permute.xlu0 %2496
      %2498 = vrot.lane.b32.xlu0 %v2424, 4
      %v2499 = vpop.permute.xlu0 %2498
      %2500 = vrot.lane.b32.xlu0 %v2425, 4
      %v2501 = vpop.permute.xlu0 %2500
      %2502 = vrot.lane.b32.xlu0 %v2433, 4
      %v2503 = vpop.permute.xlu0 %2502
      %2504 = vrot.lane.b32.xlu0 %v2434, 4
      %v2505 = vpop.permute.xlu0 %2504
      %2506 = vrot.lane.b32.xlu0 %v2442, 4
      %v2507 = vpop.permute.xlu0 %2506
      %2508 = vrot.lane.b32.xlu0 %v2443, 4
      %v2509 = vpop.permute.xlu0 %2508
      %2510 = vrot.lane.b32.xlu0 %v2451, 4
      %v2511 = vpop.permute.xlu0 %2510
      %2512 = vrot.lane.b32.xlu0 %v2452, 4
      %v2513 = vpop.permute.xlu0 %2512
      %2514 = vrot.lane.b32.xlu0 %v2460, 4
      %v2515 = vpop.permute.xlu0 %2514
      %2516 = vrot.lane.b32.xlu0 %v2461, 4
      %v2517 = vpop.permute.xlu0 %2516
      %v2546 = vsel %vm686, %v2183, %v2463
      %v2547 = vsel %vm686, %v2184, %v2465
      %v2548 = vsel %vm686, %v2192, %v2467
      %v2549 = vsel %vm686, %v2193, %v2469
      %v2550 = vsel %vm686, %v2201, %v2471
      %v2551 = vsel %vm686, %v2202, %v2473
      %v2552 = vsel %vm686, %v2210, %v2475
      %v2553 = vsel %vm686, %v2211, %v2477
      %v2554 = vsel %vm686, %v2219, %v2479
      %v2555 = vsel %vm686, %v2220, %v2481
      %v2556 = vsel %vm686, %v2228, %v2483
      %v2557 = vsel %vm686, %v2229, %v2485
      %v2558 = vsel %vm686, %v2237, %v2487
      %v2559 = vsel %vm686, %v2238, %v2489
      %v2560 = vsel %vm686, %v2246, %v2491
      %v2561 = vsel %vm686, %v2247, %v2493
      %v2562 = vsel %vm686, %v2255, %v2495
      %v2563 = vsel %vm686, %v2256, %v2497
      %v2564 = vsel %vm686, %v2264, %v2499
      %v2565 = vsel %vm686, %v2265, %v2501
      %v2566 = vsel %vm686, %v2273, %v2503
      %v2567 = vsel %vm686, %v2274, %v2505
      %v2568 = vsel %vm686, %v2282, %v2507
      %v2569 = vsel %vm686, %v2283, %v2509
      %v2570 = vsel %vm686, %v2291, %v2511
      %v2571 = vsel %vm686, %v2292, %v2513
      %v2572 = vsel %vm686, %v2300, %v2515
      %v2573 = vsel %vm686, %v2301, %v2517
      %v2574 = vld [vmem:[%s2] sm:$0x1]
      %v2576 = vperm.slane %v2574, 0
      %v2578 = vadd.f32 %v2546, %v2576
      %v2579 = vadd.f32 %v2547, %v2576
      %v2580 = vadd.f32 %v2548, %v2576
      %v2581 = vadd.f32 %v2549, %v2576
      %v2582 = vadd.f32 %v2550, %v2576
      %v2583 = vadd.f32 %v2551, %v2576
      %v2584 = vadd.f32 %v2552, %v2576
      %v2585 = vadd.f32 %v2553, %v2576
      %v2586 = vadd.f32 %v2554, %v2576
      %v2587 = vadd.f32 %v2555, %v2576
      %v2588 = vadd.f32 %v2556, %v2576
      %v2589 = vadd.f32 %v2557, %v2576
      %v2590 = vadd.f32 %v2558, %v2576
      %v2591 = vadd.f32 %v2559, %v2576
      %v2592 = vadd.f32 %v2560, %v2576
      %v2593 = vadd.f32 %v2561, %v2576
      %v2594 = vadd.f32 %v2562, %v2576
      %v2595 = vadd.f32 %v2563, %v2576
      %v2596 = vadd.f32 %v2564, %v2576
      %v2597 = vadd.f32 %v2565, %v2576
      %v2598 = vadd.f32 %v2566, %v2576
      %v2599 = vadd.f32 %v2567, %v2576
      %v2600 = vadd.f32 %v2568, %v2576
      %v2601 = vadd.f32 %v2569, %v2576
      %v2602 = vadd.f32 %v2570, %v2576
      %v2603 = vadd.f32 %v2571, %v2576
      %v2604 = vadd.f32 %v2572, %v2576
      %v2605 = vadd.f32 %v2573, %v2576
      %v2606 = vmax.f32 %v2578, 0.0
      %v2607 = vmax.f32 %v2579, 0.0
      %v2608 = vmax.f32 %v2580, 0.0
      %v2609 = vmax.f32 %v2581, 0.0
      %v2610 = vmax.f32 %v2582, 0.0
      %v2611 = vmax.f32 %v2583, 0.0
      %v2612 = vmax.f32 %v2584, 0.0
      %v2613 = vmax.f32 %v2585, 0.0
      %v2614 = vmax.f32 %v2586, 0.0
      %v2615 = vmax.f32 %v2587, 0.0
      %v2616 = vmax.f32 %v2588, 0.0
      %v2617 = vmax.f32 %v2589, 0.0
      %v2618 = vmax.f32 %v2590, 0.0
      %v2619 = vmax.f32 %v2591, 0.0
      %v2620 = vmax.f32 %v2592, 0.0
      %v2621 = vmax.f32 %v2593, 0.0
      %v2622 = vmax.f32 %v2594, 0.0
      %v2623 = vmax.f32 %v2595, 0.0
      %v2624 = vmax.f32 %v2596, 0.0
      %v2625 = vmax.f32 %v2597, 0.0
      %v2626 = vmax.f32 %v2598, 0.0
      %v2627 = vmax.f32 %v2599, 0.0
      %v2628 = vmax.f32 %v2600, 0.0
      %v2629 = vmax.f32 %v2601, 0.0
      %v2630 = vmax.f32 %v2602, 0.0
      %v2631 = vmax.f32 %v2603, 0.0
      %v2632 = vmax.f32 %v2604, 0.0
      %v2633 = vmax.f32 %v2605, 0.0
      %2634 = vst.msk [vmem:[%s234] sm:$0xff] %vm461, %v2606
      %vm2635 = vcmask 62464
      %2636 = vst.msk [vmem:[%s234 + $0x8] sm:$0x3f] %vm2635, %v2607
      %2637 = vst.msk [vmem:[%s234 + $0x10] sm:$0xff] %vm461, %v2608
      %2638 = vst.msk [vmem:[%s234 + $0x18] sm:$0x3f] %vm2635, %v2609
      %2639 = vst.msk [vmem:[%s234 + $0x20] sm:$0xff] %vm461, %v2610
      %2640 = vst.msk [vmem:[%s234 + $0x28] sm:$0x3f] %vm2635, %v2611
      %2641 = vst.msk [vmem:[%s234 + $0x30] sm:$0xff] %vm461, %v2612
      %2642 = vst.msk [vmem:[%s234 + $0x38] sm:$0x3f] %vm2635, %v2613
      %2643 = vst.msk [vmem:[%s234 + $0x40] sm:$0xff] %vm461, %v2614
      %2644 = vst.msk [vmem:[%s234 + $0x48] sm:$0x3f] %vm2635, %v2615
      %2645 = vst.msk [vmem:[%s234 + $0x50] sm:$0xff] %vm461, %v2616
      %2646 = vst.msk [vmem:[%s234 + $0x58] sm:$0x3f] %vm2635, %v2617
      %2647 = vst.msk [vmem:[%s234 + $0x60] sm:$0xff] %vm461, %v2618
      %2648 = vst.msk [vmem:[%s234 + $0x68] sm:$0x3f] %vm2635, %v2619
      %2649 = vst.msk [vmem:[%s234 + $0x70] sm:$0xff] %vm461, %v2620
      %2650 = vst.msk [vmem:[%s234 + $0x78] sm:$0x3f] %vm2635, %v2621
      %2651 = vst.msk [vmem:[%s234 + $0x80] sm:$0xff] %vm461, %v2622
      %2652 = vst.msk [vmem:[%s234 + $0x88] sm:$0x3f] %vm2635, %v2623
      %2653 = vst.msk [vmem:[%s234 + $0x90] sm:$0xff] %vm461, %v2624
      %2654 = vst.msk [vmem:[%s234 + $0x98] sm:$0x3f] %vm2635, %v2625
      %2655 = vst.msk [vmem:[%s234 + $0xa0] sm:$0xff] %vm461, %v2626
      %2656 = vst.msk [vmem:[%s234 + $0xa8] sm:$0x3f] %vm2635, %v2627
      %2657 = vst.msk [vmem:[%s234 + $0xb0] sm:$0xff] %vm461, %v2628
      %2658 = vst.msk [vmem:[%s234 + $0xb8] sm:$0x3f] %vm2635, %v2629
      %2659 = vst.msk [vmem:[%s234 + $0xc0] sm:$0xff] %vm461, %v2630
      %2660 = vst.msk [vmem:[%s234 + $0xc8] sm:$0x3f] %vm2635, %v2631
      %2661 = vst.msk [vmem:[%s234 + $0xd0] sm:$0xff] %vm461, %v2632
      %2662 = vst.msk [vmem:[%s234 + $0xd8] sm:$0x3f] %vm2635, %v2633
      %v2691 = vrot.slane %v2606, 2
      %v2692 = vrot.slane %v2606, 4
      %v2693 = vrot.slane %v2606, 6
      %v2694 = vrot.slane %v2607, 2
      %v2695 = vrot.slane %v2607, 4
      %v2696 = vrot.slane %v2608, 2
      %v2697 = vrot.slane %v2608, 4
      %v2698 = vrot.slane %v2608, 6
      %v2699 = vrot.slane %v2609, 2
      %v2700 = vrot.slane %v2609, 4
      %v2701 = vrot.slane %v2610, 2
      %v2702 = vrot.slane %v2610, 4
      %v2703 = vrot.slane %v2610, 6
      %v2704 = vrot.slane %v2611, 2
      %v2705 = vrot.slane %v2611, 4
      %v2706 = vrot.slane %v2612, 2
      %v2707 = vrot.slane %v2612, 4
      %v2708 = vrot.slane %v2612, 6
      %v2709 = vrot.slane %v2613, 2
      %v2710 = vrot.slane %v2613, 4
      %v2711 = vrot.slane %v2614, 2
      %v2712 = vrot.slane %v2614, 4
      %v2713 = vrot.slane %v2614, 6
      %v2714 = vrot.slane %v2615, 2
      %v2715 = vrot.slane %v2615, 4
      %v2716 = vrot.slane %v2616, 2
      %v2717 = vrot.slane %v2616, 4
      %v2718 = vrot.slane %v2616, 6
      %v2719 = vrot.slane %v2617, 2
      %v2720 = vrot.slane %v2617, 4
      %v2721 = vrot.slane %v2618, 2
      %v2722 = vrot.slane %v2618, 4
      %v2723 = vrot.slane %v2618, 6
      %v2724 = vrot.slane %v2619, 2
      %v2725 = vrot.slane %v2619, 4
      %v2726 = vrot.slane %v2620, 2
      %v2727 = vrot.slane %v2620, 4
      %v2728 = vrot.slane %v2620, 6
      %v2729 = vrot.slane %v2621, 2
      %v2730 = vrot.slane %v2621, 4
      %v2731 = vrot.slane %v2622, 2
      %v2732 = vrot.slane %v2622, 4
      %v2733 = vrot.slane %v2622, 6
      %v2734 = vrot.slane %v2623, 2
      %v2735 = vrot.slane %v2623, 4
      %v2736 = vrot.slane %v2624, 2
      %v2737 = vrot.slane %v2624, 4
      %v2738 = vrot.slane %v2624, 6
      %v2739 = vrot.slane %v2625, 2
      %v2740 = vrot.slane %v2625, 4
      %v2741 = vrot.slane %v2626, 2
      %v2742 = vrot.slane %v2626, 4
      %v2743 = vrot.slane %v2626, 6
      %v2744 = vrot.slane %v2627, 2
      %v2745 = vrot.slane %v2627, 4
      %v2746 = vrot.slane %v2628, 2
      %v2747 = vrot.slane %v2628, 4
      %v2748 = vrot.slane %v2628, 6
      %v2749 = vrot.slane %v2629, 2
      %v2750 = vrot.slane %v2629, 4
      %v2751 = vrot.slane %v2630, 2
      %v2752 = vrot.slane %v2630, 4
      %v2753 = vrot.slane %v2630, 6
      %v2754 = vrot.slane %v2631, 2
      %v2755 = vrot.slane %v2631, 4
      %v2756 = vrot.slane %v2632, 2
      %v2757 = vrot.slane %v2632, 4
      %v2758 = vrot.slane %v2632, 6
      %v2759 = vrot.slane %v2633, 2
      %v2760 = vrot.slane %v2633, 4
      %2831 = vst [vmem:[#allocation1] ss:$4 sm:$0xff] %v2606
      %s2832 = scalar_lea.vmem [#allocation1], 1
      %2833 = vst [vmem:[%s2832] ss:$4 sm:$0xff] %v2691
      %s2834 = scalar_lea.vmem [#allocation1], 2
      %2835 = vst [vmem:[%s2834] ss:$4 sm:$0xff] %v2692
      %s2836 = scalar_lea.vmem [#allocation1], 3
      %2837 = vst [vmem:[%s2836] ss:$4 sm:$0xff] %v2693
      %s2838 = scalar_lea.vmem [#allocation1], 32
      %2839 = vst [vmem:[%s2838] ss:$4 sm:$0xff] %v2607
      %s2840 = scalar_lea.vmem [#allocation1], 33
      %2841 = vst [vmem:[%s2840] ss:$4 sm:$0xff] %v2694
      %s2842 = scalar_lea.vmem [#allocation1], 34
      %2843 = vst [vmem:[%s2842] ss:$4 sm:$0xff] %v2695
      %s2844 = scalar_lea.vmem [#allocation1], 35
      %2845 = vst [vmem:[%s2844] ss:$4 sm:$0xff] %v2608
      %v2846 = vld.sshfl [vmem:[#allocation1] sm:$0xff pattern:$0x73625140]
      %v2847 = vld.sshfl [vmem:[#allocation1 + $0x20] sm:$0xff pattern:$0x73625140]
      %2848 = vst [vmem:[#allocation1] ss:$4 sm:$0xff] %v2696
      %2849 = vst [vmem:[%s2832] ss:$4 sm:$0xff] %v2697
      %2850 = vst [vmem:[%s2834] ss:$4 sm:$0xff] %v2698
      %2851 = vst [vmem:[%s2836] ss:$4 sm:$0xff] %v2609
      %2852 = vst [vmem:[%s2838] ss:$4 sm:$0xff] %v2699
      %2853 = vst [vmem:[%s2840] ss:$4 sm:$0xff] %v2700
      %2854 = vst [vmem:[%s2842] ss:$4 sm:$0xff] %v2610
      %2855 = vst [vmem:[%s2844] ss:$4 sm:$0xff] %v2701
      %v2856 = vld.sshfl [vmem:[#allocation1] sm:$0xff pattern:$0x73625140]
      %v2857 = vld.sshfl [vmem:[#allocation1 + $0x20] sm:$0xff pattern:$0x73625140]
      %2858 = vst [vmem:[#allocation1] ss:$4 sm:$0xff] %v2702
      %2859 = vst [vmem:[%s2832] ss:$4 sm:$0xff] %v2703
      %2860 = vst [vmem:[%s2834] ss:$4 sm:$0xff] %v2611
      %2861 = vst [vmem:[%s2836] ss:$4 sm:$0xff] %v2704
      %2862 = vst [vmem:[%s2838] ss:$4 sm:$0xff] %v2705
      %2863 = vst [vmem:[%s2840] ss:$4 sm:$0xff] %v2612
      %2864 = vst [vmem:[%s2842] ss:$4 sm:$0xff] %v2706
      %2865 = vst [vmem:[%s2844] ss:$4 sm:$0xff] %v2707
      %v2866 = vld.sshfl [vmem:[#allocation1] sm:$0xff pattern:$0x73625140]
      %v2867 = vld.sshfl [vmem:[#allocation1 + $0x20] sm:$0xff pattern:$0x73625140]
      %2868 = vst [vmem:[#allocation1] ss:$4 sm:$0xff] %v2708
      %2869 = vst [vmem:[%s2832] ss:$4 sm:$0xff] %v2613
      %2870 = vst [vmem:[%s2834] ss:$4 sm:$0xff] %v2709
      %2871 = vst [vmem:[%s2836] ss:$4 sm:$0xff] %v2710
      %2872 = vst [vmem:[%s2838] ss:$4 sm:$0xff] %v2614
      %2873 = vst [vmem:[%s2840] ss:$4 sm:$0xff] %v2711
      %2874 = vst [vmem:[%s2842] ss:$4 sm:$0xff] %v2712
      %2875 = vst [vmem:[%s2844] ss:$4 sm:$0xff] %v2713
      %v2876 = vld.sshfl [vmem:[#allocation1] sm:$0xff pattern:$0x73625140]
      %v2877 = vld.sshfl [vmem:[#allocation1 + $0x20] sm:$0xff pattern:$0x73625140]
      %2878 = vst [vmem:[#allocation1] ss:$4 sm:$0xff] %v2615
      %2879 = vst [vmem:[%s2832] ss:$4 sm:$0xff] %v2714
      %2880 = vst [vmem:[%s2834] ss:$4 sm:$0xff] %v2715
      %2881 = vst [vmem:[%s2836] ss:$4 sm:$0xff] %v2616
      %2882 = vst [vmem:[%s2838] ss:$4 sm:$0xff] %v2716
      %2883 = vst [vmem:[%s2840] ss:$4 sm:$0xff] %v2717
      %2884 = vst [vmem:[%s2842] ss:$4 sm:$0xff] %v2718
      %2885 = vst [vmem:[%s2844] ss:$4 sm:$0xff] %v2617
      %v2886 = vld.sshfl [vmem:[#allocation1] sm:$0xff pattern:$0x73625140]
      %v2887 = vld.sshfl [vmem:[#allocation1 + $0x20] sm:$0xff pattern:$0x73625140]
      %2888 = vst [vmem:[#allocation1] ss:$4 sm:$0xff] %v2719
      %2889 = vst [vmem:[%s2832] ss:$4 sm:$0xff] %v2720
      %2890 = vst [vmem:[%s2834] ss:$4 sm:$0xff] %v2618
      %2891 = vst [vmem:[%s2836] ss:$4 sm:$0xff] %v2721
      %2892 = vst [vmem:[%s2838] ss:$4 sm:$0xff] %v2722
      %2893 = vst [vmem:[%s2840] ss:$4 sm:$0xff] %v2723
      %2894 = vst [vmem:[%s2842] ss:$4 sm:$0xff] %v2619
      %2895 = vst [vmem:[%s2844] ss:$4 sm:$0xff] %v2724
      %v2896 = vld.sshfl [vmem:[#allocation1] sm:$0xff pattern:$0x73625140]
      %v2897 = vld.sshfl [vmem:[#allocation1 + $0x20] sm:$0xff pattern:$0x73625140]
      %2898 = vst [vmem:[#allocation1] ss:$4 sm:$0xff] %v2725
      %2899 = vst [vmem:[%s2832] ss:$4 sm:$0xff] %v2620
      %2900 = vst [vmem:[%s2834] ss:$4 sm:$0xff] %v2726
      %2901 = vst [vmem:[%s2836] ss:$4 sm:$0xff] %v2727
      %2902 = vst [vmem:[%s2838] ss:$4 sm:$0xff] %v2728
      %2903 = vst [vmem:[%s2840] ss:$4 sm:$0xff] %v2621
      %2904 = vst [vmem:[%s2842] ss:$4 sm:$0xff] %v2729
      %2905 = vst [vmem:[%s2844] ss:$4 sm:$0xff] %v2730
      %v2906 = vld.sshfl [vmem:[#allocation1] sm:$0xff pattern:$0x73625140]
      %v2907 = vld.sshfl [vmem:[#allocation1 + $0x20] sm:$0xff pattern:$0x73625140]
      %2908 = vst [vmem:[#allocation1] ss:$4 sm:$0xff] %v2622
      %2909 = vst [vmem:[%s2832] ss:$4 sm:$0xff] %v2731
      %2910 = vst [vmem:[%s2834] ss:$4 sm:$0xff] %v2732
      %2911 = vst [vmem:[%s2836] ss:$4 sm:$0xff] %v2733
      %2912 = vst [vmem:[%s2838] ss:$4 sm:$0xff] %v2623
      %2913 = vst [vmem:[%s2840] ss:$4 sm:$0xff] %v2734
      %2914 = vst [vmem:[%s2842] ss:$4 sm:$0xff] %v2735
      %2915 = vst [vmem:[%s2844] ss:$4 sm:$0xff] %v2624
      %v2916 = vld.sshfl [vmem:[#allocation1] sm:$0xff pattern:$0x73625140]
      %v2917 = vld.sshfl [vmem:[#allocation1 + $0x20] sm:$0xff pattern:$0x73625140]
      %2918 = vst [vmem:[#allocation1] ss:$4 sm:$0xff] %v2736
      %2919 = vst [vmem:[%s2832] ss:$4 sm:$0xff] %v2737
      %2920 = vst [vmem:[%s2834] ss:$4 sm:$0xff] %v2738
      %2921 = vst [vmem:[%s2836] ss:$4 sm:$0xff] %v2625
      %2922 = vst [vmem:[%s2838] ss:$4 sm:$0xff] %v2739
      %2923 = vst [vmem:[%s2840] ss:$4 sm:$0xff] %v2740
      %2924 = vst [vmem:[%s2842] ss:$4 sm:$0xff] %v2626
      %2925 = vst [vmem:[%s2844] ss:$4 sm:$0xff] %v2741
      %v2926 = vld.sshfl [vmem:[#allocation1] sm:$0xff pattern:$0x73625140]
      %v2927 = vld.sshfl [vmem:[#allocation1 + $0x20] sm:$0xff pattern:$0x73625140]
      %2928 = vst [vmem:[#allocation1] ss:$4 sm:$0xff] %v2742
      %2929 = vst [vmem:[%s2832] ss:$4 sm:$0xff] %v2743
      %2930 = vst [vmem:[%s2834] ss:$4 sm:$0xff] %v2627
      %2931 = vst [vmem:[%s2836] ss:$4 sm:$0xff] %v2744
      %2932 = vst [vmem:[%s2838] ss:$4 sm:$0xff] %v2745
      %2933 = vst [vmem:[%s2840] ss:$4 sm:$0xff] %v2628
      %2934 = vst [vmem:[%s2842] ss:$4 sm:$0xff] %v2746
      %2935 = vst [vmem:[%s2844] ss:$4 sm:$0xff] %v2747
      %v2936 = vld.sshfl [vmem:[#allocation1] sm:$0xff pattern:$0x73625140]
      %v2937 = vld.sshfl [vmem:[#allocation1 + $0x20] sm:$0xff pattern:$0x73625140]
      %2938 = vst [vmem:[#allocation1] ss:$4 sm:$0xff] %v2748
      %2939 = vst [vmem:[%s2832] ss:$4 sm:$0xff] %v2629
      %2940 = vst [vmem:[%s2834] ss:$4 sm:$0xff] %v2749
      %2941 = vst [vmem:[%s2836] ss:$4 sm:$0xff] %v2750
      %2942 = vst [vmem:[%s2838] ss:$4 sm:$0xff] %v2630
      %2943 = vst [vmem:[%s2840] ss:$4 sm:$0xff] %v2751
      %2944 = vst [vmem:[%s2842] ss:$4 sm:$0xff] %v2752
      %2945 = vst [vmem:[%s2844] ss:$4 sm:$0xff] %v2753
      %v2946 = vld.sshfl [vmem:[#allocation1] sm:$0xff pattern:$0x73625140]
      %v2947 = vld.sshfl [vmem:[#allocation1 + $0x20] sm:$0xff pattern:$0x73625140]
      %2948 = vst [vmem:[#allocation1] ss:$4 sm:$0xff] %v2631
      %2949 = vst [vmem:[%s2832] ss:$4 sm:$0xff] %v2754
      %2950 = vst [vmem:[%s2834] ss:$4 sm:$0xff] %v2755
      %2951 = vst [vmem:[%s2836] ss:$4 sm:$0xff] %v2632
      %2952 = vst [vmem:[%s2838] ss:$4 sm:$0xff] %v2756
      %2953 = vst [vmem:[%s2840] ss:$4 sm:$0xff] %v2757
      %2954 = vst [vmem:[%s2842] ss:$4 sm:$0xff] %v2758
      %2955 = vst [vmem:[%s2844] ss:$4 sm:$0xff] %v2633
      %v2956 = vld.sshfl [vmem:[#allocation1] sm:$0xff pattern:$0x73625140]
      %v2957 = vld.sshfl [vmem:[#allocation1 + $0x20] sm:$0xff pattern:$0x73625140]
      %2958 = vst [vmem:[#allocation1] ss:$4 sm:$0xff] %v2759
      %2959 = vst [vmem:[%s2832] ss:$4 sm:$0xff] %v2760
      %v2960 = vld.sshfl [vmem:[#allocation1] sm:$0xff pattern:$0x73625140]
      %v2986 = vsel %vm461, %v2846, 0.0
      %v2987 = vsel %vm461, %v2847, 0.0
      %v2988 = vadd.f32 %v2986, %v2987
      %v2989 = vsel %vm461, %v2856, 0.0
      %v2990 = vadd.f32 %v2988, %v2989
      %v2991 = vsel %vm461, %v2857, 0.0
      %v2992 = vadd.f32 %v2990, %v2991
      %v2993 = vsel %vm461, %v2866, 0.0
      %v2994 = vadd.f32 %v2992, %v2993
      %v2995 = vsel %vm461, %v2867, 0.0
      %v2996 = vadd.f32 %v2994, %v2995
      %v2997 = vsel %vm461, %v2876, 0.0
      %v2998 = vadd.f32 %v2996, %v2997
      %v2999 = vsel %vm461, %v2877, 0.0
      %v3000 = vadd.f32 %v2998, %v2999
      %v3001 = vsel %vm461, %v2886, 0.0
      %v3002 = vadd.f32 %v3000, %v3001
      %v3003 = vsel %vm461, %v2887, 0.0
      %v3004 = vadd.f32 %v3002, %v3003
      %v3005 = vsel %vm461, %v2896, 0.0
      %v3006 = vadd.f32 %v3004, %v3005
      %v3007 = vsel %vm461, %v2897, 0.0
      %v3008 = vadd.f32 %v3006, %v3007
      %v3009 = vsel %vm461, %v2906, 0.0
      %v3010 = vadd.f32 %v3008, %v3009
      %v3011 = vsel %vm461, %v2907, 0.0
      %v3012 = vadd.f32 %v3010, %v3011
      %v3013 = vsel %vm461, %v2916, 0.0
      %v3014 = vadd.f32 %v3012, %v3013
      %v3015 = vsel %vm461, %v2917, 0.0
      %v3016 = vadd.f32 %v3014, %v3015
      %v3017 = vsel %vm461, %v2926, 0.0
      %v3018 = vadd.f32 %v3016, %v3017
      %v3019 = vsel %vm461, %v2927, 0.0
      %v3020 = vadd.f32 %v3018, %v3019
      %v3021 = vsel %vm461, %v2936, 0.0
      %v3022 = vadd.f32 %v3020, %v3021
      %v3023 = vsel %vm461, %v2937, 0.0
      %v3024 = vadd.f32 %v3022, %v3023
      %v3025 = vsel %vm461, %v2946, 0.0
      %v3026 = vadd.f32 %v3024, %v3025
      %v3027 = vsel %vm461, %v2947, 0.0
      %v3028 = vadd.f32 %v3026, %v3027
      %v3029 = vsel %vm461, %v2956, 0.0
      %v3030 = vadd.f32 %v3028, %v3029
      %v3031 = vsel %vm461, %v2957, 0.0
      %v3032 = vadd.f32 %v3030, %v3031
      %vm3033 = vcmask 60416
      %v3034 = vsel %vm3033, %v2960, 0.0
      %v3035 = vadd.f32 %v3032, %v3034
      %v3036 = vrot.slane %v3035, 4
      %v3037 = vadd.f32 %v3035, %v3036
      %v3038 = vrot.slane %v3037, 2
      %v3039 = vadd.f32 %v3037, %v3038
      %v3040 = vrot.slane %v3039, 1
      %v3041 = vadd.f32 %v3039, %v3040
      %vm3042 = vcmask 57344
      %3043 = vst.msk [vmem:[%s243] sm:$0x1] %vm3042, %v3041
      %v3044 = vmul.f32 %v2606, %v2606
      %v3045 = vmul.f32 %v2691, %v2691
      %v3046 = vmul.f32 %v2692, %v2692
      %v3047 = vmul.f32 %v2693, %v2693
      %v3048 = vmul.f32 %v2607, %v2607
      %v3049 = vmul.f32 %v2694, %v2694
      %v3050 = vmul.f32 %v2695, %v2695
      %v3051 = vmul.f32 %v2608, %v2608
      %v3052 = vmul.f32 %v2696, %v2696
      %v3053 = vmul.f32 %v2697, %v2697
      %v3054 = vmul.f32 %v2698, %v2698
      %v3055 = vmul.f32 %v2609, %v2609
      %v3056 = vmul.f32 %v2699, %v2699
      %v3057 = vmul.f32 %v2700, %v2700
      %v3058 = vmul.f32 %v2610, %v2610
      %v3059 = vmul.f32 %v2701, %v2701
      %v3060 = vmul.f32 %v2702, %v2702
      %v3061 = vmul.f32 %v2703, %v2703
      %v3062 = vmul.f32 %v2611, %v2611
      %v3063 = vmul.f32 %v2704, %v2704
      %v3064 = vmul.f32 %v2705, %v2705
      %v3065 = vmul.f32 %v2612, %v2612
      %v3066 = vmul.f32 %v2706, %v2706
      %v3067 = vmul.f32 %v2707, %v2707
      %v3068 = vmul.f32 %v2708, %v2708
      %v3069 = vmul.f32 %v2613, %v2613
      %v3070 = vmul.f32 %v2709, %v2709
      %v3071 = vmul.f32 %v2710, %v2710
      %v3072 = vmul.f32 %v2614, %v2614
      %v3073 = vmul.f32 %v2711, %v2711
      %v3074 = vmul.f32 %v2712, %v2712
      %v3075 = vmul.f32 %v2713, %v2713
      %v3076 = vmul.f32 %v2615, %v2615
      %v3077 = vmul.f32 %v2714, %v2714
      %v3078 = vmul.f32 %v2715, %v2715
      %v3079 = vmul.f32 %v2616, %v2616
      %v3080 = vmul.f32 %v2716, %v2716
      %v3081 = vmul.f32 %v2717, %v2717
      %v3082 = vmul.f32 %v2718, %v2718
      %v3083 = vmul.f32 %v2617, %v2617
      %v3084 = vmul.f32 %v2719, %v2719
      %v3085 = vmul.f32 %v2720, %v2720
      %v3086 = vmul.f32 %v2618, %v2618
      %v3087 = vmul.f32 %v2721, %v2721
      %v3088 = vmul.f32 %v2722, %v2722
      %v3089 = vmul.f32 %v2723, %v2723
      %v3090 = vmul.f32 %v2619, %v2619
      %v3091 = vmul.f32 %v2724, %v2724
      %v3092 = vmul.f32 %v2725, %v2725
      %v3093 = vmul.f32 %v2620, %v2620
      %v3094 = vmul.f32 %v2726, %v2726
      %v3095 = vmul.f32 %v2727, %v2727
      %v3096 = vmul.f32 %v2728, %v2728
      %v3097 = vmul.f32 %v2621, %v2621
      %v3098 = vmul.f32 %v2729, %v2729
      %v3099 = vmul.f32 %v2730, %v2730
      %v3100 = vmul.f32 %v2622, %v2622
      %v3101 = vmul.f32 %v2731, %v2731
      %v3102 = vmul.f32 %v2732, %v2732
      %v3103 = vmul.f32 %v2733, %v2733
      %v3104 = vmul.f32 %v2623, %v2623
      %v3105 = vmul.f32 %v2734, %v2734
      %v3106 = vmul.f32 %v2735, %v2735
      %v3107 = vmul.f32 %v2624, %v2624
      %v3108 = vmul.f32 %v2736, %v2736
      %v3109 = vmul.f32 %v2737, %v2737
      %v3110 = vmul.f32 %v2738, %v2738
      %v3111 = vmul.f32 %v2625, %v2625
      %v3112 = vmul.f32 %v2739, %v2739
      %v3113 = vmul.f32 %v2740, %v2740
      %v3114 = vmul.f32 %v2626, %v2626
      %v3115 = vmul.f32 %v2741, %v2741
      %v3116 = vmul.f32 %v2742, %v2742
      %v3117 = vmul.f32 %v2743, %v2743
      %v3118 = vmul.f32 %v2627, %v2627
      %v3119 = vmul.f32 %v2744, %v2744
      %v3120 = vmul.f32 %v2745, %v2745
      %v3121 = vmul.f32 %v2628, %v2628
      %v3122 = vmul.f32 %v2746, %v2746
      %v3123 = vmul.f32 %v2747, %v2747
      %v3124 = vmul.f32 %v2748, %v2748
      %v3125 = vmul.f32 %v2629, %v2629
      %v3126 = vmul.f32 %v2749, %v2749
      %v3127 = vmul.f32 %v2750, %v2750
      %v3128 = vmul.f32 %v2630, %v2630
      %v3129 = vmul.f32 %v2751, %v2751
      %v3130 = vmul.f32 %v2752, %v2752
      %v3131 = vmul.f32 %v2753, %v2753
      %v3132 = vmul.f32 %v2631, %v2631
      %v3133 = vmul.f32 %v2754, %v2754
      %v3134 = vmul.f32 %v2755, %v2755
      %v3135 = vmul.f32 %v2632, %v2632
      %v3136 = vmul.f32 %v2756, %v2756
      %v3137 = vmul.f32 %v2757, %v2757
      %v3138 = vmul.f32 %v2758, %v2758
      %v3139 = vmul.f32 %v2633, %v2633
      %v3140 = vmul.f32 %v2759, %v2759
      %v3141 = vmul.f32 %v2760, %v2760
      %3240 = vst [vmem:[#allocation1] ss:$4 sm:$0xff] %v3044
      %s3241 = scalar_lea.vmem [#allocation1], 1
      %3242 = vst [vmem:[%s3241] ss:$4 sm:$0xff] %v3045
      %s3243 = scalar_lea.vmem [#allocation1], 2
      %3244 = vst [vmem:[%s3243] ss:$4 sm:$0xff] %v3046
      %s3245 = scalar_lea.vmem [#allocation1], 3
      %3246 = vst [vmem:[%s3245] ss:$4 sm:$0xff] %v3047
      %s3247 = scalar_lea.vmem [#allocation1], 32
      %3248 = vst [vmem:[%s3247] ss:$4 sm:$0xff] %v3048
      %s3249 = scalar_lea.vmem [#allocation1], 33
      %3250 = vst [vmem:[%s3249] ss:$4 sm:$0xff] %v3049
      %s3251 = scalar_lea.vmem [#allocation1], 34
      %3252 = vst [vmem:[%s3251] ss:$4 sm:$0xff] %v3050
      %s3253 = scalar_lea.vmem [#allocation1], 35
      %3254 = vst [vmem:[%s3253] ss:$4 sm:$0xff] %v3051
      %v3255 = vld.sshfl [vmem:[#allocation1] sm:$0xff pattern:$0x73625140]
      %v3256 = vld.sshfl [vmem:[#allocation1 + $0x20] sm:$0xff pattern:$0x73625140]
      %3257 = vst [vmem:[#allocation1] ss:$4 sm:$0xff] %v3052
      %3258 = vst [vmem:[%s3241] ss:$4 sm:$0xff] %v3053
      %3259 = vst [vmem:[%s3243] ss:$4 sm:$0xff] %v3054
      %3260 = vst [vmem:[%s3245] ss:$4 sm:$0xff] %v3055
      %3261 = vst [vmem:[%s3247] ss:$4 sm:$0xff] %v3056
      %3262 = vst [vmem:[%s3249] ss:$4 sm:$0xff] %v3057
      %3263 = vst [vmem:[%s3251] ss:$4 sm:$0xff] %v3058
      %3264 = vst [vmem:[%s3253] ss:$4 sm:$0xff] %v3059
      %v3265 = vld.sshfl [vmem:[#allocation1] sm:$0xff pattern:$0x73625140]
      %v3266 = vld.sshfl [vmem:[#allocation1 + $0x20] sm:$0xff pattern:$0x73625140]
      %3267 = vst [vmem:[#allocation1] ss:$4 sm:$0xff] %v3060
      %3268 = vst [vmem:[%s3241] ss:$4 sm:$0xff] %v3061
      %3269 = vst [vmem:[%s3243] ss:$4 sm:$0xff] %v3062
      %3270 = vst [vmem:[%s3245] ss:$4 sm:$0xff] %v3063
      %3271 = vst [vmem:[%s3247] ss:$4 sm:$0xff] %v3064
      %3272 = vst [vmem:[%s3249] ss:$4 sm:$0xff] %v3065
      %3273 = vst [vmem:[%s3251] ss:$4 sm:$0xff] %v3066
      %3274 = vst [vmem:[%s3253] ss:$4 sm:$0xff] %v3067
      %v3275 = vld.sshfl [vmem:[#allocation1] sm:$0xff pattern:$0x73625140]
      %v3276 = vld.sshfl [vmem:[#allocation1 + $0x20] sm:$0xff pattern:$0x73625140]
      %3277 = vst [vmem:[#allocation1] ss:$4 sm:$0xff] %v3068
      %3278 = vst [vmem:[%s3241] ss:$4 sm:$0xff] %v3069
      %3279 = vst [vmem:[%s3243] ss:$4 sm:$0xff] %v3070
      %3280 = vst [vmem:[%s3245] ss:$4 sm:$0xff] %v3071
      %3281 = vst [vmem:[%s3247] ss:$4 sm:$0xff] %v3072
      %3282 = vst [vmem:[%s3249] ss:$4 sm:$0xff] %v3073
      %3283 = vst [vmem:[%s3251] ss:$4 sm:$0xff] %v3074
      %3284 = vst [vmem:[%s3253] ss:$4 sm:$0xff] %v3075
      %v3285 = vld.sshfl [vmem:[#allocation1] sm:$0xff pattern:$0x73625140]
      %v3286 = vld.sshfl [vmem:[#allocation1 + $0x20] sm:$0xff pattern:$0x73625140]
      %3287 = vst [vmem:[#allocation1] ss:$4 sm:$0xff] %v3076
      %3288 = vst [vmem:[%s3241] ss:$4 sm:$0xff] %v3077
      %3289 = vst [vmem:[%s3243] ss:$4 sm:$0xff] %v3078
      %3290 = vst [vmem:[%s3245] ss:$4 sm:$0xff] %v3079
      %3291 = vst [vmem:[%s3247] ss:$4 sm:$0xff] %v3080
      %3292 = vst [vmem:[%s3249] ss:$4 sm:$0xff] %v3081
      %3293 = vst [vmem:[%s3251] ss:$4 sm:$0xff] %v3082
      %3294 = vst [vmem:[%s3253] ss:$4 sm:$0xff] %v3083
      %v3295 = vld.sshfl [vmem:[#allocation1] sm:$0xff pattern:$0x73625140]
      %v3296 = vld.sshfl [vmem:[#allocation1 + $0x20] sm:$0xff pattern:$0x73625140]
      %3297 = vst [vmem:[#allocation1] ss:$4 sm:$0xff] %v3084
      %3298 = vst [vmem:[%s3241] ss:$4 sm:$0xff] %v3085
      %3299 = vst [vmem:[%s3243] ss:$4 sm:$0xff] %v3086
      %3300 = vst [vmem:[%s3245] ss:$4 sm:$0xff] %v3087
      %3301 = vst [vmem:[%s3247] ss:$4 sm:$0xff] %v3088
      %3302 = vst [vmem:[%s3249] ss:$4 sm:$0xff] %v3089
      %3303 = vst [vmem:[%s3251] ss:$4 sm:$0xff] %v3090
      %3304 = vst [vmem:[%s3253] ss:$4 sm:$0xff] %v3091
      %v3305 = vld.sshfl [vmem:[#allocation1] sm:$0xff pattern:$0x73625140]
      %v3306 = vld.sshfl [vmem:[#allocation1 + $0x20] sm:$0xff pattern:$0x73625140]
      %3307 = vst [vmem:[#allocation1] ss:$4 sm:$0xff] %v3092
      %3308 = vst [vmem:[%s3241] ss:$4 sm:$0xff] %v3093
      %3309 = vst [vmem:[%s3243] ss:$4 sm:$0xff] %v3094
      %3310 = vst [vmem:[%s3245] ss:$4 sm:$0xff] %v3095
      %3311 = vst [vmem:[%s3247] ss:$4 sm:$0xff] %v3096
      %3312 = vst [vmem:[%s3249] ss:$4 sm:$0xff] %v3097
      %3313 = vst [vmem:[%s3251] ss:$4 sm:$0xff] %v3098
      %3314 = vst [vmem:[%s3253] ss:$4 sm:$0xff] %v3099
      %v3315 = vld.sshfl [vmem:[#allocation1] sm:$0xff pattern:$0x73625140]
      %v3316 = vld.sshfl [vmem:[#allocation1 + $0x20] sm:$0xff pattern:$0x73625140]
      %3317 = vst [vmem:[#allocation1] ss:$4 sm:$0xff] %v3100
      %3318 = vst [vmem:[%s3241] ss:$4 sm:$0xff] %v3101
      %3319 = vst [vmem:[%s3243] ss:$4 sm:$0xff] %v3102
      %3320 = vst [vmem:[%s3245] ss:$4 sm:$0xff] %v3103
      %3321 = vst [vmem:[%s3247] ss:$4 sm:$0xff] %v3104
      %3322 = vst [vmem:[%s3249] ss:$4 sm:$0xff] %v3105
      %3323 = vst [vmem:[%s3251] ss:$4 sm:$0xff] %v3106
      %3324 = vst [vmem:[%s3253] ss:$4 sm:$0xff] %v3107
      %v3325 = vld.sshfl [vmem:[#allocation1] sm:$0xff pattern:$0x73625140]
      %v3326 = vld.sshfl [vmem:[#allocation1 + $0x20] sm:$0xff pattern:$0x73625140]
      %3327 = vst [vmem:[#allocation1] ss:$4 sm:$0xff] %v3108
      %3328 = vst [vmem:[%s3241] ss:$4 sm:$0xff] %v3109
      %3329 = vst [vmem:[%s3243] ss:$4 sm:$0xff] %v3110
      %3330 = vst [vmem:[%s3245] ss:$4 sm:$0xff] %v3111
      %3331 = vst [vmem:[%s3247] ss:$4 sm:$0xff] %v3112
      %3332 = vst [vmem:[%s3249] ss:$4 sm:$0xff] %v3113
      %3333 = vst [vmem:[%s3251] ss:$4 sm:$0xff] %v3114
      %3334 = vst [vmem:[%s3253] ss:$4 sm:$0xff] %v3115
      %v3335 = vld.sshfl [vmem:[#allocation1] sm:$0xff pattern:$0x73625140]
      %v3336 = vld.sshfl [vmem:[#allocation1 + $0x20] sm:$0xff pattern:$0x73625140]
      %3337 = vst [vmem:[#allocation1] ss:$4 sm:$0xff] %v3116
      %3338 = vst [vmem:[%s3241] ss:$4 sm:$0xff] %v3117
      %3339 = vst [vmem:[%s3243] ss:$4 sm:$0xff] %v3118
      %3340 = vst [vmem:[%s3245] ss:$4 sm:$0xff] %v3119
      %3341 = vst [vmem:[%s3247] ss:$4 sm:$0xff] %v3120
      %3342 = vst [vmem:[%s3249] ss:$4 sm:$0xff] %v3121
      %3343 = vst [vmem:[%s3251] ss:$4 sm:$0xff] %v3122
      %3344 = vst [vmem:[%s3253] ss:$4 sm:$0xff] %v3123
      %v3345 = vld.sshfl [vmem:[#allocation1] sm:$0xff pattern:$0x73625140]
      %v3346 = vld.sshfl [vmem:[#allocation1 + $0x20] sm:$0xff pattern:$0x73625140]
      %3347 = vst [vmem:[#allocation1] ss:$4 sm:$0xff] %v3124
      %3348 = vst [vmem:[%s3241] ss:$4 sm:$0xff] %v3125
      %3349 = vst [vmem:[%s3243] ss:$4 sm:$0xff] %v3126
      %3350 = vst [vmem:[%s3245] ss:$4 sm:$0xff] %v3127
      %3351 = vst [vmem:[%s3247] ss:$4 sm:$0xff] %v3128
      %3352 = vst [vmem:[%s3249] ss:$4 sm:$0xff] %v3129
      %3353 = vst [vmem:[%s3251] ss:$4 sm:$0xff] %v3130
      %3354 = vst [vmem:[%s3253] ss:$4 sm:$0xff] %v3131
      %v3355 = vld.sshfl [vmem:[#allocation1] sm:$0xff pattern:$0x73625140]
      %v3356 = vld.sshfl [vmem:[#allocation1 + $0x20] sm:$0xff pattern:$0x73625140]
      %3357 = vst [vmem:[#allocation1] ss:$4 sm:$0xff] %v3132
      %3358 = vst [vmem:[%s3241] ss:$4 sm:$0xff] %v3133
      %3359 = vst [vmem:[%s3243] ss:$4 sm:$0xff] %v3134
      %3360 = vst [vmem:[%s3245] ss:$4 sm:$0xff] %v3135
      %3361 = vst [vmem:[%s3247] ss:$4 sm:$0xff] %v3136
      %3362 = vst [vmem:[%s3249] ss:$4 sm:$0xff] %v3137
      %3363 = vst [vmem:[%s3251] ss:$4 sm:$0xff] %v3138
      %3364 = vst [vmem:[%s3253] ss:$4 sm:$0xff] %v3139
      %v3365 = vld.sshfl [vmem:[#allocation1] sm:$0xff pattern:$0x73625140]
      %v3366 = vld.sshfl [vmem:[#allocation1 + $0x20] sm:$0xff pattern:$0x73625140]
      %3367 = vst [vmem:[#allocation1] ss:$4 sm:$0xff] %v3140
      %3368 = vst [vmem:[%s3241] ss:$4 sm:$0xff] %v3141
      %v3369 = vld.sshfl [vmem:[#allocation1] sm:$0xff pattern:$0x73625140]
      %v3395 = vsel %vm461, %v3255, 0.0
      %v3396 = vsel %vm461, %v3256, 0.0
      %v3397 = vadd.f32 %v3395, %v3396
      %v3398 = vsel %vm461, %v3265, 0.0
      %v3399 = vadd.f32 %v3397, %v3398
      %v3400 = vsel %vm461, %v3266, 0.0
      %v3401 = vadd.f32 %v3399, %v3400
      %v3402 = vsel %vm461, %v3275, 0.0
      %v3403 = vadd.f32 %v3401, %v3402
      %v3404 = vsel %vm461, %v3276, 0.0
      %v3405 = vadd.f32 %v3403, %v3404
      %v3406 = vsel %vm461, %v3285, 0.0
      %v3407 = vadd.f32 %v3405, %v3406
      %v3408 = vsel %vm461, %v3286, 0.0
      %v3409 = vadd.f32 %v3407, %v3408
      %v3410 = vsel %vm461, %v3295, 0.0
      %v3411 = vadd.f32 %v3409, %v3410
      %v3412 = vsel %vm461, %v3296, 0.0
      %v3413 = vadd.f32 %v3411, %v3412
      %v3414 = vsel %vm461, %v3305, 0.0
      %v3415 = vadd.f32 %v3413, %v3414
      %v3416 = vsel %vm461, %v3306, 0.0
      %v3417 = vadd.f32 %v3415, %v3416
      %v3418 = vsel %vm461, %v3315, 0.0
      %v3419 = vadd.f32 %v3417, %v3418
      %v3420 = vsel %vm461, %v3316, 0.0
      %v3421 = vadd.f32 %v3419, %v3420
      %v3422 = vsel %vm461, %v3325, 0.0
      %v3423 = vadd.f32 %v3421, %v3422
      %v3424 = vsel %vm461, %v3326, 0.0
      %v3425 = vadd.f32 %v3423, %v3424
      %v3426 = vsel %vm461, %v3335, 0.0
      %v3427 = vadd.f32 %v3425, %v3426
      %v3428 = vsel %vm461, %v3336, 0.0
      %v3429 = vadd.f32 %v3427, %v3428
      %v3430 = vsel %vm461, %v3345, 0.0
      %v3431 = vadd.f32 %v3429, %v3430
      %v3432 = vsel %vm461, %v3346, 0.0
      %v3433 = vadd.f32 %v3431, %v3432
      %v3434 = vsel %vm461, %v3355, 0.0
      %v3435 = vadd.f32 %v3433, %v3434
      %v3436 = vsel %vm461, %v3356, 0.0
      %v3437 = vadd.f32 %v3435, %v3436
      %v3438 = vsel %vm461, %v3365, 0.0
      %v3439 = vadd.f32 %v3437, %v3438
      %v3440 = vsel %vm461, %v3366, 0.0
      %v3441 = vadd.f32 %v3439, %v3440
      %v3442 = vsel %vm3033, %v3369, 0.0
      %v3443 = vadd.f32 %v3441, %v3442
      %v3444 = vrot.slane %v3443, 4
      %v3445 = vadd.f32 %v3443, %v3444
      %v3446 = vrot.slane %v3445, 2
      %v3447 = vadd.f32 %v3445, %v3446
      %v3448 = vrot.slane %v3447, 1
      %v3449 = vadd.f32 %v3447, %v3448
      %3450 = vst.msk [vmem:[%s243 + $0x1] sm:$0x1] %vm3042, %v3449
      %s3451 = smul.u32 14, %s21
      %p3452 = scmp.lt.s32.totalorder %s20, 1
      %s3453 = scalar_select %p3452, %s20, 1
      %p3454 = scmp.lt.s32.totalorder %s3451, 27
      %s3455 = scalar_select %p3454, %s3451, 27
      %s3456 = smul.addr %s3455, 2
      %s3457 = smul.addr %s3453, 56
      %s3458 = sadd.s32 %s3456, %s3457
      %s3459 = smul.addr %s3458, 8
      %s3460 = scalar_lea.vmem %s3, %s3459
      %p3461 = scmp.lt.s32.totalorder %s20, 1
      %s3462 = scalar_select %p3461, %s20, 1
      %p3463 = scmp.lt.s32.totalorder %s21, 1
      %s3464 = scalar_select %p3463, %s21, 1
      %s3465 = smul.addr %s3462, 2
      %s3466 = sadd.s32 %s3464, %s3465
      %s3467 = smul.addr %s3466, 2
      %s3468 = scalar_lea.vmem %s4, %s3467
      // Predicated region
      $region33: #{up_step_forward.3} parent=31 // pred_check
        %p3469 = pneg %p116
      $region34: #{up_step_forward.3} parent=31 // pred_check_branch
        %3471 = sbr.rel (%p3469) target = $region36
      $region35: #{up_step_forward.3} parent=31 // pred_region
        %s3472 = smul.u32 14, %s21
      $region36: #{up_step_forward.3} parent=31 // pred_fallthru
        _
      // Predicated region
      $region37: #{up_step_forward.3} parent=31 // pred_check
        %p3473 = pneg %p144
      $region38: #{up_step_forward.3} parent=31 // pred_check_branch
        %3475 = sbr.rel (%p3473) target = $region40
      $region39: #{up_step_forward.3} parent=31 // pred_region
        _
      $region40: #{up_step_forward.3} parent=31 // pred_fallthru
        _
    $region32: #{up_step_forward.3} parent=5 // pred_fallthru
      _
    %p3476 = scmp.le.s32.totalorder 2, %s11
    // Predicated region
    $region41: #{up_step_forward.3} parent=5 // pred_check
      %p3477 = pneg %p3476
    $region42: #{up_step_forward.3} parent=5 // pred_check_branch
      %3479 = sbr.rel (%p3477) target = $region44
    $region43: #{up_step_forward.3} parent=5 // pred_region
      %s3480 = ssub.s32 %s11, 2
      // Predicated region
      $region45: #{up_step_forward.3} parent=43 // pred_check
        %p3481 = pneg %p122
      $region46: #{up_step_forward.3} parent=43 // pred_check_branch
        %3483 = sbr.rel (%p3481) target = $region48
      $region47: #{up_step_forward.3} parent=43 // pred_region
        %s3484 = smul.u32 14, %s23
        %p3485 = scmp.lt.s32.totalorder %s22, 1
        %s3486 = scalar_select %p3485, %s22, 1
        %p3487 = scmp.lt.s32.totalorder %s3484, 27
        %s3488 = scalar_select %p3487, %s3484, 27
        %s3489 = smul.addr %s3488, 2
        %s3490 = smul.addr %s3486, 56
        %s3491 = sadd.s32 %s3489, %s3490
        %s3492 = smul.addr %s3491, 8
        %s3493 = scalar_lea.vmem %s3, %s3492
      $region48: #{up_step_forward.3} parent=43 // pred_fallthru
        _
      // Predicated region
      $region49: #{up_step_forward.3} parent=43 // pred_check
        %p3494 = pneg %p150
      $region50: #{up_step_forward.3} parent=43 // pred_check_branch
        %3496 = sbr.rel (%p3494) target = $region52
      $region51: #{up_step_forward.3} parent=43 // pred_region
        %p3497 = scmp.lt.s32.totalorder %s22, 1
        %s3498 = scalar_select %p3497, %s22, 1
        %p3499 = scmp.lt.s32.totalorder %s23, 1
        %s3500 = scalar_select %p3499, %s23, 1
        %s3501 = smul.addr %s3498, 2
        %s3502 = sadd.s32 %s3500, %s3501
        %s3503 = smul.addr %s3502, 2
        %s3504 = scalar_lea.vmem %s4, %s3503
      $region52: #{up_step_forward.3} parent=43 // pred_fallthru
        _
    $region44: #{up_step_forward.3} parent=5 // pred_fallthru
      _
  $region6: #{up_step_forward.3} parent=0 // loop_footer
    %s15 = sadd.s32 1, %s11
  $region7: #{up_step_forward.3} parent=0 // loop_footer_branch
    %10 = sbr.rel target = $region3
  $region8: #{up_step_forward.3} parent=0 // loop_exit
    _

// kernel: up_step_forward.2
$region0: #{up_step_forward.2}
  #allocation0 [shape = 'u32[]', space=smem, size = 0x4, offset = 0x4, fixed_abs, tag = 'smem constant byte address 0x4 - core index']
  #allocation1 [shape = 'u32[72,128]{1,0:T(1,128)}', space=vmem, size = 0x9000, scoped, tag = 'internal scratch']
  %s0 = inlined_call_operand.vmem [shape: f32[2,16,16,8], index: 0, kind: input, shape index: {}]
  %s1 = inlined_call_operand.vmem [shape: f32[2,32,16,8], index: 1, kind: input, shape index: {}]
  %s2 = inlined_call_operand.vmem [shape: f32[2,8,8], index: 2, kind: input, shape index: {}]
  %s3 = inlined_call_operand.vmem [shape: f32[36,4], index: 3, kind: input, shape index: {}]
  %s4 = inlined_call_operand.vmem [shape: f32[36,4], index: 4, kind: input, shape index: {}]
  %s5 = inlined_call_operand.vmem [shape: f32[1,8], index: 5, kind: input, shape index: {}]
  %s6 = inlined_call_operand.vmem [shape: f32[2,30,15,8], index: 6, kind: output, shape index: {0}]
  %s7 = inlined_call_operand.vmem [shape: f32[2,3,2,8], index: 7, kind: output, shape index: {1}]
  %8 = xla_tuple %s6, %s7
  %s9 = sld [smem:[#allocation0]]
  $region65: #{up_step_forward.2} parent=0
    _
  %s11 = ssub.s32 1, %s9
  %s12 = scalar_select 0, %s11, %s9
  loop: start=0, step=1, limit=8
  $region2: #{up_step_forward.2} parent=0 // loop_pre_header
    _
  $region3: #{up_step_forward.2} parent=0 // loop_header
    %s14 = sphi 0, %s18
    %p15 = scmp.ge.s32.totalorder %s14, 8
    %s21 = sphi 0, %s33
    %s22 = sphi 0, %s29
    %s23 = sphi 0, %s21
    %s24 = sphi 0, %s22
    %s25 = sphi 0, %s23
    %s26 = sphi 0, %s24
    %s36 = sphi 0, %s38
    %s39 = sphi 0, %s36
    %s40 = sphi 0, %s39
    %s56 = sphi 0, %s40
    %s62 = sphi 0, %s64
    %s65 = sphi 0, %s62
    %s66 = sphi 0, %s65
    %s82 = sphi 0, %s66
    %s86 = sphi 0, %s86
    %s88 = sphi 0, %s86
    %s89 = sphi 0, %s88
    %s103 = sphi 0, %s89
    %s107 = sphi 0, %s107
    %s109 = sphi 0, %s107
    %s110 = sphi 0, %s109
    %s124 = sphi 0, %s110
    %s128 = sphi 0, %s128
    %s130 = sphi 0, %s128
    %s131 = sphi 0, %s130
    %s145 = sphi 0, %s131
    %s149 = sphi 0, %s149
    %s151 = sphi 0, %s149
    %s152 = sphi 0, %s151
    %s166 = sphi 0, %s152
    %s174 = sphi 0, %s176
    %s177 = sphi 0, %s174
    %s178 = sphi 0, %s177
    %s194 = sphi 0, %s178
    %s202 = sphi 0, %s204
    %s205 = sphi 0, %s202
    %s206 = sphi 0, %s205
    %s222 = sphi 0, %s206
  $region4: #{up_step_forward.2} parent=0 // loop_header_branch
    %17 = sbr.rel (%p15) target = $region8
  $region5: #{up_step_forward.2} parent=0 // loop_body
    %s19 = ssub.s32 %s14, 1
    %s20 = ssub.s32 %s14, 2
    %s27 = sadd.s32 1, %s22
    %p28 = scmp.ge.s32.totalorder %s27, 3
    %s29 = scalar_select %p28, 0, %s27
    %s30 = sadd.s32 1, %s21
    %s31 = scalar_select %p28, %s30, %s21
    %p32 = scmp.ge.s32.totalorder %s31, 2
    %s33 = scalar_select %p32, 0, %s31
    %s34 = ssub.s32 %s21, %s33
    %p35 = scmp.eq.s32.totalorder %s34, 0
    %s37 = sadd.s32 %s36, 1
    %s38 = scalar_select %p35, %s36, %s37
    %p41 = pneg %p35
    %p42 = scmp.eq.s32.totalorder %s14, 5
    %p43 = por %p41, %p42
    %p44 = scmp.ne.s32.totalorder %s36, %s39
    %p45 = scmp.eq.s32.totalorder %s14, 0
    %p46 = por %p44, %p45
    %p47 = scmp.ne.s32.totalorder %s36, %s39
    %p48 = scmp.eq.s32.totalorder %s19, 5
    %p49 = por %p47, %p48
    %p50 = scmp.ne.s32.totalorder %s39, %s40
    %p51 = scmp.eq.s32.totalorder %s19, 0
    %p52 = por %p50, %p51
    %p53 = scmp.ne.s32.totalorder %s39, %s40
    %p54 = scmp.eq.s32.totalorder %s20, 5
    %p55 = por %p53, %p54
    %p57 = scmp.ne.s32.totalorder %s40, %s56
    %p58 = scmp.eq.s32.totalorder %s20, 0
    %p59 = por %p57, %p58
    %s60 = ssub.s32 %s21, %s33
    %p61 = scmp.eq.s32.totalorder %s60, 0
    %s63 = sadd.s32 %s62, 1
    %s64 = scalar_select %p61, %s62, %s63
    %p67 = pneg %p61
    %p68 = scmp.eq.s32.totalorder %s14, 5
    %p69 = por %p67, %p68
    %p70 = scmp.ne.s32.totalorder %s62, %s65
    %p71 = scmp.eq.s32.totalorder %s14, 0
    %p72 = por %p70, %p71
    %p73 = scmp.ne.s32.totalorder %s62, %s65
    %p74 = scmp.eq.s32.totalorder %s19, 5
    %p75 = por %p73, %p74
    %p76 = scmp.ne.s32.totalorder %s65, %s66
    %p77 = scmp.eq.s32.totalorder %s19, 0
    %p78 = por %p76, %p77
    %p79 = scmp.ne.s32.totalorder %s65, %s66
    %p80 = scmp.eq.s32.totalorder %s20, 5
    %p81 = por %p79, %p80
    %p83 = scmp.ne.s32.totalorder %s66, %s82
    %p84 = scmp.eq.s32.totalorder %s20, 0
    %p85 = por %p83, %p84
    %s87 = sadd.s32 %s86, 1
    %p90 = scmp.eq.s32.totalorder %s14, 5
    %p91 = scmp.ne.s32.totalorder %s86, %s88
    %p92 = scmp.eq.s32.totalorder %s14, 0
    %p93 = por %p91, %p92
    %p94 = scmp.ne.s32.totalorder %s86, %s88
    %p95 = scmp.eq.s32.totalorder %s19, 5
    %p96 = por %p94, %p95
    %p97 = scmp.ne.s32.totalorder %s88, %s89
    %p98 = scmp.eq.s32.totalorder %s19, 0
    %p99 = por %p97, %p98
    %p100 = scmp.ne.s32.totalorder %s88, %s89
    %p101 = scmp.eq.s32.totalorder %s20, 5
    %p102 = por %p100, %p101
    %p104 = scmp.ne.s32.totalorder %s89, %s103
    %p105 = scmp.eq.s32.totalorder %s20, 0
    %p106 = por %p104, %p105
    %s108 = sadd.s32 %s107, 1
    %p111 = scmp.eq.s32.totalorder %s14, 5
    %p112 = scmp.ne.s32.totalorder %s107, %s109
    %p113 = scmp.eq.s32.totalorder %s14, 0
    %p114 = por %p112, %p113
    %p115 = scmp.ne.s32.totalorder %s107, %s109
    %p116 = scmp.eq.s32.totalorder %s19, 5
    %p117 = por %p115, %p116
    %p118 = scmp.ne.s32.totalorder %s109, %s110
    %p119 = scmp.eq.s32.totalorder %s19, 0
    %p120 = por %p118, %p119
    %p121 = scmp.ne.s32.totalorder %s109, %s110
    %p122 = scmp.eq.s32.totalorder %s20, 5
    %p123 = por %p121, %p122
    %p125 = scmp.ne.s32.totalorder %s110, %s124
    %p126 = scmp.eq.s32.totalorder %s20, 0
    %p127 = por %p125, %p126
    %s129 = sadd.s32 %s128, 1
    %p132 = scmp.eq.s32.totalorder %s14, 5
    %p133 = scmp.ne.s32.totalorder %s128, %s130
    %p134 = scmp.eq.s32.totalorder %s14, 0
    %p135 = por %p133, %p134
    %p136 = scmp.ne.s32.totalorder %s128, %s130
    %p137 = scmp.eq.s32.totalorder %s19, 5
    %p138 = por %p136, %p137
    %p139 = scmp.ne.s32.totalorder %s130, %s131
    %p140 = scmp.eq.s32.totalorder %s19, 0
    %p141 = por %p139, %p140
    %p142 = scmp.ne.s32.totalorder %s130, %s131
    %p143 = scmp.eq.s32.totalorder %s20, 5
    %p144 = por %p142, %p143
    %p146 = scmp.ne.s32.totalorder %s131, %s145
    %p147 = scmp.eq.s32.totalorder %s20, 0
    %p148 = por %p146, %p147
    %s150 = sadd.s32 %s149, 1
    %p153 = scmp.eq.s32.totalorder %s14, 5
    %p154 = scmp.ne.s32.totalorder %s149, %s151
    %p155 = scmp.eq.s32.totalorder %s14, 0
    %p156 = por %p154, %p155
    %p157 = scmp.ne.s32.totalorder %s149, %s151
    %p158 = scmp.eq.s32.totalorder %s19, 5
    %p159 = por %p157, %p158
    %p160 = scmp.ne.s32.totalorder %s151, %s152
    %p161 = scmp.eq.s32.totalorder %s19, 0
    %p162 = por %p160, %p161
    %p163 = scmp.ne.s32.totalorder %s151, %s152
    %p164 = scmp.eq.s32.totalorder %s20, 5
    %p165 = por %p163, %p164
    %p167 = scmp.ne.s32.totalorder %s152, %s166
    %p168 = scmp.eq.s32.totalorder %s20, 0
    %p169 = por %p167, %p168
    %s170 = ssub.s32 %s21, %s33
    %s171 = ssub.s32 %s22, %s29
    %s172 = sor.u32 %s170, %s171
    %p173 = scmp.eq.s32.totalorder %s172, 0
    %s175 = sadd.s32 %s174, 1
    %s176 = scalar_select %p173, %s174, %s175
    %p179 = pneg %p173
    %p180 = scmp.eq.s32.totalorder %s14, 5
    %p181 = por %p179, %p180
    %p182 = scmp.ne.s32.totalorder %s174, %s177
    %p183 = scmp.eq.s32.totalorder %s14, 0
    %p184 = por %p182, %p183
    %p185 = scmp.ne.s32.totalorder %s174, %s177
    %p186 = scmp.eq.s32.totalorder %s19, 5
    %p187 = por %p185, %p186
    %p188 = scmp.ne.s32.totalorder %s177, %s178
    %p189 = scmp.eq.s32.totalorder %s19, 0
    %p190 = por %p188, %p189
    %p191 = scmp.ne.s32.totalorder %s177, %s178
    %p192 = scmp.eq.s32.totalorder %s20, 5
    %p193 = por %p191, %p192
    %p195 = scmp.ne.s32.totalorder %s178, %s194
    %p196 = scmp.eq.s32.totalorder %s20, 0
    %p197 = por %p195, %p196
    %s198 = ssub.s32 %s21, %s33
    %s199 = ssub.s32 %s22, %s29
    %s200 = sor.u32 %s198, %s199
    %p201 = scmp.eq.s32.totalorder %s200, 0
    %s203 = sadd.s32 %s202, 1
    %s204 = scalar_select %p201, %s202, %s203
    %p207 = pneg %p201
    %p208 = scmp.eq.s32.totalorder %s14, 5
    %p209 = por %p207, %p208
    %p210 = scmp.ne.s32.totalorder %s202, %s205
    %p211 = scmp.eq.s32.totalorder %s14, 0
    %p212 = por %p210, %p211
    %p213 = scmp.ne.s32.totalorder %s202, %s205
    %p214 = scmp.eq.s32.totalorder %s19, 5
    %p215 = por %p213, %p214
    %p216 = scmp.ne.s32.totalorder %s205, %s206
    %p217 = scmp.eq.s32.totalorder %s19, 0
    %p218 = por %p216, %p217
    %p219 = scmp.ne.s32.totalorder %s205, %s206
    %p220 = scmp.eq.s32.totalorder %s20, 5
    %p221 = por %p219, %p220
    %p223 = scmp.ne.s32.totalorder %s206, %s222
    %p224 = scmp.eq.s32.totalorder %s20, 0
    %p225 = por %p223, %p224
    %p226 = scmp.le.s32.totalorder 1, %s14
    %p227 = scmp.lt.s32.totalorder %s14, 7
    %p228 = pnand %p226, %p227
    %p229 = pneg %p228
    // Predicated region
    $region9: #{up_step_forward.2} parent=5 // pred_check
      _
    $region10: #{up_step_forward.2} parent=5 // pred_check_branch
      %231 = sbr.rel (%p228) target = $region12
    $region11: #{up_step_forward.2} parent=5 // pred_region
      %s232 = ssub.s32 %s14, 1
      // Predicated region
      $region13: #{up_step_forward.2} parent=11 // pred_check
        %p233 = pneg %p99
      $region14: #{up_step_forward.2} parent=11 // pred_check_branch
        %235 = sbr.rel (%p233) target = $region16
      $region15: #{up_step_forward.2} parent=11 // pred_region
        _
      $region16: #{up_step_forward.2} parent=11 // pred_fallthru
        _
      // Predicated region
      $region17: #{up_step_forward.2} parent=11 // pred_check
        %p236 = pneg %p120
      $region18: #{up_step_forward.2} parent=11 // pred_check_branch
        %238 = sbr.rel (%p236) target = $region20
      $region19: #{up_step_forward.2} parent=11 // pred_region
        _
      $region20: #{up_step_forward.2} parent=11 // pred_fallthru
        _
      // Predicated region
      $region21: #{up_step_forward.2} parent=11 // pred_check
        %p239 = pneg %p141
      $region22: #{up_step_forward.2} parent=11 // pred_check_branch
        %241 = sbr.rel (%p239) target = $region24
      $region23: #{up_step_forward.2} parent=11 // pred_region
        _
      $region24: #{up_step_forward.2} parent=11 // pred_fallthru
        _
      // Predicated region
      $region25: #{up_step_forward.2} parent=11 // pred_check
        %p242 = pneg %p162
      $region26: #{up_step_forward.2} parent=11 // pred_check_branch
        %244 = sbr.rel (%p242) target = $region28
      $region27: #{up_step_forward.2} parent=11 // pred_region
        _
      $region28: #{up_step_forward.2} parent=11 // pred_fallthru
        _
    $region12: #{up_step_forward.2} parent=5 // pred_fallthru
      _
    %p245 = scmp.lt.s32.totalorder %s14, 6
    // Predicated region
    $region29: #{up_step_forward.2} parent=5 // pred_check
      %p246 = pneg %p245
    $region30: #{up_step_forward.2} parent=5 // pred_check_branch
      %248 = sbr.rel (%p246) target = $region32
    $region31: #{up_step_forward.2} parent=5 // pred_region
      // Predicated region
      $region33: #{up_step_forward.2} parent=31 // pred_check
        %p249 = pneg %p46
      $region34: #{up_step_forward.2} parent=31 // pred_check_branch
        %251 = sbr.rel (%p249) target = $region36
      $region35: #{up_step_forward.2} parent=31 // pred_region
        %p252 = scmp.lt.s32.totalorder %s21, 1
        %s253 = scalar_select %p252, %s21, 1
        %s254 = smul.addr %s253, 32
        %s255 = smul.addr %s254, 8
        %s256 = scalar_lea.vmem %s0, %s255
      $region36: #{up_step_forward.2} parent=31 // pred_fallthru
        _
      // Predicated region
      $region37: #{up_step_forward.2} parent=31 // pred_check
        %p257 = pneg %p72
      $region38: #{up_step_forward.2} parent=31 // pred_check_branch
        %259 = sbr.rel (%p257) target = $region40
      $region39: #{up_step_forward.2} parent=31 // pred_region
        %p260 = scmp.lt.s32.totalorder %s21, 1
        %s261 = scalar_select %p260, %s21, 1
        %s262 = smul.addr %s261, 64
        %s263 = smul.addr %s262, 8
        %s264 = scalar_lea.vmem %s1, %s263
      $region40: #{up_step_forward.2} parent=31 // pred_fallthru
        _
    $region32: #{up_step_forward.2} parent=5 // pred_fallthru
      _
    %p265 = scmp.le.s32.totalorder 1, %s14
    %p266 = scmp.lt.s32.totalorder %s14, 7
    %p267 = pnand %p265, %p266
    %p268 = pneg %p267
    // Predicated region
    $region41: #{up_step_forward.2} parent=5 // pred_check
      _
    $region42: #{up_step_forward.2} parent=5 // pred_check_branch
      %270 = sbr.rel (%p267) target = $region44
    $region43: #{up_step_forward.2} parent=5 // pred_region
      %s271 = ssub.s32 %s14, 1
      %p272 = scmp.lt.s32.totalorder %s23, 1
      %s273 = scalar_select %p272, %s23, 1
      %s274 = smul.addr %s273, 32
      %s275 = smul.addr %s274, 8
      %s276 = scalar_lea.vmem %s0, %s275
      %p277 = pneg %p52
      %p278 = pneg %p49
      %p279 = scmp.lt.s32.totalorder %s23, 1
      %s280 = scalar_select %p279, %s23, 1
      %s281 = smul.addr %s280, 64
      %s282 = smul.addr %s281, 8
      %s283 = scalar_lea.vmem %s1, %s282
      %p284 = pneg %p78
      %p285 = pneg %p75
      %p286 = pneg %p99
      %p287 = pneg %p96
      %p288 = pneg %p120
      %p289 = pneg %p117
      %p290 = pneg %p141
      %p291 = pneg %p138
      %p292 = pneg %p162
      %p293 = pneg %p159
      %p294 = pneg %p190
      %p295 = pneg %p187
      %s296 = smul.u32 10, %s24
      %p297 = scmp.lt.s32.totalorder %s23, 1
      %s298 = scalar_select %p297, %s23, 1
      %p299 = scmp.lt.s32.totalorder %s296, 29
      %s300 = scalar_select %p299, %s296, 29
      %s301 = smul.addr %s300, 2
      %s302 = smul.addr %s298, 60
      %s303 = sadd.s32 %s301, %s302
      %s304 = smul.addr %s303, 8
      %s305 = scalar_lea.vmem %s6, %s304
      %p306 = pneg %p218
      %p307 = pneg %p215
      %p308 = scmp.lt.s32.totalorder %s23, 1
      %s309 = scalar_select %p308, %s23, 1
      %p310 = scmp.lt.s32.totalorder %s24, 2
      %s311 = scalar_select %p310, %s24, 2
      %s312 = smul.addr %s309, 3
      %s313 = sadd.s32 %s311, %s312
      %s314 = smul.addr %s313, 2
      %s315 = scalar_lea.vmem %s7, %s314
      %p316 = scmp.lt.s32.totalorder %s23, 1
      %s317 = scalar_select %p316, %s23, 1
      %s318 = smul.addr %s317, 32
      %s319 = smul.addr %s318, 8
      %s320 = scalar_lea.vmem %s0, %s319
      %p321 = scmp.lt.s32.totalorder %s23, 1
      %s322 = scalar_select %p321, %s23, 1
      %s323 = smul.addr %s322, 64
      %s324 = smul.addr %s323, 8
      %s325 = scalar_lea.vmem %s1, %s324
      %s326 = smul.u32 10, %s24
      %p327 = scmp.lt.s32.totalorder %s23, 1
      %s328 = scalar_select %p327, %s23, 1
      %p329 = scmp.lt.s32.totalorder %s326, 29
      %s330 = scalar_select %p329, %s326, 29
      %s331 = smul.addr %s330, 2
      %s332 = smul.addr %s328, 60
      %s333 = sadd.s32 %s331, %s332
      %s334 = smul.addr %s333, 8
      %s335 = scalar_lea.vmem %s6, %s334
      %s336 = smul.u32 10, %s24
      %p337 = scmp.lt.s32.totalorder %s23, 1
      %s338 = scalar_select %p337, %s23, 1
      %p339 = scmp.lt.s32.totalorder %s24, 2
      %s340 = scalar_select %p339, %s24, 2
      %s341 = smul.addr %s338, 3
      %s342 = sadd.s32 %s340, %s341
      %s343 = smul.addr %s342, 2
      %s344 = scalar_lea.vmem %s7, %s343
      %s345 = smul.u32 %s24, 10
      %s346 = smul.u32 %s24, 5
      %s347 = smul.u32 %s346, 16
      %s348 = scalar_lea.vmem %s320, %s347
      %v349 = vld [vmem:[%s348] sm:$0xff]
      %v350 = vld [vmem:[%s348 + $0x8] sm:$0xff]
      %v351 = vld [vmem:[%s348 + $0x10] sm:$0xff]
      %v352 = vld [vmem:[%s348 + $0x18] sm:$0xff]
      %v353 = vld [vmem:[%s348 + $0x20] sm:$0xff]
      %v354 = vld [vmem:[%s348 + $0x28] sm:$0xff]
      %v355 = vld [vmem:[%s348 + $0x30] sm:$0xff]
      %v356 = vld [vmem:[%s348 + $0x38] sm:$0xff]
      %v357 = vld [vmem:[%s348 + $0x40] sm:$0xff]
      %v358 = vld [vmem:[%s348 + $0x48] sm:$0xff]
      %v359 = vld [vmem:[%s348 + $0x50] sm:$0xff]
      %v360 = vld [vmem:[%s348 + $0x58] sm:$0xff]
      %v361 = vld [vmem:[%s2] sm:$0xff]
      %vm362 = vcmask 64512
      %v364 = vsel %vm362, %v349, 0
      %v367 = vsel %vm362, %v350, 0
      %v370 = vsel %vm362, %v351, 0
      %v373 = vsel %vm362, %v352, 0
      %v376 = vsel %vm362, %v353, 0
      %v379 = vsel %vm362, %v354, 0
      %v382 = vsel %vm362, %v355, 0
      %v385 = vsel %vm362, %v356, 0
      %v388 = vsel %vm362, %v357, 0
      %v391 = vsel %vm362, %v358, 0
      %v394 = vsel %vm362, %v359, 0
      %v397 = vsel %vm362, %v360, 0
      %399 = vmatpush.msra.mxu0 0.0
      %400 = vmatpush.msra.mxu0 0.0
      %401 = vmatpush.msra.mxu0 0.0
      %402 = vmatpush.msra.mxu0 0.0
      %403 = vmatpush.msra.mxu0 0.0
      %404 = vmatpush.msra.mxu0 0.0
      %405 = vmatpush.msra.mxu0 0.0
      %406 = vmatpush.msra.mxu0 0.0
      %407 = vmatpush.msra.mxu0 0.0
      %408 = vmatpush.msra.mxu0 0.0
      %409 = vmatpush.msra.mxu0 0.0
      %410 = vmatpush.msra.mxu0 0.0
      %411 = vmatpush.msra.mxu0 0.0
      %412 = vmatpush.msra.mxu0 0.0
      %413 = vmatpush.msra.mxu0 0.0
      %414 = vmatpush.msra.mxu0 %v361
      %415 = vmatmul.f32.gmra.mxu0 %v364
      %v416 = vpop.f32.mrf.mxu0
      %v417 = vadd.f32 0.0, %v416
      %418 = vmatmul.f32.gmra.mxu0 %v367
      %v419 = vpop.f32.mrf.mxu0
      %v420 = vadd.f32 0.0, %v419
      %421 = vmatmul.f32.gmra.mxu0 %v370
      %v422 = vpop.f32.mrf.mxu0
      %v423 = vadd.f32 0.0, %v422
      %424 = vmatmul.f32.gmra.mxu0 %v373
      %v425 = vpop.f32.mrf.mxu0
      %v426 = vadd.f32 0.0, %v425
      %427 = vmatmul.f32.gmra.mxu0 %v376
      %v428 = vpop.f32.mrf.mxu0
      %v429 = vadd.f32 0.0, %v428
      %430 = vmatmul.f32.gmra.mxu0 %v379
      %v431 = vpop.f32.mrf.mxu0
      %v432 = vadd.f32 0.0, %v431
      %433 = vmatmul.f32.gmra.mxu0 %v382
      %v434 = vpop.f32.mrf.mxu0
      %v435 = vadd.f32 0.0, %v434
      %436 = vmatmul.f32.gmra.mxu0 %v385
      %v437 = vpop.f32.mrf.mxu0
      %v438 = vadd.f32 0.0, %v437
      %439 = vmatmul.f32.gmra.mxu0 %v388
      %v440 = vpop.f32.mrf.mxu0
      %v441 = vadd.f32 0.0, %v440
      %442 = vmatmul.f32.gmra.mxu0 %v391
      %v443 = vpop.f32.mrf.mxu0
      %v444 = vadd.f32 0.0, %v443
      %445 = vmatmul.f32.gmra.mxu0 %v394
      %v446 = vpop.f32.mrf.mxu0
      %v447 = vadd.f32 0.0, %v446
      %448 = vmatmul.f32.gmra.mxu0 %v397
      %v449 = vpop.f32.mrf.mxu0
      %v450 = vadd.f32 0.0, %v449
      %451 = vdwg.mxu0
      %s452 = scalar_lea.vmem %s2, 8
      %v453 = vld [vmem:[%s452] sm:$0xff]
      %454 = vmatpush.msra.mxu0 0.0
      %455 = vmatpush.msra.mxu0 0.0
      %456 = vmatpush.msra.mxu0 0.0
      %457 = vmatpush.msra.mxu0 0.0
      %458 = vmatpush.msra.mxu0 0.0
      %459 = vmatpush.msra.mxu0 0.0
      %460 = vmatpush.msra.mxu0 0.0
      %461 = vmatpush.msra.mxu0 0.0
      %462 = vmatpush.msra.mxu0 0.0
      %463 = vmatpush.msra.mxu0 0.0
      %464 = vmatpush.msra.mxu0 0.0
      %465 = vmatpush.msra.mxu0 0.0
      %466 = vmatpush.msra.mxu0 0.0
      %467 = vmatpush.msra.mxu0 0.0
      %468 = vmatpush.msra.mxu0 0.0
      %469 = vmatpush.msra.mxu0 %v453
      %470 = vmatmul.f32.gmra.mxu0 %v364
      %v471 = vpop.f32.mrf.mxu0
      %v472 = vadd.f32 0.0, %v471
      %473 = vmatmul.f32.gmra.mxu0 %v367
      %v474 = vpop.f32.mrf.mxu0
      %v475 = vadd.f32 0.0, %v474
      %476 = vmatmul.f32.gmra.mxu0 %v370
      %v477 = vpop.f32.mrf.mxu0
      %v478 = vadd.f32 0.0, %v477
      %479 = vmatmul.f32.gmra.mxu0 %v373
      %v480 = vpop.f32.mrf.mxu0
      %v481 = vadd.f32 0.0, %v480
      %482 = vmatmul.f32.gmra.mxu0 %v376
      %v483 = vpop.f32.mrf.mxu0
      %v484 = vadd.f32 0.0, %v483
      %485 = vmatmul.f32.gmra.mxu0 %v379
      %v486 = vpop.f32.mrf.mxu0
      %v487 = vadd.f32 0.0, %v486
      %488 = vmatmul.f32.gmra.mxu0 %v382
      %v489 = vpop.f32.mrf.mxu0
      %v490 = vadd.f32 0.0, %v489
      %491 = vmatmul.f32.gmra.mxu0 %v385
      %v492 = vpop.f32.mrf.mxu0
      %v493 = vadd.f32 0.0, %v492
      %494 = vmatmul.f32.gmra.mxu0 %v388
      %v495 = vpop.f32.mrf.mxu0
      %v496 = vadd.f32 0.0, %v495
      %497 = vmatmul.f32.gmra.mxu0 %v391
      %v498 = vpop.f32.mrf.mxu0
      %v499 = vadd.f32 0.0, %v498
      %500 = vmatmul.f32.gmra.mxu0 %v394
      %v501 = vpop.f32.mrf.mxu0
      %v502 = vadd.f32 0.0, %v501
      %503 = vmatmul.f32.gmra.mxu0 %v397
      %v504 = vpop.f32.mrf.mxu0
      %v505 = vadd.f32 0.0, %v504
      %506 = vdwg.mxu0
      %s507 = smul.u32 %s345, 16
      %s508 = scalar_lea.vmem %s325, %s507
      %v509 = vld [vmem:[%s508] sm:$0xff]
      %v510 = vld [vmem:[%s508 + $0x8] sm:$0xff]
      %v511 = vld [vmem:[%s508 + $0x10] sm:$0xff]
      %v512 = vld [vmem:[%s508 + $0x18] sm:$0xff]
      %v513 = vld [vmem:[%s508 + $0x20] sm:$0xff]
      %v514 = vld [vmem:[%s508 + $0x28] sm:$0xff]
      %v515 = vld [vmem:[%s508 + $0x30] sm:$0xff]
      %v516 = vld [vmem:[%s508 + $0x38] sm:$0xff]
      %v517 = vld [vmem:[%s508 + $0x40] sm:$0xff]
      %v518 = vld [vmem:[%s508 + $0x48] sm:$0xff]
      %v519 = vld [vmem:[%s508 + $0x50] sm:$0xff]
      %v520 = vld [vmem:[%s508 + $0x58] sm:$0xff]
      %v521 = vld [vmem:[%s508 + $0x60] sm:$0xff]
      %v522 = vld [vmem:[%s508 + $0x68] sm:$0xff]
      %v523 = vld [vmem:[%s508 + $0x70] sm:$0xff]
      %v524 = vld [vmem:[%s508 + $0x78] sm:$0xff]
      %v525 = vld [vmem:[%s508 + $0x80] sm:$0xff]
      %v526 = vld [vmem:[%s508 + $0x88] sm:$0xff]
      %v527 = vld [vmem:[%s508 + $0x90] sm:$0xff]
      %v528 = vld [vmem:[%s508 + $0x98] sm:$0xff]
      %v529 = vld [vmem:[%s508 + $0xa0] sm:$0xff]
      %v530 = vld [vmem:[%s508 + $0xa8] sm:$0xff]
      %v531 = vld [vmem:[%s508 + $0xb0] sm:$0xff]
      %v532 = vld [vmem:[%s508 + $0xb8] sm:$0xff]
      %v533 = vld [vmem:[%s3] sm:$0xff]
      %v534 = vld [vmem:[%s3 + $0x8] sm:$0xff]
      %v535 = vld [vmem:[%s3 + $0x10] sm:$0xff]
      %v536 = vld [vmem:[%s3 + $0x18] sm:$0xff]
      %v537 = vld [vmem:[%s3 + $0x20] sm:$0xf]
      %vm562 = vcmask 1046528
      %v563 = vrot.slane %v417, 1
      %v564 = vrot.slane %v420, 1
      %v565 = vsel %vm562, %v563, %v564
      %v566 = vrot.slane %v472, 1
      %v567 = vrot.slane %v475, 1
      %v568 = vsel %vm562, %v566, %v567
      %v569 = vrot.slane %v423, 1
      %v570 = vrot.slane %v426, 1
      %v571 = vsel %vm562, %v569, %v570
      %v572 = vrot.slane %v478, 1
      %v573 = vrot.slane %v481, 1
      %v574 = vsel %vm562, %v572, %v573
      %v575 = vrot.slane %v429, 1
      %v576 = vrot.slane %v432, 1
      %v577 = vsel %vm562, %v575, %v576
      %v578 = vrot.slane %v484, 1
      %v579 = vrot.slane %v487, 1
      %v580 = vsel %vm562, %v578, %v579
      %v581 = vrot.slane %v435, 1
      %v582 = vrot.slane %v438, 1
      %v583 = vsel %vm562, %v581, %v582
      %v584 = vrot.slane %v490, 1
      %v585 = vrot.slane %v493, 1
      %v586 = vsel %vm562, %v584, %v585
      %v587 = vrot.slane %v441, 1
      %v588 = vrot.slane %v444, 1
      %v589 = vsel %vm562, %v587, %v588
      %v590 = vrot.slane %v496, 1
      %v591 = vrot.slane %v499, 1
      %v592 = vsel %vm562, %v590, %v591
      %v593 = vrot.slane %v447, 1
      %v594 = vrot.slane %v450, 1
      %v595 = vsel %vm562, %v593, %v594
      %v596 = vrot.slane %v502, 1
      %v597 = vrot.slane %v505, 1
      %v598 = vsel %vm562, %v596, %v597
      %599 = vrot.lane.b32.xlu0 %v565, 8
      %v600 = vpop.permute.xlu0 %599
      %601 = vrot.lane.b32.xlu0 %v564, 8
      %v602 = vpop.permute.xlu0 %601
      %603 = vrot.lane.b32.xlu0 %v568, 8
      %v604 = vpop.permute.xlu0 %603
      %605 = vrot.lane.b32.xlu0 %v567, 8
      %v606 = vpop.permute.xlu0 %605
      %607 = vrot.lane.b32.xlu0 %v571, 8
      %v608 = vpop.permute.xlu0 %607
      %609 = vrot.lane.b32.xlu0 %v570, 8
      %v610 = vpop.permute.xlu0 %609
      %611 = vrot.lane.b32.xlu0 %v574, 8
      %v612 = vpop.permute.xlu0 %611
      %613 = vrot.lane.b32.xlu0 %v573, 8
      %v614 = vpop.permute.xlu0 %613
      %615 = vrot.lane.b32.xlu0 %v577, 8
      %v616 = vpop.permute.xlu0 %615
      %617 = vrot.lane.b32.xlu0 %v576, 8
      %v618 = vpop.permute.xlu0 %617
      %619 = vrot.lane.b32.xlu0 %v580, 8
      %v620 = vpop.permute.xlu0 %619
      %621 = vrot.lane.b32.xlu0 %v579, 8
      %v622 = vpop.permute.xlu0 %621
      %623 = vrot.lane.b32.xlu0 %v583, 8
      %v624 = vpop.permute.xlu0 %623
      %625 = vrot.lane.b32.xlu0 %v582, 8
      %v626 = vpop.permute.xlu0 %625
      %627 = vrot.lane.b32.xlu0 %v586, 8
      %v628 = vpop.permute.xlu0 %627
      %629 = vrot.lane.b32.xlu0 %v585, 8
      %v630 = vpop.permute.xlu0 %629
      %631 = vrot.lane.b32.xlu0 %v589, 8
      %v632 = vpop.permute.xlu0 %631
      %633 = vrot.lane.b32.xlu0 %v588, 8
      %v634 = vpop.permute.xlu0 %633
      %635 = vrot.lane.b32.xlu0 %v592, 8
      %v636 = vpop.permute.xlu0 %635
      %637 = vrot.lane.b32.xlu0 %v591, 8
      %v638 = vpop.permute.xlu0 %637
      %639 = vrot.lane.b32.xlu0 %v595, 8
      %v640 = vpop.permute.xlu0 %639
      %641 = vrot.lane.b32.xlu0 %v594, 8
      %v642 = vpop.permute.xlu0 %641
      %643 = vrot.lane.b32.xlu0 %v598, 8
      %v644 = vpop.permute.xlu0 %643
      %645 = vrot.lane.b32.xlu0 %v597, 8
      %v646 = vpop.permute.xlu0 %645
      %v671 = vsel %vm362, %v417, %v600
      %v672 = vsel %vm362, %v420, %v602
      %v673 = vsel %vm362, %v472, %v604
      %v674 = vsel %vm362, %v475, %v606
      %v675 = vsel %vm362, %v423, %v608
      %v676 = vsel %vm362, %v426, %v610
      %v677 = vsel %vm362, %v478, %v612
      %v678 = vsel %vm362, %v481, %v614
      %v679 = vsel %vm362, %v429, %v616
      %v680 = vsel %vm362, %v432, %v618
      %v681 = vsel %vm362, %v484, %v620
      %v682 = vsel %vm362, %v487, %v622
      %v683 = vsel %vm362, %v435, %v624
      %v684 = vsel %vm362, %v438, %v626
      %v685 = vsel %vm362, %v490, %v628
      %v686 = vsel %vm362, %v493, %v630
      %v687 = vsel %vm362, %v441, %v632
      %v688 = vsel %vm362, %v444, %v634
      %v689 = vsel %vm362, %v496, %v636
      %v690 = vsel %vm362, %v499, %v638
      %v691 = vsel %vm362, %v447, %v640
      %v692 = vsel %vm362, %v450, %v642
      %v693 = vsel %vm362, %v502, %v644
      %v694 = vsel %vm362, %v505, %v646
      %695 = vrot.lane.b32.xlu0 %v417, 124
      %v696 = vpop.permute.xlu0 %695
      %697 = vrot.lane.b32.xlu0 %v420, 124
      %v698 = vpop.permute.xlu0 %697
      %699 = vrot.lane.b32.xlu0 %v472, 124
      %v700 = vpop.permute.xlu0 %699
      %701 = vrot.lane.b32.xlu0 %v475, 124
      %v702 = vpop.permute.xlu0 %701
      %703 = vrot.lane.b32.xlu0 %v423, 124
      %v704 = vpop.permute.xlu0 %703
      %705 = vrot.lane.b32.xlu0 %v426, 124
      %v706 = vpop.permute.xlu0 %705
      %707 = vrot.lane.b32.xlu0 %v478, 124
      %v708 = vpop.permute.xlu0 %707
      %709 = vrot.lane.b32.xlu0 %v481, 124
      %v710 = vpop.permute.xlu0 %709
      %711 = vrot.lane.b32.xlu0 %v429, 124
      %v712 = vpop.permute.xlu0 %711
      %713 = vrot.lane.b32.xlu0 %v432, 124
      %v714 = vpop.permute.xlu0 %713
      %715 = vrot.lane.b32.xlu0 %v484, 124
      %v716 = vpop.permute.xlu0 %715
      %717 = vrot.lane.b32.xlu0 %v487, 124
      %v718 = vpop.permute.xlu0 %717
      %719 = vrot.lane.b32.xlu0 %v435, 124
      %v720 = vpop.permute.xlu0 %719
      %721 = vrot.lane.b32.xlu0 %v438, 124
      %v722 = vpop.permute.xlu0 %721
      %723 = vrot.lane.b32.xlu0 %v490, 124
      %v724 = vpop.permute.xlu0 %723
      %725 = vrot.lane.b32.xlu0 %v493, 124
      %v726 = vpop.permute.xlu0 %725
      %727 = vrot.lane.b32.xlu0 %v441, 124
      %v728 = vpop.permute.xlu0 %727
      %729 = vrot.lane.b32.xlu0 %v444, 124
      %v730 = vpop.permute.xlu0 %729
      %731 = vrot.lane.b32.xlu0 %v496, 124
      %v732 = vpop.permute.xlu0 %731
      %733 = vrot.lane.b32.xlu0 %v499, 124
      %v734 = vpop.permute.xlu0 %733
      %735 = vrot.lane.b32.xlu0 %v447, 124
      %v736 = vpop.permute.xlu0 %735
      %737 = vrot.lane.b32.xlu0 %v450, 124
      %v738 = vpop.permute.xlu0 %737
      %739 = vrot.lane.b32.xlu0 %v502, 124
      %v740 = vpop.permute.xlu0 %739
      %741 = vrot.lane.b32.xlu0 %v505, 124
      %v742 = vpop.permute.xlu0 %741
      %767 = vrot.lane.b32.xlu0 %v565, 4
      %v768 = vpop.permute.xlu0 %767
      %769 = vrot.lane.b32.xlu0 %v564, 4
      %v770 = vpop.permute.xlu0 %769
      %771 = vrot.lane.b32.xlu0 %v568, 4
      %v772 = vpop.permute.xlu0 %771
      %773 = vrot.lane.b32.xlu0 %v567, 4
      %v774 = vpop.permute.xlu0 %773
      %775 = vrot.lane.b32.xlu0 %v571, 4
      %v776 = vpop.permute.xlu0 %775
      %777 = vrot.lane.b32.xlu0 %v570, 4
      %v778 = vpop.permute.xlu0 %777
      %779 = vrot.lane.b32.xlu0 %v574, 4
      %v780 = vpop.permute.xlu0 %779
      %781 = vrot.lane.b32.xlu0 %v573, 4
      %v782 = vpop.permute.xlu0 %781
      %783 = vrot.lane.b32.xlu0 %v577, 4
      %v784 = vpop.permute.xlu0 %783
      %785 = vrot.lane.b32.xlu0 %v576, 4
      %v786 = vpop.permute.xlu0 %785
      %787 = vrot.lane.b32.xlu0 %v580, 4
      %v788 = vpop.permute.xlu0 %787
      %789 = vrot.lane.b32.xlu0 %v579, 4
      %v790 = vpop.permute.xlu0 %789
      %791 = vrot.lane.b32.xlu0 %v583, 4
      %v792 = vpop.permute.xlu0 %791
      %793 = vrot.lane.b32.xlu0 %v582, 4
      %v794 = vpop.permute.xlu0 %793
      %795 = vrot.lane.b32.xlu0 %v586, 4
      %v796 = vpop.permute.xlu0 %795
      %797 = vrot.lane.b32.xlu0 %v585, 4
      %v798 = vpop.permute.xlu0 %797
      %799 = vrot.lane.b32.xlu0 %v589, 4
      %v800 = vpop.permute.xlu0 %799
      %801 = vrot.lane.b32.xlu0 %v588, 4
      %v802 = vpop.permute.xlu0 %801
      %803 = vrot.lane.b32.xlu0 %v592, 4
      %v804 = vpop.permute.xlu0 %803
      %805 = vrot.lane.b32.xlu0 %v591, 4
      %v806 = vpop.permute.xlu0 %805
      %807 = vrot.lane.b32.xlu0 %v595, 4
      %v808 = vpop.permute.xlu0 %807
      %809 = vrot.lane.b32.xlu0 %v594, 4
      %v810 = vpop.permute.xlu0 %809
      %811 = vrot.lane.b32.xlu0 %v598, 4
      %v812 = vpop.permute.xlu0 %811
      %813 = vrot.lane.b32.xlu0 %v597, 4
      %v814 = vpop.permute.xlu0 %813
      %vm839 = vcmask 31744
      %v840 = vsel %vm839, %v696, %v768
      %v841 = vsel %vm839, %v698, %v770
      %v842 = vsel %vm839, %v700, %v772
      %v843 = vsel %vm839, %v702, %v774
      %v844 = vsel %vm839, %v704, %v776
      %v845 = vsel %vm839, %v706, %v778
      %v846 = vsel %vm839, %v708, %v780
      %v847 = vsel %vm839, %v710, %v782
      %v848 = vsel %vm839, %v712, %v784
      %v849 = vsel %vm839, %v714, %v786
      %v850 = vsel %vm839, %v716, %v788
      %v851 = vsel %vm839, %v718, %v790
      %v852 = vsel %vm839, %v720, %v792
      %v853 = vsel %vm839, %v722, %v794
      %v854 = vsel %vm839, %v724, %v796
      %v855 = vsel %vm839, %v726, %v798
      %v856 = vsel %vm839, %v728, %v800
      %v857 = vsel %vm839, %v730, %v802
      %v858 = vsel %vm839, %v732, %v804
      %v859 = vsel %vm839, %v734, %v806
      %v860 = vsel %vm839, %v736, %v808
      %v861 = vsel %vm839, %v738, %v810
      %v862 = vsel %vm839, %v740, %v812
      %v863 = vsel %vm839, %v742, %v814
      %884 = vrot.lane.b32.xlu0 %v673, 12
      %v885 = vpop.permute.xlu0 %884
      %886 = vrot.lane.b32.xlu0 %v674, 12
      %v887 = vpop.permute.xlu0 %886
      %888 = vrot.lane.b32.xlu0 %v675, 12
      %v889 = vpop.permute.xlu0 %888
      %890 = vrot.lane.b32.xlu0 %v676, 12
      %v891 = vpop.permute.xlu0 %890
      %892 = vrot.lane.b32.xlu0 %v677, 12
      %v893 = vpop.permute.xlu0 %892
      %894 = vrot.lane.b32.xlu0 %v678, 12
      %v895 = vpop.permute.xlu0 %894
      %896 = vrot.lane.b32.xlu0 %v679, 12
      %v897 = vpop.permute.xlu0 %896
      %898 = vrot.lane.b32.xlu0 %v680, 12
      %v899 = vpop.permute.xlu0 %898
      %900 = vrot.lane.b32.xlu0 %v681, 12
      %v901 = vpop.permute.xlu0 %900
      %902 = vrot.lane.b32.xlu0 %v682, 12
      %v903 = vpop.permute.xlu0 %902
      %904 = vrot.lane.b32.xlu0 %v683, 12
      %v905 = vpop.permute.xlu0 %904
      %906 = vrot.lane.b32.xlu0 %v684, 12
      %v907 = vpop.permute.xlu0 %906
      %908 = vrot.lane.b32.xlu0 %v685, 12
      %v909 = vpop.permute.xlu0 %908
      %910 = vrot.lane.b32.xlu0 %v686, 12
      %v911 = vpop.permute.xlu0 %910
      %912 = vrot.lane.b32.xlu0 %v687, 12
      %v913 = vpop.permute.xlu0 %912
      %914 = vrot.lane.b32.xlu0 %v688, 12
      %v915 = vpop.permute.xlu0 %914
      %916 = vrot.lane.b32.xlu0 %v689, 12
      %v917 = vpop.permute.xlu0 %916
      %918 = vrot.lane.b32.xlu0 %v690, 12
      %v919 = vpop.permute.xlu0 %918
      %920 = vrot.lane.b32.xlu0 %v691, 12
      %v921 = vpop.permute.xlu0 %920
      %922 = vrot.lane.b32.xlu0 %v692, 12
      %v923 = vpop.permute.xlu0 %922
      %946 = vrot.lane.b32.xlu0 %v675, 24
      %v947 = vpop.permute.xlu0 %946
      %948 = vrot.lane.b32.xlu0 %v676, 24
      %v949 = vpop.permute.xlu0 %948
      %950 = vrot.lane.b32.xlu0 %v677, 24
      %v951 = vpop.permute.xlu0 %950
      %952 = vrot.lane.b32.xlu0 %v678, 24
      %v953 = vpop.permute.xlu0 %952
      %954 = vrot.lane.b32.xlu0 %v679, 24
      %v955 = vpop.permute.xlu0 %954
      %956 = vrot.lane.b32.xlu0 %v680, 24
      %v957 = vpop.permute.xlu0 %956
      %958 = vrot.lane.b32.xlu0 %v681, 24
      %v959 = vpop.permute.xlu0 %958
      %960 = vrot.lane.b32.xlu0 %v682, 24
      %v961 = vpop.permute.xlu0 %960
      %962 = vrot.lane.b32.xlu0 %v683, 24
      %v963 = vpop.permute.xlu0 %962
      %964 = vrot.lane.b32.xlu0 %v684, 24
      %v965 = vpop.permute.xlu0 %964
      %966 = vrot.lane.b32.xlu0 %v685, 24
      %v967 = vpop.permute.xlu0 %966
      %968 = vrot.lane.b32.xlu0 %v686, 24
      %v969 = vpop.permute.xlu0 %968
      %970 = vrot.lane.b32.xlu0 %v687, 24
      %v971 = vpop.permute.xlu0 %970
      %972 = vrot.lane.b32.xlu0 %v688, 24
      %v973 = vpop.permute.xlu0 %972
      %974 = vrot.lane.b32.xlu0 %v689, 24
      %v975 = vpop.permute.xlu0 %974
      %976 = vrot.lane.b32.xlu0 %v690, 24
      %v977 = vpop.permute.xlu0 %976
      %978 = vrot.lane.b32.xlu0 %v691, 24
      %v979 = vpop.permute.xlu0 %978
      %980 = vrot.lane.b32.xlu0 %v692, 24
      %v981 = vpop.permute.xlu0 %980
      %982 = vrot.lane.b32.xlu0 %v693, 24
      %v983 = vpop.permute.xlu0 %982
      %984 = vrot.lane.b32.xlu0 %v694, 24
      %v985 = vpop.permute.xlu0 %984
      %vm1006 = vcmask 97280
      %v1007 = vsel %vm1006, %v671, %v885
      %v1008 = vsel %vm1006, %v672, %v887
      %v1009 = vsel %vm1006, %v673, %v889
      %v1010 = vsel %vm1006, %v674, %v891
      %v1011 = vsel %vm1006, %v675, %v893
      %v1012 = vsel %vm1006, %v676, %v895
      %v1013 = vsel %vm1006, %v677, %v897
      %v1014 = vsel %vm1006, %v678, %v899
      %v1015 = vsel %vm1006, %v679, %v901
      %v1016 = vsel %vm1006, %v680, %v903
      %v1017 = vsel %vm1006, %v681, %v905
      %v1018 = vsel %vm1006, %v682, %v907
      %v1019 = vsel %vm1006, %v683, %v909
      %v1020 = vsel %vm1006, %v684, %v911
      %v1021 = vsel %vm1006, %v685, %v913
      %v1022 = vsel %vm1006, %v686, %v915
      %v1023 = vsel %vm1006, %v687, %v917
      %v1024 = vsel %vm1006, %v688, %v919
      %v1025 = vsel %vm1006, %v689, %v921
      %v1026 = vsel %vm1006, %v690, %v923
      %vm1027 = vcmask 195584
      %v1028 = vsel %vm1027, %v1007, %v947
      %v1029 = vsel %vm1027, %v1008, %v949
      %v1030 = vsel %vm1027, %v1009, %v951
      %v1031 = vsel %vm1027, %v1010, %v953
      %v1032 = vsel %vm1027, %v1011, %v955
      %v1033 = vsel %vm1027, %v1012, %v957
      %v1034 = vsel %vm1027, %v1013, %v959
      %v1035 = vsel %vm1027, %v1014, %v961
      %v1036 = vsel %vm1027, %v1015, %v963
      %v1037 = vsel %vm1027, %v1016, %v965
      %v1038 = vsel %vm1027, %v1017, %v967
      %v1039 = vsel %vm1027, %v1018, %v969
      %v1040 = vsel %vm1027, %v1019, %v971
      %v1041 = vsel %vm1027, %v1020, %v973
      %v1042 = vsel %vm1027, %v1021, %v975
      %v1043 = vsel %vm1027, %v1022, %v977
      %v1044 = vsel %vm1027, %v1023, %v979
      %v1045 = vsel %vm1027, %v1024, %v981
      %v1046 = vsel %vm1027, %v1025, %v983
      %v1047 = vsel %vm1027, %v1026, %v985
      %1068 = vrot.lane.b32.xlu0 %v842, 12
      %v1069 = vpop.permute.xlu0 %1068
      %1070 = vrot.lane.b32.xlu0 %v843, 12
      %v1071 = vpop.permute.xlu0 %1070
      %1072 = vrot.lane.b32.xlu0 %v844, 12
      %v1073 = vpop.permute.xlu0 %1072
      %1074 = vrot.lane.b32.xlu0 %v845, 12
      %v1075 = vpop.permute.xlu0 %1074
      %1076 = vrot.lane.b32.xlu0 %v846, 12
      %v1077 = vpop.permute.xlu0 %1076
      %1078 = vrot.lane.b32.xlu0 %v847, 12
      %v1079 = vpop.permute.xlu0 %1078
      %1080 = vrot.lane.b32.xlu0 %v848, 12
      %v1081 = vpop.permute.xlu0 %1080
      %1082 = vrot.lane.b32.xlu0 %v849, 12
      %v1083 = vpop.permute.xlu0 %1082
      %1084 = vrot.lane.b32.xlu0 %v850, 12
      %v1085 = vpop.permute.xlu0 %1084
      %1086 = vrot.lane.b32.xlu0 %v851, 12
      %v1087 = vpop.permute.xlu0 %1086
      %1088 = vrot.lane.b32.xlu0 %v852, 12
      %v1089 = vpop.permute.xlu0 %1088
      %1090 = vrot.lane.b32.xlu0 %v853, 12
      %v1091 = vpop.permute.xlu0 %1090
      %1092 = vrot.lane.b32.xlu0 %v854, 12
      %v1093 = vpop.permute.xlu0 %1092
      %1094 = vrot.lane.b32.xlu0 %v855, 12
      %v1095 = vpop.permute.xlu0 %1094
      %1096 = vrot.lane.b32.xlu0 %v856, 12
      %v1097 = vpop.permute.xlu0 %1096
      %1098 = vrot.lane.b32.xlu0 %v857, 12
      %v1099 = vpop.permute.xlu0 %1098
      %1100 = vrot.lane.b32.xlu0 %v858, 12
      %v1101 = vpop.permute.xlu0 %1100
      %1102 = vrot.lane.b32.xlu0 %v859, 12
      %v1103 = vpop.permute.xlu0 %1102
      %1104 = vrot.lane.b32.xlu0 %v860, 12
      %v1105 = vpop.permute.xlu0 %1104
      %1106 = vrot.lane.b32.xlu0 %v861, 12
      %v1107 = vpop.permute.xlu0 %1106
      %1130 = vrot.lane.b32.xlu0 %v844, 24
      %v1131 = vpop.permute.xlu0 %1130
      %1132 = vrot.lane.b32.xlu0 %v845, 24
      %v1133 = vpop.permute.xlu0 %1132
      %1134 = vrot.lane.b32.xlu0 %v846, 24
      %v1135 = vpop.permute.xlu0 %1134
      %1136 = vrot.lane.b32.xlu0 %v847, 24
      %v1137 = vpop.permute.xlu0 %1136
      %1138 = vrot.lane.b32.xlu0 %v848, 24
      %v1139 = vpop.permute.xlu0 %1138
      %1140 = vrot.lane.b32.xlu0 %v849, 24
      %v1141 = vpop.permute.xlu0 %1140
      %1142 = vrot.lane.b32.xlu0 %v850, 24
      %v1143 = vpop.permute.xlu0 %1142
      %1144 = vrot.lane.b32.xlu0 %v851, 24
      %v1145 = vpop.permute.xlu0 %1144
      %1146 = vrot.lane.b32.xlu0 %v852, 24
      %v1147 = vpop.permute.xlu0 %1146
      %1148 = vrot.lane.b32.xlu0 %v853, 24
      %v1149 = vpop.permute.xlu0 %1148
      %1150 = vrot.lane.b32.xlu0 %v854, 24
      %v1151 = vpop.permute.xlu0 %1150
      %1152 = vrot.lane.b32.xlu0 %v855, 24
      %v1153 = vpop.permute.xlu0 %1152
      %1154 = vrot.lane.b32.xlu0 %v856, 24
      %v1155 = vpop.permute.xlu0 %1154
      %1156 = vrot.lane.b32.xlu0 %v857, 24
      %v1157 = vpop.permute.xlu0 %1156
      %1158 = vrot.lane.b32.xlu0 %v858, 24
      %v1159 = vpop.permute.xlu0 %1158
      %1160 = vrot.lane.b32.xlu0 %v859, 24
      %v1161 = vpop.permute.xlu0 %1160
      %1162 = vrot.lane.b32.xlu0 %v860, 24
      %v1163 = vpop.permute.xlu0 %1162
      %1164 = vrot.lane.b32.xlu0 %v861, 24
      %v1165 = vpop.permute.xlu0 %1164
      %1166 = vrot.lane.b32.xlu0 %v862, 24
      %v1167 = vpop.permute.xlu0 %1166
      %1168 = vrot.lane.b32.xlu0 %v863, 24
      %v1169 = vpop.permute.xlu0 %1168
      %v1190 = vsel %vm1006, %v840, %v1069
      %v1191 = vsel %vm1006, %v841, %v1071
      %v1192 = vsel %vm1006, %v842, %v1073
      %v1193 = vsel %vm1006, %v843, %v1075
      %v1194 = vsel %vm1006, %v844, %v1077
      %v1195 = vsel %vm1006, %v845, %v1079
      %v1196 = vsel %vm1006, %v846, %v1081
      %v1197 = vsel %vm1006, %v847, %v1083
      %v1198 = vsel %vm1006, %v848, %v1085
      %v1199 = vsel %vm1006, %v849, %v1087
      %v1200 = vsel %vm1006, %v850, %v1089
      %v1201 = vsel %vm1006, %v851, %v1091
      %v1202 = vsel %vm1006, %v852, %v1093
      %v1203 = vsel %vm1006, %v853, %v1095
      %v1204 = vsel %vm1006, %v854, %v1097
      %v1205 = vsel %vm1006, %v855, %v1099
      %v1206 = vsel %vm1006, %v856, %v1101
      %v1207 = vsel %vm1006, %v857, %v1103
      %v1208 = vsel %vm1006, %v858, %v1105
      %v1209 = vsel %vm1006, %v859, %v1107
      %v1210 = vsel %vm1027, %v1190, %v1131
      %v1211 = vsel %vm1027, %v1191, %v1133
      %v1212 = vsel %vm1027, %v1192, %v1135
      %v1213 = vsel %vm1027, %v1193, %v1137
      %v1214 = vsel %vm1027, %v1194, %v1139
      %v1215 = vsel %vm1027, %v1195, %v1141
      %v1216 = vsel %vm1027, %v1196, %v1143
      %v1217 = vsel %vm1027, %v1197, %v1145
      %v1218 = vsel %vm1027, %v1198, %v1147
      %v1219 = vsel %vm1027, %v1199, %v1149
      %v1220 = vsel %vm1027, %v1200, %v1151
      %v1221 = vsel %vm1027, %v1201, %v1153
      %v1222 = vsel %vm1027, %v1202, %v1155
      %v1223 = vsel %vm1027, %v1203, %v1157
      %v1224 = vsel %vm1027, %v1204, %v1159
      %v1225 = vsel %vm1027, %v1205, %v1161
      %v1226 = vsel %vm1027, %v1206, %v1163
      %v1227 = vsel %vm1027, %v1207, %v1165
      %v1228 = vsel %vm1027, %v1208, %v1167
      %v1229 = vsel %vm1027, %v1209, %v1169
      %v1250 = vrot.slane %v1028, 1
      %v1251 = vrot.slane %v1028, 2
      %v1252 = vrot.slane %v1028, 3
      %v1253 = vrot.slane %v1028, 4
      %v1254 = vrot.slane %v1028, 5
      %v1255 = vrot.slane %v1028, 6
      %v1256 = vrot.slane %v1028, 7
      %v1257 = vrot.slane %v1029, 1
      %v1258 = vrot.slane %v1029, 2
      %v1259 = vrot.slane %v1029, 3
      %v1260 = vrot.slane %v1029, 4
      %v1261 = vrot.slane %v1029, 5
      %v1262 = vrot.slane %v1029, 6
      %v1263 = vrot.slane %v1030, 1
      %v1264 = vrot.slane %v1030, 2
      %v1265 = vrot.slane %v1030, 3
      %v1266 = vrot.slane %v1030, 4
      %v1267 = vrot.slane %v1030, 5
      %v1268 = vrot.slane %v1030, 6
      %v1269 = vrot.slane %v1030, 7
      %v1270 = vrot.slane %v1031, 1
      %v1271 = vrot.slane %v1031, 2
      %v1272 = vrot.slane %v1031, 3
      %v1273 = vrot.slane %v1031, 4
      %v1274 = vrot.slane %v1031, 5
      %v1275 = vrot.slane %v1031, 6
      %v1276 = vrot.slane %v1032, 1
      %v1277 = vrot.slane %v1032, 2
      %v1278 = vrot.slane %v1032, 3
      %v1279 = vrot.slane %v1032, 4
      %v1280 = vrot.slane %v1032, 5
      %v1281 = vrot.slane %v1032, 6
      %v1282 = vrot.slane %v1032, 7
      %v1283 = vrot.slane %v1033, 1
      %v1284 = vrot.slane %v1033, 2
      %v1285 = vrot.slane %v1033, 3
      %v1286 = vrot.slane %v1033, 4
      %v1287 = vrot.slane %v1033, 5
      %v1288 = vrot.slane %v1033, 6
      %v1289 = vrot.slane %v1034, 1
      %v1290 = vrot.slane %v1034, 2
      %v1291 = vrot.slane %v1034, 3
      %v1292 = vrot.slane %v1034, 4
      %v1293 = vrot.slane %v1034, 5
      %v1294 = vrot.slane %v1034, 6
      %v1295 = vrot.slane %v1034, 7
      %v1296 = vrot.slane %v1035, 1
      %v1297 = vrot.slane %v1035, 2
      %v1298 = vrot.slane %v1035, 3
      %v1299 = vrot.slane %v1035, 4
      %v1300 = vrot.slane %v1035, 5
      %v1301 = vrot.slane %v1035, 6
      %v1302 = vrot.slane %v1036, 1
      %v1303 = vrot.slane %v1036, 2
      %v1304 = vrot.slane %v1036, 3
      %v1305 = vrot.slane %v1036, 4
      %v1306 = vrot.slane %v1036, 5
      %v1307 = vrot.slane %v1036, 6
      %v1308 = vrot.slane %v1036, 7
      %v1309 = vrot.slane %v1037, 1
      %v1310 = vrot.slane %v1037, 2
      %v1311 = vrot.slane %v1037, 3
      %v1312 = vrot.slane %v1037, 4
      %v1313 = vrot.slane %v1037, 5
      %v1314 = vrot.slane %v1037, 6
      %v1315 = vrot.slane %v1038, 1
      %v1316 = vrot.slane %v1038, 2
      %v1317 = vrot.slane %v1038, 3
      %v1318 = vrot.slane %v1038, 4
      %v1319 = vrot.slane %v1038, 5
      %v1320 = vrot.slane %v1038, 6
      %v1321 = vrot.slane %v1038, 7
      %v1322 = vrot.slane %v1039, 1
      %v1323 = vrot.slane %v1039, 2
      %v1324 = vrot.slane %v1039, 3
      %v1325 = vrot.slane %v1039, 4
      %v1326 = vrot.slane %v1039, 5
      %v1327 = vrot.slane %v1039, 6
      %v1328 = vrot.slane %v1040, 1
      %v1329 = vrot.slane %v1040, 2
      %v1330 = vrot.slane %v1040, 3
      %v1331 = vrot.slane %v1040, 4
      %v1332 = vrot.slane %v1040, 5
      %v1333 = vrot.slane %v1040, 6
      %v1334 = vrot.slane %v1040, 7
      %v1335 = vrot.slane %v1041, 1
      %v1336 = vrot.slane %v1041, 2
      %v1337 = vrot.slane %v1041, 3
      %v1338 = vrot.slane %v1041, 4
      %v1339 = vrot.slane %v1041, 5
      %v1340 = vrot.slane %v1041, 6
      %v1341 = vrot.slane %v1042, 1
      %v1342 = vrot.slane %v1042, 2
      %v1343 = vrot.slane %v1042, 3
      %v1344 = vrot.slane %v1042, 4
      %v1345 = vrot.slane %v1042, 5
      %v1346 = vrot.slane %v1042, 6
      %v1347 = vrot.slane %v1042, 7
      %v1348 = vrot.slane %v1043, 1
      %v1349 = vrot.slane %v1043, 2
      %v1350 = vrot.slane %v1043, 3
      %v1351 = vrot.slane %v1043, 4
      %v1352 = vrot.slane %v1043, 5
      %v1353 = vrot.slane %v1043, 6
      %v1354 = vrot.slane %v1044, 1
      %v1355 = vrot.slane %v1044, 2
      %v1356 = vrot.slane %v1044, 3
      %v1357 = vrot.slane %v1044, 4
      %v1358 = vrot.slane %v1044, 5
      %v1359 = vrot.slane %v1044, 6
      %v1360 = vrot.slane %v1044, 7
      %v1361 = vrot.slane %v1045, 1
      %v1362 = vrot.slane %v1045, 2
      %v1363 = vrot.slane %v1045, 3
      %v1364 = vrot.slane %v1045, 4
      %v1365 = vrot.slane %v1045, 5
      %v1366 = vrot.slane %v1045, 6
      %v1367 = vrot.slane %v1046, 1
      %v1368 = vrot.slane %v1046, 2
      %v1369 = vrot.slane %v1046, 3
      %v1370 = vrot.slane %v1046, 4
      %v1371 = vrot.slane %v1046, 5
      %v1372 = vrot.slane %v1046, 6
      %v1373 = vrot.slane %v1046, 7
      %v1374 = vrot.slane %v1047, 1
      %v1375 = vrot.slane %v1047, 2
      %v1376 = vrot.slane %v1047, 3
      %v1377 = vrot.slane %v1047, 4
      %v1378 = vrot.slane %v1047, 5
      %v1379 = vrot.slane %v1047, 6
      %1380 = vst [vmem:[#allocation1] ss:$9 sm:$0xff] %v1028
      %s1381 = scalar_lea.vmem [#allocation1], 1
      %1382 = vst [vmem:[%s1381] ss:$9 sm:$0xff] %v1250
      %s1383 = scalar_lea.vmem [#allocation1], 2
      %1384 = vst [vmem:[%s1383] ss:$9 sm:$0xff] %v1251
      %s1385 = scalar_lea.vmem [#allocation1], 3
      %1386 = vst [vmem:[%s1385] ss:$9 sm:$0xff] %v1252
      %s1387 = scalar_lea.vmem [#allocation1], 4
      %1388 = vst [vmem:[%s1387] ss:$9 sm:$0xff] %v1253
      %s1389 = scalar_lea.vmem [#allocation1], 5
      %1390 = vst [vmem:[%s1389] ss:$9 sm:$0xff] %v1254
      %s1391 = scalar_lea.vmem [#allocation1], 6
      %1392 = vst [vmem:[%s1391] ss:$9 sm:$0xff] %v1255
      %s1393 = scalar_lea.vmem [#allocation1], 7
      %1394 = vst [vmem:[%s1393] ss:$9 sm:$0xff] %v1256
      %v1395 = vld [vmem:[#allocation1] sm:$0xff]
      %1396 = vst [vmem:[#allocation1] ss:$9 sm:$0xff] %v1029
      %1397 = vst [vmem:[%s1381] ss:$9 sm:$0xff] %v1257
      %1398 = vst [vmem:[%s1383] ss:$9 sm:$0xff] %v1258
      %1399 = vst [vmem:[%s1385] ss:$9 sm:$0xff] %v1259
      %1400 = vst [vmem:[%s1387] ss:$9 sm:$0xff] %v1260
      %1401 = vst [vmem:[%s1389] ss:$9 sm:$0xff] %v1261
      %1402 = vst [vmem:[%s1391] ss:$9 sm:$0xff] %v1262
      %1403 = vst [vmem:[%s1393] ss:$9 sm:$0xff] %v1030
      %v1404 = vld [vmem:[#allocation1] sm:$0xff]
      %1405 = vst [vmem:[#allocation1] ss:$9 sm:$0xff] %v1263
      %1406 = vst [vmem:[%s1381] ss:$9 sm:$0xff] %v1264
      %1407 = vst [vmem:[%s1383] ss:$9 sm:$0xff] %v1265
      %1408 = vst [vmem:[%s1385] ss:$9 sm:$0xff] %v1266
      %1409 = vst [vmem:[%s1387] ss:$9 sm:$0xff] %v1267
      %1410 = vst [vmem:[%s1389] ss:$9 sm:$0xff] %v1268
      %1411 = vst [vmem:[%s1391] ss:$9 sm:$0xff] %v1269
      %1412 = vst [vmem:[%s1393] ss:$9 sm:$0xff] %v1031
      %v1413 = vld [vmem:[#allocation1] sm:$0xff]
      %1414 = vst [vmem:[#allocation1] ss:$9 sm:$0xff] %v1270
      %1415 = vst [vmem:[%s1381] ss:$9 sm:$0xff] %v1271
      %1416 = vst [vmem:[%s1383] ss:$9 sm:$0xff] %v1272
      %1417 = vst [vmem:[%s1385] ss:$9 sm:$0xff] %v1273
      %1418 = vst [vmem:[%s1387] ss:$9 sm:$0xff] %v1274
      %1419 = vst [vmem:[%s1389] ss:$9 sm:$0xff] %v1275
      %1420 = vst [vmem:[%s1391] ss:$9 sm:$0xff] %v1032
      %1421 = vst [vmem:[%s1393] ss:$9 sm:$0xff] %v1276
      %v1422 = vld [vmem:[#allocation1] sm:$0xff]
      %1423 = vst [vmem:[#allocation1] ss:$9 sm:$0xff] %v1277
      %1424 = vst [vmem:[%s1381] ss:$9 sm:$0xff] %v1278
      %1425 = vst [vmem:[%s1383] ss:$9 sm:$0xff] %v1279
      %1426 = vst [vmem:[%s1385] ss:$9 sm:$0xff] %v1280
      %1427 = vst [vmem:[%s1387] ss:$9 sm:$0xff] %v1281
      %1428 = vst [vmem:[%s1389] ss:$9 sm:$0xff] %v1282
      %1429 = vst [vmem:[%s1391] ss:$9 sm:$0xff] %v1033
      %1430 = vst [vmem:[%s1393] ss:$9 sm:$0xff] %v1283
      %v1431 = vld [vmem:[#allocation1] sm:$0xff]
      %1432 = vst [vmem:[#allocation1] ss:$9 sm:$0xff] %v1284
      %1433 = vst [vmem:[%s1381] ss:$9 sm:$0xff] %v1285
      %1434 = vst [vmem:[%s1383] ss:$9 sm:$0xff] %v1286
      %1435 = vst [vmem:[%s1385] ss:$9 sm:$0xff] %v1287
      %1436 = vst [vmem:[%s1387] ss:$9 sm:$0xff] %v1288
      %1437 = vst [vmem:[%s1389] ss:$9 sm:$0xff] %v1034
      %1438 = vst [vmem:[%s1391] ss:$9 sm:$0xff] %v1289
      %1439 = vst [vmem:[%s1393] ss:$9 sm:$0xff] %v1290
      %v1440 = vld [vmem:[#allocation1] sm:$0xff]
      %1441 = vst [vmem:[#allocation1] ss:$9 sm:$0xff] %v1291
      %1442 = vst [vmem:[%s1381] ss:$9 sm:$0xff] %v1292
      %1443 = vst [vmem:[%s1383] ss:$9 sm:$0xff] %v1293
      %1444 = vst [vmem:[%s1385] ss:$9 sm:$0xff] %v1294
      %1445 = vst [vmem:[%s1387] ss:$9 sm:$0xff] %v1295
      %1446 = vst [vmem:[%s1389] ss:$9 sm:$0xff] %v1035
      %1447 = vst [vmem:[%s1391] ss:$9 sm:$0xff] %v1296
      %1448 = vst [vmem:[%s1393] ss:$9 sm:$0xff] %v1297
      %v1449 = vld [vmem:[#allocation1] sm:$0xff]
      %1450 = vst [vmem:[#allocation1] ss:$9 sm:$0xff] %v1298
      %1451 = vst [vmem:[%s1381] ss:$9 sm:$0xff] %v1299
      %1452 = vst [vmem:[%s1383] ss:$9 sm:$0xff] %v1300
      %1453 = vst [vmem:[%s1385] ss:$9 sm:$0xff] %v1301
      %1454 = vst [vmem:[%s1387] ss:$9 sm:$0xff] %v1036
      %1455 = vst [vmem:[%s1389] ss:$9 sm:$0xff] %v1302
      %1456 = vst [vmem:[%s1391] ss:$9 sm:$0xff] %v1303
      %1457 = vst [vmem:[%s1393] ss:$9 sm:$0xff] %v1304
      %v1458 = vld [vmem:[#allocation1] sm:$0xff]
      %1459 = vst [vmem:[#allocation1] ss:$9 sm:$0xff] %v1305
      %1460 = vst [vmem:[%s1381] ss:$9 sm:$0xff] %v1306
      %1461 = vst [vmem:[%s1383] ss:$9 sm:$0xff] %v1307
      %1462 = vst [vmem:[%s1385] ss:$9 sm:$0xff] %v1308
      %1463 = vst [vmem:[%s1387] ss:$9 sm:$0xff] %v1037
      %1464 = vst [vmem:[%s1389] ss:$9 sm:$0xff] %v1309
      %1465 = vst [vmem:[%s1391] ss:$9 sm:$0xff] %v1310
      %1466 = vst [vmem:[%s1393] ss:$9 sm:$0xff] %v1311
      %v1467 = vld [vmem:[#allocation1] sm:$0xff]
      %1468 = vst [vmem:[#allocation1] ss:$9 sm:$0xff] %v1312
      %1469 = vst [vmem:[%s1381] ss:$9 sm:$0xff] %v1313
      %1470 = vst [vmem:[%s1383] ss:$9 sm:$0xff] %v1314
      %1471 = vst [vmem:[%s1385] ss:$9 sm:$0xff] %v1038
      %1472 = vst [vmem:[%s1387] ss:$9 sm:$0xff] %v1315
      %1473 = vst [vmem:[%s1389] ss:$9 sm:$0xff] %v1316
      %1474 = vst [vmem:[%s1391] ss:$9 sm:$0xff] %v1317
      %1475 = vst [vmem:[%s1393] ss:$9 sm:$0xff] %v1318
      %v1476 = vld [vmem:[#allocation1] sm:$0xff]
      %1477 = vst [vmem:[#allocation1] ss:$9 sm:$0xff] %v1319
      %1478 = vst [vmem:[%s1381] ss:$9 sm:$0xff] %v1320
      %1479 = vst [vmem:[%s1383] ss:$9 sm:$0xff] %v1321
      %1480 = vst [vmem:[%s1385] ss:$9 sm:$0xff] %v1039
      %1481 = vst [vmem:[%s1387] ss:$9 sm:$0xff] %v1322
      %1482 = vst [vmem:[%s1389] ss:$9 sm:$0xff] %v1323
      %1483 = vst [vmem:[%s1391] ss:$9 sm:$0xff] %v1324
      %1484 = vst [vmem:[%s1393] ss:$9 sm:$0xff] %v1325
      %v1485 = vld [vmem:[#allocation1] sm:$0xff]
      %1486 = vst [vmem:[#allocation1] ss:$9 sm:$0xff] %v1326
      %1487 = vst [vmem:[%s1381] ss:$9 sm:$0xff] %v1327
      %1488 = vst [vmem:[%s1383] ss:$9 sm:$0xff] %v1040
      %1489 = vst [vmem:[%s1385] ss:$9 sm:$0xff] %v1328
      %1490 = vst [vmem:[%s1387] ss:$9 sm:$0xff] %v1329
      %1491 = vst [vmem:[%s1389] ss:$9 sm:$0xff] %v1330
      %1492 = vst [vmem:[%s1391] ss:$9 sm:$0xff] %v1331
      %1493 = vst [vmem:[%s1393] ss:$9 sm:$0xff] %v1332
      %v1494 = vld [vmem:[#allocation1] sm:$0xff]
      %1495 = vst [vmem:[#allocation1] ss:$9 sm:$0xff] %v1333
      %1496 = vst [vmem:[%s1381] ss:$9 sm:$0xff] %v1334
      %1497 = vst [vmem:[%s1383] ss:$9 sm:$0xff] %v1041
      %1498 = vst [vmem:[%s1385] ss:$9 sm:$0xff] %v1335
      %1499 = vst [vmem:[%s1387] ss:$9 sm:$0xff] %v1336
      %1500 = vst [vmem:[%s1389] ss:$9 sm:$0xff] %v1337
      %1501 = vst [vmem:[%s1391] ss:$9 sm:$0xff] %v1338
      %1502 = vst [vmem:[%s1393] ss:$9 sm:$0xff] %v1339
      %v1503 = vld [vmem:[#allocation1] sm:$0xff]
      %1504 = vst [vmem:[#allocation1] ss:$9 sm:$0xff] %v1340
      %1505 = vst [vmem:[%s1381] ss:$9 sm:$0xff] %v1042
      %1506 = vst [vmem:[%s1383] ss:$9 sm:$0xff] %v1341
      %1507 = vst [vmem:[%s1385] ss:$9 sm:$0xff] %v1342
      %1508 = vst [vmem:[%s1387] ss:$9 sm:$0xff] %v1343
      %1509 = vst [vmem:[%s1389] ss:$9 sm:$0xff] %v1344
      %1510 = vst [vmem:[%s1391] ss:$9 sm:$0xff] %v1345
      %1511 = vst [vmem:[%s1393] ss:$9 sm:$0xff] %v1346
      %v1512 = vld [vmem:[#allocation1] sm:$0xff]
      %1513 = vst [vmem:[#allocation1] ss:$9 sm:$0xff] %v1347
      %1514 = vst [vmem:[%s1381] ss:$9 sm:$0xff] %v1043
      %1515 = vst [vmem:[%s1383] ss:$9 sm:$0xff] %v1348
      %1516 = vst [vmem:[%s1385] ss:$9 sm:$0xff] %v1349
      %1517 = vst [vmem:[%s1387] ss:$9 sm:$0xff] %v1350
      %1518 = vst [vmem:[%s1389] ss:$9 sm:$0xff] %v1351
      %1519 = vst [vmem:[%s1391] ss:$9 sm:$0xff] %v1352
      %1520 = vst [vmem:[%s1393] ss:$9 sm:$0xff] %v1353
      %v1521 = vld [vmem:[#allocation1] sm:$0xff]
      %1522 = vst [vmem:[#allocation1] ss:$9 sm:$0xff] %v1044
      %1523 = vst [vmem:[%s1381] ss:$9 sm:$0xff] %v1354
      %1524 = vst [vmem:[%s1383] ss:$9 sm:$0xff] %v1355
      %1525 = vst [vmem:[%s1385] ss:$9 sm:$0xff] %v1356
      %1526 = vst [vmem:[%s1387] ss:$9 sm:$0xff] %v1357
      %1527 = vst [vmem:[%s1389] ss:$9 sm:$0xff] %v1358
      %1528 = vst [vmem:[%s1391] ss:$9 sm:$0xff] %v1359
      %1529 = vst [vmem:[%s1393] ss:$9 sm:$0xff] %v1360
      %v1530 = vld [vmem:[#allocation1] sm:$0xff]
      %1531 = vst [vmem:[#allocation1] ss:$9 sm:$0xff] %v1045
      %1532 = vst [vmem:[%s1381] ss:$9 sm:$0xff] %v1361
      %1533 = vst [vmem:[%s1383] ss:$9 sm:$0xff] %v1362
      %1534 = vst [vmem:[%s1385] ss:$9 sm:$0xff] %v1363
      %1535 = vst [vmem:[%s1387] ss:$9 sm:$0xff] %v1364
      %1536 = vst [vmem:[%s1389] ss:$9 sm:$0xff] %v1365
      %1537 = vst [vmem:[%s1391] ss:$9 sm:$0xff] %v1366
      %1538 = vst [vmem:[%s1393] ss:$9 sm:$0xff] %v1046
      %v1539 = vld [vmem:[#allocation1] sm:$0xff]
      %1540 = vst [vmem:[#allocation1] ss:$9 sm:$0xff] %v1367
      %1541 = vst [vmem:[%s1381] ss:$9 sm:$0xff] %v1368
      %1542 = vst [vmem:[%s1383] ss:$9 sm:$0xff] %v1369
      %1543 = vst [vmem:[%s1385] ss:$9 sm:$0xff] %v1370
      %1544 = vst [vmem:[%s1387] ss:$9 sm:$0xff] %v1371
      %1545 = vst [vmem:[%s1389] ss:$9 sm:$0xff] %v1372
      %1546 = vst [vmem:[%s1391] ss:$9 sm:$0xff] %v1373
      %1547 = vst [vmem:[%s1393] ss:$9 sm:$0xff] %v1047
      %v1548 = vld [vmem:[#allocation1] sm:$0xff]
      %1549 = vst [vmem:[#allocation1] ss:$9 sm:$0xff] %v1374
      %1550 = vst [vmem:[%s1381] ss:$9 sm:$0xff] %v1375
      %1551 = vst [vmem:[%s1383] ss:$9 sm:$0xff] %v1376
      %1552 = vst [vmem:[%s1385] ss:$9 sm:$0xff] %v1377
      %1553 = vst [vmem:[%s1387] ss:$9 sm:$0xff] %v1378
      %1554 = vst [vmem:[%s1389] ss:$9 sm:$0xff] %v1379
      %v1555 = vld [vmem:[#allocation1] sm:$0xff]
      %vm1556 = vcmask 293888
      %v1557 = vsel %vm1556, %v1395, 0
      %v1559 = vsel %vm1556, %v1404, 0
      %v1561 = vsel %vm1556, %v1413, 0
      %v1563 = vsel %vm1556, %v1422, 0
      %v1565 = vsel %vm1556, %v1431, 0
      %v1567 = vsel %vm1556, %v1440, 0
      %v1569 = vsel %vm1556, %v1449, 0
      %v1571 = vsel %vm1556, %v1458, 0
      %v1573 = vsel %vm1556, %v1467, 0
      %v1575 = vsel %vm1556, %v1476, 0
      %v1577 = vsel %vm1556, %v1485, 0
      %v1579 = vsel %vm1556, %v1494, 0
      %v1581 = vsel %vm1556, %v1503, 0
      %v1583 = vsel %vm1556, %v1512, 0
      %v1585 = vsel %vm1556, %v1521, 0
      %v1587 = vsel %vm1556, %v1530, 0
      %v1589 = vsel %vm1556, %v1539, 0
      %v1591 = vsel %vm1556, %v1548, 0
      %v1593 = vsel %vm1556, %v1555, 0
      %vm1595 = vcmask 1043456
      %v1597 = vsel %vm1595, %v537, 0
      %1599 = vmatpush.msra.mxu0 0.0
      %1600 = vmatpush.msra.mxu0 0.0
      %1601 = vmatpush.msra.mxu0 0.0
      %1602 = vmatpush.msra.mxu0 0.0
      %1603 = vmatpush.msra.mxu0 0.0
      %1604 = vmatpush.msra.mxu0 0.0
      %1605 = vmatpush.msra.mxu0 0.0
      %1606 = vmatpush.msra.mxu0 0.0
      %1607 = vmatpush.msra.mxu0 0.0
      %1608 = vmatpush.msra.mxu0 0.0
      %1609 = vmatpush.msra.mxu0 0.0
      %1610 = vmatpush.msra.mxu0 %v1597
      %1611 = vmatpush.msra.mxu0 %v536
      %1612 = vmatpush.msra.mxu0 %v535
      %1613 = vmatpush.msra.mxu0 %v534
      %1614 = vmatpush.msra.mxu0 %v533
      %1615 = vmatmul.f32.gmra.mxu0 %v1557
      %v1616 = vpop.f32.mrf.mxu0
      %v1617 = vadd.f32 0.0, %v1616
      %1618 = vmatmul.f32.gmra.mxu0 %v1559
      %v1619 = vpop.f32.mrf.mxu0
      %v1620 = vadd.f32 0.0, %v1619
      %1621 = vmatmul.f32.gmra.mxu0 %v1561
      %v1622 = vpop.f32.mrf.mxu0
      %v1623 = vadd.f32 0.0, %v1622
      %1624 = vmatmul.f32.gmra.mxu0 %v1563
      %v1625 = vpop.f32.mrf.mxu0
      %v1626 = vadd.f32 0.0, %v1625
      %1627 = vmatmul.f32.gmra.mxu0 %v1565
      %v1628 = vpop.f32.mrf.mxu0
      %v1629 = vadd.f32 0.0, %v1628
      %1630 = vmatmul.f32.gmra.mxu0 %v1567
      %v1631 = vpop.f32.mrf.mxu0
      %v1632 = vadd.f32 0.0, %v1631
      %1633 = vmatmul.f32.gmra.mxu0 %v1569
      %v1634 = vpop.f32.mrf.mxu0
      %v1635 = vadd.f32 0.0, %v1634
      %1636 = vmatmul.f32.gmra.mxu0 %v1571
      %v1637 = vpop.f32.mrf.mxu0
      %v1638 = vadd.f32 0.0, %v1637
      %1639 = vmatmul.f32.gmra.mxu0 %v1573
      %v1640 = vpop.f32.mrf.mxu0
      %v1641 = vadd.f32 0.0, %v1640
      %1642 = vmatmul.f32.gmra.mxu0 %v1575
      %v1643 = vpop.f32.mrf.mxu0
      %v1644 = vadd.f32 0.0, %v1643
      %1645 = vmatmul.f32.gmra.mxu0 %v1577
      %v1646 = vpop.f32.mrf.mxu0
      %v1647 = vadd.f32 0.0, %v1646
      %1648 = vmatmul.f32.gmra.mxu0 %v1579
      %v1649 = vpop.f32.mrf.mxu0
      %v1650 = vadd.f32 0.0, %v1649
      %1651 = vmatmul.f32.gmra.mxu0 %v1581
      %v1652 = vpop.f32.mrf.mxu0
      %v1653 = vadd.f32 0.0, %v1652
      %1654 = vmatmul.f32.gmra.mxu0 %v1583
      %v1655 = vpop.f32.mrf.mxu0
      %v1656 = vadd.f32 0.0, %v1655
      %1657 = vmatmul.f32.gmra.mxu0 %v1585
      %v1658 = vpop.f32.mrf.mxu0
      %v1659 = vadd.f32 0.0, %v1658
      %1660 = vmatmul.f32.gmra.mxu0 %v1587
      %v1661 = vpop.f32.mrf.mxu0
      %v1662 = vadd.f32 0.0, %v1661
      %1663 = vmatmul.f32.gmra.mxu0 %v1589
      %v1664 = vpop.f32.mrf.mxu0
      %v1665 = vadd.f32 0.0, %v1664
      %1666 = vmatmul.f32.gmra.mxu0 %v1591
      %v1667 = vpop.f32.mrf.mxu0
      %v1668 = vadd.f32 0.0, %v1667
      %1669 = vmatmul.f32.gmra.mxu0 %v1593
      %v1670 = vpop.f32.mrf.mxu0
      %v1671 = vadd.f32 0.0, %v1670
      %1672 = vdwg.mxu0
      %v1693 = vrot.slane %v1210, 1
      %v1694 = vrot.slane %v1210, 2
      %v1695 = vrot.slane %v1210, 3
      %v1696 = vrot.slane %v1210, 4
      %v1697 = vrot.slane %v1210, 5
      %v1698 = vrot.slane %v1210, 6
      %v1699 = vrot.slane %v1210, 7
      %v1700 = vrot.slane %v1211, 1
      %v1701 = vrot.slane %v1211, 2
      %v1702 = vrot.slane %v1211, 3
      %v1703 = vrot.slane %v1211, 4
      %v1704 = vrot.slane %v1211, 5
      %v1705 = vrot.slane %v1211, 6
      %v1706 = vrot.slane %v1212, 1
      %v1707 = vrot.slane %v1212, 2
      %v1708 = vrot.slane %v1212, 3
      %v1709 = vrot.slane %v1212, 4
      %v1710 = vrot.slane %v1212, 5
      %v1711 = vrot.slane %v1212, 6
      %v1712 = vrot.slane %v1212, 7
      %v1713 = vrot.slane %v1213, 1
      %v1714 = vrot.slane %v1213, 2
      %v1715 = vrot.slane %v1213, 3
      %v1716 = vrot.slane %v1213, 4
      %v1717 = vrot.slane %v1213, 5
      %v1718 = vrot.slane %v1213, 6
      %v1719 = vrot.slane %v1214, 1
      %v1720 = vrot.slane %v1214, 2
      %v1721 = vrot.slane %v1214, 3
      %v1722 = vrot.slane %v1214, 4
      %v1723 = vrot.slane %v1214, 5
      %v1724 = vrot.slane %v1214, 6
      %v1725 = vrot.slane %v1214, 7
      %v1726 = vrot.slane %v1215, 1
      %v1727 = vrot.slane %v1215, 2
      %v1728 = vrot.slane %v1215, 3
      %v1729 = vrot.slane %v1215, 4
      %v1730 = vrot.slane %v1215, 5
      %v1731 = vrot.slane %v1215, 6
      %v1732 = vrot.slane %v1216, 1
      %v1733 = vrot.slane %v1216, 2
      %v1734 = vrot.slane %v1216, 3
      %v1735 = vrot.slane %v1216, 4
      %v1736 = vrot.slane %v1216, 5
      %v1737 = vrot.slane %v1216, 6
      %v1738 = vrot.slane %v1216, 7
      %v1739 = vrot.slane %v1217, 1
      %v1740 = vrot.slane %v1217, 2
      %v1741 = vrot.slane %v1217, 3
      %v1742 = vrot.slane %v1217, 4
      %v1743 = vrot.slane %v1217, 5
      %v1744 = vrot.slane %v1217, 6
      %v1745 = vrot.slane %v1218, 1
      %v1746 = vrot.slane %v1218, 2
      %v1747 = vrot.slane %v1218, 3
      %v1748 = vrot.slane %v1218, 4
      %v1749 = vrot.slane %v1218, 5
      %v1750 = vrot.slane %v1218, 6
      %v1751 = vrot.slane %v1218, 7
      %v1752 = vrot.slane %v1219, 1
      %v1753 = vrot.slane %v1219, 2
      %v1754 = vrot.slane %v1219, 3
      %v1755 = vrot.slane %v1219, 4
      %v1756 = vrot.slane %v1219, 5
      %v1757 = vrot.slane %v1219, 6
      %v1758 = vrot.slane %v1220, 1
      %v1759 = vrot.slane %v1220, 2
      %v1760 = vrot.slane %v1220, 3
      %v1761 = vrot.slane %v1220, 4
      %v1762 = vrot.slane %v1220, 5
      %v1763 = vrot.slane %v1220, 6
      %v1764 = vrot.slane %v1220, 7
      %v1765 = vrot.slane %v1221, 1
      %v1766 = vrot.slane %v1221, 2
      %v1767 = vrot.slane %v1221, 3
      %v1768 = vrot.slane %v1221, 4
      %v1769 = vrot.slane %v1221, 5
      %v1770 = vrot.slane %v1221, 6
      %v1771 = vrot.slane %v1222, 1
      %v1772 = vrot.slane %v1222, 2
      %v1773 = vrot.slane %v1222, 3
      %v1774 = vrot.slane %v1222, 4
      %v1775 = vrot.slane %v1222, 5
      %v1776 = vrot.slane %v1222, 6
      %v1777 = vrot.slane %v1222, 7
      %v1778 = vrot.slane %v1223, 1
      %v1779 = vrot.slane %v1223, 2
      %v1780 = vrot.slane %v1223, 3
      %v1781 = vrot.slane %v1223, 4
      %v1782 = vrot.slane %v1223, 5
      %v1783 = vrot.slane %v1223, 6
      %v1784 = vrot.slane %v1224, 1
      %v1785 = vrot.slane %v1224, 2
      %v1786 = vrot.slane %v1224, 3
      %v1787 = vrot.slane %v1224, 4
      %v1788 = vrot.slane %v1224, 5
      %v1789 = vrot.slane %v1224, 6
      %v1790 = vrot.slane %v1224, 7
      %v1791 = vrot.slane %v1225, 1
      %v1792 = vrot.slane %v1225, 2
      %v1793 = vrot.slane %v1225, 3
      %v1794 = vrot.slane %v1225, 4
      %v1795 = vrot.slane %v1225, 5
      %v1796 = vrot.slane %v1225, 6
      %v1797 = vrot.slane %v1226, 1
      %v1798 = vrot.slane %v1226, 2
      %v1799 = vrot.slane %v1226, 3
      %v1800 = vrot.slane %v1226, 4
      %v1801 = vrot.slane %v1226, 5
      %v1802 = vrot.slane %v1226, 6
      %v1803 = vrot.slane %v1226, 7
      %v1804 = vrot.slane %v1227, 1
      %v1805 = vrot.slane %v1227, 2
      %v1806 = vrot.slane %v1227, 3
      %v1807 = vrot.slane %v1227, 4
      %v1808 = vrot.slane %v1227, 5
      %v1809 = vrot.slane %v1227, 6
      %v1810 = vrot.slane %v1228, 1
      %v1811 = vrot.slane %v1228, 2
      %v1812 = vrot.slane %v1228, 3
      %v1813 = vrot.slane %v1228, 4
      %v1814 = vrot.slane %v1228, 5
      %v1815 = vrot.slane %v1228, 6
      %v1816 = vrot.slane %v1228, 7
      %v1817 = vrot.slane %v1229, 1
      %v1818 = vrot.slane %v1229, 2
      %v1819 = vrot.slane %v1229, 3
      %v1820 = vrot.slane %v1229, 4
      %v1821 = vrot.slane %v1229, 5
      %v1822 = vrot.slane %v1229, 6
      %1823 = vst [vmem:[#allocation1] ss:$9 sm:$0xff] %v1210
      %s1824 = scalar_lea.vmem [#allocation1], 1
      %1825 = vst [vmem:[%s1824] ss:$9 sm:$0xff] %v1693
      %s1826 = scalar_lea.vmem [#allocation1], 2
      %1827 = vst [vmem:[%s1826] ss:$9 sm:$0xff] %v1694
      %s1828 = scalar_lea.vmem [#allocation1], 3
      %1829 = vst [vmem:[%s1828] ss:$9 sm:$0xff] %v1695
      %s1830 = scalar_lea.vmem [#allocation1], 4
      %1831 = vst [vmem:[%s1830] ss:$9 sm:$0xff] %v1696
      %s1832 = scalar_lea.vmem [#allocation1], 5
      %1833 = vst [vmem:[%s1832] ss:$9 sm:$0xff] %v1697
      %s1834 = scalar_lea.vmem [#allocation1], 6
      %1835 = vst [vmem:[%s1834] ss:$9 sm:$0xff] %v1698
      %s1836 = scalar_lea.vmem [#allocation1], 7
      %1837 = vst [vmem:[%s1836] ss:$9 sm:$0xff] %v1699
      %v1838 = vld [vmem:[#allocation1] sm:$0xff]
      %1839 = vst [vmem:[#allocation1] ss:$9 sm:$0xff] %v1211
      %1840 = vst [vmem:[%s1824] ss:$9 sm:$0xff] %v1700
      %1841 = vst [vmem:[%s1826] ss:$9 sm:$0xff] %v1701
      %1842 = vst [vmem:[%s1828] ss:$9 sm:$0xff] %v1702
      %1843 = vst [vmem:[%s1830] ss:$9 sm:$0xff] %v1703
      %1844 = vst [vmem:[%s1832] ss:$9 sm:$0xff] %v1704
      %1845 = vst [vmem:[%s1834] ss:$9 sm:$0xff] %v1705
      %1846 = vst [vmem:[%s1836] ss:$9 sm:$0xff] %v1212
      %v1847 = vld [vmem:[#allocation1] sm:$0xff]
      %1848 = vst [vmem:[#allocation1] ss:$9 sm:$0xff] %v1706
      %1849 = vst [vmem:[%s1824] ss:$9 sm:$0xff] %v1707
      %1850 = vst [vmem:[%s1826] ss:$9 sm:$0xff] %v1708
      %1851 = vst [vmem:[%s1828] ss:$9 sm:$0xff] %v1709
      %1852 = vst [vmem:[%s1830] ss:$9 sm:$0xff] %v1710
      %1853 = vst [vmem:[%s1832] ss:$9 sm:$0xff] %v1711
      %1854 = vst [vmem:[%s1834] ss:$9 sm:$0xff] %v1712
      %1855 = vst [vmem:[%s1836] ss:$9 sm:$0xff] %v1213
      %v1856 = vld [vmem:[#allocation1] sm:$0xff]
      %1857 = vst [vmem:[#allocation1] ss:$9 sm:$0xff] %v1713
      %1858 = vst [vmem:[%s1824] ss:$9 sm:$0xff] %v1714
      %1859 = vst [vmem:[%s1826] ss:$9 sm:$0xff] %v1715
      %1860 = vst [vmem:[%s1828] ss:$9 sm:$0xff] %v1716
      %1861 = vst [vmem:[%s1830] ss:$9 sm:$0xff] %v1717
      %1862 = vst [vmem:[%s1832] ss:$9 sm:$0xff] %v1718
      %1863 = vst [vmem:[%s1834] ss:$9 sm:$0xff] %v1214
      %1864 = vst [vmem:[%s1836] ss:$9 sm:$0xff] %v1719
      %v1865 = vld [vmem:[#allocation1] sm:$0xff]
      %1866 = vst [vmem:[#allocation1] ss:$9 sm:$0xff] %v1720
      %1867 = vst [vmem:[%s1824] ss:$9 sm:$0xff] %v1721
      %1868 = vst [vmem:[%s1826] ss:$9 sm:$0xff] %v1722
      %1869 = vst [vmem:[%s1828] ss:$9 sm:$0xff] %v1723
      %1870 = vst [vmem:[%s1830] ss:$9 sm:$0xff] %v1724
      %1871 = vst [vmem:[%s1832] ss:$9 sm:$0xff] %v1725
      %1872 = vst [vmem:[%s1834] ss:$9 sm:$0xff] %v1215
      %1873 = vst [vmem:[%s1836] ss:$9 sm:$0xff] %v1726
      %v1874 = vld [vmem:[#allocation1] sm:$0xff]
      %1875 = vst [vmem:[#allocation1] ss:$9 sm:$0xff] %v1727
      %1876 = vst [vmem:[%s1824] ss:$9 sm:$0xff] %v1728
      %1877 = vst [vmem:[%s1826] ss:$9 sm:$0xff] %v1729
      %1878 = vst [vmem:[%s1828] ss:$9 sm:$0xff] %v1730
      %1879 = vst [vmem:[%s1830] ss:$9 sm:$0xff] %v1731
      %1880 = vst [vmem:[%s1832] ss:$9 sm:$0xff] %v1216
      %1881 = vst [vmem:[%s1834] ss:$9 sm:$0xff] %v1732
      %1882 = vst [vmem:[%s1836] ss:$9 sm:$0xff] %v1733
      %v1883 = vld [vmem:[#allocation1] sm:$0xff]
      %1884 = vst [vmem:[#allocation1] ss:$9 sm:$0xff] %v1734
      %1885 = vst [vmem:[%s1824] ss:$9 sm:$0xff] %v1735
      %1886 = vst [vmem:[%s1826] ss:$9 sm:$0xff] %v1736
      %1887 = vst [vmem:[%s1828] ss:$9 sm:$0xff] %v1737
      %1888 = vst [vmem:[%s1830] ss:$9 sm:$0xff] %v1738
      %1889 = vst [vmem:[%s1832] ss:$9 sm:$0xff] %v1217
      %1890 = vst [vmem:[%s1834] ss:$9 sm:$0xff] %v1739
      %1891 = vst [vmem:[%s1836] ss:$9 sm:$0xff] %v1740
      %v1892 = vld [vmem:[#allocation1] sm:$0xff]
      %1893 = vst [vmem:[#allocation1] ss:$9 sm:$0xff] %v1741
      %1894 = vst [vmem:[%s1824] ss:$9 sm:$0xff] %v1742
      %1895 = vst [vmem:[%s1826] ss:$9 sm:$0xff] %v1743
      %1896 = vst [vmem:[%s1828] ss:$9 sm:$0xff] %v1744
      %1897 = vst [vmem:[%s1830] ss:$9 sm:$0xff] %v1218
      %1898 = vst [vmem:[%s1832] ss:$9 sm:$0xff] %v1745
      %1899 = vst [vmem:[%s1834] ss:$9 sm:$0xff] %v1746
      %1900 = vst [vmem:[%s1836] ss:$9 sm:$0xff] %v1747
      %v1901 = vld [vmem:[#allocation1] sm:$0xff]
      %1902 = vst [vmem:[#allocation1] ss:$9 sm:$0xff] %v1748
      %1903 = vst [vmem:[%s1824] ss:$9 sm:$0xff] %v1749
      %1904 = vst [vmem:[%s1826] ss:$9 sm:$0xff] %v1750
      %1905 = vst [vmem:[%s1828] ss:$9 sm:$0xff] %v1751
      %1906 = vst [vmem:[%s1830] ss:$9 sm:$0xff] %v1219
      %1907 = vst [vmem:[%s1832] ss:$9 sm:$0xff] %v1752
      %1908 = vst [vmem:[%s1834] ss:$9 sm:$0xff] %v1753
      %1909 = vst [vmem:[%s1836] ss:$9 sm:$0xff] %v1754
      %v1910 = vld [vmem:[#allocation1] sm:$0xff]
      %1911 = vst [vmem:[#allocation1] ss:$9 sm:$0xff] %v1755
      %1912 = vst [vmem:[%s1824] ss:$9 sm:$0xff] %v1756
      %1913 = vst [vmem:[%s1826] ss:$9 sm:$0xff] %v1757
      %1914 = vst [vmem:[%s1828] ss:$9 sm:$0xff] %v1220
      %1915 = vst [vmem:[%s1830] ss:$9 sm:$0xff] %v1758
      %1916 = vst [vmem:[%s1832] ss:$9 sm:$0xff] %v1759
      %1917 = vst [vmem:[%s1834] ss:$9 sm:$0xff] %v1760
      %1918 = vst [vmem:[%s1836] ss:$9 sm:$0xff] %v1761
      %v1919 = vld [vmem:[#allocation1] sm:$0xff]
      %1920 = vst [vmem:[#allocation1] ss:$9 sm:$0xff] %v1762
      %1921 = vst [vmem:[%s1824] ss:$9 sm:$0xff] %v1763
      %1922 = vst [vmem:[%s1826] ss:$9 sm:$0xff] %v1764
      %1923 = vst [vmem:[%s1828] ss:$9 sm:$0xff] %v1221
      %1924 = vst [vmem:[%s1830] ss:$9 sm:$0xff] %v1765
      %1925 = vst [vmem:[%s1832] ss:$9 sm:$0xff] %v1766
      %1926 = vst [vmem:[%s1834] ss:$9 sm:$0xff] %v1767
      %1927 = vst [vmem:[%s1836] ss:$9 sm:$0xff] %v1768
      %v1928 = vld [vmem:[#allocation1] sm:$0xff]
      %1929 = vst [vmem:[#allocation1] ss:$9 sm:$0xff] %v1769
      %1930 = vst [vmem:[%s1824] ss:$9 sm:$0xff] %v1770
      %1931 = vst [vmem:[%s1826] ss:$9 sm:$0xff] %v1222
      %1932 = vst [vmem:[%s1828] ss:$9 sm:$0xff] %v1771
      %1933 = vst [vmem:[%s1830] ss:$9 sm:$0xff] %v1772
      %1934 = vst [vmem:[%s1832] ss:$9 sm:$0xff] %v1773
      %1935 = vst [vmem:[%s1834] ss:$9 sm:$0xff] %v1774
      %1936 = vst [vmem:[%s1836] ss:$9 sm:$0xff] %v1775
      %v1937 = vld [vmem:[#allocation1] sm:$0xff]
      %1938 = vst [vmem:[#allocation1] ss:$9 sm:$0xff] %v1776
      %1939 = vst [vmem:[%s1824] ss:$9 sm:$0xff] %v1777
      %1940 = vst [vmem:[%s1826] ss:$9 sm:$0xff] %v1223
      %1941 = vst [vmem:[%s1828] ss:$9 sm:$0xff] %v1778
      %1942 = vst [vmem:[%s1830] ss:$9 sm:$0xff] %v1779
      %1943 = vst [vmem:[%s1832] ss:$9 sm:$0xff] %v1780
      %1944 = vst [vmem:[%s1834] ss:$9 sm:$0xff] %v1781
      %1945 = vst [vmem:[%s1836] ss:$9 sm:$0xff] %v1782
      %v1946 = vld [vmem:[#allocation1] sm:$0xff]
      %1947 = vst [vmem:[#allocation1] ss:$9 sm:$0xff] %v1783
      %1948 = vst [vmem:[%s1824] ss:$9 sm:$0xff] %v1224
      %1949 = vst [vmem:[%s1826] ss:$9 sm:$0xff] %v1784
      %1950 = vst [vmem:[%s1828] ss:$9 sm:$0xff] %v1785
      %1951 = vst [vmem:[%s1830] ss:$9 sm:$0xff] %v1786
      %1952 = vst [vmem:[%s1832] ss:$9 sm:$0xff] %v1787
      %1953 = vst [vmem:[%s1834] ss:$9 sm:$0xff] %v1788
      %1954 = vst [vmem:[%s1836] ss:$9 sm:$0xff] %v1789
      %v1955 = vld [vmem:[#allocation1] sm:$0xff]
      %1956 = vst [vmem:[#allocation1] ss:$9 sm:$0xff] %v1790
      %1957 = vst [vmem:[%s1824] ss:$9 sm:$0xff] %v1225
      %1958 = vst [vmem:[%s1826] ss:$9 sm:$0xff] %v1791
      %1959 = vst [vmem:[%s1828] ss:$9 sm:$0xff] %v1792
      %1960 = vst [vmem:[%s1830] ss:$9 sm:$0xff] %v1793
      %1961 = vst [vmem:[%s1832] ss:$9 sm:$0xff] %v1794
      %1962 = vst [vmem:[%s1834] ss:$9 sm:$0xff] %v1795
      %1963 = vst [vmem:[%s1836] ss:$9 sm:$0xff] %v1796
      %v1964 = vld [vmem:[#allocation1] sm:$0xff]
      %1965 = vst [vmem:[#allocation1] ss:$9 sm:$0xff] %v1226
      %1966 = vst [vmem:[%s1824] ss:$9 sm:$0xff] %v1797
      %1967 = vst [vmem:[%s1826] ss:$9 sm:$0xff] %v1798
      %1968 = vst [vmem:[%s1828] ss:$9 sm:$0xff] %v1799
      %1969 = vst [vmem:[%s1830] ss:$9 sm:$0xff] %v1800
      %1970 = vst [vmem:[%s1832] ss:$9 sm:$0xff] %v1801
      %1971 = vst [vmem:[%s1834] ss:$9 sm:$0xff] %v1802
      %1972 = vst [vmem:[%s1836] ss:$9 sm:$0xff] %v1803
      %v1973 = vld [vmem:[#allocation1] sm:$0xff]
      %1974 = vst [vmem:[#allocation1] ss:$9 sm:$0xff] %v1227
      %1975 = vst [vmem:[%s1824] ss:$9 sm:$0xff] %v1804
      %1976 = vst [vmem:[%s1826] ss:$9 sm:$0xff] %v1805
      %1977 = vst [vmem:[%s1828] ss:$9 sm:$0xff] %v1806
      %1978 = vst [vmem:[%s1830] ss:$9 sm:$0xff] %v1807
      %1979 = vst [vmem:[%s1832] ss:$9 sm:$0xff] %v1808
      %1980 = vst [vmem:[%s1834] ss:$9 sm:$0xff] %v1809
      %1981 = vst [vmem:[%s1836] ss:$9 sm:$0xff] %v1228
      %v1982 = vld [vmem:[#allocation1] sm:$0xff]
      %1983 = vst [vmem:[#allocation1] ss:$9 sm:$0xff] %v1810
      %1984 = vst [vmem:[%s1824] ss:$9 sm:$0xff] %v1811
      %1985 = vst [vmem:[%s1826] ss:$9 sm:$0xff] %v1812
      %1986 = vst [vmem:[%s1828] ss:$9 sm:$0xff] %v1813
      %1987 = vst [vmem:[%s1830] ss:$9 sm:$0xff] %v1814
      %1988 = vst [vmem:[%s1832] ss:$9 sm:$0xff] %v1815
      %1989 = vst [vmem:[%s1834] ss:$9 sm:$0xff] %v1816
      %1990 = vst [vmem:[%s1836] ss:$9 sm:$0xff] %v1229
      %v1991 = vld [vmem:[#allocation1] sm:$0xff]
      %1992 = vst [vmem:[#allocation1] ss:$9 sm:$0xff] %v1817
      %1993 = vst [vmem:[%s1824] ss:$9 sm:$0xff] %v1818
      %1994 = vst [vmem:[%s1826] ss:$9 sm:$0xff] %v1819
      %1995 = vst [vmem:[%s1828] ss:$9 sm:$0xff] %v1820
      %1996 = vst [vmem:[%s1830] ss:$9 sm:$0xff] %v1821
      %1997 = vst [vmem:[%s1832] ss:$9 sm:$0xff] %v1822
      %v1998 = vld [vmem:[#allocation1] sm:$0xff]
      %v1999 = vsel %vm1556, %v1838, 0
      %v2001 = vsel %vm1556, %v1847, 0
      %v2003 = vsel %vm1556, %v1856, 0
      %v2005 = vsel %vm1556, %v1865, 0
      %v2007 = vsel %vm1556, %v1874, 0
      %v2009 = vsel %vm1556, %v1883, 0
      %v2011 = vsel %vm1556, %v1892, 0
      %v2013 = vsel %vm1556, %v1901, 0
      %v2015 = vsel %vm1556, %v1910, 0
      %v2017 = vsel %vm1556, %v1919, 0
      %v2019 = vsel %vm1556, %v1928, 0
      %v2021 = vsel %vm1556, %v1937, 0
      %v2023 = vsel %vm1556, %v1946, 0
      %v2025 = vsel %vm1556, %v1955, 0
      %v2027 = vsel %vm1556, %v1964, 0
      %v2029 = vsel %vm1556, %v1973, 0
      %v2031 = vsel %vm1556, %v1982, 0
      %v2033 = vsel %vm1556, %v1991, 0
      %v2035 = vsel %vm1556, %v1998, 0
      %2037 = vmatpush.msra.mxu0 0.0
      %2038 = vmatpush.msra.mxu0 0.0
      %2039 = vmatpush.msra.mxu0 0.0
      %2040 = vmatpush.msra.mxu0 0.0
      %2041 = vmatpush.msra.mxu0 0.0
      %2042 = vmatpush.msra.mxu0 0.0
      %2043 = vmatpush.msra.mxu0 0.0
      %2044 = vmatpush.msra.mxu0 0.0
      %2045 = vmatpush.msra.mxu0 0.0
      %2046 = vmatpush.msra.mxu0 0.0
      %2047 = vmatpush.msra.mxu0 0.0
      %2048 = vmatpush.msra.mxu0 %v1597
      %2049 = vmatpush.msra.mxu0 %v536
      %2050 = vmatpush.msra.mxu0 %v535
      %2051 = vmatpush.msra.mxu0 %v534
      %2052 = vmatpush.msra.mxu0 %v533
      %2053 = vmatmul.f32.gmra.mxu0 %v1999
      %v2054 = vpop.f32.mrf.mxu0
      %v2055 = vadd.f32 0.0, %v2054
      %2056 = vmatmul.f32.gmra.mxu0 %v2001
      %v2057 = vpop.f32.mrf.mxu0
      %v2058 = vadd.f32 0.0, %v2057
      %2059 = vmatmul.f32.gmra.mxu0 %v2003
      %v2060 = vpop.f32.mrf.mxu0
      %v2061 = vadd.f32 0.0, %v2060
      %2062 = vmatmul.f32.gmra.mxu0 %v2005
      %v2063 = vpop.f32.mrf.mxu0
      %v2064 = vadd.f32 0.0, %v2063
      %2065 = vmatmul.f32.gmra.mxu0 %v2007
      %v2066 = vpop.f32.mrf.mxu0
      %v2067 = vadd.f32 0.0, %v2066
      %2068 = vmatmul.f32.gmra.mxu0 %v2009
      %v2069 = vpop.f32.mrf.mxu0
      %v2070 = vadd.f32 0.0, %v2069
      %2071 = vmatmul.f32.gmra.mxu0 %v2011
      %v2072 = vpop.f32.mrf.mxu0
      %v2073 = vadd.f32 0.0, %v2072
      %2074 = vmatmul.f32.gmra.mxu0 %v2013
      %v2075 = vpop.f32.mrf.mxu0
      %v2076 = vadd.f32 0.0, %v2075
      %2077 = vmatmul.f32.gmra.mxu0 %v2015
      %v2078 = vpop.f32.mrf.mxu0
      %v2079 = vadd.f32 0.0, %v2078
      %2080 = vmatmul.f32.gmra.mxu0 %v2017
      %v2081 = vpop.f32.mrf.mxu0
      %v2082 = vadd.f32 0.0, %v2081
      %2083 = vmatmul.f32.gmra.mxu0 %v2019
      %v2084 = vpop.f32.mrf.mxu0
      %v2085 = vadd.f32 0.0, %v2084
      %2086 = vmatmul.f32.gmra.mxu0 %v2021
      %v2087 = vpop.f32.mrf.mxu0
      %v2088 = vadd.f32 0.0, %v2087
      %2089 = vmatmul.f32.gmra.mxu0 %v2023
      %v2090 = vpop.f32.mrf.mxu0
      %v2091 = vadd.f32 0.0, %v2090
      %2092 = vmatmul.f32.gmra.mxu0 %v2025
      %v2093 = vpop.f32.mrf.mxu0
      %v2094 = vadd.f32 0.0, %v2093
      %2095 = vmatmul.f32.gmra.mxu0 %v2027
      %v2096 = vpop.f32.mrf.mxu0
      %v2097 = vadd.f32 0.0, %v2096
      %2098 = vmatmul.f32.gmra.mxu0 %v2029
      %v2099 = vpop.f32.mrf.mxu0
      %v2100 = vadd.f32 0.0, %v2099
      %2101 = vmatmul.f32.gmra.mxu0 %v2031
      %v2102 = vpop.f32.mrf.mxu0
      %v2103 = vadd.f32 0.0, %v2102
      %2104 = vmatmul.f32.gmra.mxu0 %v2033
      %v2105 = vpop.f32.mrf.mxu0
      %v2106 = vadd.f32 0.0, %v2105
      %2107 = vmatmul.f32.gmra.mxu0 %v2035
      %v2108 = vpop.f32.mrf.mxu0
      %v2109 = vadd.f32 0.0, %v2108
      %2110 = vdwg.mxu0
      %v2130 = vrot.slane %v1617, 1
      %v2131 = vrot.slane %v1617, 2
      %v2132 = vrot.slane %v1617, 3
      %v2133 = vrot.slane %v1617, 4
      %v2134 = vrot.slane %v1617, 5
      %v2135 = vrot.slane %v1617, 6
      %v2136 = vrot.slane %v1617, 7
      %v2137 = vrot.slane %v1620, 1
      %v2138 = vrot.slane %v1620, 2
      %v2139 = vrot.slane %v1620, 3
      %v2140 = vrot.slane %v1620, 4
      %v2141 = vrot.slane %v1620, 5
      %v2142 = vrot.slane %v1620, 6
      %v2143 = vrot.slane %v1620, 7
      %v2144 = vrot.slane %v1623, 1
      %v2145 = vrot.slane %v1623, 2
      %v2146 = vrot.slane %v1623, 3
      %v2147 = vrot.slane %v1623, 4
      %v2148 = vrot.slane %v1623, 5
      %v2149 = vrot.slane %v1623, 6
      %v2150 = vrot.slane %v1623, 7
      %v2151 = vrot.slane %v1626, 1
      %v2152 = vrot.slane %v1626, 2
      %v2153 = vrot.slane %v1626, 3
      %v2154 = vrot.slane %v1626, 4
      %v2155 = vrot.slane %v1626, 5
      %v2156 = vrot.slane %v1626, 6
      %v2157 = vrot.slane %v1626, 7
      %v2158 = vrot.slane %v1629, 1
      %v2159 = vrot.slane %v1629, 2
      %v2160 = vrot.slane %v1629, 3
      %v2161 = vrot.slane %v1629, 4
      %v2162 = vrot.slane %v1629, 5
      %v2163 = vrot.slane %v1629, 6
      %v2164 = vrot.slane %v1629, 7
      %v2165 = vrot.slane %v1632, 1
      %v2166 = vrot.slane %v1632, 2
      %v2167 = vrot.slane %v1632, 3
      %v2168 = vrot.slane %v1632, 4
      %v2169 = vrot.slane %v1632, 5
      %v2170 = vrot.slane %v1632, 6
      %v2171 = vrot.slane %v1632, 7
      %v2172 = vrot.slane %v1635, 1
      %v2173 = vrot.slane %v1635, 2
      %v2174 = vrot.slane %v1635, 3
      %v2175 = vrot.slane %v1635, 4
      %v2176 = vrot.slane %v1635, 5
      %v2177 = vrot.slane %v1635, 6
      %v2178 = vrot.slane %v1635, 7
      %v2179 = vrot.slane %v1638, 1
      %v2180 = vrot.slane %v1638, 2
      %v2181 = vrot.slane %v1638, 3
      %v2182 = vrot.slane %v1638, 4
      %v2183 = vrot.slane %v1638, 5
      %v2184 = vrot.slane %v1638, 6
      %v2185 = vrot.slane %v1638, 7
      %v2186 = vrot.slane %v1641, 1
      %v2187 = vrot.slane %v1641, 2
      %v2188 = vrot.slane %v1641, 3
      %v2189 = vrot.slane %v1641, 4
      %v2190 = vrot.slane %v1641, 5
      %v2191 = vrot.slane %v1641, 6
      %v2192 = vrot.slane %v1641, 7
      %v2193 = vrot.slane %v1644, 1
      %v2194 = vrot.slane %v1644, 2
      %v2195 = vrot.slane %v1644, 3
      %v2196 = vrot.slane %v1644, 4
      %v2197 = vrot.slane %v1644, 5
      %v2198 = vrot.slane %v1644, 6
      %v2199 = vrot.slane %v1644, 7
      %v2200 = vrot.slane %v1647, 1
      %v2201 = vrot.slane %v1647, 2
      %v2202 = vrot.slane %v1647, 3
      %v2203 = vrot.slane %v1647, 4
      %v2204 = vrot.slane %v1647, 5
      %v2205 = vrot.slane %v1647, 6
      %v2206 = vrot.slane %v1647, 7
      %v2207 = vrot.slane %v1650, 1
      %v2208 = vrot.slane %v1650, 2
      %v2209 = vrot.slane %v1650, 3
      %v2210 = vrot.slane %v1650, 4
      %v2211 = vrot.slane %v1650, 5
      %v2212 = vrot.slane %v1650, 6
      %v2213 = vrot.slane %v1650, 7
      %v2214 = vrot.slane %v1653, 1
      %v2215 = vrot.slane %v1653, 2
      %v2216 = vrot.slane %v1653, 3
      %v2217 = vrot.slane %v1653, 4
      %v2218 = vrot.slane %v1653, 5
      %v2219 = vrot.slane %v1653, 6
      %v2220 = vrot.slane %v1653, 7
      %v2221 = vrot.slane %v1656, 1
      %v2222 = vrot.slane %v1656, 2
      %v2223 = vrot.slane %v1656, 3
      %v2224 = vrot.slane %v1656, 4
      %v2225 = vrot.slane %v1656, 5
      %v2226 = vrot.slane %v1656, 6
      %v2227 = vrot.slane %v1656, 7
      %v2228 = vrot.slane %v1659, 1
      %v2229 = vrot.slane %v1659, 2
      %v2230 = vrot.slane %v1659, 3
      %v2231 = vrot.slane %v1659, 4
      %v2232 = vrot.slane %v1659, 5
      %v2233 = vrot.slane %v1659, 6
      %v2234 = vrot.slane %v1659, 7
      %v2235 = vrot.slane %v1662, 1
      %v2236 = vrot.slane %v1662, 2
      %v2237 = vrot.slane %v1662, 3
      %v2238 = vrot.slane %v1662, 4
      %v2239 = vrot.slane %v1662, 5
      %v2240 = vrot.slane %v1662, 6
      %v2241 = vrot.slane %v1662, 7
      %v2242 = vrot.slane %v1665, 1
      %v2243 = vrot.slane %v1665, 2
      %v2244 = vrot.slane %v1665, 3
      %v2245 = vrot.slane %v1665, 4
      %v2246 = vrot.slane %v1665, 5
      %v2247 = vrot.slane %v1665, 6
      %v2248 = vrot.slane %v1665, 7
      %v2249 = vrot.slane %v1668, 1
      %v2250 = vrot.slane %v1668, 2
      %v2251 = vrot.slane %v1668, 3
      %v2252 = vrot.slane %v1668, 4
      %v2253 = vrot.slane %v1668, 5
      %v2254 = vrot.slane %v1668, 6
      %v2255 = vrot.slane %v1668, 7
      %v2256 = vrot.slane %v1671, 1
      %v2257 = vrot.slane %v1671, 2
      %v2258 = vrot.slane %v1671, 3
      %v2259 = vrot.slane %v1671, 4
      %v2260 = vrot.slane %v1671, 5
      %v2280 = vrot.slane %v2055, 1
      %v2281 = vrot.slane %v2055, 2
      %v2282 = vrot.slane %v2055, 3
      %v2283 = vrot.slane %v2055, 4
      %v2284 = vrot.slane %v2055, 5
      %v2285 = vrot.slane %v2055, 6
      %v2286 = vrot.slane %v2055, 7
      %v2287 = vrot.slane %v2058, 1
      %v2288 = vrot.slane %v2058, 2
      %v2289 = vrot.slane %v2058, 3
      %v2290 = vrot.slane %v2058, 4
      %v2291 = vrot.slane %v2058, 5
      %v2292 = vrot.slane %v2058, 6
      %v2293 = vrot.slane %v2058, 7
      %v2294 = vrot.slane %v2061, 1
      %v2295 = vrot.slane %v2061, 2
      %v2296 = vrot.slane %v2061, 3
      %v2297 = vrot.slane %v2061, 4
      %v2298 = vrot.slane %v2061, 5
      %v2299 = vrot.slane %v2061, 6
      %v2300 = vrot.slane %v2061, 7
      %v2301 = vrot.slane %v2064, 1
      %v2302 = vrot.slane %v2064, 2
      %v2303 = vrot.slane %v2064, 3
      %v2304 = vrot.slane %v2064, 4
      %v2305 = vrot.slane %v2064, 5
      %v2306 = vrot.slane %v2064, 6
      %v2307 = vrot.slane %v2064, 7
      %v2308 = vrot.slane %v2067, 1
      %v2309 = vrot.slane %v2067, 2
      %v2310 = vrot.slane %v2067, 3
      %v2311 = vrot.slane %v2067, 4
      %v2312 = vrot.slane %v2067, 5
      %v2313 = vrot.slane %v2067, 6
      %v2314 = vrot.slane %v2067, 7
      %v2315 = vrot.slane %v2070, 1
      %v2316 = vrot.slane %v2070, 2
      %v2317 = vrot.slane %v2070, 3
      %v2318 = vrot.slane %v2070, 4
      %v2319 = vrot.slane %v2070, 5
      %v2320 = vrot.slane %v2070, 6
      %v2321 = vrot.slane %v2070, 7
      %v2322 = vrot.slane %v2073, 1
      %v2323 = vrot.slane %v2073, 2
      %v2324 = vrot.slane %v2073, 3
      %v2325 = vrot.slane %v2073, 4
      %v2326 = vrot.slane %v2073, 5
      %v2327 = vrot.slane %v2073, 6
      %v2328 = vrot.slane %v2073, 7
      %v2329 = vrot.slane %v2076, 1
      %v2330 = vrot.slane %v2076, 2
      %v2331 = vrot.slane %v2076, 3
      %v2332 = vrot.slane %v2076, 4
      %v2333 = vrot.slane %v2076, 5
      %v2334 = vrot.slane %v2076, 6
      %v2335 = vrot.slane %v2076, 7
      %v2336 = vrot.slane %v2079, 1
      %v2337 = vrot.slane %v2079, 2
      %v2338 = vrot.slane %v2079, 3
      %v2339 = vrot.slane %v2079, 4
      %v2340 = vrot.slane %v2079, 5
      %v2341 = vrot.slane %v2079, 6
      %v2342 = vrot.slane %v2079, 7
      %v2343 = vrot.slane %v2082, 1
      %v2344 = vrot.slane %v2082, 2
      %v2345 = vrot.slane %v2082, 3
      %v2346 = vrot.slane %v2082, 4
      %v2347 = vrot.slane %v2082, 5
      %v2348 = vrot.slane %v2082, 6
      %v2349 = vrot.slane %v2082, 7
      %v2350 = vrot.slane %v2085, 1
      %v2351 = vrot.slane %v2085, 2
      %v2352 = vrot.slane %v2085, 3
      %v2353 = vrot.slane %v2085, 4
      %v2354 = vrot.slane %v2085, 5
      %v2355 = vrot.slane %v2085, 6
      %v2356 = vrot.slane %v2085, 7
      %v2357 = vrot.slane %v2088, 1
      %v2358 = vrot.slane %v2088, 2
      %v2359 = vrot.slane %v2088, 3
      %v2360 = vrot.slane %v2088, 4
      %v2361 = vrot.slane %v2088, 5
      %v2362 = vrot.slane %v2088, 6
      %v2363 = vrot.slane %v2088, 7
      %v2364 = vrot.slane %v2091, 1
      %v2365 = vrot.slane %v2091, 2
      %v2366 = vrot.slane %v2091, 3
      %v2367 = vrot.slane %v2091, 4
      %v2368 = vrot.slane %v2091, 5
      %v2369 = vrot.slane %v2091, 6
      %v2370 = vrot.slane %v2091, 7
      %v2371 = vrot.slane %v2094, 1
      %v2372 = vrot.slane %v2094, 2
      %v2373 = vrot.slane %v2094, 3
      %v2374 = vrot.slane %v2094, 4
      %v2375 = vrot.slane %v2094, 5
      %v2376 = vrot.slane %v2094, 6
      %v2377 = vrot.slane %v2094, 7
      %v2378 = vrot.slane %v2097, 1
      %v2379 = vrot.slane %v2097, 2
      %v2380 = vrot.slane %v2097, 3
      %v2381 = vrot.slane %v2097, 4
      %v2382 = vrot.slane %v2097, 5
      %v2383 = vrot.slane %v2097, 6
      %v2384 = vrot.slane %v2097, 7
      %v2385 = vrot.slane %v2100, 1
      %v2386 = vrot.slane %v2100, 2
      %v2387 = vrot.slane %v2100, 3
      %v2388 = vrot.slane %v2100, 4
      %v2389 = vrot.slane %v2100, 5
      %v2390 = vrot.slane %v2100, 6
      %v2391 = vrot.slane %v2100, 7
      %v2392 = vrot.slane %v2103, 1
      %v2393 = vrot.slane %v2103, 2
      %v2394 = vrot.slane %v2103, 3
      %v2395 = vrot.slane %v2103, 4
      %v2396 = vrot.slane %v2103, 5
      %v2397 = vrot.slane %v2103, 6
      %v2398 = vrot.slane %v2103, 7
      %v2399 = vrot.slane %v2106, 1
      %v2400 = vrot.slane %v2106, 2
      %v2401 = vrot.slane %v2106, 3
      %v2402 = vrot.slane %v2106, 4
      %v2403 = vrot.slane %v2106, 5
      %v2404 = vrot.slane %v2106, 6
      %v2405 = vrot.slane %v2106, 7
      %v2406 = vrot.slane %v2109, 1
      %v2407 = vrot.slane %v2109, 2
      %v2408 = vrot.slane %v2109, 3
      %v2409 = vrot.slane %v2109, 4
      %v2410 = vrot.slane %v2109, 5
      %2411 = vst [vmem:[#allocation1] ss:$9 sm:$0xff] %v1617
      %s2412 = scalar_lea.vmem [#allocation1], 1
      %2413 = vst [vmem:[%s2412] ss:$9 sm:$0xff] %v2130
      %s2414 = scalar_lea.vmem [#allocation1], 2
      %2415 = vst [vmem:[%s2414] ss:$9 sm:$0xff] %v2131
      %s2416 = scalar_lea.vmem [#allocation1], 3
      %2417 = vst [vmem:[%s2416] ss:$9 sm:$0xff] %v2132
      %s2418 = scalar_lea.vmem [#allocation1], 4
      %2419 = vst [vmem:[%s2418] ss:$9 sm:$0xff] %v2133
      %s2420 = scalar_lea.vmem [#allocation1], 5
      %2421 = vst [vmem:[%s2420] ss:$9 sm:$0xff] %v2134
      %s2422 = scalar_lea.vmem [#allocation1], 6
      %2423 = vst [vmem:[%s2422] ss:$9 sm:$0xff] %v2135
      %s2424 = scalar_lea.vmem [#allocation1], 7
      %2425 = vst [vmem:[%s2424] ss:$9 sm:$0xff] %v2136
      %v2426 = vld [vmem:[#allocation1] sm:$0xff]
      %2427 = vst [vmem:[#allocation1] ss:$9 sm:$0xff] %v1620
      %2428 = vst [vmem:[%s2412] ss:$9 sm:$0xff] %v2137
      %2429 = vst [vmem:[%s2414] ss:$9 sm:$0xff] %v2138
      %2430 = vst [vmem:[%s2416] ss:$9 sm:$0xff] %v2139
      %2431 = vst [vmem:[%s2418] ss:$9 sm:$0xff] %v2140
      %2432 = vst [vmem:[%s2420] ss:$9 sm:$0xff] %v2141
      %2433 = vst [vmem:[%s2422] ss:$9 sm:$0xff] %v2142
      %v2434 = vld [vmem:[#allocation1] sm:$0xff]
      %2435 = vst [vmem:[#allocation1] ss:$9 sm:$0xff] %v2143
      %2436 = vst [vmem:[%s2412] ss:$9 sm:$0xff] %v1623
      %2437 = vst [vmem:[%s2414] ss:$9 sm:$0xff] %v2144
      %2438 = vst [vmem:[%s2416] ss:$9 sm:$0xff] %v2145
      %2439 = vst [vmem:[%s2418] ss:$9 sm:$0xff] %v2146
      %2440 = vst [vmem:[%s2420] ss:$9 sm:$0xff] %v2147
      %2441 = vst [vmem:[%s2422] ss:$9 sm:$0xff] %v2148
      %2442 = vst [vmem:[%s2424] ss:$9 sm:$0xff] %v2149
      %v2443 = vld [vmem:[#allocation1] sm:$0xff]
      %2444 = vst [vmem:[#allocation1] ss:$9 sm:$0xff] %v2150
      %2445 = vst [vmem:[%s2412] ss:$9 sm:$0xff] %v1626
      %2446 = vst [vmem:[%s2414] ss:$9 sm:$0xff] %v2151
      %2447 = vst [vmem:[%s2416] ss:$9 sm:$0xff] %v2152
      %2448 = vst [vmem:[%s2418] ss:$9 sm:$0xff] %v2153
      %2449 = vst [vmem:[%s2420] ss:$9 sm:$0xff] %v2154
      %2450 = vst [vmem:[%s2422] ss:$9 sm:$0xff] %v2155
      %v2451 = vld [vmem:[#allocation1] sm:$0xff]
      %2452 = vst [vmem:[#allocation1] ss:$9 sm:$0xff] %v2156
      %2453 = vst [vmem:[%s2412] ss:$9 sm:$0xff] %v2157
      %2454 = vst [vmem:[%s2414] ss:$9 sm:$0xff] %v1629
      %2455 = vst [vmem:[%s2416] ss:$9 sm:$0xff] %v2158
      %2456 = vst [vmem:[%s2418] ss:$9 sm:$0xff] %v2159
      %2457 = vst [vmem:[%s2420] ss:$9 sm:$0xff] %v2160
      %2458 = vst [vmem:[%s2422] ss:$9 sm:$0xff] %v2161
      %2459 = vst [vmem:[%s2424] ss:$9 sm:$0xff] %v2162
      %v2460 = vld [vmem:[#allocation1] sm:$0xff]
      %2461 = vst [vmem:[#allocation1] ss:$9 sm:$0xff] %v2163
      %2462 = vst [vmem:[%s2412] ss:$9 sm:$0xff] %v2164
      %2463 = vst [vmem:[%s2414] ss:$9 sm:$0xff] %v1632
      %2464 = vst [vmem:[%s2416] ss:$9 sm:$0xff] %v2165
      %2465 = vst [vmem:[%s2418] ss:$9 sm:$0xff] %v2166
      %2466 = vst [vmem:[%s2420] ss:$9 sm:$0xff] %v2167
      %2467 = vst [vmem:[%s2422] ss:$9 sm:$0xff] %v2168
      %v2468 = vld [vmem:[#allocation1] sm:$0xff]
      %2469 = vst [vmem:[#allocation1] ss:$9 sm:$0xff] %v2169
      %2470 = vst [vmem:[%s2412] ss:$9 sm:$0xff] %v2170
      %2471 = vst [vmem:[%s2414] ss:$9 sm:$0xff] %v2171
      %2472 = vst [vmem:[%s2416] ss:$9 sm:$0xff] %v1635
      %2473 = vst [vmem:[%s2418] ss:$9 sm:$0xff] %v2172
      %2474 = vst [vmem:[%s2420] ss:$9 sm:$0xff] %v2173
      %2475 = vst [vmem:[%s2422] ss:$9 sm:$0xff] %v2174
      %2476 = vst [vmem:[%s2424] ss:$9 sm:$0xff] %v2175
      %v2477 = vld [vmem:[#allocation1] sm:$0xff]
      %2478 = vst [vmem:[#allocation1] ss:$9 sm:$0xff] %v2176
      %2479 = vst [vmem:[%s2412] ss:$9 sm:$0xff] %v2177
      %2480 = vst [vmem:[%s2414] ss:$9 sm:$0xff] %v2178
      %2481 = vst [vmem:[%s2416] ss:$9 sm:$0xff] %v1638
      %2482 = vst [vmem:[%s2418] ss:$9 sm:$0xff] %v2179
      %2483 = vst [vmem:[%s2420] ss:$9 sm:$0xff] %v2180
      %2484 = vst [vmem:[%s2422] ss:$9 sm:$0xff] %v2181
      %v2485 = vld [vmem:[#allocation1] sm:$0xff]
      %2486 = vst [vmem:[#allocation1] ss:$9 sm:$0xff] %v2182
      %2487 = vst [vmem:[%s2412] ss:$9 sm:$0xff] %v2183
      %2488 = vst [vmem:[%s2414] ss:$9 sm:$0xff] %v2184
      %2489 = vst [vmem:[%s2416] ss:$9 sm:$0xff] %v2185
      %2490 = vst [vmem:[%s2418] ss:$9 sm:$0xff] %v1641
      %2491 = vst [vmem:[%s2420] ss:$9 sm:$0xff] %v2186
      %2492 = vst [vmem:[%s2422] ss:$9 sm:$0xff] %v2187
      %2493 = vst [vmem:[%s2424] ss:$9 sm:$0xff] %v2188
      %v2494 = vld [vmem:[#allocation1] sm:$0xff]
      %2495 = vst [vmem:[#allocation1] ss:$9 sm:$0xff] %v2189
      %2496 = vst [vmem:[%s2412] ss:$9 sm:$0xff] %v2190
      %2497 = vst [vmem:[%s2414] ss:$9 sm:$0xff] %v2191
      %2498 = vst [vmem:[%s2416] ss:$9 sm:$0xff] %v2192
      %2499 = vst [vmem:[%s2418] ss:$9 sm:$0xff] %v1644
      %2500 = vst [vmem:[%s2420] ss:$9 sm:$0xff] %v2193
      %2501 = vst [vmem:[%s2422] ss:$9 sm:$0xff] %v2194
      %v2502 = vld [vmem:[#allocation1] sm:$0xff]
      %2503 = vst [vmem:[#allocation1] ss:$9 sm:$0xff] %v2195
      %2504 = vst [vmem:[%s2412] ss:$9 sm:$0xff] %v2196
      %2505 = vst [vmem:[%s2414] ss:$9 sm:$0xff] %v2197
      %2506 = vst [vmem:[%s2416] ss:$9 sm:$0xff] %v2198
      %2507 = vst [vmem:[%s2418] ss:$9 sm:$0xff] %v2199
      %2508 = vst [vmem:[%s2420] ss:$9 sm:$0xff] %v1647
      %2509 = vst [vmem:[%s2422] ss:$9 sm:$0xff] %v2200
      %2510 = vst [vmem:[%s2424] ss:$9 sm:$0xff] %v2201
      %v2511 = vld [vmem:[#allocation1] sm:$0xff]
      %2512 = vst [vmem:[#allocation1] ss:$9 sm:$0xff] %v2202
      %2513 = vst [vmem:[%s2412] ss:$9 sm:$0xff] %v2203
      %2514 = vst [vmem:[%s2414] ss:$9 sm:$0xff] %v2204
      %2515 = vst [vmem:[%s2416] ss:$9 sm:$0xff] %v2205
      %2516 = vst [vmem:[%s2418] ss:$9 sm:$0xff] %v2206
      %2517 = vst [vmem:[%s2420] ss:$9 sm:$0xff] %v1650
      %2518 = vst [vmem:[%s2422] ss:$9 sm:$0xff] %v2207
      %v2519 = vld [vmem:[#allocation1] sm:$0xff]
      %2520 = vst [vmem:[#allocation1] ss:$9 sm:$0xff] %v2208
      %2521 = vst [vmem:[%s2412] ss:$9 sm:$0xff] %v2209
      %2522 = vst [vmem:[%s2414] ss:$9 sm:$0xff] %v2210
      %2523 = vst [vmem:[%s2416] ss:$9 sm:$0xff] %v2211
      %2524 = vst [vmem:[%s2418] ss:$9 sm:$0xff] %v2212
      %2525 = vst [vmem:[%s2420] ss:$9 sm:$0xff] %v2213
      %2526 = vst [vmem:[%s2422] ss:$9 sm:$0xff] %v1653
      %2527 = vst [vmem:[%s2424] ss:$9 sm:$0xff] %v2214
      %v2528 = vld [vmem:[#allocation1] sm:$0xff]
      %2529 = vst [vmem:[#allocation1] ss:$9 sm:$0xff] %v2215
      %2530 = vst [vmem:[%s2412] ss:$9 sm:$0xff] %v2216
      %2531 = vst [vmem:[%s2414] ss:$9 sm:$0xff] %v2217
      %2532 = vst [vmem:[%s2416] ss:$9 sm:$0xff] %v2218
      %2533 = vst [vmem:[%s2418] ss:$9 sm:$0xff] %v2219
      %2534 = vst [vmem:[%s2420] ss:$9 sm:$0xff] %v2220
      %2535 = vst [vmem:[%s2422] ss:$9 sm:$0xff] %v1656
      %v2536 = vld [vmem:[#allocation1] sm:$0xff]
      %2537 = vst [vmem:[#allocation1] ss:$9 sm:$0xff] %v2221
      %2538 = vst [vmem:[%s2412] ss:$9 sm:$0xff] %v2222
      %2539 = vst [vmem:[%s2414] ss:$9 sm:$0xff] %v2223
      %2540 = vst [vmem:[%s2416] ss:$9 sm:$0xff] %v2224
      %2541 = vst [vmem:[%s2418] ss:$9 sm:$0xff] %v2225
      %2542 = vst [vmem:[%s2420] ss:$9 sm:$0xff] %v2226
      %2543 = vst [vmem:[%s2422] ss:$9 sm:$0xff] %v2227
      %2544 = vst [vmem:[%s2424] ss:$9 sm:$0xff] %v1659
      %v2545 = vld [vmem:[#allocation1] sm:$0xff]
      %2546 = vst [vmem:[#allocation1] ss:$9 sm:$0xff] %v2228
      %2547 = vst [vmem:[%s2412] ss:$9 sm:$0xff] %v2229
      %2548 = vst [vmem:[%s2414] ss:$9 sm:$0xff] %v2230
      %2549 = vst [vmem:[%s2416] ss:$9 sm:$0xff] %v2231
      %2550 = vst [vmem:[%s2418] ss:$9 sm:$0xff] %v2232
      %2551 = vst [vmem:[%s2420] ss:$9 sm:$0xff] %v2233
      %2552 = vst [vmem:[%s2422] ss:$9 sm:$0xff] %v2234
      %v2553 = vld [vmem:[#allocation1] sm:$0xff]
      %2554 = vst [vmem:[#allocation1] ss:$9 sm:$0xff] %v1662
      %2555 = vst [vmem:[%s2412] ss:$9 sm:$0xff] %v2235
      %2556 = vst [vmem:[%s2414] ss:$9 sm:$0xff] %v2236
      %2557 = vst [vmem:[%s2416] ss:$9 sm:$0xff] %v2237
      %2558 = vst [vmem:[%s2418] ss:$9 sm:$0xff] %v2238
      %2559 = vst [vmem:[%s2420] ss:$9 sm:$0xff] %v2239
      %2560 = vst [vmem:[%s2422] ss:$9 sm:$0xff] %v2240
      %2561 = vst [vmem:[%s2424] ss:$9 sm:$0xff] %v2241
      %v2562 = vld [vmem:[#allocation1] sm:$0xff]
      %2563 = vst [vmem:[#allocation1] ss:$9 sm:$0xff] %v1665
      %2564 = vst [vmem:[%s2412] ss:$9 sm:$0xff] %v2242
      %2565 = vst [vmem:[%s2414] ss:$9 sm:$0xff] %v2243
      %2566 = vst [vmem:[%s2416] ss:$9 sm:$0xff] %v2244
      %2567 = vst [vmem:[%s2418] ss:$9 sm:$0xff] %v2245
      %2568 = vst [vmem:[%s2420] ss:$9 sm:$0xff] %v2246
      %2569 = vst [vmem:[%s2422] ss:$9 sm:$0xff] %v2247
      %v2570 = vld [vmem:[#allocation1] sm:$0xff]
      %2571 = vst [vmem:[#allocation1] ss:$9 sm:$0xff] %v2248
      %2572 = vst [vmem:[%s2412] ss:$9 sm:$0xff] %v1668
      %2573 = vst [vmem:[%s2414] ss:$9 sm:$0xff] %v2249
      %2574 = vst [vmem:[%s2416] ss:$9 sm:$0xff] %v2250
      %2575 = vst [vmem:[%s2418] ss:$9 sm:$0xff] %v2251
      %2576 = vst [vmem:[%s2420] ss:$9 sm:$0xff] %v2252
      %2577 = vst [vmem:[%s2422] ss:$9 sm:$0xff] %v2253
      %2578 = vst [vmem:[%s2424] ss:$9 sm:$0xff] %v2254
      %v2579 = vld [vmem:[#allocation1] sm:$0xff]
      %2580 = vst [vmem:[#allocation1] ss:$9 sm:$0xff] %v2255
      %2581 = vst [vmem:[%s2412] ss:$9 sm:$0xff] %v1671
      %2582 = vst [vmem:[%s2414] ss:$9 sm:$0xff] %v2256
      %2583 = vst [vmem:[%s2416] ss:$9 sm:$0xff] %v2257
      %2584 = vst [vmem:[%s2418] ss:$9 sm:$0xff] %v2258
      %2585 = vst [vmem:[%s2420] ss:$9 sm:$0xff] %v2259
      %2586 = vst [vmem:[%s2422] ss:$9 sm:$0xff] %v2260
      %v2587 = vld [vmem:[#allocation1] sm:$0xff]
      %2608 = vst [vmem:[#allocation1] ss:$9 sm:$0xff] %v2055
      %s2609 = scalar_lea.vmem [#allocation1], 1
      %2610 = vst [vmem:[%s2609] ss:$9 sm:$0xff] %v2280
      %s2611 = scalar_lea.vmem [#allocation1], 2
      %2612 = vst [vmem:[%s2611] ss:$9 sm:$0xff] %v2281
      %s2613 = scalar_lea.vmem [#allocation1], 3
      %2614 = vst [vmem:[%s2613] ss:$9 sm:$0xff] %v2282
      %s2615 = scalar_lea.vmem [#allocation1], 4
      %2616 = vst [vmem:[%s2615] ss:$9 sm:$0xff] %v2283
      %s2617 = scalar_lea.vmem [#allocation1], 5
      %2618 = vst [vmem:[%s2617] ss:$9 sm:$0xff] %v2284
      %s2619 = scalar_lea.vmem [#allocation1], 6
      %2620 = vst [vmem:[%s2619] ss:$9 sm:$0xff] %v2285
      %s2621 = scalar_lea.vmem [#allocation1], 7
      %2622 = vst [vmem:[%s2621] ss:$9 sm:$0xff] %v2286
      %v2623 = vld [vmem:[#allocation1] sm:$0xff]
      %2624 = vst [vmem:[#allocation1] ss:$9 sm:$0xff] %v2058
      %2625 = vst [vmem:[%s2609] ss:$9 sm:$0xff] %v2287
      %2626 = vst [vmem:[%s2611] ss:$9 sm:$0xff] %v2288
      %2627 = vst [vmem:[%s2613] ss:$9 sm:$0xff] %v2289
      %2628 = vst [vmem:[%s2615] ss:$9 sm:$0xff] %v2290
      %2629 = vst [vmem:[%s2617] ss:$9 sm:$0xff] %v2291
      %2630 = vst [vmem:[%s2619] ss:$9 sm:$0xff] %v2292
      %v2631 = vld [vmem:[#allocation1] sm:$0xff]
      %2632 = vst [vmem:[#allocation1] ss:$9 sm:$0xff] %v2293
      %2633 = vst [vmem:[%s2609] ss:$9 sm:$0xff] %v2061
      %2634 = vst [vmem:[%s2611] ss:$9 sm:$0xff] %v2294
      %2635 = vst [vmem:[%s2613] ss:$9 sm:$0xff] %v2295
      %2636 = vst [vmem:[%s2615] ss:$9 sm:$0xff] %v2296
      %2637 = vst [vmem:[%s2617] ss:$9 sm:$0xff] %v2297
      %2638 = vst [vmem:[%s2619] ss:$9 sm:$0xff] %v2298
      %2639 = vst [vmem:[%s2621] ss:$9 sm:$0xff] %v2299
      %v2640 = vld [vmem:[#allocation1] sm:$0xff]
      %2641 = vst [vmem:[#allocation1] ss:$9 sm:$0xff] %v2300
      %2642 = vst [vmem:[%s2609] ss:$9 sm:$0xff] %v2064
      %2643 = vst [vmem:[%s2611] ss:$9 sm:$0xff] %v2301
      %2644 = vst [vmem:[%s2613] ss:$9 sm:$0xff] %v2302
      %2645 = vst [vmem:[%s2615] ss:$9 sm:$0xff] %v2303
      %2646 = vst [vmem:[%s2617] ss:$9 sm:$0xff] %v2304
      %2647 = vst [vmem:[%s2619] ss:$9 sm:$0xff] %v2305
      %v2648 = vld [vmem:[#allocation1] sm:$0xff]
      %2649 = vst [vmem:[#allocation1] ss:$9 sm:$0xff] %v2306
      %2650 = vst [vmem:[%s2609] ss:$9 sm:$0xff] %v2307
      %2651 = vst [vmem:[%s2611] ss:$9 sm:$0xff] %v2067
      %2652 = vst [vmem:[%s2613] ss:$9 sm:$0xff] %v2308
      %2653 = vst [vmem:[%s2615] ss:$9 sm:$0xff] %v2309
      %2654 = vst [vmem:[%s2617] ss:$9 sm:$0xff] %v2310
      %2655 = vst [vmem:[%s2619] ss:$9 sm:$0xff] %v2311
      %2656 = vst [vmem:[%s2621] ss:$9 sm:$0xff] %v2312
      %v2657 = vld [vmem:[#allocation1] sm:$0xff]
      %2658 = vst [vmem:[#allocation1] ss:$9 sm:$0xff] %v2313
      %2659 = vst [vmem:[%s2609] ss:$9 sm:$0xff] %v2314
      %2660 = vst [vmem:[%s2611] ss:$9 sm:$0xff] %v2070
      %2661 = vst [vmem:[%s2613] ss:$9 sm:$0xff] %v2315
      %2662 = vst [vmem:[%s2615] ss:$9 sm:$0xff] %v2316
      %2663 = vst [vmem:[%s2617] ss:$9 sm:$0xff] %v2317
      %2664 = vst [vmem:[%s2619] ss:$9 sm:$0xff] %v2318
      %v2665 = vld [vmem:[#allocation1] sm:$0xff]
      %2666 = vst [vmem:[#allocation1] ss:$9 sm:$0xff] %v2319
      %2667 = vst [vmem:[%s2609] ss:$9 sm:$0xff] %v2320
      %2668 = vst [vmem:[%s2611] ss:$9 sm:$0xff] %v2321
      %2669 = vst [vmem:[%s2613] ss:$9 sm:$0xff] %v2073
      %2670 = vst [vmem:[%s2615] ss:$9 sm:$0xff] %v2322
      %2671 = vst [vmem:[%s2617] ss:$9 sm:$0xff] %v2323
      %2672 = vst [vmem:[%s2619] ss:$9 sm:$0xff] %v2324
      %2673 = vst [vmem:[%s2621] ss:$9 sm:$0xff] %v2325
      %v2674 = vld [vmem:[#allocation1] sm:$0xff]
      %2675 = vst [vmem:[#allocation1] ss:$9 sm:$0xff] %v2326
      %2676 = vst [vmem:[%s2609] ss:$9 sm:$0xff] %v2327
      %2677 = vst [vmem:[%s2611] ss:$9 sm:$0xff] %v2328
      %2678 = vst [vmem:[%s2613] ss:$9 sm:$0xff] %v2076
      %2679 = vst [vmem:[%s2615] ss:$9 sm:$0xff] %v2329
      %2680 = vst [vmem:[%s2617] ss:$9 sm:$0xff] %v2330
      %2681 = vst [vmem:[%s2619] ss:$9 sm:$0xff] %v2331
      %v2682 = vld [vmem:[#allocation1] sm:$0xff]
      %2683 = vst [vmem:[#allocation1] ss:$9 sm:$0xff] %v2332
      %2684 = vst [vmem:[%s2609] ss:$9 sm:$0xff] %v2333
      %2685 = vst [vmem:[%s2611] ss:$9 sm:$0xff] %v2334
      %2686 = vst [vmem:[%s2613] ss:$9 sm:$0xff] %v2335
      %2687 = vst [vmem:[%s2615] ss:$9 sm:$0xff] %v2079
      %2688 = vst [vmem:[%s2617] ss:$9 sm:$0xff] %v2336
      %2689 = vst [vmem:[%s2619] ss:$9 sm:$0xff] %v2337
      %2690 = vst [vmem:[%s2621] ss:$9 sm:$0xff] %v2338
      %v2691 = vld [vmem:[#allocation1] sm:$0xff]
      %2692 = vst [vmem:[#allocation1] ss:$9 sm:$0xff] %v2339
      %2693 = vst [vmem:[%s2609] ss:$9 sm:$0xff] %v2340
      %2694 = vst [vmem:[%s2611] ss:$9 sm:$0xff] %v2341
      %2695 = vst [vmem:[%s2613] ss:$9 sm:$0xff] %v2342
      %2696 = vst [vmem:[%s2615] ss:$9 sm:$0xff] %v2082
      %2697 = vst [vmem:[%s2617] ss:$9 sm:$0xff] %v2343
      %2698 = vst [vmem:[%s2619] ss:$9 sm:$0xff] %v2344
      %v2699 = vld [vmem:[#allocation1] sm:$0xff]
      %2700 = vst [vmem:[#allocation1] ss:$9 sm:$0xff] %v2345
      %2701 = vst [vmem:[%s2609] ss:$9 sm:$0xff] %v2346
      %2702 = vst [vmem:[%s2611] ss:$9 sm:$0xff] %v2347
      %2703 = vst [vmem:[%s2613] ss:$9 sm:$0xff] %v2348
      %2704 = vst [vmem:[%s2615] ss:$9 sm:$0xff] %v2349
      %2705 = vst [vmem:[%s2617] ss:$9 sm:$0xff] %v2085
      %2706 = vst [vmem:[%s2619] ss:$9 sm:$0xff] %v2350
      %2707 = vst [vmem:[%s2621] ss:$9 sm:$0xff] %v2351
      %v2708 = vld [vmem:[#allocation1] sm:$0xff]
      %2709 = vst [vmem:[#allocation1] ss:$9 sm:$0xff] %v2352
      %2710 = vst [vmem:[%s2609] ss:$9 sm:$0xff] %v2353
      %2711 = vst [vmem:[%s2611] ss:$9 sm:$0xff] %v2354
      %2712 = vst [vmem:[%s2613] ss:$9 sm:$0xff] %v2355
      %2713 = vst [vmem:[%s2615] ss:$9 sm:$0xff] %v2356
      %2714 = vst [vmem:[%s2617] ss:$9 sm:$0xff] %v2088
      %2715 = vst [vmem:[%s2619] ss:$9 sm:$0xff] %v2357
      %v2716 = vld [vmem:[#allocation1] sm:$0xff]
      %2717 = vst [vmem:[#allocation1] ss:$9 sm:$0xff] %v2358
      %2718 = vst [vmem:[%s2609] ss:$9 sm:$0xff] %v2359
      %2719 = vst [vmem:[%s2611] ss:$9 sm:$0xff] %v2360
      %2720 = vst [vmem:[%s2613] ss:$9 sm:$0xff] %v2361
      %2721 = vst [vmem:[%s2615] ss:$9 sm:$0xff] %v2362
      %2722 = vst [vmem:[%s2617] ss:$9 sm:$0xff] %v2363
      %2723 = vst [vmem:[%s2619] ss:$9 sm:$0xff] %v2091
      %2724 = vst [vmem:[%s2621] ss:$9 sm:$0xff] %v2364
      %v2725 = vld [vmem:[#allocation1] sm:$0xff]
      %2726 = vst [vmem:[#allocation1] ss:$9 sm:$0xff] %v2365
      %2727 = vst [vmem:[%s2609] ss:$9 sm:$0xff] %v2366
      %2728 = vst [vmem:[%s2611] ss:$9 sm:$0xff] %v2367
      %2729 = vst [vmem:[%s2613] ss:$9 sm:$0xff] %v2368
      %2730 = vst [vmem:[%s2615] ss:$9 sm:$0xff] %v2369
      %2731 = vst [vmem:[%s2617] ss:$9 sm:$0xff] %v2370
      %2732 = vst [vmem:[%s2619] ss:$9 sm:$0xff] %v2094
      %v2733 = vld [vmem:[#allocation1] sm:$0xff]
      %2734 = vst [vmem:[#allocation1] ss:$9 sm:$0xff] %v2371
      %2735 = vst [vmem:[%s2609] ss:$9 sm:$0xff] %v2372
      %2736 = vst [vmem:[%s2611] ss:$9 sm:$0xff] %v2373
      %2737 = vst [vmem:[%s2613] ss:$9 sm:$0xff] %v2374
      %2738 = vst [vmem:[%s2615] ss:$9 sm:$0xff] %v2375
      %2739 = vst [vmem:[%s2617] ss:$9 sm:$0xff] %v2376
      %2740 = vst [vmem:[%s2619] ss:$9 sm:$0xff] %v2377
      %2741 = vst [vmem:[%s2621] ss:$9 sm:$0xff] %v2097
      %v2742 = vld [vmem:[#allocation1] sm:$0xff]
      %2743 = vst [vmem:[#allocation1] ss:$9 sm:$0xff] %v2378
      %2744 = vst [vmem:[%s2609] ss:$9 sm:$0xff] %v2379
      %2745 = vst [vmem:[%s2611] ss:$9 sm:$0xff] %v2380
      %2746 = vst [vmem:[%s2613] ss:$9 sm:$0xff] %v2381
      %2747 = vst [vmem:[%s2615] ss:$9 sm:$0xff] %v2382
      %2748 = vst [vmem:[%s2617] ss:$9 sm:$0xff] %v2383
      %2749 = vst [vmem:[%s2619] ss:$9 sm:$0xff] %v2384
      %v2750 = vld [vmem:[#allocation1] sm:$0xff]
      %2751 = vst [vmem:[#allocation1] ss:$9 sm:$0xff] %v2100
      %2752 = vst [vmem:[%s2609] ss:$9 sm:$0xff] %v2385
      %2753 = vst [vmem:[%s2611] ss:$9 sm:$0xff] %v2386
      %2754 = vst [vmem:[%s2613] ss:$9 sm:$0xff] %v2387
      %2755 = vst [vmem:[%s2615] ss:$9 sm:$0xff] %v2388
      %2756 = vst [vmem:[%s2617] ss:$9 sm:$0xff] %v2389
      %2757 = vst [vmem:[%s2619] ss:$9 sm:$0xff] %v2390
      %2758 = vst [vmem:[%s2621] ss:$9 sm:$0xff] %v2391
      %v2759 = vld [vmem:[#allocation1] sm:$0xff]
      %2760 = vst [vmem:[#allocation1] ss:$9 sm:$0xff] %v2103
      %2761 = vst [vmem:[%s2609] ss:$9 sm:$0xff] %v2392
      %2762 = vst [vmem:[%s2611] ss:$9 sm:$0xff] %v2393
      %2763 = vst [vmem:[%s2613] ss:$9 sm:$0xff] %v2394
      %2764 = vst [vmem:[%s2615] ss:$9 sm:$0xff] %v2395
      %2765 = vst [vmem:[%s2617] ss:$9 sm:$0xff] %v2396
      %2766 = vst [vmem:[%s2619] ss:$9 sm:$0xff] %v2397
      %v2767 = vld [vmem:[#allocation1] sm:$0xff]
      %2768 = vst [vmem:[#allocation1] ss:$9 sm:$0xff] %v2398
      %2769 = vst [vmem:[%s2609] ss:$9 sm:$0xff] %v2106
      %2770 = vst [vmem:[%s2611] ss:$9 sm:$0xff] %v2399
      %2771 = vst [vmem:[%s2613] ss:$9 sm:$0xff] %v2400
      %2772 = vst [vmem:[%s2615] ss:$9 sm:$0xff] %v2401
      %2773 = vst [vmem:[%s2617] ss:$9 sm:$0xff] %v2402
      %2774 = vst [vmem:[%s2619] ss:$9 sm:$0xff] %v2403
      %2775 = vst [vmem:[%s2621] ss:$9 sm:$0xff] %v2404
      %v2776 = vld [vmem:[#allocation1] sm:$0xff]
      %2777 = vst [vmem:[#allocation1] ss:$9 sm:$0xff] %v2405
      %2778 = vst [vmem:[%s2609] ss:$9 sm:$0xff] %v2109
      %2779 = vst [vmem:[%s2611] ss:$9 sm:$0xff] %v2406
      %2780 = vst [vmem:[%s2613] ss:$9 sm:$0xff] %v2407
      %2781 = vst [vmem:[%s2615] ss:$9 sm:$0xff] %v2408
      %2782 = vst [vmem:[%s2617] ss:$9 sm:$0xff] %v2409
      %2783 = vst [vmem:[%s2619] ss:$9 sm:$0xff] %v2410
      %v2784 = vld [vmem:[#allocation1] sm:$0xff]
      %2785 = vrot.lane.b32.xlu0 %v2623, 4
      %v2786 = vpop.permute.xlu0 %2785
      %2787 = vrot.lane.b32.xlu0 %v2631, 4
      %v2788 = vpop.permute.xlu0 %2787
      %2789 = vrot.lane.b32.xlu0 %v2640, 4
      %v2790 = vpop.permute.xlu0 %2789
      %2791 = vrot.lane.b32.xlu0 %v2648, 4
      %v2792 = vpop.permute.xlu0 %2791
      %2793 = vrot.lane.b32.xlu0 %v2657, 4
      %v2794 = vpop.permute.xlu0 %2793
      %2795 = vrot.lane.b32.xlu0 %v2665, 4
      %v2796 = vpop.permute.xlu0 %2795
      %2797 = vrot.lane.b32.xlu0 %v2674, 4
      %v2798 = vpop.permute.xlu0 %2797
      %2799 = vrot.lane.b32.xlu0 %v2682, 4
      %v2800 = vpop.permute.xlu0 %2799
      %2801 = vrot.lane.b32.xlu0 %v2691, 4
      %v2802 = vpop.permute.xlu0 %2801
      %2803 = vrot.lane.b32.xlu0 %v2699, 4
      %v2804 = vpop.permute.xlu0 %2803
      %2805 = vrot.lane.b32.xlu0 %v2708, 4
      %v2806 = vpop.permute.xlu0 %2805
      %2807 = vrot.lane.b32.xlu0 %v2716, 4
      %v2808 = vpop.permute.xlu0 %2807
      %2809 = vrot.lane.b32.xlu0 %v2725, 4
      %v2810 = vpop.permute.xlu0 %2809
      %2811 = vrot.lane.b32.xlu0 %v2733, 4
      %v2812 = vpop.permute.xlu0 %2811
      %2813 = vrot.lane.b32.xlu0 %v2742, 4
      %v2814 = vpop.permute.xlu0 %2813
      %2815 = vrot.lane.b32.xlu0 %v2750, 4
      %v2816 = vpop.permute.xlu0 %2815
      %2817 = vrot.lane.b32.xlu0 %v2759, 4
      %v2818 = vpop.permute.xlu0 %2817
      %2819 = vrot.lane.b32.xlu0 %v2767, 4
      %v2820 = vpop.permute.xlu0 %2819
      %2821 = vrot.lane.b32.xlu0 %v2776, 4
      %v2822 = vpop.permute.xlu0 %2821
      %2823 = vrot.lane.b32.xlu0 %v2784, 4
      %v2824 = vpop.permute.xlu0 %2823
      %v2845 = vsel %vm839, %v2426, %v2786
      %v2846 = vsel %vm839, %v2434, %v2788
      %v2847 = vsel %vm839, %v2443, %v2790
      %v2848 = vsel %vm839, %v2451, %v2792
      %v2849 = vsel %vm839, %v2460, %v2794
      %v2850 = vsel %vm839, %v2468, %v2796
      %v2851 = vsel %vm839, %v2477, %v2798
      %v2852 = vsel %vm839, %v2485, %v2800
      %v2853 = vsel %vm839, %v2494, %v2802
      %v2854 = vsel %vm839, %v2502, %v2804
      %v2855 = vsel %vm839, %v2511, %v2806
      %v2856 = vsel %vm839, %v2519, %v2808
      %v2857 = vsel %vm839, %v2528, %v2810
      %v2858 = vsel %vm839, %v2536, %v2812
      %v2859 = vsel %vm839, %v2545, %v2814
      %v2860 = vsel %vm839, %v2553, %v2816
      %v2861 = vsel %vm839, %v2562, %v2818
      %v2862 = vsel %vm839, %v2570, %v2820
      %v2863 = vsel %vm839, %v2579, %v2822
      %v2864 = vsel %vm839, %v2587, %v2824
      %v2865 = vld [vmem:[%s4] sm:$0xff]
      %v2866 = vld [vmem:[%s4 + $0x8] sm:$0xff]
      %v2867 = vld [vmem:[%s4 + $0x10] sm:$0xff]
      %v2868 = vld [vmem:[%s4 + $0x18] sm:$0xff]
      %v2869 = vld [vmem:[%s4 + $0x20] sm:$0xf]
      %v2894 = vrot.slane %v509, 1
      %v2895 = vrot.slane %v510, 1
      %v2896 = vsel %vm562, %v2894, %v2895
      %v2897 = vrot.slane %v511, 1
      %v2898 = vrot.slane %v512, 1
      %v2899 = vsel %vm562, %v2897, %v2898
      %v2900 = vrot.slane %v513, 1
      %v2901 = vrot.slane %v514, 1
      %v2902 = vsel %vm562, %v2900, %v2901
      %v2903 = vrot.slane %v515, 1
      %v2904 = vrot.slane %v516, 1
      %v2905 = vsel %vm562, %v2903, %v2904
      %v2906 = vrot.slane %v517, 1
      %v2907 = vrot.slane %v518, 1
      %v2908 = vsel %vm562, %v2906, %v2907
      %v2909 = vrot.slane %v519, 1
      %v2910 = vrot.slane %v520, 1
      %v2911 = vsel %vm562, %v2909, %v2910
      %v2912 = vrot.slane %v521, 1
      %v2913 = vrot.slane %v522, 1
      %v2914 = vsel %vm562, %v2912, %v2913
      %v2915 = vrot.slane %v523, 1
      %v2916 = vrot.slane %v524, 1
      %v2917 = vsel %vm562, %v2915, %v2916
      %v2918 = vrot.slane %v525, 1
      %v2919 = vrot.slane %v526, 1
      %v2920 = vsel %vm562, %v2918, %v2919
      %v2921 = vrot.slane %v527, 1
      %v2922 = vrot.slane %v528, 1
      %v2923 = vsel %vm562, %v2921, %v2922
      %v2924 = vrot.slane %v529, 1
      %v2925 = vrot.slane %v530, 1
      %v2926 = vsel %vm562, %v2924, %v2925
      %v2927 = vrot.slane %v531, 1
      %v2928 = vrot.slane %v532, 1
      %v2929 = vsel %vm562, %v2927, %v2928
      %2930 = vrot.lane.b32.xlu0 %v2896, 8
      %v2931 = vpop.permute.xlu0 %2930
      %2932 = vrot.lane.b32.xlu0 %v2895, 8
      %v2933 = vpop.permute.xlu0 %2932
      %2934 = vrot.lane.b32.xlu0 %v2899, 8
      %v2935 = vpop.permute.xlu0 %2934
      %2936 = vrot.lane.b32.xlu0 %v2898, 8
      %v2937 = vpop.permute.xlu0 %2936
      %2938 = vrot.lane.b32.xlu0 %v2902, 8
      %v2939 = vpop.permute.xlu0 %2938
      %2940 = vrot.lane.b32.xlu0 %v2901, 8
      %v2941 = vpop.permute.xlu0 %2940
      %2942 = vrot.lane.b32.xlu0 %v2905, 8
      %v2943 = vpop.permute.xlu0 %2942
      %2944 = vrot.lane.b32.xlu0 %v2904, 8
      %v2945 = vpop.permute.xlu0 %2944
      %2946 = vrot.lane.b32.xlu0 %v2908, 8
      %v2947 = vpop.permute.xlu0 %2946
      %2948 = vrot.lane.b32.xlu0 %v2907, 8
      %v2949 = vpop.permute.xlu0 %2948
      %2950 = vrot.lane.b32.xlu0 %v2911, 8
      %v2951 = vpop.permute.xlu0 %2950
      %2952 = vrot.lane.b32.xlu0 %v2910, 8
      %v2953 = vpop.permute.xlu0 %2952
      %2954 = vrot.lane.b32.xlu0 %v2914, 8
      %v2955 = vpop.permute.xlu0 %2954
      %2956 = vrot.lane.b32.xlu0 %v2913, 8
      %v2957 = vpop.permute.xlu0 %2956
      %2958 = vrot.lane.b32.xlu0 %v2917, 8
      %v2959 = vpop.permute.xlu0 %2958
      %2960 = vrot.lane.b32.xlu0 %v2916, 8
      %v2961 = vpop.permute.xlu0 %2960
      %2962 = vrot.lane.b32.xlu0 %v2920, 8
      %v2963 = vpop.permute.xlu0 %2962
      %2964 = vrot.lane.b32.xlu0 %v2919, 8
      %v2965 = vpop.permute.xlu0 %2964
      %2966 = vrot.lane.b32.xlu0 %v2923, 8
      %v2967 = vpop.permute.xlu0 %2966
      %2968 = vrot.lane.b32.xlu0 %v2922, 8
      %v2969 = vpop.permute.xlu0 %2968
      %2970 = vrot.lane.b32.xlu0 %v2926, 8
      %v2971 = vpop.permute.xlu0 %2970
      %2972 = vrot.lane.b32.xlu0 %v2925, 8
      %v2973 = vpop.permute.xlu0 %2972
      %2974 = vrot.lane.b32.xlu0 %v2929, 8
      %v2975 = vpop.permute.xlu0 %2974
      %2976 = vrot.lane.b32.xlu0 %v2928, 8
      %v2977 = vpop.permute.xlu0 %2976
      %v3002 = vsel %vm362, %v509, %v2931
      %v3003 = vsel %vm362, %v510, %v2933
      %v3004 = vsel %vm362, %v511, %v2935
      %v3005 = vsel %vm362, %v512, %v2937
      %v3006 = vsel %vm362, %v513, %v2939
      %v3007 = vsel %vm362, %v514, %v2941
      %v3008 = vsel %vm362, %v515, %v2943
      %v3009 = vsel %vm362, %v516, %v2945
      %v3010 = vsel %vm362, %v517, %v2947
      %v3011 = vsel %vm362, %v518, %v2949
      %v3012 = vsel %vm362, %v519, %v2951
      %v3013 = vsel %vm362, %v520, %v2953
      %v3014 = vsel %vm362, %v521, %v2955
      %v3015 = vsel %vm362, %v522, %v2957
      %v3016 = vsel %vm362, %v523, %v2959
      %v3017 = vsel %vm362, %v524, %v2961
      %v3018 = vsel %vm362, %v525, %v2963
      %v3019 = vsel %vm362, %v526, %v2965
      %v3020 = vsel %vm362, %v527, %v2967
      %v3021 = vsel %vm362, %v528, %v2969
      %v3022 = vsel %vm362, %v529, %v2971
      %v3023 = vsel %vm362, %v530, %v2973
      %v3024 = vsel %vm362, %v531, %v2975
      %v3025 = vsel %vm362, %v532, %v2977
      %3026 = vrot.lane.b32.xlu0 %v509, 124
      %v3027 = vpop.permute.xlu0 %3026
      %3028 = vrot.lane.b32.xlu0 %v510, 124
      %v3029 = vpop.permute.xlu0 %3028
      %3030 = vrot.lane.b32.xlu0 %v511, 124
      %v3031 = vpop.permute.xlu0 %3030
      %3032 = vrot.lane.b32.xlu0 %v512, 124
      %v3033 = vpop.permute.xlu0 %3032
      %3034 = vrot.lane.b32.xlu0 %v513, 124
      %v3035 = vpop.permute.xlu0 %3034
      %3036 = vrot.lane.b32.xlu0 %v514, 124
      %v3037 = vpop.permute.xlu0 %3036
      %3038 = vrot.lane.b32.xlu0 %v515, 124
      %v3039 = vpop.permute.xlu0 %3038
      %3040 = vrot.lane.b32.xlu0 %v516, 124
      %v3041 = vpop.permute.xlu0 %3040
      %3042 = vrot.lane.b32.xlu0 %v517, 124
      %v3043 = vpop.permute.xlu0 %3042
      %3044 = vrot.lane.b32.xlu0 %v518, 124
      %v3045 = vpop.permute.xlu0 %3044
      %3046 = vrot.lane.b32.xlu0 %v519, 124
      %v3047 = vpop.permute.xlu0 %3046
      %3048 = vrot.lane.b32.xlu0 %v520, 124
      %v3049 = vpop.permute.xlu0 %3048
      %3050 = vrot.lane.b32.xlu0 %v521, 124
      %v3051 = vpop.permute.xlu0 %3050
      %3052 = vrot.lane.b32.xlu0 %v522, 124
      %v3053 = vpop.permute.xlu0 %3052
      %3054 = vrot.lane.b32.xlu0 %v523, 124
      %v3055 = vpop.permute.xlu0 %3054
      %3056 = vrot.lane.b32.xlu0 %v524, 124
      %v3057 = vpop.permute.xlu0 %3056
      %3058 = vrot.lane.b32.xlu0 %v525, 124
      %v3059 = vpop.permute.xlu0 %3058
      %3060 = vrot.lane.b32.xlu0 %v526, 124
      %v3061 = vpop.permute.xlu0 %3060
      %3062 = vrot.lane.b32.xlu0 %v527, 124
      %v3063 = vpop.permute.xlu0 %3062
      %3064 = vrot.lane.b32.xlu0 %v528, 124
      %v3065 = vpop.permute.xlu0 %3064
      %3066 = vrot.lane.b32.xlu0 %v529, 124
      %v3067 = vpop.permute.xlu0 %3066
      %3068 = vrot.lane.b32.xlu0 %v530, 124
      %v3069 = vpop.permute.xlu0 %3068
      %3070 = vrot.lane.b32.xlu0 %v531, 124
      %v3071 = vpop.permute.xlu0 %3070
      %3072 = vrot.lane.b32.xlu0 %v532, 124
      %v3073 = vpop.permute.xlu0 %3072
      %3098 = vrot.lane.b32.xlu0 %v2896, 4
      %v3099 = vpop.permute.xlu0 %3098
      %3100 = vrot.lane.b32.xlu0 %v2895, 4
      %v3101 = vpop.permute.xlu0 %3100
      %3102 = vrot.lane.b32.xlu0 %v2899, 4
      %v3103 = vpop.permute.xlu0 %3102
      %3104 = vrot.lane.b32.xlu0 %v2898, 4
      %v3105 = vpop.permute.xlu0 %3104
      %3106 = vrot.lane.b32.xlu0 %v2902, 4
      %v3107 = vpop.permute.xlu0 %3106
      %3108 = vrot.lane.b32.xlu0 %v2901, 4
      %v3109 = vpop.permute.xlu0 %3108
      %3110 = vrot.lane.b32.xlu0 %v2905, 4
      %v3111 = vpop.permute.xlu0 %3110
      %3112 = vrot.lane.b32.xlu0 %v2904, 4
      %v3113 = vpop.permute.xlu0 %3112
      %3114 = vrot.lane.b32.xlu0 %v2908, 4
      %v3115 = vpop.permute.xlu0 %3114
      %3116 = vrot.lane.b32.xlu0 %v2907, 4
      %v3117 = vpop.permute.xlu0 %3116
      %3118 = vrot.lane.b32.xlu0 %v2911, 4
      %v3119 = vpop.permute.xlu0 %3118
      %3120 = vrot.lane.b32.xlu0 %v2910, 4
      %v3121 = vpop.permute.xlu0 %3120
      %3122 = vrot.lane.b32.xlu0 %v2914, 4
      %v3123 = vpop.permute.xlu0 %3122
      %3124 = vrot.lane.b32.xlu0 %v2913, 4
      %v3125 = vpop.permute.xlu0 %3124
      %3126 = vrot.lane.b32.xlu0 %v2917, 4
      %v3127 = vpop.permute.xlu0 %3126
      %3128 = vrot.lane.b32.xlu0 %v2916, 4
      %v3129 = vpop.permute.xlu0 %3128
      %3130 = vrot.lane.b32.xlu0 %v2920, 4
      %v3131 = vpop.permute.xlu0 %3130
      %3132 = vrot.lane.b32.xlu0 %v2919, 4
      %v3133 = vpop.permute.xlu0 %3132
      %3134 = vrot.lane.b32.xlu0 %v2923, 4
      %v3135 = vpop.permute.xlu0 %3134
      %3136 = vrot.lane.b32.xlu0 %v2922, 4
      %v3137 = vpop.permute.xlu0 %3136
      %3138 = vrot.lane.b32.xlu0 %v2926, 4
      %v3139 = vpop.permute.xlu0 %3138
      %3140 = vrot.lane.b32.xlu0 %v2925, 4
      %v3141 = vpop.permute.xlu0 %3140
      %3142 = vrot.lane.b32.xlu0 %v2929, 4
      %v3143 = vpop.permute.xlu0 %3142
      %3144 = vrot.lane.b32.xlu0 %v2928, 4
      %v3145 = vpop.permute.xlu0 %3144
      %v3170 = vsel %vm839, %v3027, %v3099
      %v3171 = vsel %vm839, %v3029, %v3101
      %v3172 = vsel %vm839, %v3031, %v3103
      %v3173 = vsel %vm839, %v3033, %v3105
      %v3174 = vsel %vm839, %v3035, %v3107
      %v3175 = vsel %vm839, %v3037, %v3109
      %v3176 = vsel %vm839, %v3039, %v3111
      %v3177 = vsel %vm839, %v3041, %v3113
      %v3178 = vsel %vm839, %v3043, %v3115
      %v3179 = vsel %vm839, %v3045, %v3117
      %v3180 = vsel %vm839, %v3047, %v3119
      %v3181 = vsel %vm839, %v3049, %v3121
      %v3182 = vsel %vm839, %v3051, %v3123
      %v3183 = vsel %vm839, %v3053, %v3125
      %v3184 = vsel %vm839, %v3055, %v3127
      %v3185 = vsel %vm839, %v3057, %v3129
      %v3186 = vsel %vm839, %v3059, %v3131
      %v3187 = vsel %vm839, %v3061, %v3133
      %v3188 = vsel %vm839, %v3063, %v3135
      %v3189 = vsel %vm839, %v3065, %v3137
      %v3190 = vsel %vm839, %v3067, %v3139
      %v3191 = vsel %vm839, %v3069, %v3141
      %v3192 = vsel %vm839, %v3071, %v3143
      %v3193 = vsel %vm839, %v3073, %v3145
      %3214 = vrot.lane.b32.xlu0 %v3004, 12
      %v3215 = vpop.permute.xlu0 %3214
      %3216 = vrot.lane.b32.xlu0 %v3005, 12
      %v3217 = vpop.permute.xlu0 %3216
      %3218 = vrot.lane.b32.xlu0 %v3006, 12
      %v3219 = vpop.permute.xlu0 %3218
      %3220 = vrot.lane.b32.xlu0 %v3007, 12
      %v3221 = vpop.permute.xlu0 %3220
      %3222 = vrot.lane.b32.xlu0 %v3008, 12
      %v3223 = vpop.permute.xlu0 %3222
      %3224 = vrot.lane.b32.xlu0 %v3009, 12
      %v3225 = vpop.permute.xlu0 %3224
      %3226 = vrot.lane.b32.xlu0 %v3010, 12
      %v3227 = vpop.permute.xlu0 %3226
      %3228 = vrot.lane.b32.xlu0 %v3011, 12
      %v3229 = vpop.permute.xlu0 %3228
      %3230 = vrot.lane.b32.xlu0 %v3012, 12
      %v3231 = vpop.permute.xlu0 %3230
      %3232 = vrot.lane.b32.xlu0 %v3013, 12
      %v3233 = vpop.permute.xlu0 %3232
      %3234 = vrot.lane.b32.xlu0 %v3014, 12
      %v3235 = vpop.permute.xlu0 %3234
      %3236 = vrot.lane.b32.xlu0 %v3015, 12
      %v3237 = vpop.permute.xlu0 %3236
      %3238 = vrot.lane.b32.xlu0 %v3016, 12
      %v3239 = vpop.permute.xlu0 %3238
      %3240 = vrot.lane.b32.xlu0 %v3017, 12
      %v3241 = vpop.permute.xlu0 %3240
      %3242 = vrot.lane.b32.xlu0 %v3018, 12
      %v3243 = vpop.permute.xlu0 %3242
      %3244 = vrot.lane.b32.xlu0 %v3019, 12
      %v3245 = vpop.permute.xlu0 %3244
      %3246 = vrot.lane.b32.xlu0 %v3020, 12
      %v3247 = vpop.permute.xlu0 %3246
      %3248 = vrot.lane.b32.xlu0 %v3021, 12
      %v3249 = vpop.permute.xlu0 %3248
      %3250 = vrot.lane.b32.xlu0 %v3022, 12
      %v3251 = vpop.permute.xlu0 %3250
      %3252 = vrot.lane.b32.xlu0 %v3023, 12
      %v3253 = vpop.permute.xlu0 %3252
      %3276 = vrot.lane.b32.xlu0 %v3006, 24
      %v3277 = vpop.permute.xlu0 %3276
      %3278 = vrot.lane.b32.xlu0 %v3007, 24
      %v3279 = vpop.permute.xlu0 %3278
      %3280 = vrot.lane.b32.xlu0 %v3008, 24
      %v3281 = vpop.permute.xlu0 %3280
      %3282 = vrot.lane.b32.xlu0 %v3009, 24
      %v3283 = vpop.permute.xlu0 %3282
      %3284 = vrot.lane.b32.xlu0 %v3010, 24
      %v3285 = vpop.permute.xlu0 %3284
      %3286 = vrot.lane.b32.xlu0 %v3011, 24
      %v3287 = vpop.permute.xlu0 %3286
      %3288 = vrot.lane.b32.xlu0 %v3012, 24
      %v3289 = vpop.permute.xlu0 %3288
      %3290 = vrot.lane.b32.xlu0 %v3013, 24
      %v3291 = vpop.permute.xlu0 %3290
      %3292 = vrot.lane.b32.xlu0 %v3014, 24
      %v3293 = vpop.permute.xlu0 %3292
      %3294 = vrot.lane.b32.xlu0 %v3015, 24
      %v3295 = vpop.permute.xlu0 %3294
      %3296 = vrot.lane.b32.xlu0 %v3016, 24
      %v3297 = vpop.permute.xlu0 %3296
      %3298 = vrot.lane.b32.xlu0 %v3017, 24
      %v3299 = vpop.permute.xlu0 %3298
      %3300 = vrot.lane.b32.xlu0 %v3018, 24
      %v3301 = vpop.permute.xlu0 %3300
      %3302 = vrot.lane.b32.xlu0 %v3019, 24
      %v3303 = vpop.permute.xlu0 %3302
      %3304 = vrot.lane.b32.xlu0 %v3020, 24
      %v3305 = vpop.permute.xlu0 %3304
      %3306 = vrot.lane.b32.xlu0 %v3021, 24
      %v3307 = vpop.permute.xlu0 %3306
      %3308 = vrot.lane.b32.xlu0 %v3022, 24
      %v3309 = vpop.permute.xlu0 %3308
      %3310 = vrot.lane.b32.xlu0 %v3023, 24
      %v3311 = vpop.permute.xlu0 %3310
      %3312 = vrot.lane.b32.xlu0 %v3024, 24
      %v3313 = vpop.permute.xlu0 %3312
      %3314 = vrot.lane.b32.xlu0 %v3025, 24
      %v3315 = vpop.permute.xlu0 %3314
      %v3336 = vsel %vm1006, %v3002, %v3215
      %v3337 = vsel %vm1006, %v3003, %v3217
      %v3338 = vsel %vm1006, %v3004, %v3219
      %v3339 = vsel %vm1006, %v3005, %v3221
      %v3340 = vsel %vm1006, %v3006, %v3223
      %v3341 = vsel %vm1006, %v3007, %v3225
      %v3342 = vsel %vm1006, %v3008, %v3227
      %v3343 = vsel %vm1006, %v3009, %v3229
      %v3344 = vsel %vm1006, %v3010, %v3231
      %v3345 = vsel %vm1006, %v3011, %v3233
      %v3346 = vsel %vm1006, %v3012, %v3235
      %v3347 = vsel %vm1006, %v3013, %v3237
      %v3348 = vsel %vm1006, %v3014, %v3239
      %v3349 = vsel %vm1006, %v3015, %v3241
      %v3350 = vsel %vm1006, %v3016, %v3243
      %v3351 = vsel %vm1006, %v3017, %v3245
      %v3352 = vsel %vm1006, %v3018, %v3247
      %v3353 = vsel %vm1006, %v3019, %v3249
      %v3354 = vsel %vm1006, %v3020, %v3251
      %v3355 = vsel %vm1006, %v3021, %v3253
      %v3356 = vsel %vm1027, %v3336, %v3277
      %v3357 = vsel %vm1027, %v3337, %v3279
      %v3358 = vsel %vm1027, %v3338, %v3281
      %v3359 = vsel %vm1027, %v3339, %v3283
      %v3360 = vsel %vm1027, %v3340, %v3285
      %v3361 = vsel %vm1027, %v3341, %v3287
      %v3362 = vsel %vm1027, %v3342, %v3289
      %v3363 = vsel %vm1027, %v3343, %v3291
      %v3364 = vsel %vm1027, %v3344, %v3293
      %v3365 = vsel %vm1027, %v3345, %v3295
      %v3366 = vsel %vm1027, %v3346, %v3297
      %v3367 = vsel %vm1027, %v3347, %v3299
      %v3368 = vsel %vm1027, %v3348, %v3301
      %v3369 = vsel %vm1027, %v3349, %v3303
      %v3370 = vsel %vm1027, %v3350, %v3305
      %v3371 = vsel %vm1027, %v3351, %v3307
      %v3372 = vsel %vm1027, %v3352, %v3309
      %v3373 = vsel %vm1027, %v3353, %v3311
      %v3374 = vsel %vm1027, %v3354, %v3313
      %v3375 = vsel %vm1027, %v3355, %v3315
      %3396 = vrot.lane.b32.xlu0 %v3172, 12
      %v3397 = vpop.permute.xlu0 %3396
      %3398 = vrot.lane.b32.xlu0 %v3173, 12
      %v3399 = vpop.permute.xlu0 %3398
      %3400 = vrot.lane.b32.xlu0 %v3174, 12
      %v3401 = vpop.permute.xlu0 %3400
      %3402 = vrot.lane.b32.xlu0 %v3175, 12
      %v3403 = vpop.permute.xlu0 %3402
      %3404 = vrot.lane.b32.xlu0 %v3176, 12
      %v3405 = vpop.permute.xlu0 %3404
      %3406 = vrot.lane.b32.xlu0 %v3177, 12
      %v3407 = vpop.permute.xlu0 %3406
      %3408 = vrot.lane.b32.xlu0 %v3178, 12
      %v3409 = vpop.permute.xlu0 %3408
      %3410 = vrot.lane.b32.xlu0 %v3179, 12
      %v3411 = vpop.permute.xlu0 %3410
      %3412 = vrot.lane.b32.xlu0 %v3180, 12
      %v3413 = vpop.permute.xlu0 %3412
      %3414 = vrot.lane.b32.xlu0 %v3181, 12
      %v3415 = vpop.permute.xlu0 %3414
      %3416 = vrot.lane.b32.xlu0 %v3182, 12
      %v3417 = vpop.permute.xlu0 %3416
      %3418 = vrot.lane.b32.xlu0 %v3183, 12
      %v3419 = vpop.permute.xlu0 %3418
      %3420 = vrot.lane.b32.xlu0 %v3184, 12
      %v3421 = vpop.permute.xlu0 %3420
      %3422 = vrot.lane.b32.xlu0 %v3185, 12
      %v3423 = vpop.permute.xlu0 %3422
      %3424 = vrot.lane.b32.xlu0 %v3186, 12
      %v3425 = vpop.permute.xlu0 %3424
      %3426 = vrot.lane.b32.xlu0 %v3187, 12
      %v3427 = vpop.permute.xlu0 %3426
      %3428 = vrot.lane.b32.xlu0 %v3188, 12
      %v3429 = vpop.permute.xlu0 %3428
      %3430 = vrot.lane.b32.xlu0 %v3189, 12
      %v3431 = vpop.permute.xlu0 %3430
      %3432 = vrot.lane.b32.xlu0 %v3190, 12
      %v3433 = vpop.permute.xlu0 %3432
      %3434 = vrot.lane.b32.xlu0 %v3191, 12
      %v3435 = vpop.permute.xlu0 %3434
      %3458 = vrot.lane.b32.xlu0 %v3174, 24
      %v3459 = vpop.permute.xlu0 %3458
      %3460 = vrot.lane.b32.xlu0 %v3175, 24
      %v3461 = vpop.permute.xlu0 %3460
      %3462 = vrot.lane.b32.xlu0 %v3176, 24
      %v3463 = vpop.permute.xlu0 %3462
      %3464 = vrot.lane.b32.xlu0 %v3177, 24
      %v3465 = vpop.permute.xlu0 %3464
      %3466 = vrot.lane.b32.xlu0 %v3178, 24
      %v3467 = vpop.permute.xlu0 %3466
      %3468 = vrot.lane.b32.xlu0 %v3179, 24
      %v3469 = vpop.permute.xlu0 %3468
      %3470 = vrot.lane.b32.xlu0 %v3180, 24
      %v3471 = vpop.permute.xlu0 %3470
      %3472 = vrot.lane.b32.xlu0 %v3181, 24
      %v3473 = vpop.permute.xlu0 %3472
      %3474 = vrot.lane.b32.xlu0 %v3182, 24
      %v3475 = vpop.permute.xlu0 %3474
      %3476 = vrot.lane.b32.xlu0 %v3183, 24
      %v3477 = vpop.permute.xlu0 %3476
      %3478 = vrot.lane.b32.xlu0 %v3184, 24
      %v3479 = vpop.permute.xlu0 %3478
      %3480 = vrot.lane.b32.xlu0 %v3185, 24
      %v3481 = vpop.permute.xlu0 %3480
      %3482 = vrot.lane.b32.xlu0 %v3186, 24
      %v3483 = vpop.permute.xlu0 %3482
      %3484 = vrot.lane.b32.xlu0 %v3187, 24
      %v3485 = vpop.permute.xlu0 %3484
      %3486 = vrot.lane.b32.xlu0 %v3188, 24
      %v3487 = vpop.permute.xlu0 %3486
      %3488 = vrot.lane.b32.xlu0 %v3189, 24
      %v3489 = vpop.permute.xlu0 %3488
      %3490 = vrot.lane.b32.xlu0 %v3190, 24
      %v3491 = vpop.permute.xlu0 %3490
      %3492 = vrot.lane.b32.xlu0 %v3191, 24
      %v3493 = vpop.permute.xlu0 %3492
      %3494 = vrot.lane.b32.xlu0 %v3192, 24
      %v3495 = vpop.permute.xlu0 %3494
      %3496 = vrot.lane.b32.xlu0 %v3193, 24
      %v3497 = vpop.permute.xlu0 %3496
      %v3518 = vsel %vm1006, %v3170, %v3397
      %v3519 = vsel %vm1006, %v3171, %v3399
      %v3520 = vsel %vm1006, %v3172, %v3401
      %v3521 = vsel %vm1006, %v3173, %v3403
      %v3522 = vsel %vm1006, %v3174, %v3405
      %v3523 = vsel %vm1006, %v3175, %v3407
      %v3524 = vsel %vm1006, %v3176, %v3409
      %v3525 = vsel %vm1006, %v3177, %v3411
      %v3526 = vsel %vm1006, %v3178, %v3413
      %v3527 = vsel %vm1006, %v3179, %v3415
      %v3528 = vsel %vm1006, %v3180, %v3417
      %v3529 = vsel %vm1006, %v3181, %v3419
      %v3530 = vsel %vm1006, %v3182, %v3421
      %v3531 = vsel %vm1006, %v3183, %v3423
      %v3532 = vsel %vm1006, %v3184, %v3425
      %v3533 = vsel %vm1006, %v3185, %v3427
      %v3534 = vsel %vm1006, %v3186, %v3429
      %v3535 = vsel %vm1006, %v3187, %v3431
      %v3536 = vsel %vm1006, %v3188, %v3433
      %v3537 = vsel %vm1006, %v3189, %v3435
      %v3538 = vsel %vm1027, %v3518, %v3459
      %v3539 = vsel %vm1027, %v3519, %v3461
      %v3540 = vsel %vm1027, %v3520, %v3463
      %v3541 = vsel %vm1027, %v3521, %v3465
      %v3542 = vsel %vm1027, %v3522, %v3467
      %v3543 = vsel %vm1027, %v3523, %v3469
      %v3544 = vsel %vm1027, %v3524, %v3471
      %v3545 = vsel %vm1027, %v3525, %v3473
      %v3546 = vsel %vm1027, %v3526, %v3475
      %v3547 = vsel %vm1027, %v3527, %v3477
      %v3548 = vsel %vm1027, %v3528, %v3479
      %v3549 = vsel %vm1027, %v3529, %v3481
      %v3550 = vsel %vm1027, %v3530, %v3483
      %v3551 = vsel %vm1027, %v3531, %v3485
      %v3552 = vsel %vm1027, %v3532, %v3487
      %v3553 = vsel %vm1027, %v3533, %v3489
      %v3554 = vsel %vm1027, %v3534, %v3491
      %v3555 = vsel %vm1027, %v3535, %v3493
      %v3556 = vsel %vm1027, %v3536, %v3495
      %v3557 = vsel %vm1027, %v3537, %v3497
      %v3578 = vrot.slane %v3356, 1
      %v3579 = vrot.slane %v3356, 2
      %v3580 = vrot.slane %v3356, 3
      %v3581 = vrot.slane %v3356, 4
      %v3582 = vrot.slane %v3356, 5
      %v3583 = vrot.slane %v3356, 6
      %v3584 = vrot.slane %v3356, 7
      %v3585 = vrot.slane %v3357, 1
      %v3586 = vrot.slane %v3357, 2
      %v3587 = vrot.slane %v3357, 3
      %v3588 = vrot.slane %v3357, 4
      %v3589 = vrot.slane %v3357, 5
      %v3590 = vrot.slane %v3357, 6
      %v3591 = vrot.slane %v3358, 1
      %v3592 = vrot.slane %v3358, 2
      %v3593 = vrot.slane %v3358, 3
      %v3594 = vrot.slane %v3358, 4
      %v3595 = vrot.slane %v3358, 5
      %v3596 = vrot.slane %v3358, 6
      %v3597 = vrot.slane %v3358, 7
      %v3598 = vrot.slane %v3359, 1
      %v3599 = vrot.slane %v3359, 2
      %v3600 = vrot.slane %v3359, 3
      %v3601 = vrot.slane %v3359, 4
      %v3602 = vrot.slane %v3359, 5
      %v3603 = vrot.slane %v3359, 6
      %v3604 = vrot.slane %v3360, 1
      %v3605 = vrot.slane %v3360, 2
      %v3606 = vrot.slane %v3360, 3
      %v3607 = vrot.slane %v3360, 4
      %v3608 = vrot.slane %v3360, 5
      %v3609 = vrot.slane %v3360, 6
      %v3610 = vrot.slane %v3360, 7
      %v3611 = vrot.slane %v3361, 1
      %v3612 = vrot.slane %v3361, 2
      %v3613 = vrot.slane %v3361, 3
      %v3614 = vrot.slane %v3361, 4
      %v3615 = vrot.slane %v3361, 5
      %v3616 = vrot.slane %v3361, 6
      %v3617 = vrot.slane %v3362, 1
      %v3618 = vrot.slane %v3362, 2
      %v3619 = vrot.slane %v3362, 3
      %v3620 = vrot.slane %v3362, 4
      %v3621 = vrot.slane %v3362, 5
      %v3622 = vrot.slane %v3362, 6
      %v3623 = vrot.slane %v3362, 7
      %v3624 = vrot.slane %v3363, 1
      %v3625 = vrot.slane %v3363, 2
      %v3626 = vrot.slane %v3363, 3
      %v3627 = vrot.slane %v3363, 4
      %v3628 = vrot.slane %v3363, 5
      %v3629 = vrot.slane %v3363, 6
      %v3630 = vrot.slane %v3364, 1
      %v3631 = vrot.slane %v3364, 2
      %v3632 = vrot.slane %v3364, 3
      %v3633 = vrot.slane %v3364, 4
      %v3634 = vrot.slane %v3364, 5
      %v3635 = vrot.slane %v3364, 6
      %v3636 = vrot.slane %v3364, 7
      %v3637 = vrot.slane %v3365, 1
      %v3638 = vrot.slane %v3365, 2
      %v3639 = vrot.slane %v3365, 3
      %v3640 = vrot.slane %v3365, 4
      %v3641 = vrot.slane %v3365, 5
      %v3642 = vrot.slane %v3365, 6
      %v3643 = vrot.slane %v3366, 1
      %v3644 = vrot.slane %v3366, 2
      %v3645 = vrot.slane %v3366, 3
      %v3646 = vrot.slane %v3366, 4
      %v3647 = vrot.slane %v3366, 5
      %v3648 = vrot.slane %v3366, 6
      %v3649 = vrot.slane %v3366, 7
      %v3650 = vrot.slane %v3367, 1
      %v3651 = vrot.slane %v3367, 2
      %v3652 = vrot.slane %v3367, 3
      %v3653 = vrot.slane %v3367, 4
      %v3654 = vrot.slane %v3367, 5
      %v3655 = vrot.slane %v3367, 6
      %v3656 = vrot.slane %v3368, 1
      %v3657 = vrot.slane %v3368, 2
      %v3658 = vrot.slane %v3368, 3
      %v3659 = vrot.slane %v3368, 4
      %v3660 = vrot.slane %v3368, 5
      %v3661 = vrot.slane %v3368, 6
      %v3662 = vrot.slane %v3368, 7
      %v3663 = vrot.slane %v3369, 1
      %v3664 = vrot.slane %v3369, 2
      %v3665 = vrot.slane %v3369, 3
      %v3666 = vrot.slane %v3369, 4
      %v3667 = vrot.slane %v3369, 5
      %v3668 = vrot.slane %v3369, 6
      %v3669 = vrot.slane %v3370, 1
      %v3670 = vrot.slane %v3370, 2
      %v3671 = vrot.slane %v3370, 3
      %v3672 = vrot.slane %v3370, 4
      %v3673 = vrot.slane %v3370, 5
      %v3674 = vrot.slane %v3370, 6
      %v3675 = vrot.slane %v3370, 7
      %v3676 = vrot.slane %v3371, 1
      %v3677 = vrot.slane %v3371, 2
      %v3678 = vrot.slane %v3371, 3
      %v3679 = vrot.slane %v3371, 4
      %v3680 = vrot.slane %v3371, 5
      %v3681 = vrot.slane %v3371, 6
      %v3682 = vrot.slane %v3372, 1
      %v3683 = vrot.slane %v3372, 2
      %v3684 = vrot.slane %v3372, 3
      %v3685 = vrot.slane %v3372, 4
      %v3686 = vrot.slane %v3372, 5
      %v3687 = vrot.slane %v3372, 6
      %v3688 = vrot.slane %v3372, 7
      %v3689 = vrot.slane %v3373, 1
      %v3690 = vrot.slane %v3373, 2
      %v3691 = vrot.slane %v3373, 3
      %v3692 = vrot.slane %v3373, 4
      %v3693 = vrot.slane %v3373, 5
      %v3694 = vrot.slane %v3373, 6
      %v3695 = vrot.slane %v3374, 1
      %v3696 = vrot.slane %v3374, 2
      %v3697 = vrot.slane %v3374, 3
      %v3698 = vrot.slane %v3374, 4
      %v3699 = vrot.slane %v3374, 5
      %v3700 = vrot.slane %v3374, 6
      %v3701 = vrot.slane %v3374, 7
      %v3702 = vrot.slane %v3375, 1
      %v3703 = vrot.slane %v3375, 2
      %v3704 = vrot.slane %v3375, 3
      %v3705 = vrot.slane %v3375, 4
      %v3706 = vrot.slane %v3375, 5
      %v3707 = vrot.slane %v3375, 6
      %3708 = vst [vmem:[#allocation1] ss:$9 sm:$0xff] %v3356
      %s3709 = scalar_lea.vmem [#allocation1], 1
      %3710 = vst [vmem:[%s3709] ss:$9 sm:$0xff] %v3578
      %s3711 = scalar_lea.vmem [#allocation1], 2
      %3712 = vst [vmem:[%s3711] ss:$9 sm:$0xff] %v3579
      %s3713 = scalar_lea.vmem [#allocation1], 3
      %3714 = vst [vmem:[%s3713] ss:$9 sm:$0xff] %v3580
      %s3715 = scalar_lea.vmem [#allocation1], 4
      %3716 = vst [vmem:[%s3715] ss:$9 sm:$0xff] %v3581
      %s3717 = scalar_lea.vmem [#allocation1], 5
      %3718 = vst [vmem:[%s3717] ss:$9 sm:$0xff] %v3582
      %s3719 = scalar_lea.vmem [#allocation1], 6
      %3720 = vst [vmem:[%s3719] ss:$9 sm:$0xff] %v3583
      %s3721 = scalar_lea.vmem [#allocation1], 7
      %3722 = vst [vmem:[%s3721] ss:$9 sm:$0xff] %v3584
      %v3723 = vld [vmem:[#allocation1] sm:$0xff]
      %3724 = vst [vmem:[#allocation1] ss:$9 sm:$0xff] %v3357
      %3725 = vst [vmem:[%s3709] ss:$9 sm:$0xff] %v3585
      %3726 = vst [vmem:[%s3711] ss:$9 sm:$0xff] %v3586
      %3727 = vst [vmem:[%s3713] ss:$9 sm:$0xff] %v3587
      %3728 = vst [vmem:[%s3715] ss:$9 sm:$0xff] %v3588
      %3729 = vst [vmem:[%s3717] ss:$9 sm:$0xff] %v3589
      %3730 = vst [vmem:[%s3719] ss:$9 sm:$0xff] %v3590
      %3731 = vst [vmem:[%s3721] ss:$9 sm:$0xff] %v3358
      %v3732 = vld [vmem:[#allocation1] sm:$0xff]
      %3733 = vst [vmem:[#allocation1] ss:$9 sm:$0xff] %v3591
      %3734 = vst [vmem:[%s3709] ss:$9 sm:$0xff] %v3592
      %3735 = vst [vmem:[%s3711] ss:$9 sm:$0xff] %v3593
      %3736 = vst [vmem:[%s3713] ss:$9 sm:$0xff] %v3594
      %3737 = vst [vmem:[%s3715] ss:$9 sm:$0xff] %v3595
      %3738 = vst [vmem:[%s3717] ss:$9 sm:$0xff] %v3596
      %3739 = vst [vmem:[%s3719] ss:$9 sm:$0xff] %v3597
      %3740 = vst [vmem:[%s3721] ss:$9 sm:$0xff] %v3359
      %v3741 = vld [vmem:[#allocation1] sm:$0xff]
      %3742 = vst [vmem:[#allocation1] ss:$9 sm:$0xff] %v3598
      %3743 = vst [vmem:[%s3709] ss:$9 sm:$0xff] %v3599
      %3744 = vst [vmem:[%s3711] ss:$9 sm:$0xff] %v3600
      %3745 = vst [vmem:[%s3713] ss:$9 sm:$0xff] %v3601
      %3746 = vst [vmem:[%s3715] ss:$9 sm:$0xff] %v3602
      %3747 = vst [vmem:[%s3717] ss:$9 sm:$0xff] %v3603
      %3748 = vst [vmem:[%s3719] ss:$9 sm:$0xff] %v3360
      %3749 = vst [vmem:[%s3721] ss:$9 sm:$0xff] %v3604
      %v3750 = vld [vmem:[#allocation1] sm:$0xff]
      %3751 = vst [vmem:[#allocation1] ss:$9 sm:$0xff] %v3605
      %3752 = vst [vmem:[%s3709] ss:$9 sm:$0xff] %v3606
      %3753 = vst [vmem:[%s3711] ss:$9 sm:$0xff] %v3607
      %3754 = vst [vmem:[%s3713] ss:$9 sm:$0xff] %v3608
      %3755 = vst [vmem:[%s3715] ss:$9 sm:$0xff] %v3609
      %3756 = vst [vmem:[%s3717] ss:$9 sm:$0xff] %v3610
      %3757 = vst [vmem:[%s3719] ss:$9 sm:$0xff] %v3361
      %3758 = vst [vmem:[%s3721] ss:$9 sm:$0xff] %v3611
      %v3759 = vld [vmem:[#allocation1] sm:$0xff]
      %3760 = vst [vmem:[#allocation1] ss:$9 sm:$0xff] %v3612
      %3761 = vst [vmem:[%s3709] ss:$9 sm:$0xff] %v3613
      %3762 = vst [vmem:[%s3711] ss:$9 sm:$0xff] %v3614
      %3763 = vst [vmem:[%s3713] ss:$9 sm:$0xff] %v3615
      %3764 = vst [vmem:[%s3715] ss:$9 sm:$0xff] %v3616
      %3765 = vst [vmem:[%s3717] ss:$9 sm:$0xff] %v3362
      %3766 = vst [vmem:[%s3719] ss:$9 sm:$0xff] %v3617
      %3767 = vst [vmem:[%s3721] ss:$9 sm:$0xff] %v3618
      %v3768 = vld [vmem:[#allocation1] sm:$0xff]
      %3769 = vst [vmem:[#allocation1] ss:$9 sm:$0xff] %v3619
      %3770 = vst [vmem:[%s3709] ss:$9 sm:$0xff] %v3620
      %3771 = vst [vmem:[%s3711] ss:$9 sm:$0xff] %v3621
      %3772 = vst [vmem:[%s3713] ss:$9 sm:$0xff] %v3622
      %3773 = vst [vmem:[%s3715] ss:$9 sm:$0xff] %v3623
      %3774 = vst [vmem:[%s3717] ss:$9 sm:$0xff] %v3363
      %3775 = vst [vmem:[%s3719] ss:$9 sm:$0xff] %v3624
      %3776 = vst [vmem:[%s3721] ss:$9 sm:$0xff] %v3625
      %v3777 = vld [vmem:[#allocation1] sm:$0xff]
      %3778 = vst [vmem:[#allocation1] ss:$9 sm:$0xff] %v3626
      %3779 = vst [vmem:[%s3709] ss:$9 sm:$0xff] %v3627
      %3780 = vst [vmem:[%s3711] ss:$9 sm:$0xff] %v3628
      %3781 = vst [vmem:[%s3713] ss:$9 sm:$0xff] %v3629
      %3782 = vst [vmem:[%s3715] ss:$9 sm:$0xff] %v3364
      %3783 = vst [vmem:[%s3717] ss:$9 sm:$0xff] %v3630
      %3784 = vst [vmem:[%s3719] ss:$9 sm:$0xff] %v3631
      %3785 = vst [vmem:[%s3721] ss:$9 sm:$0xff] %v3632
      %v3786 = vld [vmem:[#allocation1] sm:$0xff]
      %3787 = vst [vmem:[#allocation1] ss:$9 sm:$0xff] %v3633
      %3788 = vst [vmem:[%s3709] ss:$9 sm:$0xff] %v3634
      %3789 = vst [vmem:[%s3711] ss:$9 sm:$0xff] %v3635
      %3790 = vst [vmem:[%s3713] ss:$9 sm:$0xff] %v3636
      %3791 = vst [vmem:[%s3715] ss:$9 sm:$0xff] %v3365
      %3792 = vst [vmem:[%s3717] ss:$9 sm:$0xff] %v3637
      %3793 = vst [vmem:[%s3719] ss:$9 sm:$0xff] %v3638
      %3794 = vst [vmem:[%s3721] ss:$9 sm:$0xff] %v3639
      %v3795 = vld [vmem:[#allocation1] sm:$0xff]
      %3796 = vst [vmem:[#allocation1] ss:$9 sm:$0xff] %v3640
      %3797 = vst [vmem:[%s3709] ss:$9 sm:$0xff] %v3641
      %3798 = vst [vmem:[%s3711] ss:$9 sm:$0xff] %v3642
      %3799 = vst [vmem:[%s3713] ss:$9 sm:$0xff] %v3366
      %3800 = vst [vmem:[%s3715] ss:$9 sm:$0xff] %v3643
      %3801 = vst [vmem:[%s3717] ss:$9 sm:$0xff] %v3644
      %3802 = vst [vmem:[%s3719] ss:$9 sm:$0xff] %v3645
      %3803 = vst [vmem:[%s3721] ss:$9 sm:$0xff] %v3646
      %v3804 = vld [vmem:[#allocation1] sm:$0xff]
      %3805 = vst [vmem:[#allocation1] ss:$9 sm:$0xff] %v3647
      %3806 = vst [vmem:[%s3709] ss:$9 sm:$0xff] %v3648
      %3807 = vst [vmem:[%s3711] ss:$9 sm:$0xff] %v3649
      %3808 = vst [vmem:[%s3713] ss:$9 sm:$0xff] %v3367
      %3809 = vst [vmem:[%s3715] ss:$9 sm:$0xff] %v3650
      %3810 = vst [vmem:[%s3717] ss:$9 sm:$0xff] %v3651
      %3811 = vst [vmem:[%s3719] ss:$9 sm:$0xff] %v3652
      %3812 = vst [vmem:[%s3721] ss:$9 sm:$0xff] %v3653
      %v3813 = vld [vmem:[#allocation1] sm:$0xff]
      %3814 = vst [vmem:[#allocation1] ss:$9 sm:$0xff] %v3654
      %3815 = vst [vmem:[%s3709] ss:$9 sm:$0xff] %v3655
      %3816 = vst [vmem:[%s3711] ss:$9 sm:$0xff] %v3368
      %3817 = vst [vmem:[%s3713] ss:$9 sm:$0xff] %v3656
      %3818 = vst [vmem:[%s3715] ss:$9 sm:$0xff] %v3657
      %3819 = vst [vmem:[%s3717] ss:$9 sm:$0xff] %v3658
      %3820 = vst [vmem:[%s3719] ss:$9 sm:$0xff] %v3659
      %3821 = vst [vmem:[%s3721] ss:$9 sm:$0xff] %v3660
      %v3822 = vld [vmem:[#allocation1] sm:$0xff]
      %3823 = vst [vmem:[#allocation1] ss:$9 sm:$0xff] %v3661
      %3824 = vst [vmem:[%s3709] ss:$9 sm:$0xff] %v3662
      %3825 = vst [vmem:[%s3711] ss:$9 sm:$0xff] %v3369
      %3826 = vst [vmem:[%s3713] ss:$9 sm:$0xff] %v3663
      %3827 = vst [vmem:[%s3715] ss:$9 sm:$0xff] %v3664
      %3828 = vst [vmem:[%s3717] ss:$9 sm:$0xff] %v3665
      %3829 = vst [vmem:[%s3719] ss:$9 sm:$0xff] %v3666
      %3830 = vst [vmem:[%s3721] ss:$9 sm:$0xff] %v3667
      %v3831 = vld [vmem:[#allocation1] sm:$0xff]
      %3832 = vst [vmem:[#allocation1] ss:$9 sm:$0xff] %v3668
      %3833 = vst [vmem:[%s3709] ss:$9 sm:$0xff] %v3370
      %3834 = vst [vmem:[%s3711] ss:$9 sm:$0xff] %v3669
      %3835 = vst [vmem:[%s3713] ss:$9 sm:$0xff] %v3670
      %3836 = vst [vmem:[%s3715] ss:$9 sm:$0xff] %v3671
      %3837 = vst [vmem:[%s3717] ss:$9 sm:$0xff] %v3672
      %3838 = vst [vmem:[%s3719] ss:$9 sm:$0xff] %v3673
      %3839 = vst [vmem:[%s3721] ss:$9 sm:$0xff] %v3674
      %v3840 = vld [vmem:[#allocation1] sm:$0xff]
      %3841 = vst [vmem:[#allocation1] ss:$9 sm:$0xff] %v3675
      %3842 = vst [vmem:[%s3709] ss:$9 sm:$0xff] %v3371
      %3843 = vst [vmem:[%s3711] ss:$9 sm:$0xff] %v3676
      %3844 = vst [vmem:[%s3713] ss:$9 sm:$0xff] %v3677
      %3845 = vst [vmem:[%s3715] ss:$9 sm:$0xff] %v3678
      %3846 = vst [vmem:[%s3717] ss:$9 sm:$0xff] %v3679
      %3847 = vst [vmem:[%s3719] ss:$9 sm:$0xff] %v3680
      %3848 = vst [vmem:[%s3721] ss:$9 sm:$0xff] %v3681
      %v3849 = vld [vmem:[#allocation1] sm:$0xff]
      %3850 = vst [vmem:[#allocation1] ss:$9 sm:$0xff] %v3372
      %3851 = vst [vmem:[%s3709] ss:$9 sm:$0xff] %v3682
      %3852 = vst [vmem:[%s3711] ss:$9 sm:$0xff] %v3683
      %3853 = vst [vmem:[%s3713] ss:$9 sm:$0xff] %v3684
      %3854 = vst [vmem:[%s3715] ss:$9 sm:$0xff] %v3685
      %3855 = vst [vmem:[%s3717] ss:$9 sm:$0xff] %v3686
      %3856 = vst [vmem:[%s3719] ss:$9 sm:$0xff] %v3687
      %3857 = vst [vmem:[%s3721] ss:$9 sm:$0xff] %v3688
      %v3858 = vld [vmem:[#allocation1] sm:$0xff]
      %3859 = vst [vmem:[#allocation1] ss:$9 sm:$0xff] %v3373
      %3860 = vst [vmem:[%s3709] ss:$9 sm:$0xff] %v3689
      %3861 = vst [vmem:[%s3711] ss:$9 sm:$0xff] %v3690
      %3862 = vst [vmem:[%s3713] ss:$9 sm:$0xff] %v3691
      %3863 = vst [vmem:[%s3715] ss:$9 sm:$0xff] %v3692
      %3864 = vst [vmem:[%s3717] ss:$9 sm:$0xff] %v3693
      %3865 = vst [vmem:[%s3719] ss:$9 sm:$0xff] %v3694
      %3866 = vst [vmem:[%s3721] ss:$9 sm:$0xff] %v3374
      %v3867 = vld [vmem:[#allocation1] sm:$0xff]
      %3868 = vst [vmem:[#allocation1] ss:$9 sm:$0xff] %v3695
      %3869 = vst [vmem:[%s3709] ss:$9 sm:$0xff] %v3696
      %3870 = vst [vmem:[%s3711] ss:$9 sm:$0xff] %v3697
      %3871 = vst [vmem:[%s3713] ss:$9 sm:$0xff] %v3698
      %3872 = vst [vmem:[%s3715] ss:$9 sm:$0xff] %v3699
      %3873 = vst [vmem:[%s3717] ss:$9 sm:$0xff] %v3700
      %3874 = vst [vmem:[%s3719] ss:$9 sm:$0xff] %v3701
      %3875 = vst [vmem:[%s3721] ss:$9 sm:$0xff] %v3375
      %v3876 = vld [vmem:[#allocation1] sm:$0xff]
      %3877 = vst [vmem:[#allocation1] ss:$9 sm:$0xff] %v3702
      %3878 = vst [vmem:[%s3709] ss:$9 sm:$0xff] %v3703
      %3879 = vst [vmem:[%s3711] ss:$9 sm:$0xff] %v3704
      %3880 = vst [vmem:[%s3713] ss:$9 sm:$0xff] %v3705
      %3881 = vst [vmem:[%s3715] ss:$9 sm:$0xff] %v3706
      %3882 = vst [vmem:[%s3717] ss:$9 sm:$0xff] %v3707
      %v3883 = vld [vmem:[#allocation1] sm:$0xff]
      %v3884 = vsel %vm1556, %v3723, 0
      %v3886 = vsel %vm1556, %v3732, 0
      %v3888 = vsel %vm1556, %v3741, 0
      %v3890 = vsel %vm1556, %v3750, 0
      %v3892 = vsel %vm1556, %v3759, 0
      %v3894 = vsel %vm1556, %v3768, 0
      %v3896 = vsel %vm1556, %v3777, 0
      %v3898 = vsel %vm1556, %v3786, 0
      %v3900 = vsel %vm1556, %v3795, 0
      %v3902 = vsel %vm1556, %v3804, 0
      %v3904 = vsel %vm1556, %v3813, 0
      %v3906 = vsel %vm1556, %v3822, 0
      %v3908 = vsel %vm1556, %v3831, 0
      %v3910 = vsel %vm1556, %v3840, 0
      %v3912 = vsel %vm1556, %v3849, 0
      %v3914 = vsel %vm1556, %v3858, 0
      %v3916 = vsel %vm1556, %v3867, 0
      %v3918 = vsel %vm1556, %v3876, 0
      %v3920 = vsel %vm1556, %v3883, 0
      %v3923 = vsel %vm1595, %v2869, 0
      %3925 = vmatpush.msra.mxu0 0.0
      %3926 = vmatpush.msra.mxu0 0.0
      %3927 = vmatpush.msra.mxu0 0.0
      %3928 = vmatpush.msra.mxu0 0.0
      %3929 = vmatpush.msra.mxu0 0.0
      %3930 = vmatpush.msra.mxu0 0.0
      %3931 = vmatpush.msra.mxu0 0.0
      %3932 = vmatpush.msra.mxu0 0.0
      %3933 = vmatpush.msra.mxu0 0.0
      %3934 = vmatpush.msra.mxu0 0.0
      %3935 = vmatpush.msra.mxu0 0.0
      %3936 = vmatpush.msra.mxu0 %v3923
      %3937 = vmatpush.msra.mxu0 %v2868
      %3938 = vmatpush.msra.mxu0 %v2867
      %3939 = vmatpush.msra.mxu0 %v2866
      %3940 = vmatpush.msra.mxu0 %v2865
      %3941 = vmatmul.f32.gmra.mxu0 %v3884
      %v3942 = vpop.f32.mrf.mxu0
      %v3943 = vadd.f32 0.0, %v3942
      %3944 = vmatmul.f32.gmra.mxu0 %v3886
      %v3945 = vpop.f32.mrf.mxu0
      %v3946 = vadd.f32 0.0, %v3945
      %3947 = vmatmul.f32.gmra.mxu0 %v3888
      %v3948 = vpop.f32.mrf.mxu0
      %v3949 = vadd.f32 0.0, %v3948
      %3950 = vmatmul.f32.gmra.mxu0 %v3890
      %v3951 = vpop.f32.mrf.mxu0
      %v3952 = vadd.f32 0.0, %v3951
      %3953 = vmatmul.f32.gmra.mxu0 %v3892
      %v3954 = vpop.f32.mrf.mxu0
      %v3955 = vadd.f32 0.0, %v3954
      %3956 = vmatmul.f32.gmra.mxu0 %v3894
      %v3957 = vpop.f32.mrf.mxu0
      %v3958 = vadd.f32 0.0, %v3957
      %3959 = vmatmul.f32.gmra.mxu0 %v3896
      %v3960 = vpop.f32.mrf.mxu0
      %v3961 = vadd.f32 0.0, %v3960
      %3962 = vmatmul.f32.gmra.mxu0 %v3898
      %v3963 = vpop.f32.mrf.mxu0
      %v3964 = vadd.f32 0.0, %v3963
      %3965 = vmatmul.f32.gmra.mxu0 %v3900
      %v3966 = vpop.f32.mrf.mxu0
      %v3967 = vadd.f32 0.0, %v3966
      %3968 = vmatmul.f32.gmra.mxu0 %v3902
      %v3969 = vpop.f32.mrf.mxu0
      %v3970 = vadd.f32 0.0, %v3969
      %3971 = vmatmul.f32.gmra.mxu0 %v3904
      %v3972 = vpop.f32.mrf.mxu0
      %v3973 = vadd.f32 0.0, %v3972
      %3974 = vmatmul.f32.gmra.mxu0 %v3906
      %v3975 = vpop.f32.mrf.mxu0
      %v3976 = vadd.f32 0.0, %v3975
      %3977 = vmatmul.f32.gmra.mxu0 %v3908
      %v3978 = vpop.f32.mrf.mxu0
      %v3979 = vadd.f32 0.0, %v3978
      %3980 = vmatmul.f32.gmra.mxu0 %v3910
      %v3981 = vpop.f32.mrf.mxu0
      %v3982 = vadd.f32 0.0, %v3981
      %3983 = vmatmul.f32.gmra.mxu0 %v3912
      %v3984 = vpop.f32.mrf.mxu0
      %v3985 = vadd.f32 0.0, %v3984
      %3986 = vmatmul.f32.gmra.mxu0 %v3914
      %v3987 = vpop.f32.mrf.mxu0
      %v3988 = vadd.f32 0.0, %v3987
      %3989 = vmatmul.f32.gmra.mxu0 %v3916
      %v3990 = vpop.f32.mrf.mxu0
      %v3991 = vadd.f32 0.0, %v3990
      %3992 = vmatmul.f32.gmra.mxu0 %v3918
      %v3993 = vpop.f32.mrf.mxu0
      %v3994 = vadd.f32 0.0, %v3993
      %3995 = vmatmul.f32.gmra.mxu0 %v3920
      %v3996 = vpop.f32.mrf.mxu0
      %v3997 = vadd.f32 0.0, %v3996
      %3998 = vdwg.mxu0
      %v4019 = vrot.slane %v3538, 1
      %v4020 = vrot.slane %v3538, 2
      %v4021 = vrot.slane %v3538, 3
      %v4022 = vrot.slane %v3538, 4
      %v4023 = vrot.slane %v3538, 5
      %v4024 = vrot.slane %v3538, 6
      %v4025 = vrot.slane %v3538, 7
      %v4026 = vrot.slane %v3539, 1
      %v4027 = vrot.slane %v3539, 2
      %v4028 = vrot.slane %v3539, 3
      %v4029 = vrot.slane %v3539, 4
      %v4030 = vrot.slane %v3539, 5
      %v4031 = vrot.slane %v3539, 6
      %v4032 = vrot.slane %v3540, 1
      %v4033 = vrot.slane %v3540, 2
      %v4034 = vrot.slane %v3540, 3
      %v4035 = vrot.slane %v3540, 4
      %v4036 = vrot.slane %v3540, 5
      %v4037 = vrot.slane %v3540, 6
      %v4038 = vrot.slane %v3540, 7
      %v4039 = vrot.slane %v3541, 1
      %v4040 = vrot.slane %v3541, 2
      %v4041 = vrot.slane %v3541, 3
      %v4042 = vrot.slane %v3541, 4
      %v4043 = vrot.slane %v3541, 5
      %v4044 = vrot.slane %v3541, 6
      %v4045 = vrot.slane %v3542, 1
      %v4046 = vrot.slane %v3542, 2
      %v4047 = vrot.slane %v3542, 3
      %v4048 = vrot.slane %v3542, 4
      %v4049 = vrot.slane %v3542, 5
      %v4050 = vrot.slane %v3542, 6
      %v4051 = vrot.slane %v3542, 7
      %v4052 = vrot.slane %v3543, 1
      %v4053 = vrot.slane %v3543, 2
      %v4054 = vrot.slane %v3543, 3
      %v4055 = vrot.slane %v3543, 4
      %v4056 = vrot.slane %v3543, 5
      %v4057 = vrot.slane %v3543, 6
      %v4058 = vrot.slane %v3544, 1
      %v4059 = vrot.slane %v3544, 2
      %v4060 = vrot.slane %v3544, 3
      %v4061 = vrot.slane %v3544, 4
      %v4062 = vrot.slane %v3544, 5
      %v4063 = vrot.slane %v3544, 6
      %v4064 = vrot.slane %v3544, 7
      %v4065 = vrot.slane %v3545, 1
      %v4066 = vrot.slane %v3545, 2
      %v4067 = vrot.slane %v3545, 3
      %v4068 = vrot.slane %v3545, 4
      %v4069 = vrot.slane %v3545, 5
      %v4070 = vrot.slane %v3545, 6
      %v4071 = vrot.slane %v3546, 1
      %v4072 = vrot.slane %v3546, 2
      %v4073 = vrot.slane %v3546, 3
      %v4074 = vrot.slane %v3546, 4
      %v4075 = vrot.slane %v3546, 5
      %v4076 = vrot.slane %v3546, 6
      %v4077 = vrot.slane %v3546, 7
      %v4078 = vrot.slane %v3547, 1
      %v4079 = vrot.slane %v3547, 2
      %v4080 = vrot.slane %v3547, 3
      %v4081 = vrot.slane %v3547, 4
      %v4082 = vrot.slane %v3547, 5
      %v4083 = vrot.slane %v3547, 6
      %v4084 = vrot.slane %v3548, 1
      %v4085 = vrot.slane %v3548, 2
      %v4086 = vrot.slane %v3548, 3
      %v4087 = vrot.slane %v3548, 4
      %v4088 = vrot.slane %v3548, 5
      %v4089 = vrot.slane %v3548, 6
      %v4090 = vrot.slane %v3548, 7
      %v4091 = vrot.slane %v3549, 1
      %v4092 = vrot.slane %v3549, 2
      %v4093 = vrot.slane %v3549, 3
      %v4094 = vrot.slane %v3549, 4
      %v4095 = vrot.slane %v3549, 5
      %v4096 = vrot.slane %v3549, 6
      %v4097 = vrot.slane %v3550, 1
      %v4098 = vrot.slane %v3550, 2
      %v4099 = vrot.slane %v3550, 3
      %v4100 = vrot.slane %v3550, 4
      %v4101 = vrot.slane %v3550, 5
      %v4102 = vrot.slane %v3550, 6
      %v4103 = vrot.slane %v3550, 7
      %v4104 = vrot.slane %v3551, 1
      %v4105 = vrot.slane %v3551, 2
      %v4106 = vrot.slane %v3551, 3
      %v4107 = vrot.slane %v3551, 4
      %v4108 = vrot.slane %v3551, 5
      %v4109 = vrot.slane %v3551, 6
      %v4110 = vrot.slane %v3552, 1
      %v4111 = vrot.slane %v3552, 2
      %v4112 = vrot.slane %v3552, 3
      %v4113 = vrot.slane %v3552, 4
      %v4114 = vrot.slane %v3552, 5
      %v4115 = vrot.slane %v3552, 6
      %v4116 = vrot.slane %v3552, 7
      %v4117 = vrot.slane %v3553, 1
      %v4118 = vrot.slane %v3553, 2
      %v4119 = vrot.slane %v3553, 3
      %v4120 = vrot.slane %v3553, 4
      %v4121 = vrot.slane %v3553, 5
      %v4122 = vrot.slane %v3553, 6
      %v4123 = vrot.slane %v3554, 1
      %v4124 = vrot.slane %v3554, 2
      %v4125 = vrot.slane %v3554, 3
      %v4126 = vrot.slane %v3554, 4
      %v4127 = vrot.slane %v3554, 5
      %v4128 = vrot.slane %v3554, 6
      %v4129 = vrot.slane %v3554, 7
      %v4130 = vrot.slane %v3555, 1
      %v4131 = vrot.slane %v3555, 2
      %v4132 = vrot.slane %v3555, 3
      %v4133 = vrot.slane %v3555, 4
      %v4134 = vrot.slane %v3555, 5
      %v4135 = vrot.slane %v3555, 6
      %v4136 = vrot.slane %v3556, 1
      %v4137 = vrot.slane %v3556, 2
      %v4138 = vrot.slane %v3556, 3
      %v4139 = vrot.slane %v3556, 4
      %v4140 = vrot.slane %v3556, 5
      %v4141 = vrot.slane %v3556, 6
      %v4142 = vrot.slane %v3556, 7
      %v4143 = vrot.slane %v3557, 1
      %v4144 = vrot.slane %v3557, 2
      %v4145 = vrot.slane %v3557, 3
      %v4146 = vrot.slane %v3557, 4
      %v4147 = vrot.slane %v3557, 5
      %v4148 = vrot.slane %v3557, 6
      %4149 = vst [vmem:[#allocation1] ss:$9 sm:$0xff] %v3538
      %s4150 = scalar_lea.vmem [#allocation1], 1
      %4151 = vst [vmem:[%s4150] ss:$9 sm:$0xff] %v4019
      %s4152 = scalar_lea.vmem [#allocation1], 2
      %4153 = vst [vmem:[%s4152] ss:$9 sm:$0xff] %v4020
      %s4154 = scalar_lea.vmem [#allocation1], 3
      %4155 = vst [vmem:[%s4154] ss:$9 sm:$0xff] %v4021
      %s4156 = scalar_lea.vmem [#allocation1], 4
      %4157 = vst [vmem:[%s4156] ss:$9 sm:$0xff] %v4022
      %s4158 = scalar_lea.vmem [#allocation1], 5
      %4159 = vst [vmem:[%s4158] ss:$9 sm:$0xff] %v4023
      %s4160 = scalar_lea.vmem [#allocation1], 6
      %4161 = vst [vmem:[%s4160] ss:$9 sm:$0xff] %v4024
      %s4162 = scalar_lea.vmem [#allocation1], 7
      %4163 = vst [vmem:[%s4162] ss:$9 sm:$0xff] %v4025
      %v4164 = vld [vmem:[#allocation1] sm:$0xff]
      %4165 = vst [vmem:[#allocation1] ss:$9 sm:$0xff] %v3539
      %4166 = vst [vmem:[%s4150] ss:$9 sm:$0xff] %v4026
      %4167 = vst [vmem:[%s4152] ss:$9 sm:$0xff] %v4027
      %4168 = vst [vmem:[%s4154] ss:$9 sm:$0xff] %v4028
      %4169 = vst [vmem:[%s4156] ss:$9 sm:$0xff] %v4029
      %4170 = vst [vmem:[%s4158] ss:$9 sm:$0xff] %v4030
      %4171 = vst [vmem:[%s4160] ss:$9 sm:$0xff] %v4031
      %4172 = vst [vmem:[%s4162] ss:$9 sm:$0xff] %v3540
      %v4173 = vld [vmem:[#allocation1] sm:$0xff]
      %4174 = vst [vmem:[#allocation1] ss:$9 sm:$0xff] %v4032
      %4175 = vst [vmem:[%s4150] ss:$9 sm:$0xff] %v4033
      %4176 = vst [vmem:[%s4152] ss:$9 sm:$0xff] %v4034
      %4177 = vst [vmem:[%s4154] ss:$9 sm:$0xff] %v4035
      %4178 = vst [vmem:[%s4156] ss:$9 sm:$0xff] %v4036
      %4179 = vst [vmem:[%s4158] ss:$9 sm:$0xff] %v4037
      %4180 = vst [vmem:[%s4160] ss:$9 sm:$0xff] %v4038
      %4181 = vst [vmem:[%s4162] ss:$9 sm:$0xff] %v3541
      %v4182 = vld [vmem:[#allocation1] sm:$0xff]
      %4183 = vst [vmem:[#allocation1] ss:$9 sm:$0xff] %v4039
      %4184 = vst [vmem:[%s4150] ss:$9 sm:$0xff] %v4040
      %4185 = vst [vmem:[%s4152] ss:$9 sm:$0xff] %v4041
      %4186 = vst [vmem:[%s4154] ss:$9 sm:$0xff] %v4042
      %4187 = vst [vmem:[%s4156] ss:$9 sm:$0xff] %v4043
      %4188 = vst [vmem:[%s4158] ss:$9 sm:$0xff] %v4044
      %4189 = vst [vmem:[%s4160] ss:$9 sm:$0xff] %v3542
      %4190 = vst [vmem:[%s4162] ss:$9 sm:$0xff] %v4045
      %v4191 = vld [vmem:[#allocation1] sm:$0xff]
      %4192 = vst [vmem:[#allocation1] ss:$9 sm:$0xff] %v4046
      %4193 = vst [vmem:[%s4150] ss:$9 sm:$0xff] %v4047
      %4194 = vst [vmem:[%s4152] ss:$9 sm:$0xff] %v4048
      %4195 = vst [vmem:[%s4154] ss:$9 sm:$0xff] %v4049
      %4196 = vst [vmem:[%s4156] ss:$9 sm:$0xff] %v4050
      %4197 = vst [vmem:[%s4158] ss:$9 sm:$0xff] %v4051
      %4198 = vst [vmem:[%s4160] ss:$9 sm:$0xff] %v3543
      %4199 = vst [vmem:[%s4162] ss:$9 sm:$0xff] %v4052
      %v4200 = vld [vmem:[#allocation1] sm:$0xff]
      %4201 = vst [vmem:[#allocation1] ss:$9 sm:$0xff] %v4053
      %4202 = vst [vmem:[%s4150] ss:$9 sm:$0xff] %v4054
      %4203 = vst [vmem:[%s4152] ss:$9 sm:$0xff] %v4055
      %4204 = vst [vmem:[%s4154] ss:$9 sm:$0xff] %v4056
      %4205 = vst [vmem:[%s4156] ss:$9 sm:$0xff] %v4057
      %4206 = vst [vmem:[%s4158] ss:$9 sm:$0xff] %v3544
      %4207 = vst [vmem:[%s4160] ss:$9 sm:$0xff] %v4058
      %4208 = vst [vmem:[%s4162] ss:$9 sm:$0xff] %v4059
      %v4209 = vld [vmem:[#allocation1] sm:$0xff]
      %4210 = vst [vmem:[#allocation1] ss:$9 sm:$0xff] %v4060
      %4211 = vst [vmem:[%s4150] ss:$9 sm:$0xff] %v4061
      %4212 = vst [vmem:[%s4152] ss:$9 sm:$0xff] %v4062
      %4213 = vst [vmem:[%s4154] ss:$9 sm:$0xff] %v4063
      %4214 = vst [vmem:[%s4156] ss:$9 sm:$0xff] %v4064
      %4215 = vst [vmem:[%s4158] ss:$9 sm:$0xff] %v3545
      %4216 = vst [vmem:[%s4160] ss:$9 sm:$0xff] %v4065
      %4217 = vst [vmem:[%s4162] ss:$9 sm:$0xff] %v4066
      %v4218 = vld [vmem:[#allocation1] sm:$0xff]
      %4219 = vst [vmem:[#allocation1] ss:$9 sm:$0xff] %v4067
      %4220 = vst [vmem:[%s4150] ss:$9 sm:$0xff] %v4068
      %4221 = vst [vmem:[%s4152] ss:$9 sm:$0xff] %v4069
      %4222 = vst [vmem:[%s4154] ss:$9 sm:$0xff] %v4070
      %4223 = vst [vmem:[%s4156] ss:$9 sm:$0xff] %v3546
      %4224 = vst [vmem:[%s4158] ss:$9 sm:$0xff] %v4071
      %4225 = vst [vmem:[%s4160] ss:$9 sm:$0xff] %v4072
      %4226 = vst [vmem:[%s4162] ss:$9 sm:$0xff] %v4073
      %v4227 = vld [vmem:[#allocation1] sm:$0xff]
      %4228 = vst [vmem:[#allocation1] ss:$9 sm:$0xff] %v4074
      %4229 = vst [vmem:[%s4150] ss:$9 sm:$0xff] %v4075
      %4230 = vst [vmem:[%s4152] ss:$9 sm:$0xff] %v4076
      %4231 = vst [vmem:[%s4154] ss:$9 sm:$0xff] %v4077
      %4232 = vst [vmem:[%s4156] ss:$9 sm:$0xff] %v3547
      %4233 = vst [vmem:[%s4158] ss:$9 sm:$0xff] %v4078
      %4234 = vst [vmem:[%s4160] ss:$9 sm:$0xff] %v4079
      %4235 = vst [vmem:[%s4162] ss:$9 sm:$0xff] %v4080
      %v4236 = vld [vmem:[#allocation1] sm:$0xff]
      %4237 = vst [vmem:[#allocation1] ss:$9 sm:$0xff] %v4081
      %4238 = vst [vmem:[%s4150] ss:$9 sm:$0xff] %v4082
      %4239 = vst [vmem:[%s4152] ss:$9 sm:$0xff] %v4083
      %4240 = vst [vmem:[%s4154] ss:$9 sm:$0xff] %v3548
      %4241 = vst [vmem:[%s4156] ss:$9 sm:$0xff] %v4084
      %4242 = vst [vmem:[%s4158] ss:$9 sm:$0xff] %v4085
      %4243 = vst [vmem:[%s4160] ss:$9 sm:$0xff] %v4086
      %4244 = vst [vmem:[%s4162] ss:$9 sm:$0xff] %v4087
      %v4245 = vld [vmem:[#allocation1] sm:$0xff]
      %4246 = vst [vmem:[#allocation1] ss:$9 sm:$0xff] %v4088
      %4247 = vst [vmem:[%s4150] ss:$9 sm:$0xff] %v4089
      %4248 = vst [vmem:[%s4152] ss:$9 sm:$0xff] %v4090
      %4249 = vst [vmem:[%s4154] ss:$9 sm:$0xff] %v3549
      %4250 = vst [vmem:[%s4156] ss:$9 sm:$0xff] %v4091
      %4251 = vst [vmem:[%s4158] ss:$9 sm:$0xff] %v4092
      %4252 = vst [vmem:[%s4160] ss:$9 sm:$0xff] %v4093
      %4253 = vst [vmem:[%s4162] ss:$9 sm:$0xff] %v4094
      %v4254 = vld [vmem:[#allocation1] sm:$0xff]
      %4255 = vst [vmem:[#allocation1] ss:$9 sm:$0xff] %v4095
      %4256 = vst [vmem:[%s4150] ss:$9 sm:$0xff] %v4096
      %4257 = vst [vmem:[%s4152] ss:$9 sm:$0xff] %v3550
      %4258 = vst [vmem:[%s4154] ss:$9 sm:$0xff] %v4097
      %4259 = vst [vmem:[%s4156] ss:$9 sm:$0xff] %v4098
      %4260 = vst [vmem:[%s4158] ss:$9 sm:$0xff] %v4099
      %4261 = vst [vmem:[%s4160] ss:$9 sm:$0xff] %v4100
      %4262 = vst [vmem:[%s4162] ss:$9 sm:$0xff] %v4101
      %v4263 = vld [vmem:[#allocation1] sm:$0xff]
      %4264 = vst [vmem:[#allocation1] ss:$9 sm:$0xff] %v4102
      %4265 = vst [vmem:[%s4150] ss:$9 sm:$0xff] %v4103
      %4266 = vst [vmem:[%s4152] ss:$9 sm:$0xff] %v3551
      %4267 = vst [vmem:[%s4154] ss:$9 sm:$0xff] %v4104
      %4268 = vst [vmem:[%s4156] ss:$9 sm:$0xff] %v4105
      %4269 = vst [vmem:[%s4158] ss:$9 sm:$0xff] %v4106
      %4270 = vst [vmem:[%s4160] ss:$9 sm:$0xff] %v4107
      %4271 = vst [vmem:[%s4162] ss:$9 sm:$0xff] %v4108
      %v4272 = vld [vmem:[#allocation1] sm:$0xff]
      %4273 = vst [vmem:[#allocation1] ss:$9 sm:$0xff] %v4109
      %4274 = vst [vmem:[%s4150] ss:$9 sm:$0xff] %v3552
      %4275 = vst [vmem:[%s4152] ss:$9 sm:$0xff] %v4110
      %4276 = vst [vmem:[%s4154] ss:$9 sm:$0xff] %v4111
      %4277 = vst [vmem:[%s4156] ss:$9 sm:$0xff] %v4112
      %4278 = vst [vmem:[%s4158] ss:$9 sm:$0xff] %v4113
      %4279 = vst [vmem:[%s4160] ss:$9 sm:$0xff] %v4114
      %4280 = vst [vmem:[%s4162] ss:$9 sm:$0xff] %v4115
      %v4281 = vld [vmem:[#allocation1] sm:$0xff]
      %4282 = vst [vmem:[#allocation1] ss:$9 sm:$0xff] %v4116
      %4283 = vst [vmem:[%s4150] ss:$9 sm:$0xff] %v3553
      %4284 = vst [vmem:[%s4152] ss:$9 sm:$0xff] %v4117
      %4285 = vst [vmem:[%s4154] ss:$9 sm:$0xff] %v4118
      %4286 = vst [vmem:[%s4156] ss:$9 sm:$0xff] %v4119
      %4287 = vst [vmem:[%s4158] ss:$9 sm:$0xff] %v4120
      %4288 = vst [vmem:[%s4160] ss:$9 sm:$0xff] %v4121
      %4289 = vst [vmem:[%s4162] ss:$9 sm:$0xff] %v4122
      %v4290 = vld [vmem:[#allocation1] sm:$0xff]
      %4291 = vst [vmem:[#allocation1] ss:$9 sm:$0xff] %v3554
      %4292 = vst [vmem:[%s4150] ss:$9 sm:$0xff] %v4123
      %4293 = vst [vmem:[%s4152] ss:$9 sm:$0xff] %v4124
      %4294 = vst [vmem:[%s4154] ss:$9 sm:$0xff] %v4125
      %4295 = vst [vmem:[%s4156] ss:$9 sm:$0xff] %v4126
      %4296 = vst [vmem:[%s4158] ss:$9 sm:$0xff] %v4127
      %4297 = vst [vmem:[%s4160] ss:$9 sm:$0xff] %v4128
      %4298 = vst [vmem:[%s4162] ss:$9 sm:$0xff] %v4129
      %v4299 = vld [vmem:[#allocation1] sm:$0xff]
      %4300 = vst [vmem:[#allocation1] ss:$9 sm:$0xff] %v3555
      %4301 = vst [vmem:[%s4150] ss:$9 sm:$0xff] %v4130
      %4302 = vst [vmem:[%s4152] ss:$9 sm:$0xff] %v4131
      %4303 = vst [vmem:[%s4154] ss:$9 sm:$0xff] %v4132
      %4304 = vst [vmem:[%s4156] ss:$9 sm:$0xff] %v4133
      %4305 = vst [vmem:[%s4158] ss:$9 sm:$0xff] %v4134
      %4306 = vst [vmem:[%s4160] ss:$9 sm:$0xff] %v4135
      %4307 = vst [vmem:[%s4162] ss:$9 sm:$0xff] %v3556
      %v4308 = vld [vmem:[#allocation1] sm:$0xff]
      %4309 = vst [vmem:[#allocation1] ss:$9 sm:$0xff] %v4136
      %4310 = vst [vmem:[%s4150] ss:$9 sm:$0xff] %v4137
      %4311 = vst [vmem:[%s4152] ss:$9 sm:$0xff] %v4138
      %4312 = vst [vmem:[%s4154] ss:$9 sm:$0xff] %v4139
      %4313 = vst [vmem:[%s4156] ss:$9 sm:$0xff] %v4140
      %4314 = vst [vmem:[%s4158] ss:$9 sm:$0xff] %v4141
      %4315 = vst [vmem:[%s4160] ss:$9 sm:$0xff] %v4142
      %4316 = vst [vmem:[%s4162] ss:$9 sm:$0xff] %v3557
      %v4317 = vld [vmem:[#allocation1] sm:$0xff]
      %4318 = vst [vmem:[#allocation1] ss:$9 sm:$0xff] %v4143
      %4319 = vst [vmem:[%s4150] ss:$9 sm:$0xff] %v4144
      %4320 = vst [vmem:[%s4152] ss:$9 sm:$0xff] %v4145
      %4321 = vst [vmem:[%s4154] ss:$9 sm:$0xff] %v4146
      %4322 = vst [vmem:[%s4156] ss:$9 sm:$0xff] %v4147
      %4323 = vst [vmem:[%s4158] ss:$9 sm:$0xff] %v4148
      %v4324 = vld [vmem:[#allocation1] sm:$0xff]
      %v4325 = vsel %vm1556, %v4164, 0
      %v4327 = vsel %vm1556, %v4173, 0
      %v4329 = vsel %vm1556, %v4182, 0
      %v4331 = vsel %vm1556, %v4191, 0
      %v4333 = vsel %vm1556, %v4200, 0
      %v4335 = vsel %vm1556, %v4209, 0
      %v4337 = vsel %vm1556, %v4218, 0
      %v4339 = vsel %vm1556, %v4227, 0
      %v4341 = vsel %vm1556, %v4236, 0
      %v4343 = vsel %vm1556, %v4245, 0
      %v4345 = vsel %vm1556, %v4254, 0
      %v4347 = vsel %vm1556, %v4263, 0
      %v4349 = vsel %vm1556, %v4272, 0
      %v4351 = vsel %vm1556, %v4281, 0
      %v4353 = vsel %vm1556, %v4290, 0
      %v4355 = vsel %vm1556, %v4299, 0
      %v4357 = vsel %vm1556, %v4308, 0
      %v4359 = vsel %vm1556, %v4317, 0
      %v4361 = vsel %vm1556, %v4324, 0
      %4363 = vmatpush.msra.mxu0 0.0
      %4364 = vmatpush.msra.mxu0 0.0
      %4365 = vmatpush.msra.mxu0 0.0
      %4366 = vmatpush.msra.mxu0 0.0
      %4367 = vmatpush.msra.mxu0 0.0
      %4368 = vmatpush.msra.mxu0 0.0
      %4369 = vmatpush.msra.mxu0 0.0
      %4370 = vmatpush.msra.mxu0 0.0
      %4371 = vmatpush.msra.mxu0 0.0
      %4372 = vmatpush.msra.mxu0 0.0
      %4373 = vmatpush.msra.mxu0 0.0
      %4374 = vmatpush.msra.mxu0 %v3923
      %4375 = vmatpush.msra.mxu0 %v2868
      %4376 = vmatpush.msra.mxu0 %v2867
      %4377 = vmatpush.msra.mxu0 %v2866
      %4378 = vmatpush.msra.mxu0 %v2865
      %4379 = vmatmul.f32.gmra.mxu0 %v4325
      %v4380 = vpop.f32.mrf.mxu0
      %v4381 = vadd.f32 0.0, %v4380
      %4382 = vmatmul.f32.gmra.mxu0 %v4327
      %v4383 = vpop.f32.mrf.mxu0
      %v4384 = vadd.f32 0.0, %v4383
      %4385 = vmatmul.f32.gmra.mxu0 %v4329
      %v4386 = vpop.f32.mrf.mxu0
      %v4387 = vadd.f32 0.0, %v4386
      %4388 = vmatmul.f32.gmra.mxu0 %v4331
      %v4389 = vpop.f32.mrf.mxu0
      %v4390 = vadd.f32 0.0, %v4389
      %4391 = vmatmul.f32.gmra.mxu0 %v4333
      %v4392 = vpop.f32.mrf.mxu0
      %v4393 = vadd.f32 0.0, %v4392
      %4394 = vmatmul.f32.gmra.mxu0 %v4335
      %v4395 = vpop.f32.mrf.mxu0
      %v4396 = vadd.f32 0.0, %v4395
      %4397 = vmatmul.f32.gmra.mxu0 %v4337
      %v4398 = vpop.f32.mrf.mxu0
      %v4399 = vadd.f32 0.0, %v4398
      %4400 = vmatmul.f32.gmra.mxu0 %v4339
      %v4401 = vpop.f32.mrf.mxu0
      %v4402 = vadd.f32 0.0, %v4401
      %4403 = vmatmul.f32.gmra.mxu0 %v4341
      %v4404 = vpop.f32.mrf.mxu0
      %v4405 = vadd.f32 0.0, %v4404
      %4406 = vmatmul.f32.gmra.mxu0 %v4343
      %v4407 = vpop.f32.mrf.mxu0
      %v4408 = vadd.f32 0.0, %v4407
      %4409 = vmatmul.f32.gmra.mxu0 %v4345
      %v4410 = vpop.f32.mrf.mxu0
      %v4411 = vadd.f32 0.0, %v4410
      %4412 = vmatmul.f32.gmra.mxu0 %v4347
      %v4413 = vpop.f32.mrf.mxu0
      %v4414 = vadd.f32 0.0, %v4413
      %4415 = vmatmul.f32.gmra.mxu0 %v4349
      %v4416 = vpop.f32.mrf.mxu0
      %v4417 = vadd.f32 0.0, %v4416
      %4418 = vmatmul.f32.gmra.mxu0 %v4351
      %v4419 = vpop.f32.mrf.mxu0
      %v4420 = vadd.f32 0.0, %v4419
      %4421 = vmatmul.f32.gmra.mxu0 %v4353
      %v4422 = vpop.f32.mrf.mxu0
      %v4423 = vadd.f32 0.0, %v4422
      %4424 = vmatmul.f32.gmra.mxu0 %v4355
      %v4425 = vpop.f32.mrf.mxu0
      %v4426 = vadd.f32 0.0, %v4425
      %4427 = vmatmul.f32.gmra.mxu0 %v4357
      %v4428 = vpop.f32.mrf.mxu0
      %v4429 = vadd.f32 0.0, %v4428
      %4430 = vmatmul.f32.gmra.mxu0 %v4359
      %v4431 = vpop.f32.mrf.mxu0
      %v4432 = vadd.f32 0.0, %v4431
      %4433 = vmatmul.f32.gmra.mxu0 %v4361
      %v4434 = vpop.f32.mrf.mxu0
      %v4435 = vadd.f32 0.0, %v4434
      %4436 = vdwg.mxu0
      %v4456 = vrot.slane %v3943, 1
      %v4457 = vrot.slane %v3943, 2
      %v4458 = vrot.slane %v3943, 3
      %v4459 = vrot.slane %v3943, 4
      %v4460 = vrot.slane %v3943, 5
      %v4461 = vrot.slane %v3943, 6
      %v4462 = vrot.slane %v3943, 7
      %v4463 = vrot.slane %v3946, 1
      %v4464 = vrot.slane %v3946, 2
      %v4465 = vrot.slane %v3946, 3
      %v4466 = vrot.slane %v3946, 4
      %v4467 = vrot.slane %v3946, 5
      %v4468 = vrot.slane %v3946, 6
      %v4469 = vrot.slane %v3946, 7
      %v4470 = vrot.slane %v3949, 1
      %v4471 = vrot.slane %v3949, 2
      %v4472 = vrot.slane %v3949, 3
      %v4473 = vrot.slane %v3949, 4
      %v4474 = vrot.slane %v3949, 5
      %v4475 = vrot.slane %v3949, 6
      %v4476 = vrot.slane %v3949, 7
      %v4477 = vrot.slane %v3952, 1
      %v4478 = vrot.slane %v3952, 2
      %v4479 = vrot.slane %v3952, 3
      %v4480 = vrot.slane %v3952, 4
      %v4481 = vrot.slane %v3952, 5
      %v4482 = vrot.slane %v3952, 6
      %v4483 = vrot.slane %v3952, 7
      %v4484 = vrot.slane %v3955, 1
      %v4485 = vrot.slane %v3955, 2
      %v4486 = vrot.slane %v3955, 3
      %v4487 = vrot.slane %v3955, 4
      %v4488 = vrot.slane %v3955, 5
      %v4489 = vrot.slane %v3955, 6
      %v4490 = vrot.slane %v3955, 7
      %v4491 = vrot.slane %v3958, 1
      %v4492 = vrot.slane %v3958, 2
      %v4493 = vrot.slane %v3958, 3
      %v4494 = vrot.slane %v3958, 4
      %v4495 = vrot.slane %v3958, 5
      %v4496 = vrot.slane %v3958, 6
      %v4497 = vrot.slane %v3958, 7
      %v4498 = vrot.slane %v3961, 1
      %v4499 = vrot.slane %v3961, 2
      %v4500 = vrot.slane %v3961, 3
      %v4501 = vrot.slane %v3961, 4
      %v4502 = vrot.slane %v3961, 5
      %v4503 = vrot.slane %v3961, 6
      %v4504 = vrot.slane %v3961, 7
      %v4505 = vrot.slane %v3964, 1
      %v4506 = vrot.slane %v3964, 2
      %v4507 = vrot.slane %v3964, 3
      %v4508 = vrot.slane %v3964, 4
      %v4509 = vrot.slane %v3964, 5
      %v4510 = vrot.slane %v3964, 6
      %v4511 = vrot.slane %v3964, 7
      %v4512 = vrot.slane %v3967, 1
      %v4513 = vrot.slane %v3967, 2
      %v4514 = vrot.slane %v3967, 3
      %v4515 = vrot.slane %v3967, 4
      %v4516 = vrot.slane %v3967, 5
      %v4517 = vrot.slane %v3967, 6
      %v4518 = vrot.slane %v3967, 7
      %v4519 = vrot.slane %v3970, 1
      %v4520 = vrot.slane %v3970, 2
      %v4521 = vrot.slane %v3970, 3
      %v4522 = vrot.slane %v3970, 4
      %v4523 = vrot.slane %v3970, 5
      %v4524 = vrot.slane %v3970, 6
      %v4525 = vrot.slane %v3970, 7
      %v4526 = vrot.slane %v3973, 1
      %v4527 = vrot.slane %v3973, 2
      %v4528 = vrot.slane %v3973, 3
      %v4529 = vrot.slane %v3973, 4
      %v4530 = vrot.slane %v3973, 5
      %v4531 = vrot.slane %v3973, 6
      %v4532 = vrot.slane %v3973, 7
      %v4533 = vrot.slane %v3976, 1
      %v4534 = vrot.slane %v3976, 2
      %v4535 = vrot.slane %v3976, 3
      %v4536 = vrot.slane %v3976, 4
      %v4537 = vrot.slane %v3976, 5
      %v4538 = vrot.slane %v3976, 6
      %v4539 = vrot.slane %v3976, 7
      %v4540 = vrot.slane %v3979, 1
      %v4541 = vrot.slane %v3979, 2
      %v4542 = vrot.slane %v3979, 3
      %v4543 = vrot.slane %v3979, 4
      %v4544 = vrot.slane %v3979, 5
      %v4545 = vrot.slane %v3979, 6
      %v4546 = vrot.slane %v3979, 7
      %v4547 = vrot.slane %v3982, 1
      %v4548 = vrot.slane %v3982, 2
      %v4549 = vrot.slane %v3982, 3
      %v4550 = vrot.slane %v3982, 4
      %v4551 = vrot.slane %v3982, 5
      %v4552 = vrot.slane %v3982, 6
      %v4553 = vrot.slane %v3982, 7
      %v4554 = vrot.slane %v3985, 1
      %v4555 = vrot.slane %v3985, 2
      %v4556 = vrot.slane %v3985, 3
      %v4557 = vrot.slane %v3985, 4
      %v4558 = vrot.slane %v3985, 5
      %v4559 = vrot.slane %v3985, 6
      %v4560 = vrot.slane %v3985, 7
      %v4561 = vrot.slane %v3988, 1
      %v4562 = vrot.slane %v3988, 2
      %v4563 = vrot.slane %v3988, 3
      %v4564 = vrot.slane %v3988, 4
      %v4565 = vrot.slane %v3988, 5
      %v4566 = vrot.slane %v3988, 6
      %v4567 = vrot.slane %v3988, 7
      %v4568 = vrot.slane %v3991, 1
      %v4569 = vrot.slane %v3991, 2
      %v4570 = vrot.slane %v3991, 3
      %v4571 = vrot.slane %v3991, 4
      %v4572 = vrot.slane %v3991, 5
      %v4573 = vrot.slane %v3991, 6
      %v4574 = vrot.slane %v3991, 7
      %v4575 = vrot.slane %v3994, 1
      %v4576 = vrot.slane %v3994, 2
      %v4577 = vrot.slane %v3994, 3
      %v4578 = vrot.slane %v3994, 4
      %v4579 = vrot.slane %v3994, 5
      %v4580 = vrot.slane %v3994, 6
      %v4581 = vrot.slane %v3994, 7
      %v4582 = vrot.slane %v3997, 1
      %v4583 = vrot.slane %v3997, 2
      %v4584 = vrot.slane %v3997, 3
      %v4585 = vrot.slane %v3997, 4
      %v4586 = vrot.slane %v3997, 5
      %v4606 = vrot.slane %v4381, 1
      %v4607 = vrot.slane %v4381, 2
      %v4608 = vrot.slane %v4381, 3
      %v4609 = vrot.slane %v4381, 4
      %v4610 = vrot.slane %v4381, 5
      %v4611 = vrot.slane %v4381, 6
      %v4612 = vrot.slane %v4381, 7
      %v4613 = vrot.slane %v4384, 1
      %v4614 = vrot.slane %v4384, 2
      %v4615 = vrot.slane %v4384, 3
      %v4616 = vrot.slane %v4384, 4
      %v4617 = vrot.slane %v4384, 5
      %v4618 = vrot.slane %v4384, 6
      %v4619 = vrot.slane %v4384, 7
      %v4620 = vrot.slane %v4387, 1
      %v4621 = vrot.slane %v4387, 2
      %v4622 = vrot.slane %v4387, 3
      %v4623 = vrot.slane %v4387, 4
      %v4624 = vrot.slane %v4387, 5
      %v4625 = vrot.slane %v4387, 6
      %v4626 = vrot.slane %v4387, 7
      %v4627 = vrot.slane %v4390, 1
      %v4628 = vrot.slane %v4390, 2
      %v4629 = vrot.slane %v4390, 3
      %v4630 = vrot.slane %v4390, 4
      %v4631 = vrot.slane %v4390, 5
      %v4632 = vrot.slane %v4390, 6
      %v4633 = vrot.slane %v4390, 7
      %v4634 = vrot.slane %v4393, 1
      %v4635 = vrot.slane %v4393, 2
      %v4636 = vrot.slane %v4393, 3
      %v4637 = vrot.slane %v4393, 4
      %v4638 = vrot.slane %v4393, 5
      %v4639 = vrot.slane %v4393, 6
      %v4640 = vrot.slane %v4393, 7
      %v4641 = vrot.slane %v4396, 1
      %v4642 = vrot.slane %v4396, 2
      %v4643 = vrot.slane %v4396, 3
      %v4644 = vrot.slane %v4396, 4
      %v4645 = vrot.slane %v4396, 5
      %v4646 = vrot.slane %v4396, 6
      %v4647 = vrot.slane %v4396, 7
      %v4648 = vrot.slane %v4399, 1
      %v4649 = vrot.slane %v4399, 2
      %v4650 = vrot.slane %v4399, 3
      %v4651 = vrot.slane %v4399, 4
      %v4652 = vrot.slane %v4399, 5
      %v4653 = vrot.slane %v4399, 6
      %v4654 = vrot.slane %v4399, 7
      %v4655 = vrot.slane %v4402, 1
      %v4656 = vrot.slane %v4402, 2
      %v4657 = vrot.slane %v4402, 3
      %v4658 = vrot.slane %v4402, 4
      %v4659 = vrot.slane %v4402, 5
      %v4660 = vrot.slane %v4402, 6
      %v4661 = vrot.slane %v4402, 7
      %v4662 = vrot.slane %v4405, 1
      %v4663 = vrot.slane %v4405, 2
      %v4664 = vrot.slane %v4405, 3
      %v4665 = vrot.slane %v4405, 4
      %v4666 = vrot.slane %v4405, 5
      %v4667 = vrot.slane %v4405, 6
      %v4668 = vrot.slane %v4405, 7
      %v4669 = vrot.slane %v4408, 1
      %v4670 = vrot.slane %v4408, 2
      %v4671 = vrot.slane %v4408, 3
      %v4672 = vrot.slane %v4408, 4
      %v4673 = vrot.slane %v4408, 5
      %v4674 = vrot.slane %v4408, 6
      %v4675 = vrot.slane %v4408, 7
      %v4676 = vrot.slane %v4411, 1
      %v4677 = vrot.slane %v4411, 2
      %v4678 = vrot.slane %v4411, 3
      %v4679 = vrot.slane %v4411, 4
      %v4680 = vrot.slane %v4411, 5
      %v4681 = vrot.slane %v4411, 6
      %v4682 = vrot.slane %v4411, 7
      %v4683 = vrot.slane %v4414, 1
      %v4684 = vrot.slane %v4414, 2
      %v4685 = vrot.slane %v4414, 3
      %v4686 = vrot.slane %v4414, 4
      %v4687 = vrot.slane %v4414, 5
      %v4688 = vrot.slane %v4414, 6
      %v4689 = vrot.slane %v4414, 7
      %v4690 = vrot.slane %v4417, 1
      %v4691 = vrot.slane %v4417, 2
      %v4692 = vrot.slane %v4417, 3
      %v4693 = vrot.slane %v4417, 4
      %v4694 = vrot.slane %v4417, 5
      %v4695 = vrot.slane %v4417, 6
      %v4696 = vrot.slane %v4417, 7
      %v4697 = vrot.slane %v4420, 1
      %v4698 = vrot.slane %v4420, 2
      %v4699 = vrot.slane %v4420, 3
      %v4700 = vrot.slane %v4420, 4
      %v4701 = vrot.slane %v4420, 5
      %v4702 = vrot.slane %v4420, 6
      %v4703 = vrot.slane %v4420, 7
      %v4704 = vrot.slane %v4423, 1
      %v4705 = vrot.slane %v4423, 2
      %v4706 = vrot.slane %v4423, 3
      %v4707 = vrot.slane %v4423, 4
      %v4708 = vrot.slane %v4423, 5
      %v4709 = vrot.slane %v4423, 6
      %v4710 = vrot.slane %v4423, 7
      %v4711 = vrot.slane %v4426, 1
      %v4712 = vrot.slane %v4426, 2
      %v4713 = vrot.slane %v4426, 3
      %v4714 = vrot.slane %v4426, 4
      %v4715 = vrot.slane %v4426, 5
      %v4716 = vrot.slane %v4426, 6
      %v4717 = vrot.slane %v4426, 7
      %v4718 = vrot.slane %v4429, 1
      %v4719 = vrot.slane %v4429, 2
      %v4720 = vrot.slane %v4429, 3
      %v4721 = vrot.slane %v4429, 4
      %v4722 = vrot.slane %v4429, 5
      %v4723 = vrot.slane %v4429, 6
      %v4724 = vrot.slane %v4429, 7
      %v4725 = vrot.slane %v4432, 1
      %v4726 = vrot.slane %v4432, 2
      %v4727 = vrot.slane %v4432, 3
      %v4728 = vrot.slane %v4432, 4
      %v4729 = vrot.slane %v4432, 5
      %v4730 = vrot.slane %v4432, 6
      %v4731 = vrot.slane %v4432, 7
      %v4732 = vrot.slane %v4435, 1
      %v4733 = vrot.slane %v4435, 2
      %v4734 = vrot.slane %v4435, 3
      %v4735 = vrot.slane %v4435, 4
      %v4736 = vrot.slane %v4435, 5
      %4737 = vst [vmem:[#allocation1] ss:$9 sm:$0xff] %v3943
      %s4738 = scalar_lea.vmem [#allocation1], 1
      %4739 = vst [vmem:[%s4738] ss:$9 sm:$0xff] %v4456
      %s4740 = scalar_lea.vmem [#allocation1], 2
      %4741 = vst [vmem:[%s4740] ss:$9 sm:$0xff] %v4457
      %s4742 = scalar_lea.vmem [#allocation1], 3
      %4743 = vst [vmem:[%s4742] ss:$9 sm:$0xff] %v4458
      %s4744 = scalar_lea.vmem [#allocation1], 4
      %4745 = vst [vmem:[%s4744] ss:$9 sm:$0xff] %v4459
      %s4746 = scalar_lea.vmem [#allocation1], 5
      %4747 = vst [vmem:[%s4746] ss:$9 sm:$0xff] %v4460
      %s4748 = scalar_lea.vmem [#allocation1], 6
      %4749 = vst [vmem:[%s4748] ss:$9 sm:$0xff] %v4461
      %s4750 = scalar_lea.vmem [#allocation1], 7
      %4751 = vst [vmem:[%s4750] ss:$9 sm:$0xff] %v4462
      %v4752 = vld [vmem:[#allocation1] sm:$0xff]
      %4753 = vst [vmem:[#allocation1] ss:$9 sm:$0xff] %v3946
      %4754 = vst [vmem:[%s4738] ss:$9 sm:$0xff] %v4463
      %4755 = vst [vmem:[%s4740] ss:$9 sm:$0xff] %v4464
      %4756 = vst [vmem:[%s4742] ss:$9 sm:$0xff] %v4465
      %4757 = vst [vmem:[%s4744] ss:$9 sm:$0xff] %v4466
      %4758 = vst [vmem:[%s4746] ss:$9 sm:$0xff] %v4467
      %4759 = vst [vmem:[%s4748] ss:$9 sm:$0xff] %v4468
      %v4760 = vld [vmem:[#allocation1] sm:$0xff]
      %4761 = vst [vmem:[#allocation1] ss:$9 sm:$0xff] %v4469
      %4762 = vst [vmem:[%s4738] ss:$9 sm:$0xff] %v3949
      %4763 = vst [vmem:[%s4740] ss:$9 sm:$0xff] %v4470
      %4764 = vst [vmem:[%s4742] ss:$9 sm:$0xff] %v4471
      %4765 = vst [vmem:[%s4744] ss:$9 sm:$0xff] %v4472
      %4766 = vst [vmem:[%s4746] ss:$9 sm:$0xff] %v4473
      %4767 = vst [vmem:[%s4748] ss:$9 sm:$0xff] %v4474
      %4768 = vst [vmem:[%s4750] ss:$9 sm:$0xff] %v4475
      %v4769 = vld [vmem:[#allocation1] sm:$0xff]
      %4770 = vst [vmem:[#allocation1] ss:$9 sm:$0xff] %v4476
      %4771 = vst [vmem:[%s4738] ss:$9 sm:$0xff] %v3952
      %4772 = vst [vmem:[%s4740] ss:$9 sm:$0xff] %v4477
      %4773 = vst [vmem:[%s4742] ss:$9 sm:$0xff] %v4478
      %4774 = vst [vmem:[%s4744] ss:$9 sm:$0xff] %v4479
      %4775 = vst [vmem:[%s4746] ss:$9 sm:$0xff] %v4480
      %4776 = vst [vmem:[%s4748] ss:$9 sm:$0xff] %v4481
      %v4777 = vld [vmem:[#allocation1] sm:$0xff]
      %4778 = vst [vmem:[#allocation1] ss:$9 sm:$0xff] %v4482
      %4779 = vst [vmem:[%s4738] ss:$9 sm:$0xff] %v4483
      %4780 = vst [vmem:[%s4740] ss:$9 sm:$0xff] %v3955
      %4781 = vst [vmem:[%s4742] ss:$9 sm:$0xff] %v4484
      %4782 = vst [vmem:[%s4744] ss:$9 sm:$0xff] %v4485
      %4783 = vst [vmem:[%s4746] ss:$9 sm:$0xff] %v4486
      %4784 = vst [vmem:[%s4748] ss:$9 sm:$0xff] %v4487
      %4785 = vst [vmem:[%s4750] ss:$9 sm:$0xff] %v4488
      %v4786 = vld [vmem:[#allocation1] sm:$0xff]
      %4787 = vst [vmem:[#allocation1] ss:$9 sm:$0xff] %v4489
      %4788 = vst [vmem:[%s4738] ss:$9 sm:$0xff] %v4490
      %4789 = vst [vmem:[%s4740] ss:$9 sm:$0xff] %v3958
      %4790 = vst [vmem:[%s4742] ss:$9 sm:$0xff] %v4491
      %4791 = vst [vmem:[%s4744] ss:$9 sm:$0xff] %v4492
      %4792 = vst [vmem:[%s4746] ss:$9 sm:$0xff] %v4493
      %4793 = vst [vmem:[%s4748] ss:$9 sm:$0xff] %v4494
      %v4794 = vld [vmem:[#allocation1] sm:$0xff]
      %4795 = vst [vmem:[#allocation1] ss:$9 sm:$0xff] %v4495
      %4796 = vst [vmem:[%s4738] ss:$9 sm:$0xff] %v4496
      %4797 = vst [vmem:[%s4740] ss:$9 sm:$0xff] %v4497
      %4798 = vst [vmem:[%s4742] ss:$9 sm:$0xff] %v3961
      %4799 = vst [vmem:[%s4744] ss:$9 sm:$0xff] %v4498
      %4800 = vst [vmem:[%s4746] ss:$9 sm:$0xff] %v4499
      %4801 = vst [vmem:[%s4748] ss:$9 sm:$0xff] %v4500
      %4802 = vst [vmem:[%s4750] ss:$9 sm:$0xff] %v4501
      %v4803 = vld [vmem:[#allocation1] sm:$0xff]
      %4804 = vst [vmem:[#allocation1] ss:$9 sm:$0xff] %v4502
      %4805 = vst [vmem:[%s4738] ss:$9 sm:$0xff] %v4503
      %4806 = vst [vmem:[%s4740] ss:$9 sm:$0xff] %v4504
      %4807 = vst [vmem:[%s4742] ss:$9 sm:$0xff] %v3964
      %4808 = vst [vmem:[%s4744] ss:$9 sm:$0xff] %v4505
      %4809 = vst [vmem:[%s4746] ss:$9 sm:$0xff] %v4506
      %4810 = vst [vmem:[%s4748] ss:$9 sm:$0xff] %v4507
      %v4811 = vld [vmem:[#allocation1] sm:$0xff]
      %4812 = vst [vmem:[#allocation1] ss:$9 sm:$0xff] %v4508
      %4813 = vst [vmem:[%s4738] ss:$9 sm:$0xff] %v4509
      %4814 = vst [vmem:[%s4740] ss:$9 sm:$0xff] %v4510
      %4815 = vst [vmem:[%s4742] ss:$9 sm:$0xff] %v4511
      %4816 = vst [vmem:[%s4744] ss:$9 sm:$0xff] %v3967
      %4817 = vst [vmem:[%s4746] ss:$9 sm:$0xff] %v4512
      %4818 = vst [vmem:[%s4748] ss:$9 sm:$0xff] %v4513
      %4819 = vst [vmem:[%s4750] ss:$9 sm:$0xff] %v4514
      %v4820 = vld [vmem:[#allocation1] sm:$0xff]
      %4821 = vst [vmem:[#allocation1] ss:$9 sm:$0xff] %v4515
      %4822 = vst [vmem:[%s4738] ss:$9 sm:$0xff] %v4516
      %4823 = vst [vmem:[%s4740] ss:$9 sm:$0xff] %v4517
      %4824 = vst [vmem:[%s4742] ss:$9 sm:$0xff] %v4518
      %4825 = vst [vmem:[%s4744] ss:$9 sm:$0xff] %v3970
      %4826 = vst [vmem:[%s4746] ss:$9 sm:$0xff] %v4519
      %4827 = vst [vmem:[%s4748] ss:$9 sm:$0xff] %v4520
      %v4828 = vld [vmem:[#allocation1] sm:$0xff]
      %4829 = vst [vmem:[#allocation1] ss:$9 sm:$0xff] %v4521
      %4830 = vst [vmem:[%s4738] ss:$9 sm:$0xff] %v4522
      %4831 = vst [vmem:[%s4740] ss:$9 sm:$0xff] %v4523
      %4832 = vst [vmem:[%s4742] ss:$9 sm:$0xff] %v4524
      %4833 = vst [vmem:[%s4744] ss:$9 sm:$0xff] %v4525
      %4834 = vst [vmem:[%s4746] ss:$9 sm:$0xff] %v3973
      %4835 = vst [vmem:[%s4748] ss:$9 sm:$0xff] %v4526
      %4836 = vst [vmem:[%s4750] ss:$9 sm:$0xff] %v4527
      %v4837 = vld [vmem:[#allocation1] sm:$0xff]
      %4838 = vst [vmem:[#allocation1] ss:$9 sm:$0xff] %v4528
      %4839 = vst [vmem:[%s4738] ss:$9 sm:$0xff] %v4529
      %4840 = vst [vmem:[%s4740] ss:$9 sm:$0xff] %v4530
      %4841 = vst [vmem:[%s4742] ss:$9 sm:$0xff] %v4531
      %4842 = vst [vmem:[%s4744] ss:$9 sm:$0xff] %v4532
      %4843 = vst [vmem:[%s4746] ss:$9 sm:$0xff] %v3976
      %4844 = vst [vmem:[%s4748] ss:$9 sm:$0xff] %v4533
      %v4845 = vld [vmem:[#allocation1] sm:$0xff]
      %4846 = vst [vmem:[#allocation1] ss:$9 sm:$0xff] %v4534
      %4847 = vst [vmem:[%s4738] ss:$9 sm:$0xff] %v4535
      %4848 = vst [vmem:[%s4740] ss:$9 sm:$0xff] %v4536
      %4849 = vst [vmem:[%s4742] ss:$9 sm:$0xff] %v4537
      %4850 = vst [vmem:[%s4744] ss:$9 sm:$0xff] %v4538
      %4851 = vst [vmem:[%s4746] ss:$9 sm:$0xff] %v4539
      %4852 = vst [vmem:[%s4748] ss:$9 sm:$0xff] %v3979
      %4853 = vst [vmem:[%s4750] ss:$9 sm:$0xff] %v4540
      %v4854 = vld [vmem:[#allocation1] sm:$0xff]
      %4855 = vst [vmem:[#allocation1] ss:$9 sm:$0xff] %v4541
      %4856 = vst [vmem:[%s4738] ss:$9 sm:$0xff] %v4542
      %4857 = vst [vmem:[%s4740] ss:$9 sm:$0xff] %v4543
      %4858 = vst [vmem:[%s4742] ss:$9 sm:$0xff] %v4544
      %4859 = vst [vmem:[%s4744] ss:$9 sm:$0xff] %v4545
      %4860 = vst [vmem:[%s4746] ss:$9 sm:$0xff] %v4546
      %4861 = vst [vmem:[%s4748] ss:$9 sm:$0xff] %v3982
      %v4862 = vld [vmem:[#allocation1] sm:$0xff]
      %4863 = vst [vmem:[#allocation1] ss:$9 sm:$0xff] %v4547
      %4864 = vst [vmem:[%s4738] ss:$9 sm:$0xff] %v4548
      %4865 = vst [vmem:[%s4740] ss:$9 sm:$0xff] %v4549
      %4866 = vst [vmem:[%s4742] ss:$9 sm:$0xff] %v4550
      %4867 = vst [vmem:[%s4744] ss:$9 sm:$0xff] %v4551
      %4868 = vst [vmem:[%s4746] ss:$9 sm:$0xff] %v4552
      %4869 = vst [vmem:[%s4748] ss:$9 sm:$0xff] %v4553
      %4870 = vst [vmem:[%s4750] ss:$9 sm:$0xff] %v3985
      %v4871 = vld [vmem:[#allocation1] sm:$0xff]
      %4872 = vst [vmem:[#allocation1] ss:$9 sm:$0xff] %v4554
      %4873 = vst [vmem:[%s4738] ss:$9 sm:$0xff] %v4555
      %4874 = vst [vmem:[%s4740] ss:$9 sm:$0xff] %v4556
      %4875 = vst [vmem:[%s4742] ss:$9 sm:$0xff] %v4557
      %4876 = vst [vmem:[%s4744] ss:$9 sm:$0xff] %v4558
      %4877 = vst [vmem:[%s4746] ss:$9 sm:$0xff] %v4559
      %4878 = vst [vmem:[%s4748] ss:$9 sm:$0xff] %v4560
      %v4879 = vld [vmem:[#allocation1] sm:$0xff]
      %4880 = vst [vmem:[#allocation1] ss:$9 sm:$0xff] %v3988
      %4881 = vst [vmem:[%s4738] ss:$9 sm:$0xff] %v4561
      %4882 = vst [vmem:[%s4740] ss:$9 sm:$0xff] %v4562
      %4883 = vst [vmem:[%s4742] ss:$9 sm:$0xff] %v4563
      %4884 = vst [vmem:[%s4744] ss:$9 sm:$0xff] %v4564
      %4885 = vst [vmem:[%s4746] ss:$9 sm:$0xff] %v4565
      %4886 = vst [vmem:[%s4748] ss:$9 sm:$0xff] %v4566
      %4887 = vst [vmem:[%s4750] ss:$9 sm:$0xff] %v4567
      %v4888 = vld [vmem:[#allocation1] sm:$0xff]
      %4889 = vst [vmem:[#allocation1] ss:$9 sm:$0xff] %v3991
      %4890 = vst [vmem:[%s4738] ss:$9 sm:$0xff] %v4568
      %4891 = vst [vmem:[%s4740] ss:$9 sm:$0xff] %v4569
      %4892 = vst [vmem:[%s4742] ss:$9 sm:$0xff] %v4570
      %4893 = vst [vmem:[%s4744] ss:$9 sm:$0xff] %v4571
      %4894 = vst [vmem:[%s4746] ss:$9 sm:$0xff] %v4572
      %4895 = vst [vmem:[%s4748] ss:$9 sm:$0xff] %v4573
      %v4896 = vld [vmem:[#allocation1] sm:$0xff]
      %4897 = vst [vmem:[#allocation1] ss:$9 sm:$0xff] %v4574
      %4898 = vst [vmem:[%s4738] ss:$9 sm:$0xff] %v3994
      %4899 = vst [vmem:[%s4740] ss:$9 sm:$0xff] %v4575
      %4900 = vst [vmem:[%s4742] ss:$9 sm:$0xff] %v4576
      %4901 = vst [vmem:[%s4744] ss:$9 sm:$0xff] %v4577
      %4902 = vst [vmem:[%s4746] ss:$9 sm:$0xff] %v4578
      %4903 = vst [vmem:[%s4748] ss:$9 sm:$0xff] %v4579
      %4904 = vst [vmem:[%s4750] ss:$9 sm:$0xff] %v4580
      %v4905 = vld [vmem:[#allocation1] sm:$0xff]
      %4906 = vst [vmem:[#allocation1] ss:$9 sm:$0xff] %v4581
      %4907 = vst [vmem:[%s4738] ss:$9 sm:$0xff] %v3997
      %4908 = vst [vmem:[%s4740] ss:$9 sm:$0xff] %v4582
      %4909 = vst [vmem:[%s4742] ss:$9 sm:$0xff] %v4583
      %4910 = vst [vmem:[%s4744] ss:$9 sm:$0xff] %v4584
      %4911 = vst [vmem:[%s4746] ss:$9 sm:$0xff] %v4585
      %4912 = vst [vmem:[%s4748] ss:$9 sm:$0xff] %v4586
      %v4913 = vld [vmem:[#allocation1] sm:$0xff]
      %4934 = vst [vmem:[#allocation1] ss:$9 sm:$0xff] %v4381
      %s4935 = scalar_lea.vmem [#allocation1], 1
      %4936 = vst [vmem:[%s4935] ss:$9 sm:$0xff] %v4606
      %s4937 = scalar_lea.vmem [#allocation1], 2
      %4938 = vst [vmem:[%s4937] ss:$9 sm:$0xff] %v4607
      %s4939 = scalar_lea.vmem [#allocation1], 3
      %4940 = vst [vmem:[%s4939] ss:$9 sm:$0xff] %v4608
      %s4941 = scalar_lea.vmem [#allocation1], 4
      %4942 = vst [vmem:[%s4941] ss:$9 sm:$0xff] %v4609
      %s4943 = scalar_lea.vmem [#allocation1], 5
      %4944 = vst [vmem:[%s4943] ss:$9 sm:$0xff] %v4610
      %s4945 = scalar_lea.vmem [#allocation1], 6
      %4946 = vst [vmem:[%s4945] ss:$9 sm:$0xff] %v4611
      %s4947 = scalar_lea.vmem [#allocation1], 7
      %4948 = vst [vmem:[%s4947] ss:$9 sm:$0xff] %v4612
      %v4949 = vld [vmem:[#allocation1] sm:$0xff]
      %4950 = vst [vmem:[#allocation1] ss:$9 sm:$0xff] %v4384
      %4951 = vst [vmem:[%s4935] ss:$9 sm:$0xff] %v4613
      %4952 = vst [vmem:[%s4937] ss:$9 sm:$0xff] %v4614
      %4953 = vst [vmem:[%s4939] ss:$9 sm:$0xff] %v4615
      %4954 = vst [vmem:[%s4941] ss:$9 sm:$0xff] %v4616
      %4955 = vst [vmem:[%s4943] ss:$9 sm:$0xff] %v4617
      %4956 = vst [vmem:[%s4945] ss:$9 sm:$0xff] %v4618
      %v4957 = vld [vmem:[#allocation1] sm:$0xff]
      %4958 = vst [vmem:[#allocation1] ss:$9 sm:$0xff] %v4619
      %4959 = vst [vmem:[%s4935] ss:$9 sm:$0xff] %v4387
      %4960 = vst [vmem:[%s4937] ss:$9 sm:$0xff] %v4620
      %4961 = vst [vmem:[%s4939] ss:$9 sm:$0xff] %v4621
      %4962 = vst [vmem:[%s4941] ss:$9 sm:$0xff] %v4622
      %4963 = vst [vmem:[%s4943] ss:$9 sm:$0xff] %v4623
      %4964 = vst [vmem:[%s4945] ss:$9 sm:$0xff] %v4624
      %4965 = vst [vmem:[%s4947] ss:$9 sm:$0xff] %v4625
      %v4966 = vld [vmem:[#allocation1] sm:$0xff]
      %4967 = vst [vmem:[#allocation1] ss:$9 sm:$0xff] %v4626
      %4968 = vst [vmem:[%s4935] ss:$9 sm:$0xff] %v4390
      %4969 = vst [vmem:[%s4937] ss:$9 sm:$0xff] %v4627
      %4970 = vst [vmem:[%s4939] ss:$9 sm:$0xff] %v4628
      %4971 = vst [vmem:[%s4941] ss:$9 sm:$0xff] %v4629
      %4972 = vst [vmem:[%s4943] ss:$9 sm:$0xff] %v4630
      %4973 = vst [vmem:[%s4945] ss:$9 sm:$0xff] %v4631
      %v4974 = vld [vmem:[#allocation1] sm:$0xff]
      %4975 = vst [vmem:[#allocation1] ss:$9 sm:$0xff] %v4632
      %4976 = vst [vmem:[%s4935] ss:$9 sm:$0xff] %v4633
      %4977 = vst [vmem:[%s4937] ss:$9 sm:$0xff] %v4393
      %4978 = vst [vmem:[%s4939] ss:$9 sm:$0xff] %v4634
      %4979 = vst [vmem:[%s4941] ss:$9 sm:$0xff] %v4635
      %4980 = vst [vmem:[%s4943] ss:$9 sm:$0xff] %v4636
      %4981 = vst [vmem:[%s4945] ss:$9 sm:$0xff] %v4637
      %4982 = vst [vmem:[%s4947] ss:$9 sm:$0xff] %v4638
      %v4983 = vld [vmem:[#allocation1] sm:$0xff]
      %4984 = vst [vmem:[#allocation1] ss:$9 sm:$0xff] %v4639
      %4985 = vst [vmem:[%s4935] ss:$9 sm:$0xff] %v4640
      %4986 = vst [vmem:[%s4937] ss:$9 sm:$0xff] %v4396
      %4987 = vst [vmem:[%s4939] ss:$9 sm:$0xff] %v4641
      %4988 = vst [vmem:[%s4941] ss:$9 sm:$0xff] %v4642
      %4989 = vst [vmem:[%s4943] ss:$9 sm:$0xff] %v4643
      %4990 = vst [vmem:[%s4945] ss:$9 sm:$0xff] %v4644
      %v4991 = vld [vmem:[#allocation1] sm:$0xff]
      %4992 = vst [vmem:[#allocation1] ss:$9 sm:$0xff] %v4645
      %4993 = vst [vmem:[%s4935] ss:$9 sm:$0xff] %v4646
      %4994 = vst [vmem:[%s4937] ss:$9 sm:$0xff] %v4647
      %4995 = vst [vmem:[%s4939] ss:$9 sm:$0xff] %v4399
      %4996 = vst [vmem:[%s4941] ss:$9 sm:$0xff] %v4648
      %4997 = vst [vmem:[%s4943] ss:$9 sm:$0xff] %v4649
      %4998 = vst [vmem:[%s4945] ss:$9 sm:$0xff] %v4650
      %4999 = vst [vmem:[%s4947] ss:$9 sm:$0xff] %v4651
      %v5000 = vld [vmem:[#allocation1] sm:$0xff]
      %5001 = vst [vmem:[#allocation1] ss:$9 sm:$0xff] %v4652
      %5002 = vst [vmem:[%s4935] ss:$9 sm:$0xff] %v4653
      %5003 = vst [vmem:[%s4937] ss:$9 sm:$0xff] %v4654
      %5004 = vst [vmem:[%s4939] ss:$9 sm:$0xff] %v4402
      %5005 = vst [vmem:[%s4941] ss:$9 sm:$0xff] %v4655
      %5006 = vst [vmem:[%s4943] ss:$9 sm:$0xff] %v4656
      %5007 = vst [vmem:[%s4945] ss:$9 sm:$0xff] %v4657
      %v5008 = vld [vmem:[#allocation1] sm:$0xff]
      %5009 = vst [vmem:[#allocation1] ss:$9 sm:$0xff] %v4658
      %5010 = vst [vmem:[%s4935] ss:$9 sm:$0xff] %v4659
      %5011 = vst [vmem:[%s4937] ss:$9 sm:$0xff] %v4660
      %5012 = vst [vmem:[%s4939] ss:$9 sm:$0xff] %v4661
      %5013 = vst [vmem:[%s4941] ss:$9 sm:$0xff] %v4405
      %5014 = vst [vmem:[%s4943] ss:$9 sm:$0xff] %v4662
      %5015 = vst [vmem:[%s4945] ss:$9 sm:$0xff] %v4663
      %5016 = vst [vmem:[%s4947] ss:$9 sm:$0xff] %v4664
      %v5017 = vld [vmem:[#allocation1] sm:$0xff]
      %5018 = vst [vmem:[#allocation1] ss:$9 sm:$0xff] %v4665
      %5019 = vst [vmem:[%s4935] ss:$9 sm:$0xff] %v4666
      %5020 = vst [vmem:[%s4937] ss:$9 sm:$0xff] %v4667
      %5021 = vst [vmem:[%s4939] ss:$9 sm:$0xff] %v4668
      %5022 = vst [vmem:[%s4941] ss:$9 sm:$0xff] %v4408
      %5023 = vst [vmem:[%s4943] ss:$9 sm:$0xff] %v4669
      %5024 = vst [vmem:[%s4945] ss:$9 sm:$0xff] %v4670
      %v5025 = vld [vmem:[#allocation1] sm:$0xff]
      %5026 = vst [vmem:[#allocation1] ss:$9 sm:$0xff] %v4671
      %5027 = vst [vmem:[%s4935] ss:$9 sm:$0xff] %v4672
      %5028 = vst [vmem:[%s4937] ss:$9 sm:$0xff] %v4673
      %5029 = vst [vmem:[%s4939] ss:$9 sm:$0xff] %v4674
      %5030 = vst [vmem:[%s4941] ss:$9 sm:$0xff] %v4675
      %5031 = vst [vmem:[%s4943] ss:$9 sm:$0xff] %v4411
      %5032 = vst [vmem:[%s4945] ss:$9 sm:$0xff] %v4676
      %5033 = vst [vmem:[%s4947] ss:$9 sm:$0xff] %v4677
      %v5034 = vld [vmem:[#allocation1] sm:$0xff]
      %5035 = vst [vmem:[#allocation1] ss:$9 sm:$0xff] %v4678
      %5036 = vst [vmem:[%s4935] ss:$9 sm:$0xff] %v4679
      %5037 = vst [vmem:[%s4937] ss:$9 sm:$0xff] %v4680
      %5038 = vst [vmem:[%s4939] ss:$9 sm:$0xff] %v4681
      %5039 = vst [vmem:[%s4941] ss:$9 sm:$0xff] %v4682
      %5040 = vst [vmem:[%s4943] ss:$9 sm:$0xff] %v4414
      %5041 = vst [vmem:[%s4945] ss:$9 sm:$0xff] %v4683
      %v5042 = vld [vmem:[#allocation1] sm:$0xff]
      %5043 = vst [vmem:[#allocation1] ss:$9 sm:$0xff] %v4684
      %5044 = vst [vmem:[%s4935] ss:$9 sm:$0xff] %v4685
      %5045 = vst [vmem:[%s4937] ss:$9 sm:$0xff] %v4686
      %5046 = vst [vmem:[%s4939] ss:$9 sm:$0xff] %v4687
      %5047 = vst [vmem:[%s4941] ss:$9 sm:$0xff] %v4688
      %5048 = vst [vmem:[%s4943] ss:$9 sm:$0xff] %v4689
      %5049 = vst [vmem:[%s4945] ss:$9 sm:$0xff] %v4417
      %5050 = vst [vmem:[%s4947] ss:$9 sm:$0xff] %v4690
      %v5051 = vld [vmem:[#allocation1] sm:$0xff]
      %5052 = vst [vmem:[#allocation1] ss:$9 sm:$0xff] %v4691
      %5053 = vst [vmem:[%s4935] ss:$9 sm:$0xff] %v4692
      %5054 = vst [vmem:[%s4937] ss:$9 sm:$0xff] %v4693
      %5055 = vst [vmem:[%s4939] ss:$9 sm:$0xff] %v4694
      %5056 = vst [vmem:[%s4941] ss:$9 sm:$0xff] %v4695
      %5057 = vst [vmem:[%s4943] ss:$9 sm:$0xff] %v4696
      %5058 = vst [vmem:[%s4945] ss:$9 sm:$0xff] %v4420
      %v5059 = vld [vmem:[#allocation1] sm:$0xff]
      %5060 = vst [vmem:[#allocation1] ss:$9 sm:$0xff] %v4697
      %5061 = vst [vmem:[%s4935] ss:$9 sm:$0xff] %v4698
      %5062 = vst [vmem:[%s4937] ss:$9 sm:$0xff] %v4699
      %5063 = vst [vmem:[%s4939] ss:$9 sm:$0xff] %v4700
      %5064 = vst [vmem:[%s4941] ss:$9 sm:$0xff] %v4701
      %5065 = vst [vmem:[%s4943] ss:$9 sm:$0xff] %v4702
      %5066 = vst [vmem:[%s4945] ss:$9 sm:$0xff] %v4703
      %5067 = vst [vmem:[%s4947] ss:$9 sm:$0xff] %v4423
      %v5068 = vld [vmem:[#allocation1] sm:$0xff]
      %5069 = vst [vmem:[#allocation1] ss:$9 sm:$0xff] %v4704
      %5070 = vst [vmem:[%s4935] ss:$9 sm:$0xff] %v4705
      %5071 = vst [vmem:[%s4937] ss:$9 sm:$0xff] %v4706
      %5072 = vst [vmem:[%s4939] ss:$9 sm:$0xff] %v4707
      %5073 = vst [vmem:[%s4941] ss:$9 sm:$0xff] %v4708
      %5074 = vst [vmem:[%s4943] ss:$9 sm:$0xff] %v4709
      %5075 = vst [vmem:[%s4945] ss:$9 sm:$0xff] %v4710
      %v5076 = vld [vmem:[#allocation1] sm:$0xff]
      %5077 = vst [vmem:[#allocation1] ss:$9 sm:$0xff] %v4426
      %5078 = vst [vmem:[%s4935] ss:$9 sm:$0xff] %v4711
      %5079 = vst [vmem:[%s4937] ss:$9 sm:$0xff] %v4712
      %5080 = vst [vmem:[%s4939] ss:$9 sm:$0xff] %v4713
      %5081 = vst [vmem:[%s4941] ss:$9 sm:$0xff] %v4714
      %5082 = vst [vmem:[%s4943] ss:$9 sm:$0xff] %v4715
      %5083 = vst [vmem:[%s4945] ss:$9 sm:$0xff] %v4716
      %5084 = vst [vmem:[%s4947] ss:$9 sm:$0xff] %v4717
      %v5085 = vld [vmem:[#allocation1] sm:$0xff]
      %5086 = vst [vmem:[#allocation1] ss:$9 sm:$0xff] %v4429
      %5087 = vst [vmem:[%s4935] ss:$9 sm:$0xff] %v4718
      %5088 = vst [vmem:[%s4937] ss:$9 sm:$0xff] %v4719
      %5089 = vst [vmem:[%s4939] ss:$9 sm:$0xff] %v4720
      %5090 = vst [vmem:[%s4941] ss:$9 sm:$0xff] %v4721
      %5091 = vst [vmem:[%s4943] ss:$9 sm:$0xff] %v4722
      %5092 = vst [vmem:[%s4945] ss:$9 sm:$0xff] %v4723
      %v5093 = vld [vmem:[#allocation1] sm:$0xff]
      %5094 = vst [vmem:[#allocation1] ss:$9 sm:$0xff] %v4724
      %5095 = vst [vmem:[%s4935] ss:$9 sm:$0xff] %v4432
      %5096 = vst [vmem:[%s4937] ss:$9 sm:$0xff] %v4725
      %5097 = vst [vmem:[%s4939] ss:$9 sm:$0xff] %v4726
      %5098 = vst [vmem:[%s4941] ss:$9 sm:$0xff] %v4727
      %5099 = vst [vmem:[%s4943] ss:$9 sm:$0xff] %v4728
      %5100 = vst [vmem:[%s4945] ss:$9 sm:$0xff] %v4729
      %5101 = vst [vmem:[%s4947] ss:$9 sm:$0xff] %v4730
      %v5102 = vld [vmem:[#allocation1] sm:$0xff]
      %5103 = vst [vmem:[#allocation1] ss:$9 sm:$0xff] %v4731
      %5104 = vst [vmem:[%s4935] ss:$9 sm:$0xff] %v4435
      %5105 = vst [vmem:[%s4937] ss:$9 sm:$0xff] %v4732
      %5106 = vst [vmem:[%s4939] ss:$9 sm:$0xff] %v4733
      %5107 = vst [vmem:[%s4941] ss:$9 sm:$0xff] %v4734
      %5108 = vst [vmem:[%s4943] ss:$9 sm:$0xff] %v4735
      %5109 = vst [vmem:[%s4945] ss:$9 sm:$0xff] %v4736
      %v5110 = vld [vmem:[#allocation1] sm:$0xff]
      %5111 = vrot.lane.b32.xlu0 %v4949, 4
      %v5112 = vpop.permute.xlu0 %5111
      %5113 = vrot.lane.b32.xlu0 %v4957, 4
      %v5114 = vpop.permute.xlu0 %5113
      %5115 = vrot.lane.b32.xlu0 %v4966, 4
      %v5116 = vpop.permute.xlu0 %5115
      %5117 = vrot.lane.b32.xlu0 %v4974, 4
      %v5118 = vpop.permute.xlu0 %5117
      %5119 = vrot.lane.b32.xlu0 %v4983, 4
      %v5120 = vpop.permute.xlu0 %5119
      %5121 = vrot.lane.b32.xlu0 %v4991, 4
      %v5122 = vpop.permute.xlu0 %5121
      %5123 = vrot.lane.b32.xlu0 %v5000, 4
      %v5124 = vpop.permute.xlu0 %5123
      %5125 = vrot.lane.b32.xlu0 %v5008, 4
      %v5126 = vpop.permute.xlu0 %5125
      %5127 = vrot.lane.b32.xlu0 %v5017, 4
      %v5128 = vpop.permute.xlu0 %5127
      %5129 = vrot.lane.b32.xlu0 %v5025, 4
      %v5130 = vpop.permute.xlu0 %5129
      %5131 = vrot.lane.b32.xlu0 %v5034, 4
      %v5132 = vpop.permute.xlu0 %5131
      %5133 = vrot.lane.b32.xlu0 %v5042, 4
      %v5134 = vpop.permute.xlu0 %5133
      %5135 = vrot.lane.b32.xlu0 %v5051, 4
      %v5136 = vpop.permute.xlu0 %5135
      %5137 = vrot.lane.b32.xlu0 %v5059, 4
      %v5138 = vpop.permute.xlu0 %5137
      %5139 = vrot.lane.b32.xlu0 %v5068, 4
      %v5140 = vpop.permute.xlu0 %5139
      %5141 = vrot.lane.b32.xlu0 %v5076, 4
      %v5142 = vpop.permute.xlu0 %5141
      %5143 = vrot.lane.b32.xlu0 %v5085, 4
      %v5144 = vpop.permute.xlu0 %5143
      %5145 = vrot.lane.b32.xlu0 %v5093, 4
      %v5146 = vpop.permute.xlu0 %5145
      %5147 = vrot.lane.b32.xlu0 %v5102, 4
      %v5148 = vpop.permute.xlu0 %5147
      %5149 = vrot.lane.b32.xlu0 %v5110, 4
      %v5150 = vpop.permute.xlu0 %5149
      %v5171 = vsel %vm839, %v4752, %v5112
      %v5172 = vsel %vm839, %v4760, %v5114
      %v5173 = vsel %vm839, %v4769, %v5116
      %v5174 = vsel %vm839, %v4777, %v5118
      %v5175 = vsel %vm839, %v4786, %v5120
      %v5176 = vsel %vm839, %v4794, %v5122
      %v5177 = vsel %vm839, %v4803, %v5124
      %v5178 = vsel %vm839, %v4811, %v5126
      %v5179 = vsel %vm839, %v4820, %v5128
      %v5180 = vsel %vm839, %v4828, %v5130
      %v5181 = vsel %vm839, %v4837, %v5132
      %v5182 = vsel %vm839, %v4845, %v5134
      %v5183 = vsel %vm839, %v4854, %v5136
      %v5184 = vsel %vm839, %v4862, %v5138
      %v5185 = vsel %vm839, %v4871, %v5140
      %v5186 = vsel %vm839, %v4879, %v5142
      %v5187 = vsel %vm839, %v4888, %v5144
      %v5188 = vsel %vm839, %v4896, %v5146
      %v5189 = vsel %vm839, %v4905, %v5148
      %v5190 = vsel %vm839, %v4913, %v5150
      %v5191 = vadd.f32 %v2845, %v5171
      %v5192 = vadd.f32 %v2846, %v5172
      %v5193 = vadd.f32 %v2847, %v5173
      %v5194 = vadd.f32 %v2848, %v5174
      %v5195 = vadd.f32 %v2849, %v5175
      %v5196 = vadd.f32 %v2850, %v5176
      %v5197 = vadd.f32 %v2851, %v5177
      %v5198 = vadd.f32 %v2852, %v5178
      %v5199 = vadd.f32 %v2853, %v5179
      %v5200 = vadd.f32 %v2854, %v5180
      %v5201 = vadd.f32 %v2855, %v5181
      %v5202 = vadd.f32 %v2856, %v5182
      %v5203 = vadd.f32 %v2857, %v5183
      %v5204 = vadd.f32 %v2858, %v5184
      %v5205 = vadd.f32 %v2859, %v5185
      %v5206 = vadd.f32 %v2860, %v5186
      %v5207 = vadd.f32 %v2861, %v5187
      %v5208 = vadd.f32 %v2862, %v5188
      %v5209 = vadd.f32 %v2863, %v5189
      %v5210 = vadd.f32 %v2864, %v5190
      %v5211 = vld [vmem:[%s5] sm:$0x1]
      %v5213 = vperm.slane %v5211, 0
      %v5215 = vadd.f32 %v5191, %v5213
      %v5216 = vadd.f32 %v5192, %v5213
      %v5217 = vadd.f32 %v5193, %v5213
      %v5218 = vadd.f32 %v5194, %v5213
      %v5219 = vadd.f32 %v5195, %v5213
      %v5220 = vadd.f32 %v5196, %v5213
      %v5221 = vadd.f32 %v5197, %v5213
      %v5222 = vadd.f32 %v5198, %v5213
      %v5223 = vadd.f32 %v5199, %v5213
      %v5224 = vadd.f32 %v5200, %v5213
      %v5225 = vadd.f32 %v5201, %v5213
      %v5226 = vadd.f32 %v5202, %v5213
      %v5227 = vadd.f32 %v5203, %v5213
      %v5228 = vadd.f32 %v5204, %v5213
      %v5229 = vadd.f32 %v5205, %v5213
      %v5230 = vadd.f32 %v5206, %v5213
      %v5231 = vadd.f32 %v5207, %v5213
      %v5232 = vadd.f32 %v5208, %v5213
      %v5233 = vadd.f32 %v5209, %v5213
      %v5234 = vadd.f32 %v5210, %v5213
      %v5235 = vmax.f32 %v5215, 0.0
      %v5236 = vmax.f32 %v5216, 0.0
      %v5237 = vmax.f32 %v5217, 0.0
      %v5238 = vmax.f32 %v5218, 0.0
      %v5239 = vmax.f32 %v5219, 0.0
      %v5240 = vmax.f32 %v5220, 0.0
      %v5241 = vmax.f32 %v5221, 0.0
      %v5242 = vmax.f32 %v5222, 0.0
      %v5243 = vmax.f32 %v5223, 0.0
      %v5244 = vmax.f32 %v5224, 0.0
      %v5245 = vmax.f32 %v5225, 0.0
      %v5246 = vmax.f32 %v5226, 0.0
      %v5247 = vmax.f32 %v5227, 0.0
      %v5248 = vmax.f32 %v5228, 0.0
      %v5249 = vmax.f32 %v5229, 0.0
      %v5250 = vmax.f32 %v5230, 0.0
      %v5251 = vmax.f32 %v5231, 0.0
      %v5252 = vmax.f32 %v5232, 0.0
      %v5253 = vmax.f32 %v5233, 0.0
      %v5254 = vmax.f32 %v5234, 0.0
      %5255 = vst.msk [vmem:[%s335] sm:$0xff] %vm362, %v5235
      %vm5256 = vcmask 63488
      %5257 = vst.msk [vmem:[%s335 + $0x8] sm:$0x7f] %vm5256, %v5236
      %5258 = vst.msk [vmem:[%s335 + $0x10] sm:$0xff] %vm362, %v5237
      %5259 = vst.msk [vmem:[%s335 + $0x18] sm:$0x7f] %vm5256, %v5238
      %5260 = vst.msk [vmem:[%s335 + $0x20] sm:$0xff] %vm362, %v5239
      %5261 = vst.msk [vmem:[%s335 + $0x28] sm:$0x7f] %vm5256, %v5240
      %5262 = vst.msk [vmem:[%s335 + $0x30] sm:$0xff] %vm362, %v5241
      %5263 = vst.msk [vmem:[%s335 + $0x38] sm:$0x7f] %vm5256, %v5242
      %5264 = vst.msk [vmem:[%s335 + $0x40] sm:$0xff] %vm362, %v5243
      %5265 = vst.msk [vmem:[%s335 + $0x48] sm:$0x7f] %vm5256, %v5244
      %5266 = vst.msk [vmem:[%s335 + $0x50] sm:$0xff] %vm362, %v5245
      %5267 = vst.msk [vmem:[%s335 + $0x58] sm:$0x7f] %vm5256, %v5246
      %5268 = vst.msk [vmem:[%s335 + $0x60] sm:$0xff] %vm362, %v5247
      %5269 = vst.msk [vmem:[%s335 + $0x68] sm:$0x7f] %vm5256, %v5248
      %5270 = vst.msk [vmem:[%s335 + $0x70] sm:$0xff] %vm362, %v5249
      %5271 = vst.msk [vmem:[%s335 + $0x78] sm:$0x7f] %vm5256, %v5250
      %5272 = vst.msk [vmem:[%s335 + $0x80] sm:$0xff] %vm362, %v5251
      %5273 = vst.msk [vmem:[%s335 + $0x88] sm:$0x7f] %vm5256, %v5252
      %5274 = vst.msk [vmem:[%s335 + $0x90] sm:$0xff] %vm362, %v5253
      %5275 = vst.msk [vmem:[%s335 + $0x98] sm:$0x7f] %vm5256, %v5254
      %v5296 = vrot.slane %v5235, 1
      %v5297 = vrot.slane %v5235, 2
      %v5298 = vrot.slane %v5235, 3
      %v5299 = vrot.slane %v5235, 4
      %v5300 = vrot.slane %v5235, 5
      %v5301 = vrot.slane %v5235, 6
      %v5302 = vrot.slane %v5235, 7
      %v5303 = vrot.slane %v5236, 1
      %v5304 = vrot.slane %v5236, 2
      %v5305 = vrot.slane %v5236, 3
      %v5306 = vrot.slane %v5236, 4
      %v5307 = vrot.slane %v5236, 5
      %v5308 = vrot.slane %v5236, 6
      %v5309 = vrot.slane %v5237, 1
      %v5310 = vrot.slane %v5237, 2
      %v5311 = vrot.slane %v5237, 3
      %v5312 = vrot.slane %v5237, 4
      %v5313 = vrot.slane %v5237, 5
      %v5314 = vrot.slane %v5237, 6
      %v5315 = vrot.slane %v5237, 7
      %v5316 = vrot.slane %v5238, 1
      %v5317 = vrot.slane %v5238, 2
      %v5318 = vrot.slane %v5238, 3
      %v5319 = vrot.slane %v5238, 4
      %v5320 = vrot.slane %v5238, 5
      %v5321 = vrot.slane %v5238, 6
      %v5322 = vrot.slane %v5239, 1
      %v5323 = vrot.slane %v5239, 2
      %v5324 = vrot.slane %v5239, 3
      %v5325 = vrot.slane %v5239, 4
      %v5326 = vrot.slane %v5239, 5
      %v5327 = vrot.slane %v5239, 6
      %v5328 = vrot.slane %v5239, 7
      %v5329 = vrot.slane %v5240, 1
      %v5330 = vrot.slane %v5240, 2
      %v5331 = vrot.slane %v5240, 3
      %v5332 = vrot.slane %v5240, 4
      %v5333 = vrot.slane %v5240, 5
      %v5334 = vrot.slane %v5240, 6
      %v5335 = vrot.slane %v5241, 1
      %v5336 = vrot.slane %v5241, 2
      %v5337 = vrot.slane %v5241, 3
      %v5338 = vrot.slane %v5241, 4
      %v5339 = vrot.slane %v5241, 5
      %v5340 = vrot.slane %v5241, 6
      %v5341 = vrot.slane %v5241, 7
      %v5342 = vrot.slane %v5242, 1
      %v5343 = vrot.slane %v5242, 2
      %v5344 = vrot.slane %v5242, 3
      %v5345 = vrot.slane %v5242, 4
      %v5346 = vrot.slane %v5242, 5
      %v5347 = vrot.slane %v5242, 6
      %v5348 = vrot.slane %v5243, 1
      %v5349 = vrot.slane %v5243, 2
      %v5350 = vrot.slane %v5243, 3
      %v5351 = vrot.slane %v5243, 4
      %v5352 = vrot.slane %v5243, 5
      %v5353 = vrot.slane %v5243, 6
      %v5354 = vrot.slane %v5243, 7
      %v5355 = vrot.slane %v5244, 1
      %v5356 = vrot.slane %v5244, 2
      %v5357 = vrot.slane %v5244, 3
      %v5358 = vrot.slane %v5244, 4
      %v5359 = vrot.slane %v5244, 5
      %v5360 = vrot.slane %v5244, 6
      %v5361 = vrot.slane %v5245, 1
      %v5362 = vrot.slane %v5245, 2
      %v5363 = vrot.slane %v5245, 3
      %v5364 = vrot.slane %v5245, 4
      %v5365 = vrot.slane %v5245, 5
      %v5366 = vrot.slane %v5245, 6
      %v5367 = vrot.slane %v5245, 7
      %v5368 = vrot.slane %v5246, 1
      %v5369 = vrot.slane %v5246, 2
      %v5370 = vrot.slane %v5246, 3
      %v5371 = vrot.slane %v5246, 4
      %v5372 = vrot.slane %v5246, 5
      %v5373 = vrot.slane %v5246, 6
      %v5374 = vrot.slane %v5247, 1
      %v5375 = vrot.slane %v5247, 2
      %v5376 = vrot.slane %v5247, 3
      %v5377 = vrot.slane %v5247, 4
      %v5378 = vrot.slane %v5247, 5
      %v5379 = vrot.slane %v5247, 6
      %v5380 = vrot.slane %v5247, 7
      %v5381 = vrot.slane %v5248, 1
      %v5382 = vrot.slane %v5248, 2
      %v5383 = vrot.slane %v5248, 3
      %v5384 = vrot.slane %v5248, 4
      %v5385 = vrot.slane %v5248, 5
      %v5386 = vrot.slane %v5248, 6
      %v5387 = vrot.slane %v5249, 1
      %v5388 = vrot.slane %v5249, 2
      %v5389 = vrot.slane %v5249, 3
      %v5390 = vrot.slane %v5249, 4
      %v5391 = vrot.slane %v5249, 5
      %v5392 = vrot.slane %v5249, 6
      %v5393 = vrot.slane %v5249, 7
      %v5394 = vrot.slane %v5250, 1
      %v5395 = vrot.slane %v5250, 2
      %v5396 = vrot.slane %v5250, 3
      %v5397 = vrot.slane %v5250, 4
      %v5398 = vrot.slane %v5250, 5
      %v5399 = vrot.slane %v5250, 6
      %v5400 = vrot.slane %v5251, 1
      %v5401 = vrot.slane %v5251, 2
      %v5402 = vrot.slane %v5251, 3
      %v5403 = vrot.slane %v5251, 4
      %v5404 = vrot.slane %v5251, 5
      %v5405 = vrot.slane %v5251, 6
      %v5406 = vrot.slane %v5251, 7
      %v5407 = vrot.slane %v5252, 1
      %v5408 = vrot.slane %v5252, 2
      %v5409 = vrot.slane %v5252, 3
      %v5410 = vrot.slane %v5252, 4
      %v5411 = vrot.slane %v5252, 5
      %v5412 = vrot.slane %v5252, 6
      %v5413 = vrot.slane %v5253, 1
      %v5414 = vrot.slane %v5253, 2
      %v5415 = vrot.slane %v5253, 3
      %v5416 = vrot.slane %v5253, 4
      %v5417 = vrot.slane %v5253, 5
      %v5418 = vrot.slane %v5253, 6
      %v5419 = vrot.slane %v5253, 7
      %v5420 = vrot.slane %v5254, 1
      %v5421 = vrot.slane %v5254, 2
      %v5422 = vrot.slane %v5254, 3
      %v5423 = vrot.slane %v5254, 4
      %v5424 = vrot.slane %v5254, 5
      %v5425 = vrot.slane %v5254, 6
      %5556 = vst [vmem:[#allocation1] ss:$9 sm:$0xff] %v5235
      %s5557 = scalar_lea.vmem [#allocation1], 1
      %5558 = vst [vmem:[%s5557] ss:$9 sm:$0xff] %v5296
      %s5559 = scalar_lea.vmem [#allocation1], 2
      %5560 = vst [vmem:[%s5559] ss:$9 sm:$0xff] %v5297
      %s5561 = scalar_lea.vmem [#allocation1], 3
      %5562 = vst [vmem:[%s5561] ss:$9 sm:$0xff] %v5298
      %s5563 = scalar_lea.vmem [#allocation1], 4
      %5564 = vst [vmem:[%s5563] ss:$9 sm:$0xff] %v5299
      %s5565 = scalar_lea.vmem [#allocation1], 5
      %5566 = vst [vmem:[%s5565] ss:$9 sm:$0xff] %v5300
      %s5567 = scalar_lea.vmem [#allocation1], 6
      %5568 = vst [vmem:[%s5567] ss:$9 sm:$0xff] %v5301
      %s5569 = scalar_lea.vmem [#allocation1], 7
      %5570 = vst [vmem:[%s5569] ss:$9 sm:$0xff] %v5302
      %v5571 = vld [vmem:[#allocation1] sm:$0xff]
      %5572 = vst [vmem:[#allocation1] ss:$9 sm:$0xff] %v5236
      %5573 = vst [vmem:[%s5557] ss:$9 sm:$0xff] %v5303
      %5574 = vst [vmem:[%s5559] ss:$9 sm:$0xff] %v5304
      %5575 = vst [vmem:[%s5561] ss:$9 sm:$0xff] %v5305
      %5576 = vst [vmem:[%s5563] ss:$9 sm:$0xff] %v5306
      %5577 = vst [vmem:[%s5565] ss:$9 sm:$0xff] %v5307
      %5578 = vst [vmem:[%s5567] ss:$9 sm:$0xff] %v5308
      %5579 = vst [vmem:[%s5569] ss:$9 sm:$0xff] %v5237
      %v5580 = vld [vmem:[#allocation1] sm:$0xff]
      %5581 = vst [vmem:[#allocation1] ss:$9 sm:$0xff] %v5309
      %5582 = vst [vmem:[%s5557] ss:$9 sm:$0xff] %v5310
      %5583 = vst [vmem:[%s5559] ss:$9 sm:$0xff] %v5311
      %5584 = vst [vmem:[%s5561] ss:$9 sm:$0xff] %v5312
      %5585 = vst [vmem:[%s5563] ss:$9 sm:$0xff] %v5313
      %5586 = vst [vmem:[%s5565] ss:$9 sm:$0xff] %v5314
      %5587 = vst [vmem:[%s5567] ss:$9 sm:$0xff] %v5315
      %5588 = vst [vmem:[%s5569] ss:$9 sm:$0xff] %v5238
      %v5589 = vld [vmem:[#allocation1] sm:$0xff]
      %5590 = vst [vmem:[#allocation1] ss:$9 sm:$0xff] %v5316
      %5591 = vst [vmem:[%s5557] ss:$9 sm:$0xff] %v5317
      %5592 = vst [vmem:[%s5559] ss:$9 sm:$0xff] %v5318
      %5593 = vst [vmem:[%s5561] ss:$9 sm:$0xff] %v5319
      %5594 = vst [vmem:[%s5563] ss:$9 sm:$0xff] %v5320
      %5595 = vst [vmem:[%s5565] ss:$9 sm:$0xff] %v5321
      %5596 = vst [vmem:[%s5567] ss:$9 sm:$0xff] %v5239
      %5597 = vst [vmem:[%s5569] ss:$9 sm:$0xff] %v5322
      %v5598 = vld [vmem:[#allocation1] sm:$0xff]
      %5599 = vst [vmem:[#allocation1] ss:$9 sm:$0xff] %v5323
      %5600 = vst [vmem:[%s5557] ss:$9 sm:$0xff] %v5324
      %5601 = vst [vmem:[%s5559] ss:$9 sm:$0xff] %v5325
      %5602 = vst [vmem:[%s5561] ss:$9 sm:$0xff] %v5326
      %5603 = vst [vmem:[%s5563] ss:$9 sm:$0xff] %v5327
      %5604 = vst [vmem:[%s5565] ss:$9 sm:$0xff] %v5328
      %5605 = vst [vmem:[%s5567] ss:$9 sm:$0xff] %v5240
      %5606 = vst [vmem:[%s5569] ss:$9 sm:$0xff] %v5329
      %v5607 = vld [vmem:[#allocation1] sm:$0xff]
      %5608 = vst [vmem:[#allocation1] ss:$9 sm:$0xff] %v5330
      %5609 = vst [vmem:[%s5557] ss:$9 sm:$0xff] %v5331
      %5610 = vst [vmem:[%s5559] ss:$9 sm:$0xff] %v5332
      %5611 = vst [vmem:[%s5561] ss:$9 sm:$0xff] %v5333
      %5612 = vst [vmem:[%s5563] ss:$9 sm:$0xff] %v5334
      %5613 = vst [vmem:[%s5565] ss:$9 sm:$0xff] %v5241
      %5614 = vst [vmem:[%s5567] ss:$9 sm:$0xff] %v5335
      %5615 = vst [vmem:[%s5569] ss:$9 sm:$0xff] %v5336
      %v5616 = vld [vmem:[#allocation1] sm:$0xff]
      %5617 = vst [vmem:[#allocation1] ss:$9 sm:$0xff] %v5337
      %5618 = vst [vmem:[%s5557] ss:$9 sm:$0xff] %v5338
      %5619 = vst [vmem:[%s5559] ss:$9 sm:$0xff] %v5339
      %5620 = vst [vmem:[%s5561] ss:$9 sm:$0xff] %v5340
      %5621 = vst [vmem:[%s5563] ss:$9 sm:$0xff] %v5341
      %5622 = vst [vmem:[%s5565] ss:$9 sm:$0xff] %v5242
      %5623 = vst [vmem:[%s5567] ss:$9 sm:$0xff] %v5342
      %5624 = vst [vmem:[%s5569] ss:$9 sm:$0xff] %v5343
      %v5625 = vld [vmem:[#allocation1] sm:$0xff]
      %5626 = vst [vmem:[#allocation1] ss:$9 sm:$0xff] %v5344
      %5627 = vst [vmem:[%s5557] ss:$9 sm:$0xff] %v5345
      %5628 = vst [vmem:[%s5559] ss:$9 sm:$0xff] %v5346
      %5629 = vst [vmem:[%s5561] ss:$9 sm:$0xff] %v5347
      %5630 = vst [vmem:[%s5563] ss:$9 sm:$0xff] %v5243
      %5631 = vst [vmem:[%s5565] ss:$9 sm:$0xff] %v5348
      %5632 = vst [vmem:[%s5567] ss:$9 sm:$0xff] %v5349
      %5633 = vst [vmem:[%s5569] ss:$9 sm:$0xff] %v5350
      %v5634 = vld [vmem:[#allocation1] sm:$0xff]
      %5635 = vst [vmem:[#allocation1] ss:$9 sm:$0xff] %v5351
      %5636 = vst [vmem:[%s5557] ss:$9 sm:$0xff] %v5352
      %5637 = vst [vmem:[%s5559] ss:$9 sm:$0xff] %v5353
      %5638 = vst [vmem:[%s5561] ss:$9 sm:$0xff] %v5354
      %5639 = vst [vmem:[%s5563] ss:$9 sm:$0xff] %v5244
      %5640 = vst [vmem:[%s5565] ss:$9 sm:$0xff] %v5355
      %5641 = vst [vmem:[%s5567] ss:$9 sm:$0xff] %v5356
      %5642 = vst [vmem:[%s5569] ss:$9 sm:$0xff] %v5357
      %v5643 = vld [vmem:[#allocation1] sm:$0xff]
      %5644 = vst [vmem:[#allocation1] ss:$9 sm:$0xff] %v5358
      %5645 = vst [vmem:[%s5557] ss:$9 sm:$0xff] %v5359
      %5646 = vst [vmem:[%s5559] ss:$9 sm:$0xff] %v5360
      %5647 = vst [vmem:[%s5561] ss:$9 sm:$0xff] %v5245
      %5648 = vst [vmem:[%s5563] ss:$9 sm:$0xff] %v5361
      %5649 = vst [vmem:[%s5565] ss:$9 sm:$0xff] %v5362
      %5650 = vst [vmem:[%s5567] ss:$9 sm:$0xff] %v5363
      %5651 = vst [vmem:[%s5569] ss:$9 sm:$0xff] %v5364
      %v5652 = vld [vmem:[#allocation1] sm:$0xff]
      %5653 = vst [vmem:[#allocation1] ss:$9 sm:$0xff] %v5365
      %5654 = vst [vmem:[%s5557] ss:$9 sm:$0xff] %v5366
      %5655 = vst [vmem:[%s5559] ss:$9 sm:$0xff] %v5367
      %5656 = vst [vmem:[%s5561] ss:$9 sm:$0xff] %v5246
      %5657 = vst [vmem:[%s5563] ss:$9 sm:$0xff] %v5368
      %5658 = vst [vmem:[%s5565] ss:$9 sm:$0xff] %v5369
      %5659 = vst [vmem:[%s5567] ss:$9 sm:$0xff] %v5370
      %5660 = vst [vmem:[%s5569] ss:$9 sm:$0xff] %v5371
      %v5661 = vld [vmem:[#allocation1] sm:$0xff]
      %5662 = vst [vmem:[#allocation1] ss:$9 sm:$0xff] %v5372
      %5663 = vst [vmem:[%s5557] ss:$9 sm:$0xff] %v5373
      %5664 = vst [vmem:[%s5559] ss:$9 sm:$0xff] %v5247
      %5665 = vst [vmem:[%s5561] ss:$9 sm:$0xff] %v5374
      %5666 = vst [vmem:[%s5563] ss:$9 sm:$0xff] %v5375
      %5667 = vst [vmem:[%s5565] ss:$9 sm:$0xff] %v5376
      %5668 = vst [vmem:[%s5567] ss:$9 sm:$0xff] %v5377
      %5669 = vst [vmem:[%s5569] ss:$9 sm:$0xff] %v5378
      %v5670 = vld [vmem:[#allocation1] sm:$0xff]
      %5671 = vst [vmem:[#allocation1] ss:$9 sm:$0xff] %v5379
      %5672 = vst [vmem:[%s5557] ss:$9 sm:$0xff] %v5380
      %5673 = vst [vmem:[%s5559] ss:$9 sm:$0xff] %v5248
      %5674 = vst [vmem:[%s5561] ss:$9 sm:$0xff] %v5381
      %5675 = vst [vmem:[%s5563] ss:$9 sm:$0xff] %v5382
      %5676 = vst [vmem:[%s5565] ss:$9 sm:$0xff] %v5383
      %5677 = vst [vmem:[%s5567] ss:$9 sm:$0xff] %v5384
      %5678 = vst [vmem:[%s5569] ss:$9 sm:$0xff] %v5385
      %v5679 = vld [vmem:[#allocation1] sm:$0xff]
      %5680 = vst [vmem:[#allocation1] ss:$9 sm:$0xff] %v5386
      %5681 = vst [vmem:[%s5557] ss:$9 sm:$0xff] %v5249
      %5682 = vst [vmem:[%s5559] ss:$9 sm:$0xff] %v5387
      %5683 = vst [vmem:[%s5561] ss:$9 sm:$0xff] %v5388
      %5684 = vst [vmem:[%s5563] ss:$9 sm:$0xff] %v5389
      %5685 = vst [vmem:[%s5565] ss:$9 sm:$0xff] %v5390
      %5686 = vst [vmem:[%s5567] ss:$9 sm:$0xff] %v5391
      %5687 = vst [vmem:[%s5569] ss:$9 sm:$0xff] %v5392
      %v5688 = vld [vmem:[#allocation1] sm:$0xff]
      %5689 = vst [vmem:[#allocation1] ss:$9 sm:$0xff] %v5393
      %5690 = vst [vmem:[%s5557] ss:$9 sm:$0xff] %v5250
      %5691 = vst [vmem:[%s5559] ss:$9 sm:$0xff] %v5394
      %5692 = vst [vmem:[%s5561] ss:$9 sm:$0xff] %v5395
      %5693 = vst [vmem:[%s5563] ss:$9 sm:$0xff] %v5396
      %5694 = vst [vmem:[%s5565] ss:$9 sm:$0xff] %v5397
      %5695 = vst [vmem:[%s5567] ss:$9 sm:$0xff] %v5398
      %5696 = vst [vmem:[%s5569] ss:$9 sm:$0xff] %v5399
      %v5697 = vld [vmem:[#allocation1] sm:$0xff]
      %5698 = vst [vmem:[#allocation1] ss:$9 sm:$0xff] %v5251
      %5699 = vst [vmem:[%s5557] ss:$9 sm:$0xff] %v5400
      %5700 = vst [vmem:[%s5559] ss:$9 sm:$0xff] %v5401
      %5701 = vst [vmem:[%s5561] ss:$9 sm:$0xff] %v5402
      %5702 = vst [vmem:[%s5563] ss:$9 sm:$0xff] %v5403
      %5703 = vst [vmem:[%s5565] ss:$9 sm:$0xff] %v5404
      %5704 = vst [vmem:[%s5567] ss:$9 sm:$0xff] %v5405
      %5705 = vst [vmem:[%s5569] ss:$9 sm:$0xff] %v5406
      %v5706 = vld [vmem:[#allocation1] sm:$0xff]
      %5707 = vst [vmem:[#allocation1] ss:$9 sm:$0xff] %v5252
      %5708 = vst [vmem:[%s5557] ss:$9 sm:$0xff] %v5407
      %5709 = vst [vmem:[%s5559] ss:$9 sm:$0xff] %v5408
      %5710 = vst [vmem:[%s5561] ss:$9 sm:$0xff] %v5409
      %5711 = vst [vmem:[%s5563] ss:$9 sm:$0xff] %v5410
      %5712 = vst [vmem:[%s5565] ss:$9 sm:$0xff] %v5411
      %5713 = vst [vmem:[%s5567] ss:$9 sm:$0xff] %v5412
      %5714 = vst [vmem:[%s5569] ss:$9 sm:$0xff] %v5253
      %v5715 = vld [vmem:[#allocation1] sm:$0xff]
      %5716 = vst [vmem:[#allocation1] ss:$9 sm:$0xff] %v5413
      %5717 = vst [vmem:[%s5557] ss:$9 sm:$0xff] %v5414
      %5718 = vst [vmem:[%s5559] ss:$9 sm:$0xff] %v5415
      %5719 = vst [vmem:[%s5561] ss:$9 sm:$0xff] %v5416
      %5720 = vst [vmem:[%s5563] ss:$9 sm:$0xff] %v5417
      %5721 = vst [vmem:[%s5565] ss:$9 sm:$0xff] %v5418
      %5722 = vst [vmem:[%s5567] ss:$9 sm:$0xff] %v5419
      %5723 = vst [vmem:[%s5569] ss:$9 sm:$0xff] %v5254
      %v5724 = vld [vmem:[#allocation1] sm:$0xff]
      %5725 = vst [vmem:[#allocation1] ss:$9 sm:$0xff] %v5420
      %5726 = vst [vmem:[%s5557] ss:$9 sm:$0xff] %v5421
      %5727 = vst [vmem:[%s5559] ss:$9 sm:$0xff] %v5422
      %5728 = vst [vmem:[%s5561] ss:$9 sm:$0xff] %v5423
      %5729 = vst [vmem:[%s5563] ss:$9 sm:$0xff] %v5424
      %5730 = vst [vmem:[%s5565] ss:$9 sm:$0xff] %v5425
      %v5731 = vld [vmem:[#allocation1] sm:$0xff]
      %v5751 = vsel %vm362, %v5571, 0.0
      %v5752 = vsel %vm362, %v5580, 0.0
      %v5753 = vadd.f32 %v5751, %v5752
      %v5754 = vsel %vm362, %v5589, 0.0
      %v5755 = vadd.f32 %v5753, %v5754
      %v5756 = vsel %vm362, %v5598, 0.0
      %v5757 = vadd.f32 %v5755, %v5756
      %v5758 = vsel %vm362, %v5607, 0.0
      %v5759 = vadd.f32 %v5757, %v5758
      %v5760 = vsel %vm362, %v5616, 0.0
      %v5761 = vadd.f32 %v5759, %v5760
      %v5762 = vsel %vm362, %v5625, 0.0
      %v5763 = vadd.f32 %v5761, %v5762
      %v5764 = vsel %vm362, %v5634, 0.0
      %v5765 = vadd.f32 %v5763, %v5764
      %v5766 = vsel %vm362, %v5643, 0.0
      %v5767 = vadd.f32 %v5765, %v5766
      %v5768 = vsel %vm362, %v5652, 0.0
      %v5769 = vadd.f32 %v5767, %v5768
      %v5770 = vsel %vm362, %v5661, 0.0
      %v5771 = vadd.f32 %v5769, %v5770
      %v5772 = vsel %vm362, %v5670, 0.0
      %v5773 = vadd.f32 %v5771, %v5772
      %v5774 = vsel %vm362, %v5679, 0.0
      %v5775 = vadd.f32 %v5773, %v5774
      %v5776 = vsel %vm362, %v5688, 0.0
      %v5777 = vadd.f32 %v5775, %v5776
      %v5778 = vsel %vm362, %v5697, 0.0
      %v5779 = vadd.f32 %v5777, %v5778
      %v5780 = vsel %vm362, %v5706, 0.0
      %v5781 = vadd.f32 %v5779, %v5780
      %v5782 = vsel %vm362, %v5715, 0.0
      %v5783 = vadd.f32 %v5781, %v5782
      %v5784 = vsel %vm362, %v5724, 0.0
      %v5785 = vadd.f32 %v5783, %v5784
      %vm5786 = vcmask 62464
      %v5787 = vsel %vm5786, %v5731, 0.0
      %v5788 = vadd.f32 %v5785, %v5787
      %v5789 = vrot.slane %v5788, 4
      %v5790 = vadd.f32 %v5788, %v5789
      %v5791 = vrot.slane %v5790, 2
      %v5792 = vadd.f32 %v5790, %v5791
      %v5793 = vrot.slane %v5792, 1
      %v5794 = vadd.f32 %v5792, %v5793
      %vm5795 = vcmask 57344
      %5796 = vst.msk [vmem:[%s344] sm:$0x1] %vm5795, %v5794
      %v5797 = vmul.f32 %v5235, %v5235
      %v5798 = vmul.f32 %v5296, %v5296
      %v5799 = vmul.f32 %v5297, %v5297
      %v5800 = vmul.f32 %v5298, %v5298
      %v5801 = vmul.f32 %v5299, %v5299
      %v5802 = vmul.f32 %v5300, %v5300
      %v5803 = vmul.f32 %v5301, %v5301
      %v5804 = vmul.f32 %v5302, %v5302
      %v5805 = vmul.f32 %v5236, %v5236
      %v5806 = vmul.f32 %v5303, %v5303
      %v5807 = vmul.f32 %v5304, %v5304
      %v5808 = vmul.f32 %v5305, %v5305
      %v5809 = vmul.f32 %v5306, %v5306
      %v5810 = vmul.f32 %v5307, %v5307
      %v5811 = vmul.f32 %v5308, %v5308
      %v5812 = vmul.f32 %v5237, %v5237
      %v5813 = vmul.f32 %v5309, %v5309
      %v5814 = vmul.f32 %v5310, %v5310
      %v5815 = vmul.f32 %v5311, %v5311
      %v5816 = vmul.f32 %v5312, %v5312
      %v5817 = vmul.f32 %v5313, %v5313
      %v5818 = vmul.f32 %v5314, %v5314
      %v5819 = vmul.f32 %v5315, %v5315
      %v5820 = vmul.f32 %v5238, %v5238
      %v5821 = vmul.f32 %v5316, %v5316
      %v5822 = vmul.f32 %v5317, %v5317
      %v5823 = vmul.f32 %v5318, %v5318
      %v5824 = vmul.f32 %v5319, %v5319
      %v5825 = vmul.f32 %v5320, %v5320
      %v5826 = vmul.f32 %v5321, %v5321
      %v5827 = vmul.f32 %v5239, %v5239
      %v5828 = vmul.f32 %v5322, %v5322
      %v5829 = vmul.f32 %v5323, %v5323
      %v5830 = vmul.f32 %v5324, %v5324
      %v5831 = vmul.f32 %v5325, %v5325
      %v5832 = vmul.f32 %v5326, %v5326
      %v5833 = vmul.f32 %v5327, %v5327
      %v5834 = vmul.f32 %v5328, %v5328
      %v5835 = vmul.f32 %v5240, %v5240
      %v5836 = vmul.f32 %v5329, %v5329
      %v5837 = vmul.f32 %v5330, %v5330
      %v5838 = vmul.f32 %v5331, %v5331
      %v5839 = vmul.f32 %v5332, %v5332
      %v5840 = vmul.f32 %v5333, %v5333
      %v5841 = vmul.f32 %v5334, %v5334
      %v5842 = vmul.f32 %v5241, %v5241
      %v5843 = vmul.f32 %v5335, %v5335
      %v5844 = vmul.f32 %v5336, %v5336
      %v5845 = vmul.f32 %v5337, %v5337
      %v5846 = vmul.f32 %v5338, %v5338
      %v5847 = vmul.f32 %v5339, %v5339
      %v5848 = vmul.f32 %v5340, %v5340
      %v5849 = vmul.f32 %v5341, %v5341
      %v5850 = vmul.f32 %v5242, %v5242
      %v5851 = vmul.f32 %v5342, %v5342
      %v5852 = vmul.f32 %v5343, %v5343
      %v5853 = vmul.f32 %v5344, %v5344
      %v5854 = vmul.f32 %v5345, %v5345
      %v5855 = vmul.f32 %v5346, %v5346
      %v5856 = vmul.f32 %v5347, %v5347
      %v5857 = vmul.f32 %v5243, %v5243
      %v5858 = vmul.f32 %v5348, %v5348
      %v5859 = vmul.f32 %v5349, %v5349
      %v5860 = vmul.f32 %v5350, %v5350
      %v5861 = vmul.f32 %v5351, %v5351
      %v5862 = vmul.f32 %v5352, %v5352
      %v5863 = vmul.f32 %v5353, %v5353
      %v5864 = vmul.f32 %v5354, %v5354
      %v5865 = vmul.f32 %v5244, %v5244
      %v5866 = vmul.f32 %v5355, %v5355
      %v5867 = vmul.f32 %v5356, %v5356
      %v5868 = vmul.f32 %v5357, %v5357
      %v5869 = vmul.f32 %v5358, %v5358
      %v5870 = vmul.f32 %v5359, %v5359
      %v5871 = vmul.f32 %v5360, %v5360
      %v5872 = vmul.f32 %v5245, %v5245
      %v5873 = vmul.f32 %v5361, %v5361
      %v5874 = vmul.f32 %v5362, %v5362
      %v5875 = vmul.f32 %v5363, %v5363
      %v5876 = vmul.f32 %v5364, %v5364
      %v5877 = vmul.f32 %v5365, %v5365
      %v5878 = vmul.f32 %v5366, %v5366
      %v5879 = vmul.f32 %v5367, %v5367
      %v5880 = vmul.f32 %v5246, %v5246
      %v5881 = vmul.f32 %v5368, %v5368
      %v5882 = vmul.f32 %v5369, %v5369
      %v5883 = vmul.f32 %v5370, %v5370
      %v5884 = vmul.f32 %v5371, %v5371
      %v5885 = vmul.f32 %v5372, %v5372
      %v5886 = vmul.f32 %v5373, %v5373
      %v5887 = vmul.f32 %v5247, %v5247
      %v5888 = vmul.f32 %v5374, %v5374
      %v5889 = vmul.f32 %v5375, %v5375
      %v5890 = vmul.f32 %v5376, %v5376
      %v5891 = vmul.f32 %v5377, %v5377
      %v5892 = vmul.f32 %v5378, %v5378
      %v5893 = vmul.f32 %v5379, %v5379
      %v5894 = vmul.f32 %v5380, %v5380
      %v5895 = vmul.f32 %v5248, %v5248
      %v5896 = vmul.f32 %v5381, %v5381
      %v5897 = vmul.f32 %v5382, %v5382
      %v5898 = vmul.f32 %v5383, %v5383
      %v5899 = vmul.f32 %v5384, %v5384
      %v5900 = vmul.f32 %v5385, %v5385
      %v5901 = vmul.f32 %v5386, %v5386
      %v5902 = vmul.f32 %v5249, %v5249
      %v5903 = vmul.f32 %v5387, %v5387
      %v5904 = vmul.f32 %v5388, %v5388
      %v5905 = vmul.f32 %v5389, %v5389
      %v5906 = vmul.f32 %v5390, %v5390
      %v5907 = vmul.f32 %v5391, %v5391
      %v5908 = vmul.f32 %v5392, %v5392
      %v5909 = vmul.f32 %v5393, %v5393
      %v5910 = vmul.f32 %v5250, %v5250
      %v5911 = vmul.f32 %v5394, %v5394
      %v5912 = vmul.f32 %v5395, %v5395
      %v5913 = vmul.f32 %v5396, %v5396
      %v5914 = vmul.f32 %v5397, %v5397
      %v5915 = vmul.f32 %v5398, %v5398
      %v5916 = vmul.f32 %v5399, %v5399
      %v5917 = vmul.f32 %v5251, %v5251
      %v5918 = vmul.f32 %v5400, %v5400
      %v5919 = vmul.f32 %v5401, %v5401
      %v5920 = vmul.f32 %v5402, %v5402
      %v5921 = vmul.f32 %v5403, %v5403
      %v5922 = vmul.f32 %v5404, %v5404
      %v5923 = vmul.f32 %v5405, %v5405
      %v5924 = vmul.f32 %v5406, %v5406
      %v5925 = vmul.f32 %v5252, %v5252
      %v5926 = vmul.f32 %v5407, %v5407
      %v5927 = vmul.f32 %v5408, %v5408
      %v5928 = vmul.f32 %v5409, %v5409
      %v5929 = vmul.f32 %v5410, %v5410
      %v5930 = vmul.f32 %v5411, %v5411
      %v5931 = vmul.f32 %v5412, %v5412
      %v5932 = vmul.f32 %v5253, %v5253
      %v5933 = vmul.f32 %v5413, %v5413
      %v5934 = vmul.f32 %v5414, %v5414
      %v5935 = vmul.f32 %v5415, %v5415
      %v5936 = vmul.f32 %v5416, %v5416
      %v5937 = vmul.f32 %v5417, %v5417
      %v5938 = vmul.f32 %v5418, %v5418
      %v5939 = vmul.f32 %v5419, %v5419
      %v5940 = vmul.f32 %v5254, %v5254
      %v5941 = vmul.f32 %v5420, %v5420
      %v5942 = vmul.f32 %v5421, %v5421
      %v5943 = vmul.f32 %v5422, %v5422
      %v5944 = vmul.f32 %v5423, %v5423
      %v5945 = vmul.f32 %v5424, %v5424
      %v5946 = vmul.f32 %v5425, %v5425
      %6097 = vst [vmem:[#allocation1] ss:$9 sm:$0xff] %v5797
      %s6098 = scalar_lea.vmem [#allocation1], 1
      %6099 = vst [vmem:[%s6098] ss:$9 sm:$0xff] %v5798
      %s6100 = scalar_lea.vmem [#allocation1], 2
      %6101 = vst [vmem:[%s6100] ss:$9 sm:$0xff] %v5799
      %s6102 = scalar_lea.vmem [#allocation1], 3
      %6103 = vst [vmem:[%s6102] ss:$9 sm:$0xff] %v5800
      %s6104 = scalar_lea.vmem [#allocation1], 4
      %6105 = vst [vmem:[%s6104] ss:$9 sm:$0xff] %v5801
      %s6106 = scalar_lea.vmem [#allocation1], 5
      %6107 = vst [vmem:[%s6106] ss:$9 sm:$0xff] %v5802
      %s6108 = scalar_lea.vmem [#allocation1], 6
      %6109 = vst [vmem:[%s6108] ss:$9 sm:$0xff] %v5803
      %s6110 = scalar_lea.vmem [#allocation1], 7
      %6111 = vst [vmem:[%s6110] ss:$9 sm:$0xff] %v5804
      %v6112 = vld [vmem:[#allocation1] sm:$0xff]
      %6113 = vst [vmem:[#allocation1] ss:$9 sm:$0xff] %v5805
      %6114 = vst [vmem:[%s6098] ss:$9 sm:$0xff] %v5806
      %6115 = vst [vmem:[%s6100] ss:$9 sm:$0xff] %v5807
      %6116 = vst [vmem:[%s6102] ss:$9 sm:$0xff] %v5808
      %6117 = vst [vmem:[%s6104] ss:$9 sm:$0xff] %v5809
      %6118 = vst [vmem:[%s6106] ss:$9 sm:$0xff] %v5810
      %6119 = vst [vmem:[%s6108] ss:$9 sm:$0xff] %v5811
      %6120 = vst [vmem:[%s6110] ss:$9 sm:$0xff] %v5812
      %v6121 = vld [vmem:[#allocation1] sm:$0xff]
      %6122 = vst [vmem:[#allocation1] ss:$9 sm:$0xff] %v5813
      %6123 = vst [vmem:[%s6098] ss:$9 sm:$0xff] %v5814
      %6124 = vst [vmem:[%s6100] ss:$9 sm:$0xff] %v5815
      %6125 = vst [vmem:[%s6102] ss:$9 sm:$0xff] %v5816
      %6126 = vst [vmem:[%s6104] ss:$9 sm:$0xff] %v5817
      %6127 = vst [vmem:[%s6106] ss:$9 sm:$0xff] %v5818
      %6128 = vst [vmem:[%s6108] ss:$9 sm:$0xff] %v5819
      %6129 = vst [vmem:[%s6110] ss:$9 sm:$0xff] %v5820
      %v6130 = vld [vmem:[#allocation1] sm:$0xff]
      %6131 = vst [vmem:[#allocation1] ss:$9 sm:$0xff] %v5821
      %6132 = vst [vmem:[%s6098] ss:$9 sm:$0xff] %v5822
      %6133 = vst [vmem:[%s6100] ss:$9 sm:$0xff] %v5823
      %6134 = vst [vmem:[%s6102] ss:$9 sm:$0xff] %v5824
      %6135 = vst [vmem:[%s6104] ss:$9 sm:$0xff] %v5825
      %6136 = vst [vmem:[%s6106] ss:$9 sm:$0xff] %v5826
      %6137 = vst [vmem:[%s6108] ss:$9 sm:$0xff] %v5827
      %6138 = vst [vmem:[%s6110] ss:$9 sm:$0xff] %v5828
      %v6139 = vld [vmem:[#allocation1] sm:$0xff]
      %6140 = vst [vmem:[#allocation1] ss:$9 sm:$0xff] %v5829
      %6141 = vst [vmem:[%s6098] ss:$9 sm:$0xff] %v5830
      %6142 = vst [vmem:[%s6100] ss:$9 sm:$0xff] %v5831
      %6143 = vst [vmem:[%s6102] ss:$9 sm:$0xff] %v5832
      %6144 = vst [vmem:[%s6104] ss:$9 sm:$0xff] %v5833
      %6145 = vst [vmem:[%s6106] ss:$9 sm:$0xff] %v5834
      %6146 = vst [vmem:[%s6108] ss:$9 sm:$0xff] %v5835
      %6147 = vst [vmem:[%s6110] ss:$9 sm:$0xff] %v5836
      %v6148 = vld [vmem:[#allocation1] sm:$0xff]
      %6149 = vst [vmem:[#allocation1] ss:$9 sm:$0xff] %v5837
      %6150 = vst [vmem:[%s6098] ss:$9 sm:$0xff] %v5838
      %6151 = vst [vmem:[%s6100] ss:$9 sm:$0xff] %v5839
      %6152 = vst [vmem:[%s6102] ss:$9 sm:$0xff] %v5840
      %6153 = vst [vmem:[%s6104] ss:$9 sm:$0xff] %v5841
      %6154 = vst [vmem:[%s6106] ss:$9 sm:$0xff] %v5842
      %6155 = vst [vmem:[%s6108] ss:$9 sm:$0xff] %v5843
      %6156 = vst [vmem:[%s6110] ss:$9 sm:$0xff] %v5844
      %v6157 = vld [vmem:[#allocation1] sm:$0xff]
      %6158 = vst [vmem:[#allocation1] ss:$9 sm:$0xff] %v5845
      %6159 = vst [vmem:[%s6098] ss:$9 sm:$0xff] %v5846
      %6160 = vst [vmem:[%s6100] ss:$9 sm:$0xff] %v5847
      %6161 = vst [vmem:[%s6102] ss:$9 sm:$0xff] %v5848
      %6162 = vst [vmem:[%s6104] ss:$9 sm:$0xff] %v5849
      %6163 = vst [vmem:[%s6106] ss:$9 sm:$0xff] %v5850
      %6164 = vst [vmem:[%s6108] ss:$9 sm:$0xff] %v5851
      %6165 = vst [vmem:[%s6110] ss:$9 sm:$0xff] %v5852
      %v6166 = vld [vmem:[#allocation1] sm:$0xff]
      %6167 = vst [vmem:[#allocation1] ss:$9 sm:$0xff] %v5853
      %6168 = vst [vmem:[%s6098] ss:$9 sm:$0xff] %v5854
      %6169 = vst [vmem:[%s6100] ss:$9 sm:$0xff] %v5855
      %6170 = vst [vmem:[%s6102] ss:$9 sm:$0xff] %v5856
      %6171 = vst [vmem:[%s6104] ss:$9 sm:$0xff] %v5857
      %6172 = vst [vmem:[%s6106] ss:$9 sm:$0xff] %v5858
      %6173 = vst [vmem:[%s6108] ss:$9 sm:$0xff] %v5859
      %6174 = vst [vmem:[%s6110] ss:$9 sm:$0xff] %v5860
      %v6175 = vld [vmem:[#allocation1] sm:$0xff]
      %6176 = vst [vmem:[#allocation1] ss:$9 sm:$0xff] %v5861
      %6177 = vst [vmem:[%s6098] ss:$9 sm:$0xff] %v5862
      %6178 = vst [vmem:[%s6100] ss:$9 sm:$0xff] %v5863
      %6179 = vst [vmem:[%s6102] ss:$9 sm:$0xff] %v5864
      %6180 = vst [vmem:[%s6104] ss:$9 sm:$0xff] %v5865
      %6181 = vst [vmem:[%s6106] ss:$9 sm:$0xff] %v5866
      %6182 = vst [vmem:[%s6108] ss:$9 sm:$0xff] %v5867
      %6183 = vst [vmem:[%s6110] ss:$9 sm:$0xff] %v5868
      %v6184 = vld [vmem:[#allocation1] sm:$0xff]
      %6185 = vst [vmem:[#allocation1] ss:$9 sm:$0xff] %v5869
      %6186 = vst [vmem:[%s6098] ss:$9 sm:$0xff] %v5870
      %6187 = vst [vmem:[%s6100] ss:$9 sm:$0xff] %v5871
      %6188 = vst [vmem:[%s6102] ss:$9 sm:$0xff] %v5872
      %6189 = vst [vmem:[%s6104] ss:$9 sm:$0xff] %v5873
      %6190 = vst [vmem:[%s6106] ss:$9 sm:$0xff] %v5874
      %6191 = vst [vmem:[%s6108] ss:$9 sm:$0xff] %v5875
      %6192 = vst [vmem:[%s6110] ss:$9 sm:$0xff] %v5876
      %v6193 = vld [vmem:[#allocation1] sm:$0xff]
      %6194 = vst [vmem:[#allocation1] ss:$9 sm:$0xff] %v5877
      %6195 = vst [vmem:[%s6098] ss:$9 sm:$0xff] %v5878
      %6196 = vst [vmem:[%s6100] ss:$9 sm:$0xff] %v5879
      %6197 = vst [vmem:[%s6102] ss:$9 sm:$0xff] %v5880
      %6198 = vst [vmem:[%s6104] ss:$9 sm:$0xff] %v5881
      %6199 = vst [vmem:[%s6106] ss:$9 sm:$0xff] %v5882
      %6200 = vst [vmem:[%s6108] ss:$9 sm:$0xff] %v5883
      %6201 = vst [vmem:[%s6110] ss:$9 sm:$0xff] %v5884
      %v6202 = vld [vmem:[#allocation1] sm:$0xff]
      %6203 = vst [vmem:[#allocation1] ss:$9 sm:$0xff] %v5885
      %6204 = vst [vmem:[%s6098] ss:$9 sm:$0xff] %v5886
      %6205 = vst [vmem:[%s6100] ss:$9 sm:$0xff] %v5887
      %6206 = vst [vmem:[%s6102] ss:$9 sm:$0xff] %v5888
      %6207 = vst [vmem:[%s6104] ss:$9 sm:$0xff] %v5889
      %6208 = vst [vmem:[%s6106] ss:$9 sm:$0xff] %v5890
      %6209 = vst [vmem:[%s6108] ss:$9 sm:$0xff] %v5891
      %6210 = vst [vmem:[%s6110] ss:$9 sm:$0xff] %v5892
      %v6211 = vld [vmem:[#allocation1] sm:$0xff]
      %6212 = vst [vmem:[#allocation1] ss:$9 sm:$0xff] %v5893
      %6213 = vst [vmem:[%s6098] ss:$9 sm:$0xff] %v5894
      %6214 = vst [vmem:[%s6100] ss:$9 sm:$0xff] %v5895
      %6215 = vst [vmem:[%s6102] ss:$9 sm:$0xff] %v5896
      %6216 = vst [vmem:[%s6104] ss:$9 sm:$0xff] %v5897
      %6217 = vst [vmem:[%s6106] ss:$9 sm:$0xff] %v5898
      %6218 = vst [vmem:[%s6108] ss:$9 sm:$0xff] %v5899
      %6219 = vst [vmem:[%s6110] ss:$9 sm:$0xff] %v5900
      %v6220 = vld [vmem:[#allocation1] sm:$0xff]
      %6221 = vst [vmem:[#allocation1] ss:$9 sm:$0xff] %v5901
      %6222 = vst [vmem:[%s6098] ss:$9 sm:$0xff] %v5902
      %6223 = vst [vmem:[%s6100] ss:$9 sm:$0xff] %v5903
      %6224 = vst [vmem:[%s6102] ss:$9 sm:$0xff] %v5904
      %6225 = vst [vmem:[%s6104] ss:$9 sm:$0xff] %v5905
      %6226 = vst [vmem:[%s6106] ss:$9 sm:$0xff] %v5906
      %6227 = vst [vmem:[%s6108] ss:$9 sm:$0xff] %v5907
      %6228 = vst [vmem:[%s6110] ss:$9 sm:$0xff] %v5908
      %v6229 = vld [vmem:[#allocation1] sm:$0xff]
      %6230 = vst [vmem:[#allocation1] ss:$9 sm:$0xff] %v5909
      %6231 = vst [vmem:[%s6098] ss:$9 sm:$0xff] %v5910
      %6232 = vst [vmem:[%s6100] ss:$9 sm:$0xff] %v5911
      %6233 = vst [vmem:[%s6102] ss:$9 sm:$0xff] %v5912
      %6234 = vst [vmem:[%s6104] ss:$9 sm:$0xff] %v5913
      %6235 = vst [vmem:[%s6106] ss:$9 sm:$0xff] %v5914
      %6236 = vst [vmem:[%s6108] ss:$9 sm:$0xff] %v5915
      %6237 = vst [vmem:[%s6110] ss:$9 sm:$0xff] %v5916
      %v6238 = vld [vmem:[#allocation1] sm:$0xff]
      %6239 = vst [vmem:[#allocation1] ss:$9 sm:$0xff] %v5917
      %6240 = vst [vmem:[%s6098] ss:$9 sm:$0xff] %v5918
      %6241 = vst [vmem:[%s6100] ss:$9 sm:$0xff] %v5919
      %6242 = vst [vmem:[%s6102] ss:$9 sm:$0xff] %v5920
      %6243 = vst [vmem:[%s6104] ss:$9 sm:$0xff] %v5921
      %6244 = vst [vmem:[%s6106] ss:$9 sm:$0xff] %v5922
      %6245 = vst [vmem:[%s6108] ss:$9 sm:$0xff] %v5923
      %6246 = vst [vmem:[%s6110] ss:$9 sm:$0xff] %v5924
      %v6247 = vld [vmem:[#allocation1] sm:$0xff]
      %6248 = vst [vmem:[#allocation1] ss:$9 sm:$0xff] %v5925
      %6249 = vst [vmem:[%s6098] ss:$9 sm:$0xff] %v5926
      %6250 = vst [vmem:[%s6100] ss:$9 sm:$0xff] %v5927
      %6251 = vst [vmem:[%s6102] ss:$9 sm:$0xff] %v5928
      %6252 = vst [vmem:[%s6104] ss:$9 sm:$0xff] %v5929
      %6253 = vst [vmem:[%s6106] ss:$9 sm:$0xff] %v5930
      %6254 = vst [vmem:[%s6108] ss:$9 sm:$0xff] %v5931
      %6255 = vst [vmem:[%s6110] ss:$9 sm:$0xff] %v5932
      %v6256 = vld [vmem:[#allocation1] sm:$0xff]
      %6257 = vst [vmem:[#allocation1] ss:$9 sm:$0xff] %v5933
      %6258 = vst [vmem:[%s6098] ss:$9 sm:$0xff] %v5934
      %6259 = vst [vmem:[%s6100] ss:$9 sm:$0xff] %v5935
      %6260 = vst [vmem:[%s6102] ss:$9 sm:$0xff] %v5936
      %6261 = vst [vmem:[%s6104] ss:$9 sm:$0xff] %v5937
      %6262 = vst [vmem:[%s6106] ss:$9 sm:$0xff] %v5938
      %6263 = vst [vmem:[%s6108] ss:$9 sm:$0xff] %v5939
      %6264 = vst [vmem:[%s6110] ss:$9 sm:$0xff] %v5940
      %v6265 = vld [vmem:[#allocation1] sm:$0xff]
      %6266 = vst [vmem:[#allocation1] ss:$9 sm:$0xff] %v5941
      %6267 = vst [vmem:[%s6098] ss:$9 sm:$0xff] %v5942
      %6268 = vst [vmem:[%s6100] ss:$9 sm:$0xff] %v5943
      %6269 = vst [vmem:[%s6102] ss:$9 sm:$0xff] %v5944
      %6270 = vst [vmem:[%s6104] ss:$9 sm:$0xff] %v5945
      %6271 = vst [vmem:[%s6106] ss:$9 sm:$0xff] %v5946
      %v6272 = vld [vmem:[#allocation1] sm:$0xff]
      %v6292 = vsel %vm362, %v6112, 0.0
      %v6293 = vsel %vm362, %v6121, 0.0
      %v6294 = vadd.f32 %v6292, %v6293
      %v6295 = vsel %vm362, %v6130, 0.0
      %v6296 = vadd.f32 %v6294, %v6295
      %v6297 = vsel %vm362, %v6139, 0.0
      %v6298 = vadd.f32 %v6296, %v6297
      %v6299 = vsel %vm362, %v6148, 0.0
      %v6300 = vadd.f32 %v6298, %v6299
      %v6301 = vsel %vm362, %v6157, 0.0
      %v6302 = vadd.f32 %v6300, %v6301
      %v6303 = vsel %vm362, %v6166, 0.0
      %v6304 = vadd.f32 %v6302, %v6303
      %v6305 = vsel %vm362, %v6175, 0.0
      %v6306 = vadd.f32 %v6304, %v6305
      %v6307 = vsel %vm362, %v6184, 0.0
      %v6308 = vadd.f32 %v6306, %v6307
      %v6309 = vsel %vm362, %v6193, 0.0
      %v6310 = vadd.f32 %v6308, %v6309
      %v6311 = vsel %vm362, %v6202, 0.0
      %v6312 = vadd.f32 %v6310, %v6311
      %v6313 = vsel %vm362, %v6211, 0.0
      %v6314 = vadd.f32 %v6312, %v6313
      %v6315 = vsel %vm362, %v6220, 0.0
      %v6316 = vadd.f32 %v6314, %v6315
      %v6317 = vsel %vm362, %v6229, 0.0
      %v6318 = vadd.f32 %v6316, %v6317
      %v6319 = vsel %vm362, %v6238, 0.0
      %v6320 = vadd.f32 %v6318, %v6319
      %v6321 = vsel %vm362, %v6247, 0.0
      %v6322 = vadd.f32 %v6320, %v6321
      %v6323 = vsel %vm362, %v6256, 0.0
      %v6324 = vadd.f32 %v6322, %v6323
      %v6325 = vsel %vm362, %v6265, 0.0
      %v6326 = vadd.f32 %v6324, %v6325
      %v6327 = vsel %vm5786, %v6272, 0.0
      %v6328 = vadd.f32 %v6326, %v6327
      %v6329 = vrot.slane %v6328, 4
      %v6330 = vadd.f32 %v6328, %v6329
      %v6331 = vrot.slane %v6330, 2
      %v6332 = vadd.f32 %v6330, %v6331
      %v6333 = vrot.slane %v6332, 1
      %v6334 = vadd.f32 %v6332, %v6333
      %6335 = vst.msk [vmem:[%s344 + $0x1] sm:$0x1] %vm5795, %v6334
      %s6336 = smul.u32 10, %s24
      %p6337 = scmp.lt.s32.totalorder %s23, 1
      %s6338 = scalar_select %p6337, %s23, 1
      %p6339 = scmp.lt.s32.totalorder %s6336, 29
      %s6340 = scalar_select %p6339, %s6336, 29
      %s6341 = smul.addr %s6340, 2
      %s6342 = smul.addr %s6338, 60
      %s6343 = sadd.s32 %s6341, %s6342
      %s6344 = smul.addr %s6343, 8
      %s6345 = scalar_lea.vmem %s6, %s6344
      %p6346 = scmp.lt.s32.totalorder %s23, 1
      %s6347 = scalar_select %p6346, %s23, 1
      %p6348 = scmp.lt.s32.totalorder %s24, 2
      %s6349 = scalar_select %p6348, %s24, 2
      %s6350 = smul.addr %s6347, 3
      %s6351 = sadd.s32 %s6349, %s6350
      %s6352 = smul.addr %s6351, 2
      %s6353 = scalar_lea.vmem %s7, %s6352
      // Predicated region
      $region45: #{up_step_forward.2} parent=43 // pred_check
        %p6354 = pneg %p187
      $region46: #{up_step_forward.2} parent=43 // pred_check_branch
        %6356 = sbr.rel (%p6354) target = $region48
      $region47: #{up_step_forward.2} parent=43 // pred_region
        %s6357 = smul.u32 10, %s24
      $region48: #{up_step_forward.2} parent=43 // pred_fallthru
        _
      // Predicated region
      $region49: #{up_step_forward.2} parent=43 // pred_check
        %p6358 = pneg %p215
      $region50: #{up_step_forward.2} parent=43 // pred_check_branch
        %6360 = sbr.rel (%p6358) target = $region52
      $region51: #{up_step_forward.2} parent=43 // pred_region
        _
      $region52: #{up_step_forward.2} parent=43 // pred_fallthru
        _
    $region44: #{up_step_forward.2} parent=5 // pred_fallthru
      _
    %p6361 = scmp.le.s32.totalorder 2, %s14
    // Predicated region
    $region53: #{up_step_forward.2} parent=5 // pred_check
      %p6362 = pneg %p6361
    $region54: #{up_step_forward.2} parent=5 // pred_check_branch
      %6364 = sbr.rel (%p6362) target = $region56
    $region55: #{up_step_forward.2} parent=5 // pred_region
      %s6365 = ssub.s32 %s14, 2
      // Predicated region
      $region57: #{up_step_forward.2} parent=55 // pred_check
        %p6366 = pneg %p193
      $region58: #{up_step_forward.2} parent=55 // pred_check_branch
        %6368 = sbr.rel (%p6366) target = $region60
      $region59: #{up_step_forward.2} parent=55 // pred_region
        %s6369 = smul.u32 10, %s26
        %p6370 = scmp.lt.s32.totalorder %s25, 1
        %s6371 = scalar_select %p6370, %s25, 1
        %p6372 = scmp.lt.s32.totalorder %s6369, 29
        %s6373 = scalar_select %p6372, %s6369, 29
        %s6374 = smul.addr %s6373, 2
        %s6375 = smul.addr %s6371, 60
        %s6376 = sadd.s32 %s6374, %s6375
        %s6377 = smul.addr %s6376, 8
        %s6378 = scalar_lea.vmem %s6, %s6377
      $region60: #{up_step_forward.2} parent=55 // pred_fallthru
        _
      // Predicated region
      $region61: #{up_step_forward.2} parent=55 // pred_check
        %p6379 = pneg %p221
      $region62: #{up_step_forward.2} parent=55 // pred_check_branch
        %6381 = sbr.rel (%p6379) target = $region64
      $region63: #{up_step_forward.2} parent=55 // pred_region
        %p6382 = scmp.lt.s32.totalorder %s25, 1
        %s6383 = scalar_select %p6382, %s25, 1
        %p6384 = scmp.lt.s32.totalorder %s26, 2
        %s6385 = scalar_select %p6384, %s26, 2
        %s6386 = smul.addr %s6383, 3
        %s6387 = sadd.s32 %s6385, %s6386
        %s6388 = smul.addr %s6387, 2
        %s6389 = scalar_lea.vmem %s7, %s6388
      $region64: #{up_step_forward.2} parent=55 // pred_fallthru
        _
    $region56: #{up_step_forward.2} parent=5 // pred_fallthru
      _
  $region6: #{up_step_forward.2} parent=0 // loop_footer
    %s18 = sadd.s32 1, %s14
  $region7: #{up_step_forward.2} parent=0 // loop_footer_branch
    %13 = sbr.rel target = $region3
  $region8: #{up_step_forward.2} parent=0 // loop_exit
    _

</llo_original>
